<compile_context>
chip_gen: v5e
topology: v5e:2x2
jax: 0.10.0
libtpu: 0.0.40
codegen_flags: <defaults>
</compile_context>

<pallas_src>
import math

import jax
import jax.numpy as jnp
from jax import lax
from jax.experimental import pallas as pl
from jax.experimental.pallas import tpu as pltpu


# ---------------------------------------------------------------------------
# static helpers: tap offsets and per-image edge-validity / lattice masks
# ---------------------------------------------------------------------------
def _tap_offsets(kh, kw, dilation=1):
    return [((dy - kh // 2) * dilation, (dx - kw // 2) * dilation)
            for dy in range(kh) for dx in range(kw)]


def _tap_masks(h, w, offsets):
    """(T, h*w) float32 validity masks for rolled (shifted) neighbours."""
    ys, xs = jnp.meshgrid(jnp.arange(h), jnp.arange(w), indexing="ij")
    ys = ys.reshape(1, -1)
    xs = xs.reshape(1, -1)
    rows = []
    for dy, dx in offsets:
        rows.append((ys + dy >= 0) & (ys + dy < h) & (xs + dx >= 0) & (xs + dx < w))
    return jnp.concatenate(rows, axis=0).astype(jnp.float32)


def _even_even_mask(h, w):
    ys, xs = jnp.meshgrid(jnp.arange(h), jnp.arange(w), indexing="ij")
    return ((ys % 2 == 0) & (xs % 2 == 0)).reshape(1, -1).astype(jnp.float32)


# ---------------------------------------------------------------------------
# in-kernel helpers ((C, lanes) layout, lanes = LANE_B * H * W on the lane dim)
# ---------------------------------------------------------------------------
def _shift(x, s, lanes):
    """y[..., q] = x[..., (q + s) mod lanes]  (XLU lane rotation, no copies)."""
    if s == 0:
        return x
    return pltpu.roll(x, shift=(-s) % lanes, axis=1)


def _dense_conv(x_in, w_ref, b_ref, m_ref, shifts, col_ref, lanes):
    """KxK dense conv as a single MXU matmul fed from a reused bf16 im2col scratch.

    x_in    : (Cin, lanes) f32 (logical channel concat already done)
    w_ref   : (Cout, T*Cin) bf16 flattened weight, tap-major / channel-minor
    m_ref   : (T, lanes) f32 edge-validity masks; shifts: per-tap flat lane shifts
    col_ref : (>= T*Cin, lanes) bf16 VMEM scratch, reused by every dense conv
    """
    cin = x_in.shape[0]
    for t, s in enumerate(shifts):
        v = _shift(x_in, s, lanes)
        if s != 0:
            v = v * m_ref[t:t + 1, :]               # f32 VPU mask math (v5e-safe)
        col_ref[t * cin:(t + 1) * cin, :] = v.astype(col_ref.dtype)
    col = col_ref[0:len(shifts) * cin, :]           # bf16 feed to the MXU
    out = jnp.dot(w_ref[...], col, preferred_element_type=jnp.float32)
    return out + b_ref[...]


def _dw_conv(x, w_ref, b_ref, m_ref, shifts, lanes):
    """Depthwise conv: x (C, lanes), w_ref (C, T) -> (C, lanes). VPU FMAs + XLU rolls."""
    acc = jnp.zeros_like(x)
    for t, s in enumerate(shifts):
        v = _shift(x, s, lanes)
        if s != 0:
            v = v * m_ref[t:t + 1, :]
        acc = acc + v * w_ref[:, t:t + 1]
    return acc + b_ref[...]


# ---------------------------------------------------------------------------
# fused GhostBottleneckV2 kernel
# ---------------------------------------------------------------------------
def _make_kernel(h, w, c1, mid, c2, lane_b):
    lanes = lane_b * h * w
    init1 = mid // 2
    s3 = [dy * w + dx for dy, dx in _tap_offsets(3, 3)]        # dense / dw 3x3
    s3d = [dy * w + dx for dy, dx in _tap_offsets(3, 3, 2)]    # dilated taps (pooled grid)
    s15d = [dy * w + dx for dy, dx in _tap_offsets(1, 5, 2)]
    s51d = [dy * w + dx for dy, dx in _tap_offsets(5, 1, 2)]

    def kernel(x_ref, mee_ref, m3_ref, m3d_ref, m15d_ref, m51d_ref,
               w_g1p, b_g1p, w_g1c, b_g1c,
               w_d1, b_d1, w_d2, b_d2, w_d3, b_d3,
               w_g2p, b_g2p, w_g2c, b_g2c,
               o_ref, col_ref):
        x = x_ref[0].astype(jnp.float32)                        # (c1, lanes)

        # 2x2 avg-pool, kept scattered on the even/even lattice of the full grid
        # (only even/even lanes are consumed downstream; wrap lanes are discarded).
        z = 0.25 * (x + _shift(x, 1, lanes) + _shift(x, w, lanes) + _shift(x, w + 1, lanes))

        # ---- ghost1 main path (relu); f32 `x` dies after the g1p im2col --------
        x1 = jnp.maximum(_dense_conv(x, w_g1p, b_g1p, m3_ref, s3, col_ref, lanes), 0.0)
        x2 = jnp.maximum(_dw_conv(x1, w_g1c, b_g1c, m3_ref, s3, lanes), 0.0)

        # ---- DFC gate branch (ghost1 'attn' mode), dilated taps on the lattice --
        g = _dense_conv(z, w_d1, b_d1, m3d_ref, s3d, col_ref, lanes)    # 3x3 + BN
        g = _dw_conv(g, w_d2, b_d2, m15d_ref, s15d, lanes)              # dw (1,5) + BN
        g = _dw_conv(g, w_d3, b_d3, m51d_ref, s51d, lanes)              # dw (5,1) + BN
        g = jax.nn.sigmoid(g) * mee_ref[...]                            # keep pooled lattice
        g = g + _shift(g, -1, lanes)                                    # nearest 2x along W
        gate = g + _shift(g, -w, lanes)                                 # nearest 2x along H

        # gate halves consumed immediately after they are formed (short live range)
        x12 = jnp.concatenate([x1 * gate[:init1], x2 * gate[init1:]], axis=0)

        # (stride == 1, se_ratio == 0 -> no conv_dw / SE in this configuration)

        # ---- ghost2 (no activation) ---------------------------------------------
        y1 = _dense_conv(x12, w_g2p, b_g2p, m3_ref, s3, col_ref, lanes)
        y2 = _dw_conv(y1, w_g2c, b_g2c, m3_ref, s3, lanes)

        # ---- identity shortcut; ONE lane/sublane-dense full-tile store ----------
        out = jnp.concatenate([y1, y2], axis=0) + x_ref[0].astype(jnp.float32)
        o_ref[0] = out.astype(o_ref.dtype)

    return kernel


# ---------------------------------------------------------------------------
# weight flattening (tap-major, channel-minor) to match the im2col stacking
# ---------------------------------------------------------------------------
def _flat_dense(w):                        # (kh, kw, ci, co) -> (co, kh*kw*ci)
    kh, kw, ci, co = w.shape
    return jnp.transpose(w.reshape(kh * kw, ci, co), (2, 0, 1)).reshape(co, kh * kw * ci)


def _flat_dw(w):                           # (kh, kw, c) -> (c, kh*kw)
    kh, kw, c = w.shape
    return w.reshape(kh * kw, c).T


# ---------------------------------------------------------------------------
# lane-batch sizing (v7x-safe VMEM budget, >=2 grid steps for 2 TensorCores)
# ---------------------------------------------------------------------------
def _vmem_estimate_bytes(lane_b, hw, c1, mid, c2):
    lanes = lane_b * hw
    bf16, f32 = 2, 4
    io = 2 * (c1 + c2) * lanes * bf16                 # double-buffered bf16 I/O blocks
    masks = 2 * (1 + 9 + 9 + 5 + 5) * lanes * f32     # tiled masks (conservative x2)
    col = 9 * max(c1, mid) * lanes * bf16             # reused bf16 im2col scratch
    live = 3 * (2 * c1 + 2 * mid + c2) * lanes * f32  # f32 intermediates + headroom
    return io + masks + col + live


def _choose_lane_batch(n, hw, c1, mid, c2, target=16, budget=24 << 20):
    best = 1
    for b in range(1, min(n, target) + 1):
        if n % b == 0 and _vmem_estimate_bytes(b, hw, c1, mid, c2) <= budget:
            best = b
    if n // best < 2:                                  # keep both v7x TCs busy if possible
        for b in range(best - 1, 0, -1):
            if n % b == 0 and n // b >= 2:
                best = b
                break
    return best


# ---------------------------------------------------------------------------
# public wrapper (NCHW in / NCHW out, like the PyTorch module)
# ---------------------------------------------------------------------------
@jax.jit
def ghost_bottleneck_v2(x_nchw, params):
    n, c1, h, w = x_nchw.shape
    mid = params['w_dfc1'].shape[-1]
    c2 = 2 * params['w_g2p'].shape[-1]
    assert c1 == c2, "identity-shortcut configuration (c1 == c2, stride == 1)"
    assert h % 2 == 0 and w % 2 == 0, "even H/W required by fused 2x2 pool / 2x upsample"
    # TODO(synk): the PyTorch module's F.interpolate(size=x.shape[-1]) makes the gate
    # (W, W) when H != W; only the square-image case is implemented here.
    assert h == w
    hw = h * w

    lane_b = _choose_lane_batch(n, hw, c1, mid, c2)
    nb = n // lane_b
    lanes = lane_b * hw

    # bf16 across HBM / DMA; all in-kernel math is f32 (MXU fed bf16, f32 accumulate).
    # Fold lane_b images into the lane axis: (nb, C, lane_b*H*W), channel-major per step.
    x = x_nchw.astype(jnp.bfloat16).reshape(nb, lane_b, c1, hw)
    x = jnp.transpose(x, (0, 2, 1, 3)).reshape(nb, c1, lanes)

    def tile(m):                     # per-image masks tiled along the lane-batch axis
        return jnp.tile(m, (1, lane_b))

    masks = (
        tile(_even_even_mask(h, w)),
        tile(_tap_masks(h, w, _tap_offsets(3, 3))),
        tile(_tap_masks(h, w, _tap_offsets(3, 3, 2))),
        tile(_tap_masks(h, w, _tap_offsets(1, 5, 2))),
        tile(_tap_masks(h, w, _tap_offsets(5, 1, 2))),
    )
    bf = jnp.bfloat16
    weights = (
        _flat_dense(params['w_g1p']).astype(bf), params['b_g1p'].reshape(-1, 1),
        _flat_dw(params['w_g1c']), params['b_g1c'].reshape(-1, 1),
        _flat_dense(params['w_dfc1']).astype(bf), params['b_dfc1'].reshape(-1, 1),
        _flat_dw(params['w_dfc2']), params['b_dfc2'].reshape(-1, 1),
        _flat_dw(params['w_dfc3']), params['b_dfc3'].reshape(-1, 1),
        _flat_dense(params['w_g2p']).astype(bf), params['b_g2p'].reshape(-1, 1),
        _flat_dw(params['w_g2c']), params['b_g2c'].reshape(-1, 1),
    )

    def _full(a):
        zeros = (0,) * a.ndim
        return pl.BlockSpec(a.shape, lambda i, _z=zeros: _z)

    est = _vmem_estimate_bytes(lane_b, hw, c1, mid, c2)
    vmem_limit = int(max(32 << 20, min(est + (16 << 20), 64 << 20)))

    # TODO(synk): for very large H*W add a second "parallel" spatial grid axis with a
    # 2-row halo instead of whole-image lane blocks.
    out = pl.pallas_call(
        _make_kernel(h, w, c1, mid, c2, lane_b),
        out_shape=jax.ShapeDtypeStruct((nb, c2, lanes), jnp.bfloat16),
        grid=(nb,),
        in_specs=[pl.BlockSpec((1, c1, lanes), lambda i: (i, 0, 0))]
                 + [_full(a) for a in masks]
                 + [_full(a) for a in weights],
        out_specs=pl.BlockSpec((1, c2, lanes), lambda i: (i, 0, 0)),
        scratch_shapes=[pltpu.VMEM((9 * max(c1, mid), lanes), jnp.bfloat16)],
        compiler_params=pltpu.CompilerParams(
            dimension_semantics=("parallel",),
            vmem_limit_bytes=vmem_limit),
    )(x, *masks, *weights)

    out = out.reshape(nb, c2, lane_b, hw)
    out = jnp.transpose(out, (0, 2, 1, 3)).reshape(n, c2, h, w)
    return out


# ---------------------------------------------------------------------------
# parameter construction (deterministic, eval-mode BN folded into conv w/b)
# ---------------------------------------------------------------------------
def _round_channels(channels, divisor=4):
    rounded = max(int(channels + divisor / 2) // divisor * divisor, divisor)
    if rounded < 0.9 * channels:
        rounded += divisor
    return rounded


def _fold_bn(w, bn, eps=1e-5):
    gamma, beta, mean, var = bn
    scale = gamma / jnp.sqrt(var + eps)
    return w * scale, beta - mean * scale


def _bn_init(key, c):
    k1, k2, k3, k4 = jax.random.split(key, 4)
    gamma = jax.random.uniform(k1, (c,), jnp.float32, 0.8, 1.2)
    beta = 0.1 * jax.random.normal(k2, (c,), jnp.float32)
    mean = 0.1 * jax.random.normal(k3, (c,), jnp.float32)
    var = jax.random.uniform(k4, (c,), jnp.float32, 0.5, 1.5)
    return gamma, beta, mean, var


def _conv_init(key, shape, fan_in):
    return jax.random.normal(key, shape, jnp.float32) / math.sqrt(fan_in)


def init_params(key, c1, c2, e=2):
    mid = _round_channels(c1 * e, 4)
    init1 = math.ceil(mid / 2)
    init2 = math.ceil(c2 / 2)
    assert 2 * init1 == mid and 2 * init2 == c2, "even channel counts assumed"

    keys = jax.random.split(key, 14)
    p = {}
    w, b = _fold_bn(_conv_init(keys[0], (3, 3, c1, init1), 9 * c1), _bn_init(keys[1], init1))
    p['w_g1p'], p['b_g1p'] = w, b                               # ghost1 primary + BN (+relu)
    w, b = _fold_bn(_conv_init(keys[2], (3, 3, init1), 9), _bn_init(keys[3], init1))
    p['w_g1c'], p['b_g1c'] = w, b                               # ghost1 cheap (dw) + BN (+relu)
    w, b = _fold_bn(_conv_init(keys[4], (3, 3, c1, mid), 9 * c1), _bn_init(keys[5], mid))
    p['w_dfc1'], p['b_dfc1'] = w, b                             # DFC conv 3x3 + BN
    w, b = _fold_bn(_conv_init(keys[6], (1, 5, mid), 5), _bn_init(keys[7], mid))
    p['w_dfc2'], p['b_dfc2'] = w, b                             # DFC dw (1,5) + BN
    w, b = _fold_bn(_conv_init(keys[8], (5, 1, mid), 5), _bn_init(keys[9], mid))
    p['w_dfc3'], p['b_dfc3'] = w, b                             # DFC dw (5,1) + BN
    w, b = _fold_bn(_conv_init(keys[10], (3, 3, mid, init2), 9 * mid), _bn_init(keys[11], init2))
    p['w_g2p'], p['b_g2p'] = w, b                               # ghost2 primary + BN
    w, b = _fold_bn(_conv_init(keys[12], (3, 3, init2), 9), _bn_init(keys[13], init2))
    p['w_g2c'], p['b_g2c'] = w, b                               # ghost2 cheap (dw) + BN
    return p


# ---------------------------------------------------------------------------
# pure-JAX reference (for verification)
# ---------------------------------------------------------------------------
def _ref_conv(x, w, b):
    y = lax.conv_general_dilated(x, w, (1, 1), 'SAME',
                                 dimension_numbers=('NHWC', 'HWIO', 'NHWC'))
    return y + b.reshape(1, 1, 1, -1)


def _ref_dwconv(x, w, b):
    c = x.shape[-1]
    y = lax.conv_general_dilated(x, w[:, :, None, :], (1, 1), 'SAME',
                                 dimension_numbers=('NHWC', 'HWIO', 'NHWC'),
                                 feature_group_count=c)
    return y + b.reshape(1, 1, 1, -1)


def ghost_bottleneck_v2_ref(x_nchw, p):
    # mirrors the kernel's bf16 activation / dense-weight quantization; math in f32
    def q(wt):                                  # dense weights are fed to the MXU in bf16
        return wt.astype(jnp.bfloat16).astype(jnp.float32)

    x = jnp.transpose(x_nchw.astype(jnp.bfloat16).astype(jnp.float32), (0, 2, 3, 1))
    n, h, w, c1 = x.shape
    xp = x.reshape(n, h // 2, 2, w // 2, 2, c1).mean(axis=(2, 4))
    g = _ref_conv(xp, q(p['w_dfc1']), p['b_dfc1'])
    g = _ref_dwconv(g, p['w_dfc2'], p['b_dfc2'])
    g = _ref_dwconv(g, p['w_dfc3'], p['b_dfc3'])
    gate = jnp.repeat(jnp.repeat(jax.nn.sigmoid(g), 2, axis=1), 2, axis=2)

    x1 = jax.nn.relu(_ref_conv(x, q(p['w_g1p']), p['b_g1p']))
    x2 = jax.nn.relu(_ref_dwconv(x1, p['w_g1c'], p['b_g1c']))
    g1 = jnp.concatenate([x1, x2], axis=-1) * gate
    y1 = _ref_conv(g1, q(p['w_g2p']), p['b_g2p'])
    y2 = _ref_dwconv(y1, p['w_g2c'], p['b_g2c'])
    out = jnp.concatenate([y1, y2], axis=-1) + x
    return jnp.transpose(out, (0, 3, 1, 2))


if __name__ == "__main__":
    import numpy as np

    key = jax.random.PRNGKey(0)
    kx, kp = jax.random.split(key)
    N, C, H, W = 8, 8, 16, 16          # c1 == c2 == 8, s == 1 -> identity shortcut
    x = jax.random.normal(kx, (N, C, H, W), jnp.float32)
    params = init_params(kp, C, C)

    out = jax.block_until_ready(ghost_bottleneck_v2(x, params))
    ref = jax.block_until_ready(ghost_bottleneck_v2_ref(x, params))

    assert out.shape == (N, C, H, W) and out.dtype == jnp.bfloat16
    np.testing.assert_allclose(np.asarray(out, dtype=np.float32),
                               np.asarray(ref, dtype=np.float32),
                               rtol=3e-2, atol=3e-2)   # bf16 activation/weight tolerance
    print("KERNEL_OK")
</pallas_src>

<mosaic_0001>
module attributes {stable_mosaic.version = 11 : i64} {
  func.func @kernel(%arg0: i32, %arg1: memref<1x8x1024xbf16, #tpu.memory_space<vmem>>, %arg2: memref<1x1024xf32, #tpu.memory_space<vmem>>, %arg3: memref<9x1024xf32, #tpu.memory_space<vmem>>, %arg4: memref<9x1024xf32, #tpu.memory_space<vmem>>, %arg5: memref<5x1024xf32, #tpu.memory_space<vmem>>, %arg6: memref<5x1024xf32, #tpu.memory_space<vmem>>, %arg7: memref<8x72xbf16, #tpu.memory_space<vmem>>, %arg8: memref<8x1xf32, #tpu.memory_space<vmem>>, %arg9: memref<8x9xf32, #tpu.memory_space<vmem>>, %arg10: memref<8x1xf32, #tpu.memory_space<vmem>>, %arg11: memref<16x72xbf16, #tpu.memory_space<vmem>>, %arg12: memref<16x1xf32, #tpu.memory_space<vmem>>, %arg13: memref<16x5xf32, #tpu.memory_space<vmem>>, %arg14: memref<16x1xf32, #tpu.memory_space<vmem>>, %arg15: memref<16x5xf32, #tpu.memory_space<vmem>>, %arg16: memref<16x1xf32, #tpu.memory_space<vmem>>, %arg17: memref<4x144xbf16, #tpu.memory_space<vmem>>, %arg18: memref<4x1xf32, #tpu.memory_space<vmem>>, %arg19: memref<4x9xf32, #tpu.memory_space<vmem>>, %arg20: memref<4x1xf32, #tpu.memory_space<vmem>>, %arg21: memref<1x8x1024xbf16, #tpu.memory_space<vmem>>, %arg22: memref<144x1024xbf16, #tpu.memory_space<vmem>>) attributes {dimension_semantics = [#tpu.dimension_semantics<parallel>], iteration_bounds = array<i64: 2>, scalar_prefetch = 0 : i64, scratch_operands = 1 : i64, tpu.core_type = #tpu.core_type<tc>, window_params = [{transform_indices = @transform_0, window_bounds = array<i64: 1, 8, 1024>}, {pipeline_mode = #tpu.pipeline_mode<synchronous>, transform_indices = @transform_1, window_bounds = array<i64: 1, 1024>}, {pipeline_mode = #tpu.pipeline_mode<synchronous>, transform_indices = @transform_2, window_bounds = array<i64: 9, 1024>}, {pipeline_mode = #tpu.pipeline_mode<synchronous>, transform_indices = @transform_3, window_bounds = array<i64: 9, 1024>}, {pipeline_mode = #tpu.pipeline_mode<synchronous>, transform_indices = @transform_4, window_bounds = array<i64: 5, 1024>}, {pipeline_mode = #tpu.pipeline_mode<synchronous>, transform_indices = @transform_5, window_bounds = array<i64: 5, 1024>}, {pipeline_mode = #tpu.pipeline_mode<synchronous>, transform_indices = @transform_6, window_bounds = array<i64: 8, 72>}, {pipeline_mode = #tpu.pipeline_mode<synchronous>, transform_indices = @transform_7, window_bounds = array<i64: 8, 1>}, {pipeline_mode = #tpu.pipeline_mode<synchronous>, transform_indices = @transform_8, window_bounds = array<i64: 8, 9>}, {pipeline_mode = #tpu.pipeline_mode<synchronous>, transform_indices = @transform_9, window_bounds = array<i64: 8, 1>}, {pipeline_mode = #tpu.pipeline_mode<synchronous>, transform_indices = @transform_10, window_bounds = array<i64: 16, 72>}, {pipeline_mode = #tpu.pipeline_mode<synchronous>, transform_indices = @transform_11, window_bounds = array<i64: 16, 1>}, {pipeline_mode = #tpu.pipeline_mode<synchronous>, transform_indices = @transform_12, window_bounds = array<i64: 16, 5>}, {pipeline_mode = #tpu.pipeline_mode<synchronous>, transform_indices = @transform_13, window_bounds = array<i64: 16, 1>}, {pipeline_mode = #tpu.pipeline_mode<synchronous>, transform_indices = @transform_14, window_bounds = array<i64: 16, 5>}, {pipeline_mode = #tpu.pipeline_mode<synchronous>, transform_indices = @transform_15, window_bounds = array<i64: 16, 1>}, {pipeline_mode = #tpu.pipeline_mode<synchronous>, transform_indices = @transform_16, window_bounds = array<i64: 4, 144>}, {pipeline_mode = #tpu.pipeline_mode<synchronous>, transform_indices = @transform_17, window_bounds = array<i64: 4, 1>}, {pipeline_mode = #tpu.pipeline_mode<synchronous>, transform_indices = @transform_18, window_bounds = array<i64: 4, 9>}, {pipeline_mode = #tpu.pipeline_mode<synchronous>, transform_indices = @transform_19, window_bounds = array<i64: 4, 1>}, {transform_indices = @transform_20, window_bounds = array<i64: 1, 8, 1024>}]} {
    %c0 = arith.constant 0 : index
    %c0_0 = arith.constant 0 : index
    %c0_1 = arith.constant 0 : index
    %0 = vector.load %arg1[%c0, %c0_0, %c0_1] : memref<1x8x1024xbf16, #tpu.memory_space<vmem>>, vector<1x8x1024xbf16>
    %1 = vector.shape_cast %0 : vector<1x8x1024xbf16> to vector<8x1024xbf16>
    %2 = arith.extf %1 : vector<8x1024xbf16> to vector<8x1024xf32>
    %c1023_i32 = arith.constant 1023 : i32
    %3 = tpu.dynamic_rotate %2 by %c1023_i32 dim 1 : vector<8x1024xf32>, i32 -> vector<8x1024xf32>
    %4 = arith.addf %2, %3 : vector<8x1024xf32>
    %c1008_i32 = arith.constant 1008 : i32
    %5 = tpu.dynamic_rotate %2 by %c1008_i32 dim 1 : vector<8x1024xf32>, i32 -> vector<8x1024xf32>
    %6 = arith.addf %4, %5 : vector<8x1024xf32>
    %c1007_i32 = arith.constant 1007 : i32
    %7 = tpu.dynamic_rotate %2 by %c1007_i32 dim 1 : vector<8x1024xf32>, i32 -> vector<8x1024xf32>
    %8 = arith.addf %6, %7 : vector<8x1024xf32>
    %cst = arith.constant 2.500000e-01 : f32
    %9 = vector.broadcast %cst : f32 to vector<8x1024xf32>
    %10 = arith.mulf %9, %8 : vector<8x1024xf32>
    %c17_i32 = arith.constant 17 : i32
    %11 = tpu.dynamic_rotate %2 by %c17_i32 dim 1 : vector<8x1024xf32>, i32 -> vector<8x1024xf32>
    %c0_2 = arith.constant 0 : index
    %c0_3 = arith.constant 0 : index
    %12 = vector.load %arg3[%c0_2, %c0_3] : memref<9x1024xf32, #tpu.memory_space<vmem>>, vector<1x1024xf32>
    %13 = vector.broadcast %12 : vector<1x1024xf32> to vector<8x1024xf32>
    %14 = arith.mulf %11, %13 : vector<8x1024xf32>
    %15 = arith.truncf %14 : vector<8x1024xf32> to vector<8x1024xbf16>
    %c0_4 = arith.constant 0 : index
    %c0_5 = arith.constant 0 : index
    %16 = vector.load %arg22[%c0_4, %c0_5] : memref<144x1024xbf16, #tpu.memory_space<vmem>>, vector<8x1024xbf16>
    tpu.vector_store %arg22[%c0_4, %c0_5], %15 {strides = array<i32>} : memref<144x1024xbf16, #tpu.memory_space<vmem>>, vector<8x1024xbf16>,
    %c16_i32 = arith.constant 16 : i32
    %17 = tpu.dynamic_rotate %2 by %c16_i32 dim 1 : vector<8x1024xf32>, i32 -> vector<8x1024xf32>
    %c1 = arith.constant 1 : index
    %c0_6 = arith.constant 0 : index
    %18 = vector.load %arg3[%c1, %c0_6] : memref<9x1024xf32, #tpu.memory_space<vmem>>, vector<1x1024xf32>
    %19 = vector.broadcast %18 : vector<1x1024xf32> to vector<8x1024xf32>
    %20 = arith.mulf %17, %19 : vector<8x1024xf32>
    %21 = arith.truncf %20 : vector<8x1024xf32> to vector<8x1024xbf16>
    %c8 = arith.constant 8 : index
    %c0_7 = arith.constant 0 : index
    %22 = vector.load %arg22[%c8, %c0_7] : memref<144x1024xbf16, #tpu.memory_space<vmem>>, vector<8x1024xbf16>
    tpu.vector_store %arg22[%c8, %c0_7], %21 {strides = array<i32>} : memref<144x1024xbf16, #tpu.memory_space<vmem>>, vector<8x1024xbf16>,
    %c15_i32 = arith.constant 15 : i32
    %23 = tpu.dynamic_rotate %2 by %c15_i32 dim 1 : vector<8x1024xf32>, i32 -> vector<8x1024xf32>
    %c2 = arith.constant 2 : index
    %c0_8 = arith.constant 0 : index
    %24 = vector.load %arg3[%c2, %c0_8] : memref<9x1024xf32, #tpu.memory_space<vmem>>, vector<1x1024xf32>
    %25 = vector.broadcast %24 : vector<1x1024xf32> to vector<8x1024xf32>
    %26 = arith.mulf %23, %25 : vector<8x1024xf32>
    %27 = arith.truncf %26 : vector<8x1024xf32> to vector<8x1024xbf16>
    %c16 = arith.constant 16 : index
    %c0_9 = arith.constant 0 : index
    %28 = vector.load %arg22[%c16, %c0_9] : memref<144x1024xbf16, #tpu.memory_space<vmem>>, vector<8x1024xbf16>
    tpu.vector_store %arg22[%c16, %c0_9], %27 {strides = array<i32>} : memref<144x1024xbf16, #tpu.memory_space<vmem>>, vector<8x1024xbf16>,
    %c1_i32 = arith.constant 1 : i32
    %29 = tpu.dynamic_rotate %2 by %c1_i32 dim 1 : vector<8x1024xf32>, i32 -> vector<8x1024xf32>
    %c3 = arith.constant 3 : index
    %c0_10 = arith.constant 0 : index
    %30 = vector.load %arg3[%c3, %c0_10] : memref<9x1024xf32, #tpu.memory_space<vmem>>, vector<1x1024xf32>
    %31 = vector.broadcast %30 : vector<1x1024xf32> to vector<8x1024xf32>
    %32 = arith.mulf %29, %31 : vector<8x1024xf32>
    %33 = arith.truncf %32 : vector<8x1024xf32> to vector<8x1024xbf16>
    %c24 = arith.constant 24 : index
    %c0_11 = arith.constant 0 : index
    %34 = vector.load %arg22[%c24, %c0_11] : memref<144x1024xbf16, #tpu.memory_space<vmem>>, vector<8x1024xbf16>
    tpu.vector_store %arg22[%c24, %c0_11], %33 {strides = array<i32>} : memref<144x1024xbf16, #tpu.memory_space<vmem>>, vector<8x1024xbf16>,
    %35 = arith.truncf %2 : vector<8x1024xf32> to vector<8x1024xbf16>
    %c32 = arith.constant 32 : index
    %c0_12 = arith.constant 0 : index
    %36 = vector.load %arg22[%c32, %c0_12] : memref<144x1024xbf16, #tpu.memory_space<vmem>>, vector<8x1024xbf16>
    tpu.vector_store %arg22[%c32, %c0_12], %35 {strides = array<i32>} : memref<144x1024xbf16, #tpu.memory_space<vmem>>, vector<8x1024xbf16>,
    %c1023_i32_13 = arith.constant 1023 : i32
    %37 = tpu.dynamic_rotate %2 by %c1023_i32_13 dim 1 : vector<8x1024xf32>, i32 -> vector<8x1024xf32>
    %c5 = arith.constant 5 : index
    %c0_14 = arith.constant 0 : index
    %38 = vector.load %arg3[%c5, %c0_14] : memref<9x1024xf32, #tpu.memory_space<vmem>>, vector<1x1024xf32>
    %39 = vector.broadcast %38 : vector<1x1024xf32> to vector<8x1024xf32>
    %40 = arith.mulf %37, %39 : vector<8x1024xf32>
    %41 = arith.truncf %40 : vector<8x1024xf32> to vector<8x1024xbf16>
    %c40 = arith.constant 40 : index
    %c0_15 = arith.constant 0 : index
    %42 = vector.load %arg22[%c40, %c0_15] : memref<144x1024xbf16, #tpu.memory_space<vmem>>, vector<8x1024xbf16>
    tpu.vector_store %arg22[%c40, %c0_15], %41 {strides = array<i32>} : memref<144x1024xbf16, #tpu.memory_space<vmem>>, vector<8x1024xbf16>,
    %c1009_i32 = arith.constant 1009 : i32
    %43 = tpu.dynamic_rotate %2 by %c1009_i32 dim 1 : vector<8x1024xf32>, i32 -> vector<8x1024xf32>
    %c6 = arith.constant 6 : index
    %c0_16 = arith.constant 0 : index
    %44 = vector.load %arg3[%c6, %c0_16] : memref<9x1024xf32, #tpu.memory_space<vmem>>, vector<1x1024xf32>
    %45 = vector.broadcast %44 : vector<1x1024xf32> to vector<8x1024xf32>
    %46 = arith.mulf %43, %45 : vector<8x1024xf32>
    %47 = arith.truncf %46 : vector<8x1024xf32> to vector<8x1024xbf16>
    %c48 = arith.constant 48 : index
    %c0_17 = arith.constant 0 : index
    %48 = vector.load %arg22[%c48, %c0_17] : memref<144x1024xbf16, #tpu.memory_space<vmem>>, vector<8x1024xbf16>
    tpu.vector_store %arg22[%c48, %c0_17], %47 {strides = array<i32>} : memref<144x1024xbf16, #tpu.memory_space<vmem>>, vector<8x1024xbf16>,
    %c1008_i32_18 = arith.constant 1008 : i32
    %49 = tpu.dynamic_rotate %2 by %c1008_i32_18 dim 1 : vector<8x1024xf32>, i32 -> vector<8x1024xf32>
    %c7 = arith.constant 7 : index
    %c0_19 = arith.constant 0 : index
    %50 = vector.load %arg3[%c7, %c0_19] : memref<9x1024xf32, #tpu.memory_space<vmem>>, vector<1x1024xf32>
    %51 = vector.broadcast %50 : vector<1x1024xf32> to vector<8x1024xf32>
    %52 = arith.mulf %49, %51 : vector<8x1024xf32>
    %53 = arith.truncf %52 : vector<8x1024xf32> to vector<8x1024xbf16>
    %c56 = arith.constant 56 : index
    %c0_20 = arith.constant 0 : index
    %54 = vector.load %arg22[%c56, %c0_20] : memref<144x1024xbf16, #tpu.memory_space<vmem>>, vector<8x1024xbf16>
    tpu.vector_store %arg22[%c56, %c0_20], %53 {strides = array<i32>} : memref<144x1024xbf16, #tpu.memory_space<vmem>>, vector<8x1024xbf16>,
    %c1007_i32_21 = arith.constant 1007 : i32
    %55 = tpu.dynamic_rotate %2 by %c1007_i32_21 dim 1 : vector<8x1024xf32>, i32 -> vector<8x1024xf32>
    %c8_22 = arith.constant 8 : index
    %c0_23 = arith.constant 0 : index
    %56 = vector.load %arg3[%c8_22, %c0_23] : memref<9x1024xf32, #tpu.memory_space<vmem>>, vector<1x1024xf32>
    %57 = vector.broadcast %56 : vector<1x1024xf32> to vector<8x1024xf32>
    %58 = arith.mulf %55, %57 : vector<8x1024xf32>
    %59 = arith.truncf %58 : vector<8x1024xf32> to vector<8x1024xbf16>
    %c64 = arith.constant 64 : index
    %c0_24 = arith.constant 0 : index
    %60 = vector.load %arg22[%c64, %c0_24] : memref<144x1024xbf16, #tpu.memory_space<vmem>>, vector<8x1024xbf16>
    tpu.vector_store %arg22[%c64, %c0_24], %59 {strides = array<i32>} : memref<144x1024xbf16, #tpu.memory_space<vmem>>, vector<8x1024xbf16>,
    %c0_25 = arith.constant 0 : index
    %c0_26 = arith.constant 0 : index
    %61 = vector.load %arg22[%c0_25, %c0_26] : memref<144x1024xbf16, #tpu.memory_space<vmem>>, vector<72x1024xbf16>
    %c0_27 = arith.constant 0 : index
    %c0_28 = arith.constant 0 : index
    %62 = vector.load %arg7[%c0_27, %c0_28] : memref<8x72xbf16, #tpu.memory_space<vmem>>, vector<8x72xbf16>
    %cst_29 = arith.constant dense<0.000000e+00> : vector<8x1024xf32>
    %63 = tpu.matmul %62, %61, %cst_29 {dimension_numbers = #tpu.dot_dimension_numbers<[1], [0], [0], [1], [0, 0, 1, 1], [], []>} : vector<8x72xbf16>, vector<72x1024xbf16>, vector<8x1024xf32> -> vector<8x1024xf32>
    %c0_30 = arith.constant 0 : index
    %c0_31 = arith.constant 0 : index
    %64 = vector.load %arg8[%c0_30, %c0_31] : memref<8x1xf32, #tpu.memory_space<vmem>>, vector<8x1xf32>
    %65 = vector.broadcast %64 : vector<8x1xf32> to vector<8x1024xf32>
    %66 = arith.addf %63, %65 : vector<8x1024xf32>
    %cst_32 = arith.constant 0.000000e+00 : f32
    %67 = vector.broadcast %cst_32 : f32 to vector<8x1024xf32>
    %68 = arith.maximumf %66, %67 : vector<8x1024xf32>
    %cst_33 = arith.constant 0.000000e+00 : f32
    %69 = vector.broadcast %cst_33 : f32 to vector<8x1024xf32>
    %c17_i32_34 = arith.constant 17 : i32
    %70 = tpu.dynamic_rotate %68 by %c17_i32_34 dim 1 : vector<8x1024xf32>, i32 -> vector<8x1024xf32>
    %c0_35 = arith.constant 0 : index
    %c0_36 = arith.constant 0 : index
    %71 = vector.load %arg3[%c0_35, %c0_36] : memref<9x1024xf32, #tpu.memory_space<vmem>>, vector<1x1024xf32>
    %72 = vector.broadcast %71 : vector<1x1024xf32> to vector<8x1024xf32>
    %73 = arith.mulf %70, %72 : vector<8x1024xf32>
    %c0_37 = arith.constant 0 : index
    %c0_38 = arith.constant 0 : index
    %74 = vector.load %arg9[%c0_37, %c0_38] : memref<8x9xf32, #tpu.memory_space<vmem>>, vector<8x1xf32>
    %75 = vector.broadcast %74 : vector<8x1xf32> to vector<8x1024xf32>
    %76 = arith.mulf %73, %75 : vector<8x1024xf32>
    %77 = arith.addf %69, %76 : vector<8x1024xf32>
    %c16_i32_39 = arith.constant 16 : i32
    %78 = tpu.dynamic_rotate %68 by %c16_i32_39 dim 1 : vector<8x1024xf32>, i32 -> vector<8x1024xf32>
    %c1_40 = arith.constant 1 : index
    %c0_41 = arith.constant 0 : index
    %79 = vector.load %arg3[%c1_40, %c0_41] : memref<9x1024xf32, #tpu.memory_space<vmem>>, vector<1x1024xf32>
    %80 = vector.broadcast %79 : vector<1x1024xf32> to vector<8x1024xf32>
    %81 = arith.mulf %78, %80 : vector<8x1024xf32>
    %c0_42 = arith.constant 0 : index
    %c1_43 = arith.constant 1 : index
    %82 = vector.load %arg9[%c0_42, %c1_43] : memref<8x9xf32, #tpu.memory_space<vmem>>, vector<8x1xf32>
    %83 = vector.broadcast %82 : vector<8x1xf32> to vector<8x1024xf32>
    %84 = arith.mulf %81, %83 : vector<8x1024xf32>
    %85 = arith.addf %77, %84 : vector<8x1024xf32>
    %c15_i32_44 = arith.constant 15 : i32
    %86 = tpu.dynamic_rotate %68 by %c15_i32_44 dim 1 : vector<8x1024xf32>, i32 -> vector<8x1024xf32>
    %c2_45 = arith.constant 2 : index
    %c0_46 = arith.constant 0 : index
    %87 = vector.load %arg3[%c2_45, %c0_46] : memref<9x1024xf32, #tpu.memory_space<vmem>>, vector<1x1024xf32>
    %88 = vector.broadcast %87 : vector<1x1024xf32> to vector<8x1024xf32>
    %89 = arith.mulf %86, %88 : vector<8x1024xf32>
    %c0_47 = arith.constant 0 : index
    %c2_48 = arith.constant 2 : index
    %90 = vector.load %arg9[%c0_47, %c2_48] : memref<8x9xf32, #tpu.memory_space<vmem>>, vector<8x1xf32>
    %91 = vector.broadcast %90 : vector<8x1xf32> to vector<8x1024xf32>
    %92 = arith.mulf %89, %91 : vector<8x1024xf32>
    %93 = arith.addf %85, %92 : vector<8x1024xf32>
    %c1_i32_49 = arith.constant 1 : i32
    %94 = tpu.dynamic_rotate %68 by %c1_i32_49 dim 1 : vector<8x1024xf32>, i32 -> vector<8x1024xf32>
    %c3_50 = arith.constant 3 : index
    %c0_51 = arith.constant 0 : index
    %95 = vector.load %arg3[%c3_50, %c0_51] : memref<9x1024xf32, #tpu.memory_space<vmem>>, vector<1x1024xf32>
    %96 = vector.broadcast %95 : vector<1x1024xf32> to vector<8x1024xf32>
    %97 = arith.mulf %94, %96 : vector<8x1024xf32>
    %c0_52 = arith.constant 0 : index
    %c3_53 = arith.constant 3 : index
    %98 = vector.load %arg9[%c0_52, %c3_53] : memref<8x9xf32, #tpu.memory_space<vmem>>, vector<8x1xf32>
    %99 = vector.broadcast %98 : vector<8x1xf32> to vector<8x1024xf32>
    %100 = arith.mulf %97, %99 : vector<8x1024xf32>
    %101 = arith.addf %93, %100 : vector<8x1024xf32>
    %c0_54 = arith.constant 0 : index
    %c4 = arith.constant 4 : index
    %102 = vector.load %arg9[%c0_54, %c4] : memref<8x9xf32, #tpu.memory_space<vmem>>, vector<8x1xf32>
    %103 = vector.broadcast %102 : vector<8x1xf32> to vector<8x1024xf32>
    %104 = arith.mulf %68, %103 : vector<8x1024xf32>
    %105 = arith.addf %101, %104 : vector<8x1024xf32>
    %c1023_i32_55 = arith.constant 1023 : i32
    %106 = tpu.dynamic_rotate %68 by %c1023_i32_55 dim 1 : vector<8x1024xf32>, i32 -> vector<8x1024xf32>
    %c5_56 = arith.constant 5 : index
    %c0_57 = arith.constant 0 : index
    %107 = vector.load %arg3[%c5_56, %c0_57] : memref<9x1024xf32, #tpu.memory_space<vmem>>, vector<1x1024xf32>
    %108 = vector.broadcast %107 : vector<1x1024xf32> to vector<8x1024xf32>
    %109 = arith.mulf %106, %108 : vector<8x1024xf32>
    %c0_58 = arith.constant 0 : index
    %c5_59 = arith.constant 5 : index
    %110 = vector.load %arg9[%c0_58, %c5_59] : memref<8x9xf32, #tpu.memory_space<vmem>>, vector<8x1xf32>
    %111 = vector.broadcast %110 : vector<8x1xf32> to vector<8x1024xf32>
    %112 = arith.mulf %109, %111 : vector<8x1024xf32>
    %113 = arith.addf %105, %112 : vector<8x1024xf32>
    %c1009_i32_60 = arith.constant 1009 : i32
    %114 = tpu.dynamic_rotate %68 by %c1009_i32_60 dim 1 : vector<8x1024xf32>, i32 -> vector<8x1024xf32>
    %c6_61 = arith.constant 6 : index
    %c0_62 = arith.constant 0 : index
    %115 = vector.load %arg3[%c6_61, %c0_62] : memref<9x1024xf32, #tpu.memory_space<vmem>>, vector<1x1024xf32>
    %116 = vector.broadcast %115 : vector<1x1024xf32> to vector<8x1024xf32>
    %117 = arith.mulf %114, %116 : vector<8x1024xf32>
    %c0_63 = arith.constant 0 : index
    %c6_64 = arith.constant 6 : index
    %118 = vector.load %arg9[%c0_63, %c6_64] : memref<8x9xf32, #tpu.memory_space<vmem>>, vector<8x1xf32>
    %119 = vector.broadcast %118 : vector<8x1xf32> to vector<8x1024xf32>
    %120 = arith.mulf %117, %119 : vector<8x1024xf32>
    %121 = arith.addf %113, %120 : vector<8x1024xf32>
    %c1008_i32_65 = arith.constant 1008 : i32
    %122 = tpu.dynamic_rotate %68 by %c1008_i32_65 dim 1 : vector<8x1024xf32>, i32 -> vector<8x1024xf32>
    %c7_66 = arith.constant 7 : index
    %c0_67 = arith.constant 0 : index
    %123 = vector.load %arg3[%c7_66, %c0_67] : memref<9x1024xf32, #tpu.memory_space<vmem>>, vector<1x1024xf32>
    %124 = vector.broadcast %123 : vector<1x1024xf32> to vector<8x1024xf32>
    %125 = arith.mulf %122, %124 : vector<8x1024xf32>
    %c0_68 = arith.constant 0 : index
    %c7_69 = arith.constant 7 : index
    %126 = vector.load %arg9[%c0_68, %c7_69] : memref<8x9xf32, #tpu.memory_space<vmem>>, vector<8x1xf32>
    %127 = vector.broadcast %126 : vector<8x1xf32> to vector<8x1024xf32>
    %128 = arith.mulf %125, %127 : vector<8x1024xf32>
    %129 = arith.addf %121, %128 : vector<8x1024xf32>
    %c1007_i32_70 = arith.constant 1007 : i32
    %130 = tpu.dynamic_rotate %68 by %c1007_i32_70 dim 1 : vector<8x1024xf32>, i32 -> vector<8x1024xf32>
    %c8_71 = arith.constant 8 : index
    %c0_72 = arith.constant 0 : index
    %131 = vector.load %arg3[%c8_71, %c0_72] : memref<9x1024xf32, #tpu.memory_space<vmem>>, vector<1x1024xf32>
    %132 = vector.broadcast %131 : vector<1x1024xf32> to vector<8x1024xf32>
    %133 = arith.mulf %130, %132 : vector<8x1024xf32>
    %c0_73 = arith.constant 0 : index
    %c8_74 = arith.constant 8 : index
    %134 = vector.load %arg9[%c0_73, %c8_74] : memref<8x9xf32, #tpu.memory_space<vmem>>, vector<8x1xf32>
    %135 = vector.broadcast %134 : vector<8x1xf32> to vector<8x1024xf32>
    %136 = arith.mulf %133, %135 : vector<8x1024xf32>
    %137 = arith.addf %129, %136 : vector<8x1024xf32>
    %c0_75 = arith.constant 0 : index
    %c0_76 = arith.constant 0 : index
    %138 = vector.load %arg10[%c0_75, %c0_76] : memref<8x1xf32, #tpu.memory_space<vmem>>, vector<8x1xf32>
    %139 = vector.broadcast %138 : vector<8x1xf32> to vector<8x1024xf32>
    %140 = arith.addf %137, %139 : vector<8x1024xf32>
    %cst_77 = arith.constant 0.000000e+00 : f32
    %141 = vector.broadcast %cst_77 : f32 to vector<8x1024xf32>
    %142 = arith.maximumf %140, %141 : vector<8x1024xf32>
    %c34_i32 = arith.constant 34 : i32
    %143 = tpu.dynamic_rotate %10 by %c34_i32 dim 1 : vector<8x1024xf32>, i32 -> vector<8x1024xf32>
    %c0_78 = arith.constant 0 : index
    %c0_79 = arith.constant 0 : index
    %144 = vector.load %arg4[%c0_78, %c0_79] : memref<9x1024xf32, #tpu.memory_space<vmem>>, vector<1x1024xf32>
    %145 = vector.broadcast %144 : vector<1x1024xf32> to vector<8x1024xf32>
    %146 = arith.mulf %143, %145 : vector<8x1024xf32>
    %147 = arith.truncf %146 : vector<8x1024xf32> to vector<8x1024xbf16>
    %c0_80 = arith.constant 0 : index
    %c0_81 = arith.constant 0 : index
    %148 = vector.load %arg22[%c0_80, %c0_81] : memref<144x1024xbf16, #tpu.memory_space<vmem>>, vector<8x1024xbf16>
    tpu.vector_store %arg22[%c0_80, %c0_81], %147 {strides = array<i32>} : memref<144x1024xbf16, #tpu.memory_space<vmem>>, vector<8x1024xbf16>,
    %c32_i32 = arith.constant 32 : i32
    %149 = tpu.dynamic_rotate %10 by %c32_i32 dim 1 : vector<8x1024xf32>, i32 -> vector<8x1024xf32>
    %c1_82 = arith.constant 1 : index
    %c0_83 = arith.constant 0 : index
    %150 = vector.load %arg4[%c1_82, %c0_83] : memref<9x1024xf32, #tpu.memory_space<vmem>>, vector<1x1024xf32>
    %151 = vector.broadcast %150 : vector<1x1024xf32> to vector<8x1024xf32>
    %152 = arith.mulf %149, %151 : vector<8x1024xf32>
    %153 = arith.truncf %152 : vector<8x1024xf32> to vector<8x1024xbf16>
    %c8_84 = arith.constant 8 : index
    %c0_85 = arith.constant 0 : index
    %154 = vector.load %arg22[%c8_84, %c0_85] : memref<144x1024xbf16, #tpu.memory_space<vmem>>, vector<8x1024xbf16>
    tpu.vector_store %arg22[%c8_84, %c0_85], %153 {strides = array<i32>} : memref<144x1024xbf16, #tpu.memory_space<vmem>>, vector<8x1024xbf16>,
    %c30_i32 = arith.constant 30 : i32
    %155 = tpu.dynamic_rotate %10 by %c30_i32 dim 1 : vector<8x1024xf32>, i32 -> vector<8x1024xf32>
    %c2_86 = arith.constant 2 : index
    %c0_87 = arith.constant 0 : index
    %156 = vector.load %arg4[%c2_86, %c0_87] : memref<9x1024xf32, #tpu.memory_space<vmem>>, vector<1x1024xf32>
    %157 = vector.broadcast %156 : vector<1x1024xf32> to vector<8x1024xf32>
    %158 = arith.mulf %155, %157 : vector<8x1024xf32>
    %159 = arith.truncf %158 : vector<8x1024xf32> to vector<8x1024xbf16>
    %c16_88 = arith.constant 16 : index
    %c0_89 = arith.constant 0 : index
    %160 = vector.load %arg22[%c16_88, %c0_89] : memref<144x1024xbf16, #tpu.memory_space<vmem>>, vector<8x1024xbf16>
    tpu.vector_store %arg22[%c16_88, %c0_89], %159 {strides = array<i32>} : memref<144x1024xbf16, #tpu.memory_space<vmem>>, vector<8x1024xbf16>,
    %c2_i32 = arith.constant 2 : i32
    %161 = tpu.dynamic_rotate %10 by %c2_i32 dim 1 : vector<8x1024xf32>, i32 -> vector<8x1024xf32>
    %c3_90 = arith.constant 3 : index
    %c0_91 = arith.constant 0 : index
    %162 = vector.load %arg4[%c3_90, %c0_91] : memref<9x1024xf32, #tpu.memory_space<vmem>>, vector<1x1024xf32>
    %163 = vector.broadcast %162 : vector<1x1024xf32> to vector<8x1024xf32>
    %164 = arith.mulf %161, %163 : vector<8x1024xf32>
    %165 = arith.truncf %164 : vector<8x1024xf32> to vector<8x1024xbf16>
    %c24_92 = arith.constant 24 : index
    %c0_93 = arith.constant 0 : index
    %166 = vector.load %arg22[%c24_92, %c0_93] : memref<144x1024xbf16, #tpu.memory_space<vmem>>, vector<8x1024xbf16>
    tpu.vector_store %arg22[%c24_92, %c0_93], %165 {strides = array<i32>} : memref<144x1024xbf16, #tpu.memory_space<vmem>>, vector<8x1024xbf16>,
    %167 = arith.truncf %10 : vector<8x1024xf32> to vector<8x1024xbf16>
    %c32_94 = arith.constant 32 : index
    %c0_95 = arith.constant 0 : index
    %168 = vector.load %arg22[%c32_94, %c0_95] : memref<144x1024xbf16, #tpu.memory_space<vmem>>, vector<8x1024xbf16>
    tpu.vector_store %arg22[%c32_94, %c0_95], %167 {strides = array<i32>} : memref<144x1024xbf16, #tpu.memory_space<vmem>>, vector<8x1024xbf16>,
    %c1022_i32 = arith.constant 1022 : i32
    %169 = tpu.dynamic_rotate %10 by %c1022_i32 dim 1 : vector<8x1024xf32>, i32 -> vector<8x1024xf32>
    %c5_96 = arith.constant 5 : index
    %c0_97 = arith.constant 0 : index
    %170 = vector.load %arg4[%c5_96, %c0_97] : memref<9x1024xf32, #tpu.memory_space<vmem>>, vector<1x1024xf32>
    %171 = vector.broadcast %170 : vector<1x1024xf32> to vector<8x1024xf32>
    %172 = arith.mulf %169, %171 : vector<8x1024xf32>
    %173 = arith.truncf %172 : vector<8x1024xf32> to vector<8x1024xbf16>
    %c40_98 = arith.constant 40 : index
    %c0_99 = arith.constant 0 : index
    %174 = vector.load %arg22[%c40_98, %c0_99] : memref<144x1024xbf16, #tpu.memory_space<vmem>>, vector<8x1024xbf16>
    tpu.vector_store %arg22[%c40_98, %c0_99], %173 {strides = array<i32>} : memref<144x1024xbf16, #tpu.memory_space<vmem>>, vector<8x1024xbf16>,
    %c994_i32 = arith.constant 994 : i32
    %175 = tpu.dynamic_rotate %10 by %c994_i32 dim 1 : vector<8x1024xf32>, i32 -> vector<8x1024xf32>
    %c6_100 = arith.constant 6 : index
    %c0_101 = arith.constant 0 : index
    %176 = vector.load %arg4[%c6_100, %c0_101] : memref<9x1024xf32, #tpu.memory_space<vmem>>, vector<1x1024xf32>
    %177 = vector.broadcast %176 : vector<1x1024xf32> to vector<8x1024xf32>
    %178 = arith.mulf %175, %177 : vector<8x1024xf32>
    %179 = arith.truncf %178 : vector<8x1024xf32> to vector<8x1024xbf16>
    %c48_102 = arith.constant 48 : index
    %c0_103 = arith.constant 0 : index
    %180 = vector.load %arg22[%c48_102, %c0_103] : memref<144x1024xbf16, #tpu.memory_space<vmem>>, vector<8x1024xbf16>
    tpu.vector_store %arg22[%c48_102, %c0_103], %179 {strides = array<i32>} : memref<144x1024xbf16, #tpu.memory_space<vmem>>, vector<8x1024xbf16>,
    %c992_i32 = arith.constant 992 : i32
    %181 = tpu.dynamic_rotate %10 by %c992_i32 dim 1 : vector<8x1024xf32>, i32 -> vector<8x1024xf32>
    %c7_104 = arith.constant 7 : index
    %c0_105 = arith.constant 0 : index
    %182 = vector.load %arg4[%c7_104, %c0_105] : memref<9x1024xf32, #tpu.memory_space<vmem>>, vector<1x1024xf32>
    %183 = vector.broadcast %182 : vector<1x1024xf32> to vector<8x1024xf32>
    %184 = arith.mulf %181, %183 : vector<8x1024xf32>
    %185 = arith.truncf %184 : vector<8x1024xf32> to vector<8x1024xbf16>
    %c56_106 = arith.constant 56 : index
    %c0_107 = arith.constant 0 : index
    %186 = vector.load %arg22[%c56_106, %c0_107] : memref<144x1024xbf16, #tpu.memory_space<vmem>>, vector<8x1024xbf16>
    tpu.vector_store %arg22[%c56_106, %c0_107], %185 {strides = array<i32>} : memref<144x1024xbf16, #tpu.memory_space<vmem>>, vector<8x1024xbf16>,
    %c990_i32 = arith.constant 990 : i32
    %187 = tpu.dynamic_rotate %10 by %c990_i32 dim 1 : vector<8x1024xf32>, i32 -> vector<8x1024xf32>
    %c8_108 = arith.constant 8 : index
    %c0_109 = arith.constant 0 : index
    %188 = vector.load %arg4[%c8_108, %c0_109] : memref<9x1024xf32, #tpu.memory_space<vmem>>, vector<1x1024xf32>
    %189 = vector.broadcast %188 : vector<1x1024xf32> to vector<8x1024xf32>
    %190 = arith.mulf %187, %189 : vector<8x1024xf32>
    %191 = arith.truncf %190 : vector<8x1024xf32> to vector<8x1024xbf16>
    %c64_110 = arith.constant 64 : index
    %c0_111 = arith.constant 0 : index
    %192 = vector.load %arg22[%c64_110, %c0_111] : memref<144x1024xbf16, #tpu.memory_space<vmem>>, vector<8x1024xbf16>
    tpu.vector_store %arg22[%c64_110, %c0_111], %191 {strides = array<i32>} : memref<144x1024xbf16, #tpu.memory_space<vmem>>, vector<8x1024xbf16>,
    %c0_112 = arith.constant 0 : index
    %c0_113 = arith.constant 0 : index
    %193 = vector.load %arg22[%c0_112, %c0_113] : memref<144x1024xbf16, #tpu.memory_space<vmem>>, vector<72x1024xbf16>
    %c0_114 = arith.constant 0 : index
    %c0_115 = arith.constant 0 : index
    %194 = vector.load %arg11[%c0_114, %c0_115] : memref<16x72xbf16, #tpu.memory_space<vmem>>, vector<16x72xbf16>
    %cst_116 = arith.constant dense<0.000000e+00> : vector<16x1024xf32>
    %195 = tpu.matmul %194, %193, %cst_116 {dimension_numbers = #tpu.dot_dimension_numbers<[1], [0], [0], [1], [0, 0, 1, 1], [], []>} : vector<16x72xbf16>, vector<72x1024xbf16>, vector<16x1024xf32> -> vector<16x1024xf32>
    %c0_117 = arith.constant 0 : index
    %c0_118 = arith.constant 0 : index
    %196 = vector.load %arg12[%c0_117, %c0_118] : memref<16x1xf32, #tpu.memory_space<vmem>>, vector<16x1xf32>
    %197 = vector.broadcast %196 : vector<16x1xf32> to vector<16x1024xf32>
    %198 = arith.addf %195, %197 : vector<16x1024xf32>
    %cst_119 = arith.constant 0.000000e+00 : f32
    %199 = vector.broadcast %cst_119 : f32 to vector<16x1024xf32>
    %c4_i32 = arith.constant 4 : i32
    %200 = tpu.dynamic_rotate %198 by %c4_i32 dim 1 : vector<16x1024xf32>, i32 -> vector<16x1024xf32>
    %c0_120 = arith.constant 0 : index
    %c0_121 = arith.constant 0 : index
    %201 = vector.load %arg5[%c0_120, %c0_121] : memref<5x1024xf32, #tpu.memory_space<vmem>>, vector<1x1024xf32>
    %202 = vector.broadcast %201 : vector<1x1024xf32> to vector<16x1024xf32>
    %203 = arith.mulf %200, %202 : vector<16x1024xf32>
    %c0_122 = arith.constant 0 : index
    %c0_123 = arith.constant 0 : index
    %204 = vector.load %arg13[%c0_122, %c0_123] : memref<16x5xf32, #tpu.memory_space<vmem>>, vector<16x1xf32>
    %205 = vector.broadcast %204 : vector<16x1xf32> to vector<16x1024xf32>
    %206 = arith.mulf %203, %205 : vector<16x1024xf32>
    %207 = arith.addf %199, %206 : vector<16x1024xf32>
    %c2_i32_124 = arith.constant 2 : i32
    %208 = tpu.dynamic_rotate %198 by %c2_i32_124 dim 1 : vector<16x1024xf32>, i32 -> vector<16x1024xf32>
    %c1_125 = arith.constant 1 : index
    %c0_126 = arith.constant 0 : index
    %209 = vector.load %arg5[%c1_125, %c0_126] : memref<5x1024xf32, #tpu.memory_space<vmem>>, vector<1x1024xf32>
    %210 = vector.broadcast %209 : vector<1x1024xf32> to vector<16x1024xf32>
    %211 = arith.mulf %208, %210 : vector<16x1024xf32>
    %c0_127 = arith.constant 0 : index
    %c1_128 = arith.constant 1 : index
    %212 = vector.load %arg13[%c0_127, %c1_128] : memref<16x5xf32, #tpu.memory_space<vmem>>, vector<16x1xf32>
    %213 = vector.broadcast %212 : vector<16x1xf32> to vector<16x1024xf32>
    %214 = arith.mulf %211, %213 : vector<16x1024xf32>
    %215 = arith.addf %207, %214 : vector<16x1024xf32>
    %c0_129 = arith.constant 0 : index
    %c2_130 = arith.constant 2 : index
    %216 = vector.load %arg13[%c0_129, %c2_130] : memref<16x5xf32, #tpu.memory_space<vmem>>, vector<16x1xf32>
    %217 = vector.broadcast %216 : vector<16x1xf32> to vector<16x1024xf32>
    %218 = arith.mulf %198, %217 : vector<16x1024xf32>
    %219 = arith.addf %215, %218 : vector<16x1024xf32>
    %c1022_i32_131 = arith.constant 1022 : i32
    %220 = tpu.dynamic_rotate %198 by %c1022_i32_131 dim 1 : vector<16x1024xf32>, i32 -> vector<16x1024xf32>
    %c3_132 = arith.constant 3 : index
    %c0_133 = arith.constant 0 : index
    %221 = vector.load %arg5[%c3_132, %c0_133] : memref<5x1024xf32, #tpu.memory_space<vmem>>, vector<1x1024xf32>
    %222 = vector.broadcast %221 : vector<1x1024xf32> to vector<16x1024xf32>
    %223 = arith.mulf %220, %222 : vector<16x1024xf32>
    %c0_134 = arith.constant 0 : index
    %c3_135 = arith.constant 3 : index
    %224 = vector.load %arg13[%c0_134, %c3_135] : memref<16x5xf32, #tpu.memory_space<vmem>>, vector<16x1xf32>
    %225 = vector.broadcast %224 : vector<16x1xf32> to vector<16x1024xf32>
    %226 = arith.mulf %223, %225 : vector<16x1024xf32>
    %227 = arith.addf %219, %226 : vector<16x1024xf32>
    %c1020_i32 = arith.constant 1020 : i32
    %228 = tpu.dynamic_rotate %198 by %c1020_i32 dim 1 : vector<16x1024xf32>, i32 -> vector<16x1024xf32>
    %c4_136 = arith.constant 4 : index
    %c0_137 = arith.constant 0 : index
    %229 = vector.load %arg5[%c4_136, %c0_137] : memref<5x1024xf32, #tpu.memory_space<vmem>>, vector<1x1024xf32>
    %230 = vector.broadcast %229 : vector<1x1024xf32> to vector<16x1024xf32>
    %231 = arith.mulf %228, %230 : vector<16x1024xf32>
    %c0_138 = arith.constant 0 : index
    %c4_139 = arith.constant 4 : index
    %232 = vector.load %arg13[%c0_138, %c4_139] : memref<16x5xf32, #tpu.memory_space<vmem>>, vector<16x1xf32>
    %233 = vector.broadcast %232 : vector<16x1xf32> to vector<16x1024xf32>
    %234 = arith.mulf %231, %233 : vector<16x1024xf32>
    %235 = arith.addf %227, %234 : vector<16x1024xf32>
    %c0_140 = arith.constant 0 : index
    %c0_141 = arith.constant 0 : index
    %236 = vector.load %arg14[%c0_140, %c0_141] : memref<16x1xf32, #tpu.memory_space<vmem>>, vector<16x1xf32>
    %237 = vector.broadcast %236 : vector<16x1xf32> to vector<16x1024xf32>
    %238 = arith.addf %235, %237 : vector<16x1024xf32>
    %cst_142 = arith.constant 0.000000e+00 : f32
    %239 = vector.broadcast %cst_142 : f32 to vector<16x1024xf32>
    %c64_i32 = arith.constant 64 : i32
    %240 = tpu.dynamic_rotate %238 by %c64_i32 dim 1 : vector<16x1024xf32>, i32 -> vector<16x1024xf32>
    %c0_143 = arith.constant 0 : index
    %c0_144 = arith.constant 0 : index
    %241 = vector.load %arg6[%c0_143, %c0_144] : memref<5x1024xf32, #tpu.memory_space<vmem>>, vector<1x1024xf32>
    %242 = vector.broadcast %241 : vector<1x1024xf32> to vector<16x1024xf32>
    %243 = arith.mulf %240, %242 : vector<16x1024xf32>
    %c0_145 = arith.constant 0 : index
    %c0_146 = arith.constant 0 : index
    %244 = vector.load %arg15[%c0_145, %c0_146] : memref<16x5xf32, #tpu.memory_space<vmem>>, vector<16x1xf32>
    %245 = vector.broadcast %244 : vector<16x1xf32> to vector<16x1024xf32>
    %246 = arith.mulf %243, %245 : vector<16x1024xf32>
    %247 = arith.addf %239, %246 : vector<16x1024xf32>
    %c32_i32_147 = arith.constant 32 : i32
    %248 = tpu.dynamic_rotate %238 by %c32_i32_147 dim 1 : vector<16x1024xf32>, i32 -> vector<16x1024xf32>
    %c1_148 = arith.constant 1 : index
    %c0_149 = arith.constant 0 : index
    %249 = vector.load %arg6[%c1_148, %c0_149] : memref<5x1024xf32, #tpu.memory_space<vmem>>, vector<1x1024xf32>
    %250 = vector.broadcast %249 : vector<1x1024xf32> to vector<16x1024xf32>
    %251 = arith.mulf %248, %250 : vector<16x1024xf32>
    %c0_150 = arith.constant 0 : index
    %c1_151 = arith.constant 1 : index
    %252 = vector.load %arg15[%c0_150, %c1_151] : memref<16x5xf32, #tpu.memory_space<vmem>>, vector<16x1xf32>
    %253 = vector.broadcast %252 : vector<16x1xf32> to vector<16x1024xf32>
    %254 = arith.mulf %251, %253 : vector<16x1024xf32>
    %255 = arith.addf %247, %254 : vector<16x1024xf32>
    %c0_152 = arith.constant 0 : index
    %c2_153 = arith.constant 2 : index
    %256 = vector.load %arg15[%c0_152, %c2_153] : memref<16x5xf32, #tpu.memory_space<vmem>>, vector<16x1xf32>
    %257 = vector.broadcast %256 : vector<16x1xf32> to vector<16x1024xf32>
    %258 = arith.mulf %238, %257 : vector<16x1024xf32>
    %259 = arith.addf %255, %258 : vector<16x1024xf32>
    %c992_i32_154 = arith.constant 992 : i32
    %260 = tpu.dynamic_rotate %238 by %c992_i32_154 dim 1 : vector<16x1024xf32>, i32 -> vector<16x1024xf32>
    %c3_155 = arith.constant 3 : index
    %c0_156 = arith.constant 0 : index
    %261 = vector.load %arg6[%c3_155, %c0_156] : memref<5x1024xf32, #tpu.memory_space<vmem>>, vector<1x1024xf32>
    %262 = vector.broadcast %261 : vector<1x1024xf32> to vector<16x1024xf32>
    %263 = arith.mulf %260, %262 : vector<16x1024xf32>
    %c0_157 = arith.constant 0 : index
    %c3_158 = arith.constant 3 : index
    %264 = vector.load %arg15[%c0_157, %c3_158] : memref<16x5xf32, #tpu.memory_space<vmem>>, vector<16x1xf32>
    %265 = vector.broadcast %264 : vector<16x1xf32> to vector<16x1024xf32>
    %266 = arith.mulf %263, %265 : vector<16x1024xf32>
    %267 = arith.addf %259, %266 : vector<16x1024xf32>
    %c960_i32 = arith.constant 960 : i32
    %268 = tpu.dynamic_rotate %238 by %c960_i32 dim 1 : vector<16x1024xf32>, i32 -> vector<16x1024xf32>
    %c4_159 = arith.constant 4 : index
    %c0_160 = arith.constant 0 : index
    %269 = vector.load %arg6[%c4_159, %c0_160] : memref<5x1024xf32, #tpu.memory_space<vmem>>, vector<1x1024xf32>
    %270 = vector.broadcast %269 : vector<1x1024xf32> to vector<16x1024xf32>
    %271 = arith.mulf %268, %270 : vector<16x1024xf32>
    %c0_161 = arith.constant 0 : index
    %c4_162 = arith.constant 4 : index
    %272 = vector.load %arg15[%c0_161, %c4_162] : memref<16x5xf32, #tpu.memory_space<vmem>>, vector<16x1xf32>
    %273 = vector.broadcast %272 : vector<16x1xf32> to vector<16x1024xf32>
    %274 = arith.mulf %271, %273 : vector<16x1024xf32>
    %275 = arith.addf %267, %274 : vector<16x1024xf32>
    %c0_163 = arith.constant 0 : index
    %c0_164 = arith.constant 0 : index
    %276 = vector.load %arg16[%c0_163, %c0_164] : memref<16x1xf32, #tpu.memory_space<vmem>>, vector<16x1xf32>
    %277 = vector.broadcast %276 : vector<16x1xf32> to vector<16x1024xf32>
    %278 = arith.addf %275, %277 : vector<16x1024xf32>
    %279 = arith.negf %278 : vector<16x1024xf32>
    %280 = math.exp %279 : vector<16x1024xf32>
    %cst_165 = arith.constant 1.000000e+00 : f32
    %281 = vector.broadcast %cst_165 : f32 to vector<16x1024xf32>
    %282 = arith.addf %281, %280 : vector<16x1024xf32>
    %283 = arith.divf %281, %282 : vector<16x1024xf32>
    %c0_166 = arith.constant 0 : index
    %c0_167 = arith.constant 0 : index
    %284 = vector.load %arg2[%c0_166, %c0_167] : memref<1x1024xf32, #tpu.memory_space<vmem>>, vector<1x1024xf32>
    %285 = vector.broadcast %284 : vector<1x1024xf32> to vector<16x1024xf32>
    %286 = arith.mulf %283, %285 : vector<16x1024xf32>
    %c1_i32_168 = arith.constant 1 : i32
    %287 = tpu.dynamic_rotate %286 by %c1_i32_168 dim 1 : vector<16x1024xf32>, i32 -> vector<16x1024xf32>
    %288 = arith.addf %286, %287 : vector<16x1024xf32>
    %c16_i32_169 = arith.constant 16 : i32
    %289 = tpu.dynamic_rotate %288 by %c16_i32_169 dim 1 : vector<16x1024xf32>, i32 -> vector<16x1024xf32>
    %290 = arith.addf %288, %289 : vector<16x1024xf32>
    %291 = vector.extract_strided_slice %290 {offsets = [0, 0], sizes = [8, 1024], strides = [1, 1]} : vector<16x1024xf32> to vector<8x1024xf32>
    %292 = arith.mulf %68, %291 : vector<8x1024xf32>
    %293 = vector.extract_strided_slice %290 {offsets = [8, 0], sizes = [8, 1024], strides = [1, 1]} : vector<16x1024xf32> to vector<8x1024xf32>
    %294 = arith.mulf %142, %293 : vector<8x1024xf32>
    %295 = tpu.concatenate %292, %294 in 0 : vector<8x1024xf32>, vector<8x1024xf32> -> vector<16x1024xf32>
    %c17_i32_170 = arith.constant 17 : i32
    %296 = tpu.dynamic_rotate %295 by %c17_i32_170 dim 1 : vector<16x1024xf32>, i32 -> vector<16x1024xf32>
    %c0_171 = arith.constant 0 : index
    %c0_172 = arith.constant 0 : index
    %297 = vector.load %arg3[%c0_171, %c0_172] : memref<9x1024xf32, #tpu.memory_space<vmem>>, vector<1x1024xf32>
    %298 = vector.broadcast %297 : vector<1x1024xf32> to vector<16x1024xf32>
    %299 = arith.mulf %296, %298 : vector<16x1024xf32>
    %300 = arith.truncf %299 : vector<16x1024xf32> to vector<16x1024xbf16>
    %c0_173 = arith.constant 0 : index
    %c0_174 = arith.constant 0 : index
    %301 = vector.load %arg22[%c0_173, %c0_174] : memref<144x1024xbf16, #tpu.memory_space<vmem>>, vector<16x1024xbf16>
    tpu.vector_store %arg22[%c0_173, %c0_174], %300 {strides = array<i32>} : memref<144x1024xbf16, #tpu.memory_space<vmem>>, vector<16x1024xbf16>,
    %c16_i32_175 = arith.constant 16 : i32
    %302 = tpu.dynamic_rotate %295 by %c16_i32_175 dim 1 : vector<16x1024xf32>, i32 -> vector<16x1024xf32>
    %c1_176 = arith.constant 1 : index
    %c0_177 = arith.constant 0 : index
    %303 = vector.load %arg3[%c1_176, %c0_177] : memref<9x1024xf32, #tpu.memory_space<vmem>>, vector<1x1024xf32>
    %304 = vector.broadcast %303 : vector<1x1024xf32> to vector<16x1024xf32>
    %305 = arith.mulf %302, %304 : vector<16x1024xf32>
    %306 = arith.truncf %305 : vector<16x1024xf32> to vector<16x1024xbf16>
    %c16_178 = arith.constant 16 : index
    %c0_179 = arith.constant 0 : index
    %307 = vector.load %arg22[%c16_178, %c0_179] : memref<144x1024xbf16, #tpu.memory_space<vmem>>, vector<16x1024xbf16>
    tpu.vector_store %arg22[%c16_178, %c0_179], %306 {strides = array<i32>} : memref<144x1024xbf16, #tpu.memory_space<vmem>>, vector<16x1024xbf16>,
    %c15_i32_180 = arith.constant 15 : i32
    %308 = tpu.dynamic_rotate %295 by %c15_i32_180 dim 1 : vector<16x1024xf32>, i32 -> vector<16x1024xf32>
    %c2_181 = arith.constant 2 : index
    %c0_182 = arith.constant 0 : index
    %309 = vector.load %arg3[%c2_181, %c0_182] : memref<9x1024xf32, #tpu.memory_space<vmem>>, vector<1x1024xf32>
    %310 = vector.broadcast %309 : vector<1x1024xf32> to vector<16x1024xf32>
    %311 = arith.mulf %308, %310 : vector<16x1024xf32>
    %312 = arith.truncf %311 : vector<16x1024xf32> to vector<16x1024xbf16>
    %c32_183 = arith.constant 32 : index
    %c0_184 = arith.constant 0 : index
    %313 = vector.load %arg22[%c32_183, %c0_184] : memref<144x1024xbf16, #tpu.memory_space<vmem>>, vector<16x1024xbf16>
    tpu.vector_store %arg22[%c32_183, %c0_184], %312 {strides = array<i32>} : memref<144x1024xbf16, #tpu.memory_space<vmem>>, vector<16x1024xbf16>,
    %c1_i32_185 = arith.constant 1 : i32
    %314 = tpu.dynamic_rotate %295 by %c1_i32_185 dim 1 : vector<16x1024xf32>, i32 -> vector<16x1024xf32>
    %c3_186 = arith.constant 3 : index
    %c0_187 = arith.constant 0 : index
    %315 = vector.load %arg3[%c3_186, %c0_187] : memref<9x1024xf32, #tpu.memory_space<vmem>>, vector<1x1024xf32>
    %316 = vector.broadcast %315 : vector<1x1024xf32> to vector<16x1024xf32>
    %317 = arith.mulf %314, %316 : vector<16x1024xf32>
    %318 = arith.truncf %317 : vector<16x1024xf32> to vector<16x1024xbf16>
    %c48_188 = arith.constant 48 : index
    %c0_189 = arith.constant 0 : index
    %319 = vector.load %arg22[%c48_188, %c0_189] : memref<144x1024xbf16, #tpu.memory_space<vmem>>, vector<16x1024xbf16>
    tpu.vector_store %arg22[%c48_188, %c0_189], %318 {strides = array<i32>} : memref<144x1024xbf16, #tpu.memory_space<vmem>>, vector<16x1024xbf16>,
    %320 = arith.truncf %295 : vector<16x1024xf32> to vector<16x1024xbf16>
    %c64_190 = arith.constant 64 : index
    %c0_191 = arith.constant 0 : index
    %321 = vector.load %arg22[%c64_190, %c0_191] : memref<144x1024xbf16, #tpu.memory_space<vmem>>, vector<16x1024xbf16>
    tpu.vector_store %arg22[%c64_190, %c0_191], %320 {strides = array<i32>} : memref<144x1024xbf16, #tpu.memory_space<vmem>>, vector<16x1024xbf16>,
    %c1023_i32_192 = arith.constant 1023 : i32
    %322 = tpu.dynamic_rotate %295 by %c1023_i32_192 dim 1 : vector<16x1024xf32>, i32 -> vector<16x1024xf32>
    %c5_193 = arith.constant 5 : index
    %c0_194 = arith.constant 0 : index
    %323 = vector.load %arg3[%c5_193, %c0_194] : memref<9x1024xf32, #tpu.memory_space<vmem>>, vector<1x1024xf32>
    %324 = vector.broadcast %323 : vector<1x1024xf32> to vector<16x1024xf32>
    %325 = arith.mulf %322, %324 : vector<16x1024xf32>
    %326 = arith.truncf %325 : vector<16x1024xf32> to vector<16x1024xbf16>
    %c80 = arith.constant 80 : index
    %c0_195 = arith.constant 0 : index
    %327 = vector.load %arg22[%c80, %c0_195] : memref<144x1024xbf16, #tpu.memory_space<vmem>>, vector<16x1024xbf16>
    tpu.vector_store %arg22[%c80, %c0_195], %326 {strides = array<i32>} : memref<144x1024xbf16, #tpu.memory_space<vmem>>, vector<16x1024xbf16>,
    %c1009_i32_196 = arith.constant 1009 : i32
    %328 = tpu.dynamic_rotate %295 by %c1009_i32_196 dim 1 : vector<16x1024xf32>, i32 -> vector<16x1024xf32>
    %c6_197 = arith.constant 6 : index
    %c0_198 = arith.constant 0 : index
    %329 = vector.load %arg3[%c6_197, %c0_198] : memref<9x1024xf32, #tpu.memory_space<vmem>>, vector<1x1024xf32>
    %330 = vector.broadcast %329 : vector<1x1024xf32> to vector<16x1024xf32>
    %331 = arith.mulf %328, %330 : vector<16x1024xf32>
    %332 = arith.truncf %331 : vector<16x1024xf32> to vector<16x1024xbf16>
    %c96 = arith.constant 96 : index
    %c0_199 = arith.constant 0 : index
    %333 = vector.load %arg22[%c96, %c0_199] : memref<144x1024xbf16, #tpu.memory_space<vmem>>, vector<16x1024xbf16>
    tpu.vector_store %arg22[%c96, %c0_199], %332 {strides = array<i32>} : memref<144x1024xbf16, #tpu.memory_space<vmem>>, vector<16x1024xbf16>,
    %c1008_i32_200 = arith.constant 1008 : i32
    %334 = tpu.dynamic_rotate %295 by %c1008_i32_200 dim 1 : vector<16x1024xf32>, i32 -> vector<16x1024xf32>
    %c7_201 = arith.constant 7 : index
    %c0_202 = arith.constant 0 : index
    %335 = vector.load %arg3[%c7_201, %c0_202] : memref<9x1024xf32, #tpu.memory_space<vmem>>, vector<1x1024xf32>
    %336 = vector.broadcast %335 : vector<1x1024xf32> to vector<16x1024xf32>
    %337 = arith.mulf %334, %336 : vector<16x1024xf32>
    %338 = arith.truncf %337 : vector<16x1024xf32> to vector<16x1024xbf16>
    %c112 = arith.constant 112 : index
    %c0_203 = arith.constant 0 : index
    %339 = vector.load %arg22[%c112, %c0_203] : memref<144x1024xbf16, #tpu.memory_space<vmem>>, vector<16x1024xbf16>
    tpu.vector_store %arg22[%c112, %c0_203], %338 {strides = array<i32>} : memref<144x1024xbf16, #tpu.memory_space<vmem>>, vector<16x1024xbf16>,
    %c1007_i32_204 = arith.constant 1007 : i32
    %340 = tpu.dynamic_rotate %295 by %c1007_i32_204 dim 1 : vector<16x1024xf32>, i32 -> vector<16x1024xf32>
    %c8_205 = arith.constant 8 : index
    %c0_206 = arith.constant 0 : index
    %341 = vector.load %arg3[%c8_205, %c0_206] : memref<9x1024xf32, #tpu.memory_space<vmem>>, vector<1x1024xf32>
    %342 = vector.broadcast %341 : vector<1x1024xf32> to vector<16x1024xf32>
    %343 = arith.mulf %340, %342 : vector<16x1024xf32>
    %344 = arith.truncf %343 : vector<16x1024xf32> to vector<16x1024xbf16>
    %c128 = arith.constant 128 : index
    %c0_207 = arith.constant 0 : index
    %345 = vector.load %arg22[%c128, %c0_207] : memref<144x1024xbf16, #tpu.memory_space<vmem>>, vector<16x1024xbf16>
    tpu.vector_store %arg22[%c128, %c0_207], %344 {strides = array<i32>} : memref<144x1024xbf16, #tpu.memory_space<vmem>>, vector<16x1024xbf16>,
    %c0_208 = arith.constant 0 : index
    %c0_209 = arith.constant 0 : index
    %346 = vector.load %arg22[%c0_208, %c0_209] : memref<144x1024xbf16, #tpu.memory_space<vmem>>, vector<144x1024xbf16>
    %c0_210 = arith.constant 0 : index
    %c0_211 = arith.constant 0 : index
    %347 = vector.load %arg17[%c0_210, %c0_211] : memref<4x144xbf16, #tpu.memory_space<vmem>>, vector<4x144xbf16>
    %cst_212 = arith.constant dense<0.000000e+00> : vector<4x1024xf32>
    %348 = tpu.matmul %347, %346, %cst_212 {dimension_numbers = #tpu.dot_dimension_numbers<[1], [0], [0], [1], [0, 0, 1, 1], [], []>} : vector<4x144xbf16>, vector<144x1024xbf16>, vector<4x1024xf32> -> vector<4x1024xf32>
    %c0_213 = arith.constant 0 : index
    %c0_214 = arith.constant 0 : index
    %349 = vector.load %arg18[%c0_213, %c0_214] : memref<4x1xf32, #tpu.memory_space<vmem>>, vector<4x1xf32>
    %350 = vector.broadcast %349 : vector<4x1xf32> to vector<4x1024xf32>
    %351 = arith.addf %348, %350 : vector<4x1024xf32>
    %cst_215 = arith.constant 0.000000e+00 : f32
    %352 = vector.broadcast %cst_215 : f32 to vector<4x1024xf32>
    %c17_i32_216 = arith.constant 17 : i32
    %353 = tpu.dynamic_rotate %351 by %c17_i32_216 dim 1 : vector<4x1024xf32>, i32 -> vector<4x1024xf32>
    %c0_217 = arith.constant 0 : index
    %c0_218 = arith.constant 0 : index
    %354 = vector.load %arg3[%c0_217, %c0_218] : memref<9x1024xf32, #tpu.memory_space<vmem>>, vector<1x1024xf32>
    %355 = vector.broadcast %354 : vector<1x1024xf32> to vector<4x1024xf32>
    %356 = arith.mulf %353, %355 : vector<4x1024xf32>
    %c0_219 = arith.constant 0 : index
    %c0_220 = arith.constant 0 : index
    %357 = vector.load %arg19[%c0_219, %c0_220] : memref<4x9xf32, #tpu.memory_space<vmem>>, vector<4x1xf32>
    %358 = vector.broadcast %357 : vector<4x1xf32> to vector<4x1024xf32>
    %359 = arith.mulf %356, %358 : vector<4x1024xf32>
    %360 = arith.addf %352, %359 : vector<4x1024xf32>
    %c16_i32_221 = arith.constant 16 : i32
    %361 = tpu.dynamic_rotate %351 by %c16_i32_221 dim 1 : vector<4x1024xf32>, i32 -> vector<4x1024xf32>
    %c1_222 = arith.constant 1 : index
    %c0_223 = arith.constant 0 : index
    %362 = vector.load %arg3[%c1_222, %c0_223] : memref<9x1024xf32, #tpu.memory_space<vmem>>, vector<1x1024xf32>
    %363 = vector.broadcast %362 : vector<1x1024xf32> to vector<4x1024xf32>
    %364 = arith.mulf %361, %363 : vector<4x1024xf32>
    %c0_224 = arith.constant 0 : index
    %c1_225 = arith.constant 1 : index
    %365 = vector.load %arg19[%c0_224, %c1_225] : memref<4x9xf32, #tpu.memory_space<vmem>>, vector<4x1xf32>
    %366 = vector.broadcast %365 : vector<4x1xf32> to vector<4x1024xf32>
    %367 = arith.mulf %364, %366 : vector<4x1024xf32>
    %368 = arith.addf %360, %367 : vector<4x1024xf32>
    %c15_i32_226 = arith.constant 15 : i32
    %369 = tpu.dynamic_rotate %351 by %c15_i32_226 dim 1 : vector<4x1024xf32>, i32 -> vector<4x1024xf32>
    %c2_227 = arith.constant 2 : index
    %c0_228 = arith.constant 0 : index
    %370 = vector.load %arg3[%c2_227, %c0_228] : memref<9x1024xf32, #tpu.memory_space<vmem>>, vector<1x1024xf32>
    %371 = vector.broadcast %370 : vector<1x1024xf32> to vector<4x1024xf32>
    %372 = arith.mulf %369, %371 : vector<4x1024xf32>
    %c0_229 = arith.constant 0 : index
    %c2_230 = arith.constant 2 : index
    %373 = vector.load %arg19[%c0_229, %c2_230] : memref<4x9xf32, #tpu.memory_space<vmem>>, vector<4x1xf32>
    %374 = vector.broadcast %373 : vector<4x1xf32> to vector<4x1024xf32>
    %375 = arith.mulf %372, %374 : vector<4x1024xf32>
    %376 = arith.addf %368, %375 : vector<4x1024xf32>
    %c1_i32_231 = arith.constant 1 : i32
    %377 = tpu.dynamic_rotate %351 by %c1_i32_231 dim 1 : vector<4x1024xf32>, i32 -> vector<4x1024xf32>
    %c3_232 = arith.constant 3 : index
    %c0_233 = arith.constant 0 : index
    %378 = vector.load %arg3[%c3_232, %c0_233] : memref<9x1024xf32, #tpu.memory_space<vmem>>, vector<1x1024xf32>
    %379 = vector.broadcast %378 : vector<1x1024xf32> to vector<4x1024xf32>
    %380 = arith.mulf %377, %379 : vector<4x1024xf32>
    %c0_234 = arith.constant 0 : index
    %c3_235 = arith.constant 3 : index
    %381 = vector.load %arg19[%c0_234, %c3_235] : memref<4x9xf32, #tpu.memory_space<vmem>>, vector<4x1xf32>
    %382 = vector.broadcast %381 : vector<4x1xf32> to vector<4x1024xf32>
    %383 = arith.mulf %380, %382 : vector<4x1024xf32>
    %384 = arith.addf %376, %383 : vector<4x1024xf32>
    %c0_236 = arith.constant 0 : index
    %c4_237 = arith.constant 4 : index
    %385 = vector.load %arg19[%c0_236, %c4_237] : memref<4x9xf32, #tpu.memory_space<vmem>>, vector<4x1xf32>
    %386 = vector.broadcast %385 : vector<4x1xf32> to vector<4x1024xf32>
    %387 = arith.mulf %351, %386 : vector<4x1024xf32>
    %388 = arith.addf %384, %387 : vector<4x1024xf32>
    %c1023_i32_238 = arith.constant 1023 : i32
    %389 = tpu.dynamic_rotate %351 by %c1023_i32_238 dim 1 : vector<4x1024xf32>, i32 -> vector<4x1024xf32>
    %c5_239 = arith.constant 5 : index
    %c0_240 = arith.constant 0 : index
    %390 = vector.load %arg3[%c5_239, %c0_240] : memref<9x1024xf32, #tpu.memory_space<vmem>>, vector<1x1024xf32>
    %391 = vector.broadcast %390 : vector<1x1024xf32> to vector<4x1024xf32>
    %392 = arith.mulf %389, %391 : vector<4x1024xf32>
    %c0_241 = arith.constant 0 : index
    %c5_242 = arith.constant 5 : index
    %393 = vector.load %arg19[%c0_241, %c5_242] : memref<4x9xf32, #tpu.memory_space<vmem>>, vector<4x1xf32>
    %394 = vector.broadcast %393 : vector<4x1xf32> to vector<4x1024xf32>
    %395 = arith.mulf %392, %394 : vector<4x1024xf32>
    %396 = arith.addf %388, %395 : vector<4x1024xf32>
    %c1009_i32_243 = arith.constant 1009 : i32
    %397 = tpu.dynamic_rotate %351 by %c1009_i32_243 dim 1 : vector<4x1024xf32>, i32 -> vector<4x1024xf32>
    %c6_244 = arith.constant 6 : index
    %c0_245 = arith.constant 0 : index
    %398 = vector.load %arg3[%c6_244, %c0_245] : memref<9x1024xf32, #tpu.memory_space<vmem>>, vector<1x1024xf32>
    %399 = vector.broadcast %398 : vector<1x1024xf32> to vector<4x1024xf32>
    %400 = arith.mulf %397, %399 : vector<4x1024xf32>
    %c0_246 = arith.constant 0 : index
    %c6_247 = arith.constant 6 : index
    %401 = vector.load %arg19[%c0_246, %c6_247] : memref<4x9xf32, #tpu.memory_space<vmem>>, vector<4x1xf32>
    %402 = vector.broadcast %401 : vector<4x1xf32> to vector<4x1024xf32>
    %403 = arith.mulf %400, %402 : vector<4x1024xf32>
    %404 = arith.addf %396, %403 : vector<4x1024xf32>
    %c1008_i32_248 = arith.constant 1008 : i32
    %405 = tpu.dynamic_rotate %351 by %c1008_i32_248 dim 1 : vector<4x1024xf32>, i32 -> vector<4x1024xf32>
    %c7_249 = arith.constant 7 : index
    %c0_250 = arith.constant 0 : index
    %406 = vector.load %arg3[%c7_249, %c0_250] : memref<9x1024xf32, #tpu.memory_space<vmem>>, vector<1x1024xf32>
    %407 = vector.broadcast %406 : vector<1x1024xf32> to vector<4x1024xf32>
    %408 = arith.mulf %405, %407 : vector<4x1024xf32>
    %c0_251 = arith.constant 0 : index
    %c7_252 = arith.constant 7 : index
    %409 = vector.load %arg19[%c0_251, %c7_252] : memref<4x9xf32, #tpu.memory_space<vmem>>, vector<4x1xf32>
    %410 = vector.broadcast %409 : vector<4x1xf32> to vector<4x1024xf32>
    %411 = arith.mulf %408, %410 : vector<4x1024xf32>
    %412 = arith.addf %404, %411 : vector<4x1024xf32>
    %c1007_i32_253 = arith.constant 1007 : i32
    %413 = tpu.dynamic_rotate %351 by %c1007_i32_253 dim 1 : vector<4x1024xf32>, i32 -> vector<4x1024xf32>
    %c8_254 = arith.constant 8 : index
    %c0_255 = arith.constant 0 : index
    %414 = vector.load %arg3[%c8_254, %c0_255] : memref<9x1024xf32, #tpu.memory_space<vmem>>, vector<1x1024xf32>
    %415 = vector.broadcast %414 : vector<1x1024xf32> to vector<4x1024xf32>
    %416 = arith.mulf %413, %415 : vector<4x1024xf32>
    %c0_256 = arith.constant 0 : index
    %c8_257 = arith.constant 8 : index
    %417 = vector.load %arg19[%c0_256, %c8_257] : memref<4x9xf32, #tpu.memory_space<vmem>>, vector<4x1xf32>
    %418 = vector.broadcast %417 : vector<4x1xf32> to vector<4x1024xf32>
    %419 = arith.mulf %416, %418 : vector<4x1024xf32>
    %420 = arith.addf %412, %419 : vector<4x1024xf32>
    %c0_258 = arith.constant 0 : index
    %c0_259 = arith.constant 0 : index
    %421 = vector.load %arg20[%c0_258, %c0_259] : memref<4x1xf32, #tpu.memory_space<vmem>>, vector<4x1xf32>
    %422 = vector.broadcast %421 : vector<4x1xf32> to vector<4x1024xf32>
    %423 = arith.addf %420, %422 : vector<4x1024xf32>
    %424 = tpu.concatenate %351, %423 in 0 : vector<4x1024xf32>, vector<4x1024xf32> -> vector<8x1024xf32>
    %c0_260 = arith.constant 0 : index
    %c0_261 = arith.constant 0 : index
    %c0_262 = arith.constant 0 : index
    %425 = vector.load %arg1[%c0_260, %c0_261, %c0_262] : memref<1x8x1024xbf16, #tpu.memory_space<vmem>>, vector<1x8x1024xbf16>
    %426 = vector.shape_cast %425 : vector<1x8x1024xbf16> to vector<8x1024xbf16>
    %427 = arith.extf %426 : vector<8x1024xbf16> to vector<8x1024xf32>
    %428 = arith.addf %424, %427 : vector<8x1024xf32>
    %429 = arith.truncf %428 : vector<8x1024xf32> to vector<8x1024xbf16>
    %c0_263 = arith.constant 0 : index
    %c0_264 = arith.constant 0 : index
    %c0_265 = arith.constant 0 : index
    %430 = vector.load %arg21[%c0_263, %c0_264, %c0_265] : memref<1x8x1024xbf16, #tpu.memory_space<vmem>>, vector<1x8x1024xbf16>
    %431 = vector.shape_cast %430 : vector<1x8x1024xbf16> to vector<8x1024xbf16>
    %432 = vector.shape_cast %429 : vector<8x1024xbf16> to vector<1x8x1024xbf16>
    tpu.vector_store %arg21[%c0_263, %c0_264, %c0_265], %432 {strides = array<i32>} : memref<1x8x1024xbf16, #tpu.memory_space<vmem>>, vector<1x8x1024xbf16>,
    return
  }
  func.func @transform_0(%arg0: i32) -> (i32, i32, i32) {
    %c0_i32 = arith.constant 0 : i32
    %c0_i32_0 = arith.constant 0 : i32
    %c0_i32_1 = arith.constant 0 : i32
    return %arg0, %c0_i32, %c0_i32_0 : i32, i32, i32
  }
  func.func @transform_1(%arg0: i32) -> (i32, i32) {
    %c0_i32 = arith.constant 0 : i32
    %c0_i32_0 = arith.constant 0 : i32
    %c0_i32_1 = arith.constant 0 : i32
    return %c0_i32, %c0_i32_0 : i32, i32
  }
  func.func @transform_2(%arg0: i32) -> (i32, i32) {
    %c0_i32 = arith.constant 0 : i32
    %c0_i32_0 = arith.constant 0 : i32
    %c0_i32_1 = arith.constant 0 : i32
    return %c0_i32, %c0_i32_0 : i32, i32
  }
  func.func @transform_3(%arg0: i32) -> (i32, i32) {
    %c0_i32 = arith.constant 0 : i32
    %c0_i32_0 = arith.constant 0 : i32
    %c0_i32_1 = arith.constant 0 : i32
    return %c0_i32, %c0_i32_0 : i32, i32
  }
  func.func @transform_4(%arg0: i32) -> (i32, i32) {
    %c0_i32 = arith.constant 0 : i32
    %c0_i32_0 = arith.constant 0 : i32
    %c0_i32_1 = arith.constant 0 : i32
    return %c0_i32, %c0_i32_0 : i32, i32
  }
  func.func @transform_5(%arg0: i32) -> (i32, i32) {
    %c0_i32 = arith.constant 0 : i32
    %c0_i32_0 = arith.constant 0 : i32
    %c0_i32_1 = arith.constant 0 : i32
    return %c0_i32, %c0_i32_0 : i32, i32
  }
  func.func @transform_6(%arg0: i32) -> (i32, i32) {
    %c0_i32 = arith.constant 0 : i32
    %c0_i32_0 = arith.constant 0 : i32
    %c0_i32_1 = arith.constant 0 : i32
    return %c0_i32, %c0_i32_0 : i32, i32
  }
  func.func @transform_7(%arg0: i32) -> (i32, i32) {
    %c0_i32 = arith.constant 0 : i32
    %c0_i32_0 = arith.constant 0 : i32
    %c0_i32_1 = arith.constant 0 : i32
    return %c0_i32, %c0_i32_0 : i32, i32
  }
  func.func @transform_8(%arg0: i32) -> (i32, i32) {
    %c0_i32 = arith.constant 0 : i32
    %c0_i32_0 = arith.constant 0 : i32
    %c0_i32_1 = arith.constant 0 : i32
    return %c0_i32, %c0_i32_0 : i32, i32
  }
  func.func @transform_9(%arg0: i32) -> (i32, i32) {
    %c0_i32 = arith.constant 0 : i32
    %c0_i32_0 = arith.constant 0 : i32
    %c0_i32_1 = arith.constant 0 : i32
    return %c0_i32, %c0_i32_0 : i32, i32
  }
  func.func @transform_10(%arg0: i32) -> (i32, i32) {
    %c0_i32 = arith.constant 0 : i32
    %c0_i32_0 = arith.constant 0 : i32
    %c0_i32_1 = arith.constant 0 : i32
    return %c0_i32, %c0_i32_0 : i32, i32
  }
  func.func @transform_11(%arg0: i32) -> (i32, i32) {
    %c0_i32 = arith.constant 0 : i32
    %c0_i32_0 = arith.constant 0 : i32
    %c0_i32_1 = arith.constant 0 : i32
    return %c0_i32, %c0_i32_0 : i32, i32
  }
  func.func @transform_12(%arg0: i32) -> (i32, i32) {
    %c0_i32 = arith.constant 0 : i32
    %c0_i32_0 = arith.constant 0 : i32
    %c0_i32_1 = arith.constant 0 : i32
    return %c0_i32, %c0_i32_0 : i32, i32
  }
  func.func @transform_13(%arg0: i32) -> (i32, i32) {
    %c0_i32 = arith.constant 0 : i32
    %c0_i32_0 = arith.constant 0 : i32
    %c0_i32_1 = arith.constant 0 : i32
    return %c0_i32, %c0_i32_0 : i32, i32
  }
  func.func @transform_14(%arg0: i32) -> (i32, i32) {
    %c0_i32 = arith.constant 0 : i32
    %c0_i32_0 = arith.constant 0 : i32
    %c0_i32_1 = arith.constant 0 : i32
    return %c0_i32, %c0_i32_0 : i32, i32
  }
  func.func @transform_15(%arg0: i32) -> (i32, i32) {
    %c0_i32 = arith.constant 0 : i32
    %c0_i32_0 = arith.constant 0 : i32
    %c0_i32_1 = arith.constant 0 : i32
    return %c0_i32, %c0_i32_0 : i32, i32
  }
  func.func @transform_16(%arg0: i32) -> (i32, i32) {
    %c0_i32 = arith.constant 0 : i32
    %c0_i32_0 = arith.constant 0 : i32
    %c0_i32_1 = arith.constant 0 : i32
    return %c0_i32, %c0_i32_0 : i32, i32
  }
  func.func @transform_17(%arg0: i32) -> (i32, i32) {
    %c0_i32 = arith.constant 0 : i32
    %c0_i32_0 = arith.constant 0 : i32
    %c0_i32_1 = arith.constant 0 : i32
    return %c0_i32, %c0_i32_0 : i32, i32
  }
  func.func @transform_18(%arg0: i32) -> (i32, i32) {
    %c0_i32 = arith.constant 0 : i32
    %c0_i32_0 = arith.constant 0 : i32
    %c0_i32_1 = arith.constant 0 : i32
    return %c0_i32, %c0_i32_0 : i32, i32
  }
  func.func @transform_19(%arg0: i32) -> (i32, i32) {
    %c0_i32 = arith.constant 0 : i32
    %c0_i32_0 = arith.constant 0 : i32
    %c0_i32_1 = arith.constant 0 : i32
    return %c0_i32, %c0_i32_0 : i32, i32
  }
  func.func @transform_20(%arg0: i32) -> (i32, i32, i32) {
    %c0_i32 = arith.constant 0 : i32
    %c0_i32_0 = arith.constant 0 : i32
    %c0_i32_1 = arith.constant 0 : i32
    return %arg0, %c0_i32, %c0_i32_0 : i32, i32, i32
  }
}

</mosaic_0001>

<llo_original>
// kernel: ghost_bottleneck_v2.1
$region0: #{ghost_bottleneck_v2.1}
  #allocation0 [shape = 'u32[]', space=smem, size = 0x4, offset = 0x4, fixed_abs, tag = 'smem constant byte address 0x4 - core index']
  #allocation1 [shape = 'u32[72,128]{1,0:T(1,128)}', space=vmem, size = 0x9000, scoped, tag = 'internal scratch']
  #allocation2 [shape = 'bf16[144,1024]{1,0:T(8,128)(2,1)}', space=vmem, size = 0x48000, scoped, tag = 'scratch operand']
  %s0 = inlined_call_operand.vmem [shape: bf16[2,8,1024], index: 0, kind: input, shape index: {}]
  %s1 = inlined_call_operand.vmem [shape: f32[1,1024], index: 1, kind: input, shape index: {}]
  %s2 = inlined_call_operand.vmem [shape: f32[9,1024], index: 2, kind: input, shape index: {}]
  %s3 = inlined_call_operand.vmem [shape: f32[9,1024], index: 3, kind: input, shape index: {}]
  %s4 = inlined_call_operand.vmem [shape: f32[5,1024], index: 4, kind: input, shape index: {}]
  %s5 = inlined_call_operand.vmem [shape: f32[5,1024], index: 5, kind: input, shape index: {}]
  %s6 = inlined_call_operand.vmem [shape: bf16[8,72], index: 6, kind: input, shape index: {}]
  %s7 = inlined_call_operand.vmem [shape: f32[8,1], index: 7, kind: input, shape index: {}]
  %s8 = inlined_call_operand.vmem [shape: f32[8,9], index: 8, kind: input, shape index: {}]
  %s9 = inlined_call_operand.vmem [shape: f32[8,1], index: 9, kind: input, shape index: {}]
  %s10 = inlined_call_operand.vmem [shape: bf16[16,72], index: 10, kind: input, shape index: {}]
  %s11 = inlined_call_operand.vmem [shape: f32[16,1], index: 11, kind: input, shape index: {}]
  %s12 = inlined_call_operand.vmem [shape: f32[16,5], index: 12, kind: input, shape index: {}]
  %s13 = inlined_call_operand.vmem [shape: f32[16,1], index: 13, kind: input, shape index: {}]
  %s14 = inlined_call_operand.vmem [shape: f32[16,5], index: 14, kind: input, shape index: {}]
  %s15 = inlined_call_operand.vmem [shape: f32[16,1], index: 15, kind: input, shape index: {}]
  %s16 = inlined_call_operand.vmem [shape: bf16[4,144], index: 16, kind: input, shape index: {}]
  %s17 = inlined_call_operand.vmem [shape: f32[4,1], index: 17, kind: input, shape index: {}]
  %s18 = inlined_call_operand.vmem [shape: f32[4,9], index: 18, kind: input, shape index: {}]
  %s19 = inlined_call_operand.vmem [shape: f32[4,1], index: 19, kind: input, shape index: {}]
  %s20 = inlined_call_operand.vmem [shape: bf16[2,8,1024], index: 20, kind: output, shape index: {}]
  %s21 = sld [smem:[#allocation0]]
  $region113: #{ghost_bottleneck_v2.1} parent=0
    _
  %s23 = ssub.s32 1, %s21
  %s24 = scalar_select 0, %s23, %s21
  loop: start=0, step=1, limit=4
  $region2: #{ghost_bottleneck_v2.1} parent=0 // loop_pre_header
    _
  $region3: #{ghost_bottleneck_v2.1} parent=0 // loop_header
    %s26 = sphi 0, %s30
    %p27 = scmp.ge.s32.totalorder %s26, 4
    %s36 = sphi 0, %s38
    %s39 = sphi 0, %s36
    %s40 = sphi 0, %s39
    %s56 = sphi 0, %s40
    %s60 = sphi 0, %s60
    %s62 = sphi 0, %s60
    %s63 = sphi 0, %s62
    %s77 = sphi 0, %s63
    %s81 = sphi 0, %s81
    %s83 = sphi 0, %s81
    %s84 = sphi 0, %s83
    %s98 = sphi 0, %s84
    %s102 = sphi 0, %s102
    %s104 = sphi 0, %s102
    %s105 = sphi 0, %s104
    %s119 = sphi 0, %s105
    %s123 = sphi 0, %s123
    %s125 = sphi 0, %s123
    %s126 = sphi 0, %s125
    %s140 = sphi 0, %s126
    %s144 = sphi 0, %s144
    %s146 = sphi 0, %s144
    %s147 = sphi 0, %s146
    %s161 = sphi 0, %s147
    %s165 = sphi 0, %s165
    %s167 = sphi 0, %s165
    %s168 = sphi 0, %s167
    %s182 = sphi 0, %s168
    %s186 = sphi 0, %s186
    %s188 = sphi 0, %s186
    %s189 = sphi 0, %s188
    %s203 = sphi 0, %s189
    %s207 = sphi 0, %s207
    %s209 = sphi 0, %s207
    %s210 = sphi 0, %s209
    %s224 = sphi 0, %s210
    %s228 = sphi 0, %s228
    %s230 = sphi 0, %s228
    %s231 = sphi 0, %s230
    %s245 = sphi 0, %s231
    %s249 = sphi 0, %s249
    %s251 = sphi 0, %s249
    %s252 = sphi 0, %s251
    %s266 = sphi 0, %s252
    %s270 = sphi 0, %s270
    %s272 = sphi 0, %s270
    %s273 = sphi 0, %s272
    %s287 = sphi 0, %s273
    %s291 = sphi 0, %s291
    %s293 = sphi 0, %s291
    %s294 = sphi 0, %s293
    %s308 = sphi 0, %s294
    %s312 = sphi 0, %s312
    %s314 = sphi 0, %s312
    %s315 = sphi 0, %s314
    %s329 = sphi 0, %s315
    %s333 = sphi 0, %s333
    %s335 = sphi 0, %s333
    %s336 = sphi 0, %s335
    %s350 = sphi 0, %s336
    %s354 = sphi 0, %s354
    %s356 = sphi 0, %s354
    %s357 = sphi 0, %s356
    %s371 = sphi 0, %s357
    %s375 = sphi 0, %s375
    %s377 = sphi 0, %s375
    %s378 = sphi 0, %s377
    %s392 = sphi 0, %s378
    %s396 = sphi 0, %s396
    %s398 = sphi 0, %s396
    %s399 = sphi 0, %s398
    %s413 = sphi 0, %s399
    %s417 = sphi 0, %s417
    %s419 = sphi 0, %s417
    %s420 = sphi 0, %s419
    %s434 = sphi 0, %s420
    %s438 = sphi 0, %s438
    %s440 = sphi 0, %s438
    %s441 = sphi 0, %s440
    %s455 = sphi 0, %s441
    %s461 = sphi 0, %s463
    %s464 = sphi 0, %s461
    %s465 = sphi 0, %s464
    %s481 = sphi 0, %s465
  $region4: #{ghost_bottleneck_v2.1} parent=0 // loop_header_branch
    %29 = sbr.rel (%p27) target = $region8
  $region5: #{ghost_bottleneck_v2.1} parent=0 // loop_body
    %s31 = ssub.s32 %s26, 1
    %s32 = ssub.s32 %s26, 2
    %s33 = sadd.s32 %s26, 1
    %s34 = ssub.s32 %s26, %s33
    %p35 = scmp.eq.s32.totalorder %s34, 0
    %s37 = sadd.s32 %s36, 1
    %s38 = scalar_select %p35, %s36, %s37
    %p41 = pneg %p35
    %p42 = scmp.eq.s32.totalorder %s26, 1
    %p43 = por %p41, %p42
    %p44 = scmp.ne.s32.totalorder %s36, %s39
    %p45 = scmp.eq.s32.totalorder %s26, 0
    %p46 = por %p44, %p45
    %p47 = scmp.ne.s32.totalorder %s36, %s39
    %p48 = scmp.eq.s32.totalorder %s31, 1
    %p49 = por %p47, %p48
    %p50 = scmp.ne.s32.totalorder %s39, %s40
    %p51 = scmp.eq.s32.totalorder %s31, 0
    %p52 = por %p50, %p51
    %p53 = scmp.ne.s32.totalorder %s39, %s40
    %p54 = scmp.eq.s32.totalorder %s32, 1
    %p55 = por %p53, %p54
    %p57 = scmp.ne.s32.totalorder %s40, %s56
    %p58 = scmp.eq.s32.totalorder %s32, 0
    %p59 = por %p57, %p58
    %s61 = sadd.s32 %s60, 1
    %p64 = scmp.eq.s32.totalorder %s26, 1
    %p65 = scmp.ne.s32.totalorder %s60, %s62
    %p66 = scmp.eq.s32.totalorder %s26, 0
    %p67 = por %p65, %p66
    %p68 = scmp.ne.s32.totalorder %s60, %s62
    %p69 = scmp.eq.s32.totalorder %s31, 1
    %p70 = por %p68, %p69
    %p71 = scmp.ne.s32.totalorder %s62, %s63
    %p72 = scmp.eq.s32.totalorder %s31, 0
    %p73 = por %p71, %p72
    %p74 = scmp.ne.s32.totalorder %s62, %s63
    %p75 = scmp.eq.s32.totalorder %s32, 1
    %p76 = por %p74, %p75
    %p78 = scmp.ne.s32.totalorder %s63, %s77
    %p79 = scmp.eq.s32.totalorder %s32, 0
    %p80 = por %p78, %p79
    %s82 = sadd.s32 %s81, 1
    %p85 = scmp.eq.s32.totalorder %s26, 1
    %p86 = scmp.ne.s32.totalorder %s81, %s83
    %p87 = scmp.eq.s32.totalorder %s26, 0
    %p88 = por %p86, %p87
    %p89 = scmp.ne.s32.totalorder %s81, %s83
    %p90 = scmp.eq.s32.totalorder %s31, 1
    %p91 = por %p89, %p90
    %p92 = scmp.ne.s32.totalorder %s83, %s84
    %p93 = scmp.eq.s32.totalorder %s31, 0
    %p94 = por %p92, %p93
    %p95 = scmp.ne.s32.totalorder %s83, %s84
    %p96 = scmp.eq.s32.totalorder %s32, 1
    %p97 = por %p95, %p96
    %p99 = scmp.ne.s32.totalorder %s84, %s98
    %p100 = scmp.eq.s32.totalorder %s32, 0
    %p101 = por %p99, %p100
    %s103 = sadd.s32 %s102, 1
    %p106 = scmp.eq.s32.totalorder %s26, 1
    %p107 = scmp.ne.s32.totalorder %s102, %s104
    %p108 = scmp.eq.s32.totalorder %s26, 0
    %p109 = por %p107, %p108
    %p110 = scmp.ne.s32.totalorder %s102, %s104
    %p111 = scmp.eq.s32.totalorder %s31, 1
    %p112 = por %p110, %p111
    %p113 = scmp.ne.s32.totalorder %s104, %s105
    %p114 = scmp.eq.s32.totalorder %s31, 0
    %p115 = por %p113, %p114
    %p116 = scmp.ne.s32.totalorder %s104, %s105
    %p117 = scmp.eq.s32.totalorder %s32, 1
    %p118 = por %p116, %p117
    %p120 = scmp.ne.s32.totalorder %s105, %s119
    %p121 = scmp.eq.s32.totalorder %s32, 0
    %p122 = por %p120, %p121
    %s124 = sadd.s32 %s123, 1
    %p127 = scmp.eq.s32.totalorder %s26, 1
    %p128 = scmp.ne.s32.totalorder %s123, %s125
    %p129 = scmp.eq.s32.totalorder %s26, 0
    %p130 = por %p128, %p129
    %p131 = scmp.ne.s32.totalorder %s123, %s125
    %p132 = scmp.eq.s32.totalorder %s31, 1
    %p133 = por %p131, %p132
    %p134 = scmp.ne.s32.totalorder %s125, %s126
    %p135 = scmp.eq.s32.totalorder %s31, 0
    %p136 = por %p134, %p135
    %p137 = scmp.ne.s32.totalorder %s125, %s126
    %p138 = scmp.eq.s32.totalorder %s32, 1
    %p139 = por %p137, %p138
    %p141 = scmp.ne.s32.totalorder %s126, %s140
    %p142 = scmp.eq.s32.totalorder %s32, 0
    %p143 = por %p141, %p142
    %s145 = sadd.s32 %s144, 1
    %p148 = scmp.eq.s32.totalorder %s26, 1
    %p149 = scmp.ne.s32.totalorder %s144, %s146
    %p150 = scmp.eq.s32.totalorder %s26, 0
    %p151 = por %p149, %p150
    %p152 = scmp.ne.s32.totalorder %s144, %s146
    %p153 = scmp.eq.s32.totalorder %s31, 1
    %p154 = por %p152, %p153
    %p155 = scmp.ne.s32.totalorder %s146, %s147
    %p156 = scmp.eq.s32.totalorder %s31, 0
    %p157 = por %p155, %p156
    %p158 = scmp.ne.s32.totalorder %s146, %s147
    %p159 = scmp.eq.s32.totalorder %s32, 1
    %p160 = por %p158, %p159
    %p162 = scmp.ne.s32.totalorder %s147, %s161
    %p163 = scmp.eq.s32.totalorder %s32, 0
    %p164 = por %p162, %p163
    %s166 = sadd.s32 %s165, 1
    %p169 = scmp.eq.s32.totalorder %s26, 1
    %p170 = scmp.ne.s32.totalorder %s165, %s167
    %p171 = scmp.eq.s32.totalorder %s26, 0
    %p172 = por %p170, %p171
    %p173 = scmp.ne.s32.totalorder %s165, %s167
    %p174 = scmp.eq.s32.totalorder %s31, 1
    %p175 = por %p173, %p174
    %p176 = scmp.ne.s32.totalorder %s167, %s168
    %p177 = scmp.eq.s32.totalorder %s31, 0
    %p178 = por %p176, %p177
    %p179 = scmp.ne.s32.totalorder %s167, %s168
    %p180 = scmp.eq.s32.totalorder %s32, 1
    %p181 = por %p179, %p180
    %p183 = scmp.ne.s32.totalorder %s168, %s182
    %p184 = scmp.eq.s32.totalorder %s32, 0
    %p185 = por %p183, %p184
    %s187 = sadd.s32 %s186, 1
    %p190 = scmp.eq.s32.totalorder %s26, 1
    %p191 = scmp.ne.s32.totalorder %s186, %s188
    %p192 = scmp.eq.s32.totalorder %s26, 0
    %p193 = por %p191, %p192
    %p194 = scmp.ne.s32.totalorder %s186, %s188
    %p195 = scmp.eq.s32.totalorder %s31, 1
    %p196 = por %p194, %p195
    %p197 = scmp.ne.s32.totalorder %s188, %s189
    %p198 = scmp.eq.s32.totalorder %s31, 0
    %p199 = por %p197, %p198
    %p200 = scmp.ne.s32.totalorder %s188, %s189
    %p201 = scmp.eq.s32.totalorder %s32, 1
    %p202 = por %p200, %p201
    %p204 = scmp.ne.s32.totalorder %s189, %s203
    %p205 = scmp.eq.s32.totalorder %s32, 0
    %p206 = por %p204, %p205
    %s208 = sadd.s32 %s207, 1
    %p211 = scmp.eq.s32.totalorder %s26, 1
    %p212 = scmp.ne.s32.totalorder %s207, %s209
    %p213 = scmp.eq.s32.totalorder %s26, 0
    %p214 = por %p212, %p213
    %p215 = scmp.ne.s32.totalorder %s207, %s209
    %p216 = scmp.eq.s32.totalorder %s31, 1
    %p217 = por %p215, %p216
    %p218 = scmp.ne.s32.totalorder %s209, %s210
    %p219 = scmp.eq.s32.totalorder %s31, 0
    %p220 = por %p218, %p219
    %p221 = scmp.ne.s32.totalorder %s209, %s210
    %p222 = scmp.eq.s32.totalorder %s32, 1
    %p223 = por %p221, %p222
    %p225 = scmp.ne.s32.totalorder %s210, %s224
    %p226 = scmp.eq.s32.totalorder %s32, 0
    %p227 = por %p225, %p226
    %s229 = sadd.s32 %s228, 1
    %p232 = scmp.eq.s32.totalorder %s26, 1
    %p233 = scmp.ne.s32.totalorder %s228, %s230
    %p234 = scmp.eq.s32.totalorder %s26, 0
    %p235 = por %p233, %p234
    %p236 = scmp.ne.s32.totalorder %s228, %s230
    %p237 = scmp.eq.s32.totalorder %s31, 1
    %p238 = por %p236, %p237
    %p239 = scmp.ne.s32.totalorder %s230, %s231
    %p240 = scmp.eq.s32.totalorder %s31, 0
    %p241 = por %p239, %p240
    %p242 = scmp.ne.s32.totalorder %s230, %s231
    %p243 = scmp.eq.s32.totalorder %s32, 1
    %p244 = por %p242, %p243
    %p246 = scmp.ne.s32.totalorder %s231, %s245
    %p247 = scmp.eq.s32.totalorder %s32, 0
    %p248 = por %p246, %p247
    %s250 = sadd.s32 %s249, 1
    %p253 = scmp.eq.s32.totalorder %s26, 1
    %p254 = scmp.ne.s32.totalorder %s249, %s251
    %p255 = scmp.eq.s32.totalorder %s26, 0
    %p256 = por %p254, %p255
    %p257 = scmp.ne.s32.totalorder %s249, %s251
    %p258 = scmp.eq.s32.totalorder %s31, 1
    %p259 = por %p257, %p258
    %p260 = scmp.ne.s32.totalorder %s251, %s252
    %p261 = scmp.eq.s32.totalorder %s31, 0
    %p262 = por %p260, %p261
    %p263 = scmp.ne.s32.totalorder %s251, %s252
    %p264 = scmp.eq.s32.totalorder %s32, 1
    %p265 = por %p263, %p264
    %p267 = scmp.ne.s32.totalorder %s252, %s266
    %p268 = scmp.eq.s32.totalorder %s32, 0
    %p269 = por %p267, %p268
    %s271 = sadd.s32 %s270, 1
    %p274 = scmp.eq.s32.totalorder %s26, 1
    %p275 = scmp.ne.s32.totalorder %s270, %s272
    %p276 = scmp.eq.s32.totalorder %s26, 0
    %p277 = por %p275, %p276
    %p278 = scmp.ne.s32.totalorder %s270, %s272
    %p279 = scmp.eq.s32.totalorder %s31, 1
    %p280 = por %p278, %p279
    %p281 = scmp.ne.s32.totalorder %s272, %s273
    %p282 = scmp.eq.s32.totalorder %s31, 0
    %p283 = por %p281, %p282
    %p284 = scmp.ne.s32.totalorder %s272, %s273
    %p285 = scmp.eq.s32.totalorder %s32, 1
    %p286 = por %p284, %p285
    %p288 = scmp.ne.s32.totalorder %s273, %s287
    %p289 = scmp.eq.s32.totalorder %s32, 0
    %p290 = por %p288, %p289
    %s292 = sadd.s32 %s291, 1
    %p295 = scmp.eq.s32.totalorder %s26, 1
    %p296 = scmp.ne.s32.totalorder %s291, %s293
    %p297 = scmp.eq.s32.totalorder %s26, 0
    %p298 = por %p296, %p297
    %p299 = scmp.ne.s32.totalorder %s291, %s293
    %p300 = scmp.eq.s32.totalorder %s31, 1
    %p301 = por %p299, %p300
    %p302 = scmp.ne.s32.totalorder %s293, %s294
    %p303 = scmp.eq.s32.totalorder %s31, 0
    %p304 = por %p302, %p303
    %p305 = scmp.ne.s32.totalorder %s293, %s294
    %p306 = scmp.eq.s32.totalorder %s32, 1
    %p307 = por %p305, %p306
    %p309 = scmp.ne.s32.totalorder %s294, %s308
    %p310 = scmp.eq.s32.totalorder %s32, 0
    %p311 = por %p309, %p310
    %s313 = sadd.s32 %s312, 1
    %p316 = scmp.eq.s32.totalorder %s26, 1
    %p317 = scmp.ne.s32.totalorder %s312, %s314
    %p318 = scmp.eq.s32.totalorder %s26, 0
    %p319 = por %p317, %p318
    %p320 = scmp.ne.s32.totalorder %s312, %s314
    %p321 = scmp.eq.s32.totalorder %s31, 1
    %p322 = por %p320, %p321
    %p323 = scmp.ne.s32.totalorder %s314, %s315
    %p324 = scmp.eq.s32.totalorder %s31, 0
    %p325 = por %p323, %p324
    %p326 = scmp.ne.s32.totalorder %s314, %s315
    %p327 = scmp.eq.s32.totalorder %s32, 1
    %p328 = por %p326, %p327
    %p330 = scmp.ne.s32.totalorder %s315, %s329
    %p331 = scmp.eq.s32.totalorder %s32, 0
    %p332 = por %p330, %p331
    %s334 = sadd.s32 %s333, 1
    %p337 = scmp.eq.s32.totalorder %s26, 1
    %p338 = scmp.ne.s32.totalorder %s333, %s335
    %p339 = scmp.eq.s32.totalorder %s26, 0
    %p340 = por %p338, %p339
    %p341 = scmp.ne.s32.totalorder %s333, %s335
    %p342 = scmp.eq.s32.totalorder %s31, 1
    %p343 = por %p341, %p342
    %p344 = scmp.ne.s32.totalorder %s335, %s336
    %p345 = scmp.eq.s32.totalorder %s31, 0
    %p346 = por %p344, %p345
    %p347 = scmp.ne.s32.totalorder %s335, %s336
    %p348 = scmp.eq.s32.totalorder %s32, 1
    %p349 = por %p347, %p348
    %p351 = scmp.ne.s32.totalorder %s336, %s350
    %p352 = scmp.eq.s32.totalorder %s32, 0
    %p353 = por %p351, %p352
    %s355 = sadd.s32 %s354, 1
    %p358 = scmp.eq.s32.totalorder %s26, 1
    %p359 = scmp.ne.s32.totalorder %s354, %s356
    %p360 = scmp.eq.s32.totalorder %s26, 0
    %p361 = por %p359, %p360
    %p362 = scmp.ne.s32.totalorder %s354, %s356
    %p363 = scmp.eq.s32.totalorder %s31, 1
    %p364 = por %p362, %p363
    %p365 = scmp.ne.s32.totalorder %s356, %s357
    %p366 = scmp.eq.s32.totalorder %s31, 0
    %p367 = por %p365, %p366
    %p368 = scmp.ne.s32.totalorder %s356, %s357
    %p369 = scmp.eq.s32.totalorder %s32, 1
    %p370 = por %p368, %p369
    %p372 = scmp.ne.s32.totalorder %s357, %s371
    %p373 = scmp.eq.s32.totalorder %s32, 0
    %p374 = por %p372, %p373
    %s376 = sadd.s32 %s375, 1
    %p379 = scmp.eq.s32.totalorder %s26, 1
    %p380 = scmp.ne.s32.totalorder %s375, %s377
    %p381 = scmp.eq.s32.totalorder %s26, 0
    %p382 = por %p380, %p381
    %p383 = scmp.ne.s32.totalorder %s375, %s377
    %p384 = scmp.eq.s32.totalorder %s31, 1
    %p385 = por %p383, %p384
    %p386 = scmp.ne.s32.totalorder %s377, %s378
    %p387 = scmp.eq.s32.totalorder %s31, 0
    %p388 = por %p386, %p387
    %p389 = scmp.ne.s32.totalorder %s377, %s378
    %p390 = scmp.eq.s32.totalorder %s32, 1
    %p391 = por %p389, %p390
    %p393 = scmp.ne.s32.totalorder %s378, %s392
    %p394 = scmp.eq.s32.totalorder %s32, 0
    %p395 = por %p393, %p394
    %s397 = sadd.s32 %s396, 1
    %p400 = scmp.eq.s32.totalorder %s26, 1
    %p401 = scmp.ne.s32.totalorder %s396, %s398
    %p402 = scmp.eq.s32.totalorder %s26, 0
    %p403 = por %p401, %p402
    %p404 = scmp.ne.s32.totalorder %s396, %s398
    %p405 = scmp.eq.s32.totalorder %s31, 1
    %p406 = por %p404, %p405
    %p407 = scmp.ne.s32.totalorder %s398, %s399
    %p408 = scmp.eq.s32.totalorder %s31, 0
    %p409 = por %p407, %p408
    %p410 = scmp.ne.s32.totalorder %s398, %s399
    %p411 = scmp.eq.s32.totalorder %s32, 1
    %p412 = por %p410, %p411
    %p414 = scmp.ne.s32.totalorder %s399, %s413
    %p415 = scmp.eq.s32.totalorder %s32, 0
    %p416 = por %p414, %p415
    %s418 = sadd.s32 %s417, 1
    %p421 = scmp.eq.s32.totalorder %s26, 1
    %p422 = scmp.ne.s32.totalorder %s417, %s419
    %p423 = scmp.eq.s32.totalorder %s26, 0
    %p424 = por %p422, %p423
    %p425 = scmp.ne.s32.totalorder %s417, %s419
    %p426 = scmp.eq.s32.totalorder %s31, 1
    %p427 = por %p425, %p426
    %p428 = scmp.ne.s32.totalorder %s419, %s420
    %p429 = scmp.eq.s32.totalorder %s31, 0
    %p430 = por %p428, %p429
    %p431 = scmp.ne.s32.totalorder %s419, %s420
    %p432 = scmp.eq.s32.totalorder %s32, 1
    %p433 = por %p431, %p432
    %p435 = scmp.ne.s32.totalorder %s420, %s434
    %p436 = scmp.eq.s32.totalorder %s32, 0
    %p437 = por %p435, %p436
    %s439 = sadd.s32 %s438, 1
    %p442 = scmp.eq.s32.totalorder %s26, 1
    %p443 = scmp.ne.s32.totalorder %s438, %s440
    %p444 = scmp.eq.s32.totalorder %s26, 0
    %p445 = por %p443, %p444
    %p446 = scmp.ne.s32.totalorder %s438, %s440
    %p447 = scmp.eq.s32.totalorder %s31, 1
    %p448 = por %p446, %p447
    %p449 = scmp.ne.s32.totalorder %s440, %s441
    %p450 = scmp.eq.s32.totalorder %s31, 0
    %p451 = por %p449, %p450
    %p452 = scmp.ne.s32.totalorder %s440, %s441
    %p453 = scmp.eq.s32.totalorder %s32, 1
    %p454 = por %p452, %p453
    %p456 = scmp.ne.s32.totalorder %s441, %s455
    %p457 = scmp.eq.s32.totalorder %s32, 0
    %p458 = por %p456, %p457
    %s459 = ssub.s32 %s26, %s33
    %p460 = scmp.eq.s32.totalorder %s459, 0
    %s462 = sadd.s32 %s461, 1
    %s463 = scalar_select %p460, %s461, %s462
    %p466 = pneg %p460
    %p467 = scmp.eq.s32.totalorder %s26, 1
    %p468 = por %p466, %p467
    %p469 = scmp.ne.s32.totalorder %s461, %s464
    %p470 = scmp.eq.s32.totalorder %s26, 0
    %p471 = por %p469, %p470
    %p472 = scmp.ne.s32.totalorder %s461, %s464
    %p473 = scmp.eq.s32.totalorder %s31, 1
    %p474 = por %p472, %p473
    %p475 = scmp.ne.s32.totalorder %s464, %s465
    %p476 = scmp.eq.s32.totalorder %s31, 0
    %p477 = por %p475, %p476
    %p478 = scmp.ne.s32.totalorder %s464, %s465
    %p479 = scmp.eq.s32.totalorder %s32, 1
    %p480 = por %p478, %p479
    %p482 = scmp.ne.s32.totalorder %s465, %s481
    %p483 = scmp.eq.s32.totalorder %s32, 0
    %p484 = por %p482, %p483
    %p485 = scmp.le.s32.totalorder 1, %s26
    %p486 = scmp.lt.s32.totalorder %s26, 3
    %p487 = pnand %p485, %p486
    %p488 = pneg %p487
    // Predicated region
    $region9: #{ghost_bottleneck_v2.1} parent=5 // pred_check
      _
    $region10: #{ghost_bottleneck_v2.1} parent=5 // pred_check_branch
      %490 = sbr.rel (%p487) target = $region12
    $region11: #{ghost_bottleneck_v2.1} parent=5 // pred_region
      %s491 = ssub.s32 %s26, 1
      // Predicated region
      $region13: #{ghost_bottleneck_v2.1} parent=11 // pred_check
        %p492 = pneg %p73
      $region14: #{ghost_bottleneck_v2.1} parent=11 // pred_check_branch
        %494 = sbr.rel (%p492) target = $region16
      $region15: #{ghost_bottleneck_v2.1} parent=11 // pred_region
        _
      $region16: #{ghost_bottleneck_v2.1} parent=11 // pred_fallthru
        _
      // Predicated region
      $region17: #{ghost_bottleneck_v2.1} parent=11 // pred_check
        %p495 = pneg %p94
      $region18: #{ghost_bottleneck_v2.1} parent=11 // pred_check_branch
        %497 = sbr.rel (%p495) target = $region20
      $region19: #{ghost_bottleneck_v2.1} parent=11 // pred_region
        _
      $region20: #{ghost_bottleneck_v2.1} parent=11 // pred_fallthru
        _
      // Predicated region
      $region21: #{ghost_bottleneck_v2.1} parent=11 // pred_check
        %p498 = pneg %p115
      $region22: #{ghost_bottleneck_v2.1} parent=11 // pred_check_branch
        %500 = sbr.rel (%p498) target = $region24
      $region23: #{ghost_bottleneck_v2.1} parent=11 // pred_region
        _
      $region24: #{ghost_bottleneck_v2.1} parent=11 // pred_fallthru
        _
      // Predicated region
      $region25: #{ghost_bottleneck_v2.1} parent=11 // pred_check
        %p501 = pneg %p136
      $region26: #{ghost_bottleneck_v2.1} parent=11 // pred_check_branch
        %503 = sbr.rel (%p501) target = $region28
      $region27: #{ghost_bottleneck_v2.1} parent=11 // pred_region
        _
      $region28: #{ghost_bottleneck_v2.1} parent=11 // pred_fallthru
        _
      // Predicated region
      $region29: #{ghost_bottleneck_v2.1} parent=11 // pred_check
        %p504 = pneg %p157
      $region30: #{ghost_bottleneck_v2.1} parent=11 // pred_check_branch
        %506 = sbr.rel (%p504) target = $region32
      $region31: #{ghost_bottleneck_v2.1} parent=11 // pred_region
        _
      $region32: #{ghost_bottleneck_v2.1} parent=11 // pred_fallthru
        _
      // Predicated region
      $region33: #{ghost_bottleneck_v2.1} parent=11 // pred_check
        %p507 = pneg %p178
      $region34: #{ghost_bottleneck_v2.1} parent=11 // pred_check_branch
        %509 = sbr.rel (%p507) target = $region36
      $region35: #{ghost_bottleneck_v2.1} parent=11 // pred_region
        _
      $region36: #{ghost_bottleneck_v2.1} parent=11 // pred_fallthru
        _
      // Predicated region
      $region37: #{ghost_bottleneck_v2.1} parent=11 // pred_check
        %p510 = pneg %p199
      $region38: #{ghost_bottleneck_v2.1} parent=11 // pred_check_branch
        %512 = sbr.rel (%p510) target = $region40
      $region39: #{ghost_bottleneck_v2.1} parent=11 // pred_region
        _
      $region40: #{ghost_bottleneck_v2.1} parent=11 // pred_fallthru
        _
      // Predicated region
      $region41: #{ghost_bottleneck_v2.1} parent=11 // pred_check
        %p513 = pneg %p220
      $region42: #{ghost_bottleneck_v2.1} parent=11 // pred_check_branch
        %515 = sbr.rel (%p513) target = $region44
      $region43: #{ghost_bottleneck_v2.1} parent=11 // pred_region
        _
      $region44: #{ghost_bottleneck_v2.1} parent=11 // pred_fallthru
        _
      // Predicated region
      $region45: #{ghost_bottleneck_v2.1} parent=11 // pred_check
        %p516 = pneg %p241
      $region46: #{ghost_bottleneck_v2.1} parent=11 // pred_check_branch
        %518 = sbr.rel (%p516) target = $region48
      $region47: #{ghost_bottleneck_v2.1} parent=11 // pred_region
        _
      $region48: #{ghost_bottleneck_v2.1} parent=11 // pred_fallthru
        _
      // Predicated region
      $region49: #{ghost_bottleneck_v2.1} parent=11 // pred_check
        %p519 = pneg %p262
      $region50: #{ghost_bottleneck_v2.1} parent=11 // pred_check_branch
        %521 = sbr.rel (%p519) target = $region52
      $region51: #{ghost_bottleneck_v2.1} parent=11 // pred_region
        _
      $region52: #{ghost_bottleneck_v2.1} parent=11 // pred_fallthru
        _
      // Predicated region
      $region53: #{ghost_bottleneck_v2.1} parent=11 // pred_check
        %p522 = pneg %p283
      $region54: #{ghost_bottleneck_v2.1} parent=11 // pred_check_branch
        %524 = sbr.rel (%p522) target = $region56
      $region55: #{ghost_bottleneck_v2.1} parent=11 // pred_region
        _
      $region56: #{ghost_bottleneck_v2.1} parent=11 // pred_fallthru
        _
      // Predicated region
      $region57: #{ghost_bottleneck_v2.1} parent=11 // pred_check
        %p525 = pneg %p304
      $region58: #{ghost_bottleneck_v2.1} parent=11 // pred_check_branch
        %527 = sbr.rel (%p525) target = $region60
      $region59: #{ghost_bottleneck_v2.1} parent=11 // pred_region
        _
      $region60: #{ghost_bottleneck_v2.1} parent=11 // pred_fallthru
        _
      // Predicated region
      $region61: #{ghost_bottleneck_v2.1} parent=11 // pred_check
        %p528 = pneg %p325
      $region62: #{ghost_bottleneck_v2.1} parent=11 // pred_check_branch
        %530 = sbr.rel (%p528) target = $region64
      $region63: #{ghost_bottleneck_v2.1} parent=11 // pred_region
        _
      $region64: #{ghost_bottleneck_v2.1} parent=11 // pred_fallthru
        _
      // Predicated region
      $region65: #{ghost_bottleneck_v2.1} parent=11 // pred_check
        %p531 = pneg %p346
      $region66: #{ghost_bottleneck_v2.1} parent=11 // pred_check_branch
        %533 = sbr.rel (%p531) target = $region68
      $region67: #{ghost_bottleneck_v2.1} parent=11 // pred_region
        _
      $region68: #{ghost_bottleneck_v2.1} parent=11 // pred_fallthru
        _
      // Predicated region
      $region69: #{ghost_bottleneck_v2.1} parent=11 // pred_check
        %p534 = pneg %p367
      $region70: #{ghost_bottleneck_v2.1} parent=11 // pred_check_branch
        %536 = sbr.rel (%p534) target = $region72
      $region71: #{ghost_bottleneck_v2.1} parent=11 // pred_region
        _
      $region72: #{ghost_bottleneck_v2.1} parent=11 // pred_fallthru
        _
      // Predicated region
      $region73: #{ghost_bottleneck_v2.1} parent=11 // pred_check
        %p537 = pneg %p388
      $region74: #{ghost_bottleneck_v2.1} parent=11 // pred_check_branch
        %539 = sbr.rel (%p537) target = $region76
      $region75: #{ghost_bottleneck_v2.1} parent=11 // pred_region
        _
      $region76: #{ghost_bottleneck_v2.1} parent=11 // pred_fallthru
        _
      // Predicated region
      $region77: #{ghost_bottleneck_v2.1} parent=11 // pred_check
        %p540 = pneg %p409
      $region78: #{ghost_bottleneck_v2.1} parent=11 // pred_check_branch
        %542 = sbr.rel (%p540) target = $region80
      $region79: #{ghost_bottleneck_v2.1} parent=11 // pred_region
        _
      $region80: #{ghost_bottleneck_v2.1} parent=11 // pred_fallthru
        _
      // Predicated region
      $region81: #{ghost_bottleneck_v2.1} parent=11 // pred_check
        %p543 = pneg %p430
      $region82: #{ghost_bottleneck_v2.1} parent=11 // pred_check_branch
        %545 = sbr.rel (%p543) target = $region84
      $region83: #{ghost_bottleneck_v2.1} parent=11 // pred_region
        _
      $region84: #{ghost_bottleneck_v2.1} parent=11 // pred_fallthru
        _
      // Predicated region
      $region85: #{ghost_bottleneck_v2.1} parent=11 // pred_check
        %p546 = pneg %p451
      $region86: #{ghost_bottleneck_v2.1} parent=11 // pred_check_branch
        %548 = sbr.rel (%p546) target = $region88
      $region87: #{ghost_bottleneck_v2.1} parent=11 // pred_region
        _
      $region88: #{ghost_bottleneck_v2.1} parent=11 // pred_fallthru
        _
    $region12: #{ghost_bottleneck_v2.1} parent=5 // pred_fallthru
      _
    %p549 = scmp.lt.s32.totalorder %s26, 2
    // Predicated region
    $region89: #{ghost_bottleneck_v2.1} parent=5 // pred_check
      %p550 = pneg %p549
    $region90: #{ghost_bottleneck_v2.1} parent=5 // pred_check_branch
      %552 = sbr.rel (%p550) target = $region92
    $region91: #{ghost_bottleneck_v2.1} parent=5 // pred_region
      // Predicated region
      $region93: #{ghost_bottleneck_v2.1} parent=91 // pred_check
        %p553 = pneg %p46
      $region94: #{ghost_bottleneck_v2.1} parent=91 // pred_check_branch
        %555 = sbr.rel (%p553) target = $region96
      $region95: #{ghost_bottleneck_v2.1} parent=91 // pred_region
        %p556 = scmp.lt.s32.totalorder %s26, 1
        %s557 = scalar_select %p556, %s26, 1
        %s558 = smul.addr %s557, 8
        %s559 = smul.addr %s558, 4
        %s560 = scalar_lea.vmem %s0, %s559
      $region96: #{ghost_bottleneck_v2.1} parent=91 // pred_fallthru
        _
    $region92: #{ghost_bottleneck_v2.1} parent=5 // pred_fallthru
      _
    %p561 = scmp.le.s32.totalorder 1, %s26
    %p562 = scmp.lt.s32.totalorder %s26, 3
    %p563 = pnand %p561, %p562
    %p564 = pneg %p563
    // Predicated region
    $region97: #{ghost_bottleneck_v2.1} parent=5 // pred_check
      _
    $region98: #{ghost_bottleneck_v2.1} parent=5 // pred_check_branch
      %566 = sbr.rel (%p563) target = $region100
    $region99: #{ghost_bottleneck_v2.1} parent=5 // pred_region
      %s567 = ssub.s32 %s26, 1
      %p568 = scmp.lt.s32.totalorder %s31, 1
      %s569 = scalar_select %p568, %s31, 1
      %s570 = smul.addr %s569, 8
      %s571 = smul.addr %s570, 4
      %s572 = scalar_lea.vmem %s0, %s571
      %p573 = pneg %p52
      %p574 = pneg %p49
      %p575 = pneg %p73
      %p576 = pneg %p70
      %p577 = pneg %p94
      %p578 = pneg %p91
      %p579 = pneg %p115
      %p580 = pneg %p112
      %p581 = pneg %p136
      %p582 = pneg %p133
      %p583 = pneg %p157
      %p584 = pneg %p154
      %p585 = pneg %p178
      %p586 = pneg %p175
      %p587 = pneg %p199
      %p588 = pneg %p196
      %p589 = pneg %p220
      %p590 = pneg %p217
      %p591 = pneg %p241
      %p592 = pneg %p238
      %p593 = pneg %p262
      %p594 = pneg %p259
      %p595 = pneg %p283
      %p596 = pneg %p280
      %p597 = pneg %p304
      %p598 = pneg %p301
      %p599 = pneg %p325
      %p600 = pneg %p322
      %p601 = pneg %p346
      %p602 = pneg %p343
      %p603 = pneg %p367
      %p604 = pneg %p364
      %p605 = pneg %p388
      %p606 = pneg %p385
      %p607 = pneg %p409
      %p608 = pneg %p406
      %p609 = pneg %p430
      %p610 = pneg %p427
      %p611 = pneg %p451
      %p612 = pneg %p448
      %p613 = pneg %p477
      %p614 = pneg %p474
      %p615 = scmp.lt.s32.totalorder %s31, 1
      %s616 = scalar_select %p615, %s31, 1
      %s617 = smul.addr %s616, 8
      %s618 = smul.addr %s617, 4
      %s619 = scalar_lea.vmem %s20, %s618
      %p620 = scmp.lt.s32.totalorder %s31, 1
      %s621 = scalar_select %p620, %s31, 1
      %s622 = smul.addr %s621, 8
      %s623 = smul.addr %s622, 4
      %s624 = scalar_lea.vmem %s0, %s623
      %p625 = scmp.lt.s32.totalorder %s31, 1
      %s626 = scalar_select %p625, %s31, 1
      %s627 = smul.addr %s626, 8
      %s628 = smul.addr %s627, 4
      %s629 = scalar_lea.vmem %s20, %s628
      %v631 = vld [vmem:[%s624] sm:$0xff]
      %v632 = vld [vmem:[%s624 + $0x8] sm:$0xff]
      %v633 = vld [vmem:[%s624 + $0x10] sm:$0xff]
      %v634 = vld [vmem:[%s624 + $0x18] sm:$0xff]
      %v635 = vunpack.c.l.bf16 %v631
      %v636 = vunpack.c.h.bf16 %v631
      %v637 = vunpack.c.l.bf16 %v632
      %v638 = vunpack.c.h.bf16 %v632
      %v639 = vunpack.c.l.bf16 %v633
      %v640 = vunpack.c.h.bf16 %v633
      %v641 = vunpack.c.l.bf16 %v634
      %v642 = vunpack.c.h.bf16 %v634
      %643 = vrot.lane.b32.xlu0 %v635, 127
      %v644 = vpop.permute.xlu0 %643
      %645 = vrot.lane.b32.xlu0 %v636, 127
      %v646 = vpop.permute.xlu0 %645
      %647 = vrot.lane.b32.xlu0 %v637, 127
      %v648 = vpop.permute.xlu0 %647
      %649 = vrot.lane.b32.xlu0 %v638, 127
      %v650 = vpop.permute.xlu0 %649
      %651 = vrot.lane.b32.xlu0 %v639, 127
      %v652 = vpop.permute.xlu0 %651
      %653 = vrot.lane.b32.xlu0 %v640, 127
      %v654 = vpop.permute.xlu0 %653
      %655 = vrot.lane.b32.xlu0 %v641, 127
      %v656 = vpop.permute.xlu0 %655
      %657 = vrot.lane.b32.xlu0 %v642, 127
      %v658 = vpop.permute.xlu0 %657
      %v659 = vlaneseq
      %v660 = vand.u32 %v659, 127
      %vm661 = vcmp.lt.s32.totalorder %v660, 127
      %v662 = vsel %vm661, %v656, %v658
      %v663 = vsel %vm661, %v654, %v656
      %v664 = vsel %vm661, %v652, %v654
      %v665 = vsel %vm661, %v650, %v652
      %v666 = vsel %vm661, %v648, %v650
      %v667 = vsel %vm661, %v646, %v648
      %v668 = vsel %vm661, %v644, %v646
      %v669 = vsel %vm661, %v658, %v644
      %v670 = vadd.f32 %v635, %v668
      %v671 = vadd.f32 %v636, %v667
      %v672 = vadd.f32 %v637, %v666
      %v673 = vadd.f32 %v638, %v665
      %v674 = vadd.f32 %v639, %v664
      %v675 = vadd.f32 %v640, %v663
      %v676 = vadd.f32 %v641, %v662
      %v677 = vadd.f32 %v642, %v669
      %678 = vrot.lane.b32.xlu0 %v635, 112
      %v679 = vpop.permute.xlu0 %678
      %680 = vrot.lane.b32.xlu0 %v636, 112
      %v681 = vpop.permute.xlu0 %680
      %682 = vrot.lane.b32.xlu0 %v637, 112
      %v683 = vpop.permute.xlu0 %682
      %684 = vrot.lane.b32.xlu0 %v638, 112
      %v685 = vpop.permute.xlu0 %684
      %686 = vrot.lane.b32.xlu0 %v639, 112
      %v687 = vpop.permute.xlu0 %686
      %688 = vrot.lane.b32.xlu0 %v640, 112
      %v689 = vpop.permute.xlu0 %688
      %690 = vrot.lane.b32.xlu0 %v641, 112
      %v691 = vpop.permute.xlu0 %690
      %692 = vrot.lane.b32.xlu0 %v642, 112
      %v693 = vpop.permute.xlu0 %692
      %vm694 = vcmp.lt.s32.totalorder %v660, 112
      %v695 = vsel %vm694, %v691, %v693
      %v696 = vsel %vm694, %v689, %v691
      %v697 = vsel %vm694, %v687, %v689
      %v698 = vsel %vm694, %v685, %v687
      %v699 = vsel %vm694, %v683, %v685
      %v700 = vsel %vm694, %v681, %v683
      %v701 = vsel %vm694, %v679, %v681
      %v702 = vsel %vm694, %v693, %v679
      %v703 = vadd.f32 %v670, %v701
      %v704 = vadd.f32 %v671, %v700
      %v705 = vadd.f32 %v672, %v699
      %v706 = vadd.f32 %v673, %v698
      %v707 = vadd.f32 %v674, %v697
      %v708 = vadd.f32 %v675, %v696
      %v709 = vadd.f32 %v676, %v695
      %v710 = vadd.f32 %v677, %v702
      %711 = vrot.lane.b32.xlu0 %v635, 111
      %v712 = vpop.permute.xlu0 %711
      %713 = vrot.lane.b32.xlu0 %v636, 111
      %v714 = vpop.permute.xlu0 %713
      %715 = vrot.lane.b32.xlu0 %v637, 111
      %v716 = vpop.permute.xlu0 %715
      %717 = vrot.lane.b32.xlu0 %v638, 111
      %v718 = vpop.permute.xlu0 %717
      %719 = vrot.lane.b32.xlu0 %v639, 111
      %v720 = vpop.permute.xlu0 %719
      %721 = vrot.lane.b32.xlu0 %v640, 111
      %v722 = vpop.permute.xlu0 %721
      %723 = vrot.lane.b32.xlu0 %v641, 111
      %v724 = vpop.permute.xlu0 %723
      %725 = vrot.lane.b32.xlu0 %v642, 111
      %v726 = vpop.permute.xlu0 %725
      %vm727 = vcmp.lt.s32.totalorder %v660, 111
      %v728 = vsel %vm727, %v724, %v726
      %v729 = vsel %vm727, %v722, %v724
      %v730 = vsel %vm727, %v720, %v722
      %v731 = vsel %vm727, %v718, %v720
      %v732 = vsel %vm727, %v716, %v718
      %v733 = vsel %vm727, %v714, %v716
      %v734 = vsel %vm727, %v712, %v714
      %v735 = vsel %vm727, %v726, %v712
      %v736 = vadd.f32 %v703, %v734
      %v737 = vadd.f32 %v704, %v733
      %v738 = vadd.f32 %v705, %v732
      %v739 = vadd.f32 %v706, %v731
      %v740 = vadd.f32 %v707, %v730
      %v741 = vadd.f32 %v708, %v729
      %v742 = vadd.f32 %v709, %v728
      %v743 = vadd.f32 %v710, %v735
      %v744 = vmul.f32 %v736, 0.25
      %v745 = vmul.f32 %v737, 0.25
      %v746 = vmul.f32 %v738, 0.25
      %v747 = vmul.f32 %v739, 0.25
      %v748 = vmul.f32 %v740, 0.25
      %v749 = vmul.f32 %v741, 0.25
      %v750 = vmul.f32 %v742, 0.25
      %v751 = vmul.f32 %v743, 0.25
      %752 = vrot.lane.b32.xlu0 %v635, 17
      %v753 = vpop.permute.xlu0 %752
      %754 = vrot.lane.b32.xlu0 %v636, 17
      %v755 = vpop.permute.xlu0 %754
      %756 = vrot.lane.b32.xlu0 %v637, 17
      %v757 = vpop.permute.xlu0 %756
      %758 = vrot.lane.b32.xlu0 %v638, 17
      %v759 = vpop.permute.xlu0 %758
      %760 = vrot.lane.b32.xlu0 %v639, 17
      %v761 = vpop.permute.xlu0 %760
      %762 = vrot.lane.b32.xlu0 %v640, 17
      %v763 = vpop.permute.xlu0 %762
      %764 = vrot.lane.b32.xlu0 %v641, 17
      %v765 = vpop.permute.xlu0 %764
      %766 = vrot.lane.b32.xlu0 %v642, 17
      %v767 = vpop.permute.xlu0 %766
      %vm768 = vcmp.lt.s32.totalorder %v660, 17
      %v769 = vsel %vm768, %v765, %v767
      %v770 = vsel %vm768, %v763, %v765
      %v771 = vsel %vm768, %v761, %v763
      %v772 = vsel %vm768, %v759, %v761
      %v773 = vsel %vm768, %v757, %v759
      %v774 = vsel %vm768, %v755, %v757
      %v775 = vsel %vm768, %v753, %v755
      %v776 = vsel %vm768, %v767, %v753
      %v777 = vld [vmem:[%s2] ss:$8 sm:$0xf]
      %v778 = vld [vmem:[%s2] ss:$8 sm:$0xf0]
      %v779 = vor.u32 %v777, %v778
      %v781 = vperm.slane %v779, 0
      %v782 = vperm.slane %v779, 1
      %v783 = vperm.slane %v779, 2
      %v784 = vperm.slane %v779, 3
      %v785 = vperm.slane %v779, 4
      %v786 = vperm.slane %v779, 5
      %v787 = vperm.slane %v779, 6
      %v788 = vperm.slane %v779, 7
      %v797 = vmul.f32 %v776, %v781
      %v798 = vmul.f32 %v775, %v782
      %v799 = vmul.f32 %v774, %v783
      %v800 = vmul.f32 %v773, %v784
      %v801 = vmul.f32 %v772, %v785
      %v802 = vmul.f32 %v771, %v786
      %v803 = vmul.f32 %v770, %v787
      %v804 = vmul.f32 %v769, %v788
      %v805 = vpack.c.bf16 %v798, %v797
      %v806 = vpack.c.bf16 %v800, %v799
      %v807 = vpack.c.bf16 %v802, %v801
      %v808 = vpack.c.bf16 %v804, %v803
      %809 = vst [vmem:[#allocation2] sm:$0xff] %v805
      %810 = vst [vmem:[#allocation2 + $0x8] sm:$0xff] %v806
      %811 = vst [vmem:[#allocation2 + $0x10] sm:$0xff] %v807
      %812 = vst [vmem:[#allocation2 + $0x18] sm:$0xff] %v808
      %813 = vrot.lane.b32.xlu0 %v635, 16
      %v814 = vpop.permute.xlu0 %813
      %815 = vrot.lane.b32.xlu0 %v636, 16
      %v816 = vpop.permute.xlu0 %815
      %817 = vrot.lane.b32.xlu0 %v637, 16
      %v818 = vpop.permute.xlu0 %817
      %819 = vrot.lane.b32.xlu0 %v638, 16
      %v820 = vpop.permute.xlu0 %819
      %821 = vrot.lane.b32.xlu0 %v639, 16
      %v822 = vpop.permute.xlu0 %821
      %823 = vrot.lane.b32.xlu0 %v640, 16
      %v824 = vpop.permute.xlu0 %823
      %825 = vrot.lane.b32.xlu0 %v641, 16
      %v826 = vpop.permute.xlu0 %825
      %827 = vrot.lane.b32.xlu0 %v642, 16
      %v828 = vpop.permute.xlu0 %827
      %vm829 = vcmp.lt.s32.totalorder %v660, 16
      %v830 = vsel %vm829, %v826, %v828
      %v831 = vsel %vm829, %v824, %v826
      %v832 = vsel %vm829, %v822, %v824
      %v833 = vsel %vm829, %v820, %v822
      %v834 = vsel %vm829, %v818, %v820
      %v835 = vsel %vm829, %v816, %v818
      %v836 = vsel %vm829, %v814, %v816
      %v837 = vsel %vm829, %v828, %v814
      %s838 = scalar_lea.vmem %s2, 1
      %v839 = vld [vmem:[%s838] ss:$8 sm:$0xf]
      %v840 = vld [vmem:[%s838] ss:$8 sm:$0xf0]
      %v841 = vor.u32 %v839, %v840
      %v843 = vperm.slane %v841, 0
      %v844 = vperm.slane %v841, 1
      %v845 = vperm.slane %v841, 2
      %v846 = vperm.slane %v841, 3
      %v847 = vperm.slane %v841, 4
      %v848 = vperm.slane %v841, 5
      %v849 = vperm.slane %v841, 6
      %v850 = vperm.slane %v841, 7
      %v859 = vmul.f32 %v837, %v843
      %v860 = vmul.f32 %v836, %v844
      %v861 = vmul.f32 %v835, %v845
      %v862 = vmul.f32 %v834, %v846
      %v863 = vmul.f32 %v833, %v847
      %v864 = vmul.f32 %v832, %v848
      %v865 = vmul.f32 %v831, %v849
      %v866 = vmul.f32 %v830, %v850
      %v867 = vpack.c.bf16 %v860, %v859
      %v868 = vpack.c.bf16 %v862, %v861
      %v869 = vpack.c.bf16 %v864, %v863
      %v870 = vpack.c.bf16 %v866, %v865
      %871 = vst [vmem:[#allocation2 + $0x20] sm:$0xff] %v867
      %872 = vst [vmem:[#allocation2 + $0x28] sm:$0xff] %v868
      %873 = vst [vmem:[#allocation2 + $0x30] sm:$0xff] %v869
      %874 = vst [vmem:[#allocation2 + $0x38] sm:$0xff] %v870
      %875 = vrot.lane.b32.xlu0 %v635, 15
      %v876 = vpop.permute.xlu0 %875
      %877 = vrot.lane.b32.xlu0 %v636, 15
      %v878 = vpop.permute.xlu0 %877
      %879 = vrot.lane.b32.xlu0 %v637, 15
      %v880 = vpop.permute.xlu0 %879
      %881 = vrot.lane.b32.xlu0 %v638, 15
      %v882 = vpop.permute.xlu0 %881
      %883 = vrot.lane.b32.xlu0 %v639, 15
      %v884 = vpop.permute.xlu0 %883
      %885 = vrot.lane.b32.xlu0 %v640, 15
      %v886 = vpop.permute.xlu0 %885
      %887 = vrot.lane.b32.xlu0 %v641, 15
      %v888 = vpop.permute.xlu0 %887
      %889 = vrot.lane.b32.xlu0 %v642, 15
      %v890 = vpop.permute.xlu0 %889
      %vm891 = vcmp.lt.s32.totalorder %v660, 15
      %v892 = vsel %vm891, %v888, %v890
      %v893 = vsel %vm891, %v886, %v888
      %v894 = vsel %vm891, %v884, %v886
      %v895 = vsel %vm891, %v882, %v884
      %v896 = vsel %vm891, %v880, %v882
      %v897 = vsel %vm891, %v878, %v880
      %v898 = vsel %vm891, %v876, %v878
      %v899 = vsel %vm891, %v890, %v876
      %s900 = scalar_lea.vmem %s2, 2
      %v901 = vld [vmem:[%s900] ss:$8 sm:$0xf]
      %v902 = vld [vmem:[%s900] ss:$8 sm:$0xf0]
      %v903 = vor.u32 %v901, %v902
      %v905 = vperm.slane %v903, 0
      %v906 = vperm.slane %v903, 1
      %v907 = vperm.slane %v903, 2
      %v908 = vperm.slane %v903, 3
      %v909 = vperm.slane %v903, 4
      %v910 = vperm.slane %v903, 5
      %v911 = vperm.slane %v903, 6
      %v912 = vperm.slane %v903, 7
      %v921 = vmul.f32 %v899, %v905
      %v922 = vmul.f32 %v898, %v906
      %v923 = vmul.f32 %v897, %v907
      %v924 = vmul.f32 %v896, %v908
      %v925 = vmul.f32 %v895, %v909
      %v926 = vmul.f32 %v894, %v910
      %v927 = vmul.f32 %v893, %v911
      %v928 = vmul.f32 %v892, %v912
      %v929 = vpack.c.bf16 %v922, %v921
      %v930 = vpack.c.bf16 %v924, %v923
      %v931 = vpack.c.bf16 %v926, %v925
      %v932 = vpack.c.bf16 %v928, %v927
      %933 = vst [vmem:[#allocation2 + $0x40] sm:$0xff] %v929
      %934 = vst [vmem:[#allocation2 + $0x48] sm:$0xff] %v930
      %935 = vst [vmem:[#allocation2 + $0x50] sm:$0xff] %v931
      %936 = vst [vmem:[#allocation2 + $0x58] sm:$0xff] %v932
      %937 = vrot.lane.b32.xlu0 %v635, 1
      %v938 = vpop.permute.xlu0 %937
      %939 = vrot.lane.b32.xlu0 %v636, 1
      %v940 = vpop.permute.xlu0 %939
      %941 = vrot.lane.b32.xlu0 %v637, 1
      %v942 = vpop.permute.xlu0 %941
      %943 = vrot.lane.b32.xlu0 %v638, 1
      %v944 = vpop.permute.xlu0 %943
      %945 = vrot.lane.b32.xlu0 %v639, 1
      %v946 = vpop.permute.xlu0 %945
      %947 = vrot.lane.b32.xlu0 %v640, 1
      %v948 = vpop.permute.xlu0 %947
      %949 = vrot.lane.b32.xlu0 %v641, 1
      %v950 = vpop.permute.xlu0 %949
      %951 = vrot.lane.b32.xlu0 %v642, 1
      %v952 = vpop.permute.xlu0 %951
      %vm953 = vcmp.lt.s32.totalorder %v660, 1
      %v954 = vsel %vm953, %v950, %v952
      %v955 = vsel %vm953, %v948, %v950
      %v956 = vsel %vm953, %v946, %v948
      %v957 = vsel %vm953, %v944, %v946
      %v958 = vsel %vm953, %v942, %v944
      %v959 = vsel %vm953, %v940, %v942
      %v960 = vsel %vm953, %v938, %v940
      %v961 = vsel %vm953, %v952, %v938
      %s962 = scalar_lea.vmem %s2, 3
      %v963 = vld [vmem:[%s962] ss:$8 sm:$0xf]
      %v964 = vld [vmem:[%s962] ss:$8 sm:$0xf0]
      %v965 = vor.u32 %v963, %v964
      %v967 = vperm.slane %v965, 0
      %v968 = vperm.slane %v965, 1
      %v969 = vperm.slane %v965, 2
      %v970 = vperm.slane %v965, 3
      %v971 = vperm.slane %v965, 4
      %v972 = vperm.slane %v965, 5
      %v973 = vperm.slane %v965, 6
      %v974 = vperm.slane %v965, 7
      %v983 = vmul.f32 %v961, %v967
      %v984 = vmul.f32 %v960, %v968
      %v985 = vmul.f32 %v959, %v969
      %v986 = vmul.f32 %v958, %v970
      %v987 = vmul.f32 %v957, %v971
      %v988 = vmul.f32 %v956, %v972
      %v989 = vmul.f32 %v955, %v973
      %v990 = vmul.f32 %v954, %v974
      %v991 = vpack.c.bf16 %v984, %v983
      %v992 = vpack.c.bf16 %v986, %v985
      %v993 = vpack.c.bf16 %v988, %v987
      %v994 = vpack.c.bf16 %v990, %v989
      %995 = vst [vmem:[#allocation2 + $0x60] sm:$0xff] %v991
      %996 = vst [vmem:[#allocation2 + $0x68] sm:$0xff] %v992
      %997 = vst [vmem:[#allocation2 + $0x70] sm:$0xff] %v993
      %998 = vst [vmem:[#allocation2 + $0x78] sm:$0xff] %v994
      %999 = vst [vmem:[#allocation2 + $0x80] sm:$0xff] %v631
      %1000 = vst [vmem:[#allocation2 + $0x88] sm:$0xff] %v632
      %1001 = vst [vmem:[#allocation2 + $0x90] sm:$0xff] %v633
      %1002 = vst [vmem:[#allocation2 + $0x98] sm:$0xff] %v634
      %s1003 = scalar_lea.vmem %s2, 5
      %v1004 = vld [vmem:[%s1003] ss:$8 sm:$0xf]
      %v1005 = vld [vmem:[%s1003] ss:$8 sm:$0xf0]
      %v1006 = vor.u32 %v1004, %v1005
      %v1008 = vperm.slane %v1006, 0
      %v1009 = vperm.slane %v1006, 1
      %v1010 = vperm.slane %v1006, 2
      %v1011 = vperm.slane %v1006, 3
      %v1012 = vperm.slane %v1006, 4
      %v1013 = vperm.slane %v1006, 5
      %v1014 = vperm.slane %v1006, 6
      %v1015 = vperm.slane %v1006, 7
      %v1024 = vmul.f32 %v668, %v1008
      %v1025 = vmul.f32 %v667, %v1009
      %v1026 = vmul.f32 %v666, %v1010
      %v1027 = vmul.f32 %v665, %v1011
      %v1028 = vmul.f32 %v664, %v1012
      %v1029 = vmul.f32 %v663, %v1013
      %v1030 = vmul.f32 %v662, %v1014
      %v1031 = vmul.f32 %v669, %v1015
      %v1032 = vpack.c.bf16 %v1025, %v1024
      %v1033 = vpack.c.bf16 %v1027, %v1026
      %v1034 = vpack.c.bf16 %v1029, %v1028
      %v1035 = vpack.c.bf16 %v1031, %v1030
      %1036 = vst [vmem:[#allocation2 + $0xa0] sm:$0xff] %v1032
      %1037 = vst [vmem:[#allocation2 + $0xa8] sm:$0xff] %v1033
      %1038 = vst [vmem:[#allocation2 + $0xb0] sm:$0xff] %v1034
      %1039 = vst [vmem:[#allocation2 + $0xb8] sm:$0xff] %v1035
      %1040 = vrot.lane.b32.xlu0 %v635, 113
      %v1041 = vpop.permute.xlu0 %1040
      %1042 = vrot.lane.b32.xlu0 %v636, 113
      %v1043 = vpop.permute.xlu0 %1042
      %1044 = vrot.lane.b32.xlu0 %v637, 113
      %v1045 = vpop.permute.xlu0 %1044
      %1046 = vrot.lane.b32.xlu0 %v638, 113
      %v1047 = vpop.permute.xlu0 %1046
      %1048 = vrot.lane.b32.xlu0 %v639, 113
      %v1049 = vpop.permute.xlu0 %1048
      %1050 = vrot.lane.b32.xlu0 %v640, 113
      %v1051 = vpop.permute.xlu0 %1050
      %1052 = vrot.lane.b32.xlu0 %v641, 113
      %v1053 = vpop.permute.xlu0 %1052
      %1054 = vrot.lane.b32.xlu0 %v642, 113
      %v1055 = vpop.permute.xlu0 %1054
      %vm1056 = vcmp.lt.s32.totalorder %v660, 113
      %v1057 = vsel %vm1056, %v1053, %v1055
      %v1058 = vsel %vm1056, %v1051, %v1053
      %v1059 = vsel %vm1056, %v1049, %v1051
      %v1060 = vsel %vm1056, %v1047, %v1049
      %v1061 = vsel %vm1056, %v1045, %v1047
      %v1062 = vsel %vm1056, %v1043, %v1045
      %v1063 = vsel %vm1056, %v1041, %v1043
      %v1064 = vsel %vm1056, %v1055, %v1041
      %s1065 = scalar_lea.vmem %s2, 6
      %v1066 = vld [vmem:[%s1065] ss:$8 sm:$0xf]
      %v1067 = vld [vmem:[%s1065] ss:$8 sm:$0xf0]
      %v1068 = vor.u32 %v1066, %v1067
      %v1070 = vperm.slane %v1068, 0
      %v1071 = vperm.slane %v1068, 1
      %v1072 = vperm.slane %v1068, 2
      %v1073 = vperm.slane %v1068, 3
      %v1074 = vperm.slane %v1068, 4
      %v1075 = vperm.slane %v1068, 5
      %v1076 = vperm.slane %v1068, 6
      %v1077 = vperm.slane %v1068, 7
      %v1086 = vmul.f32 %v1063, %v1070
      %v1087 = vmul.f32 %v1062, %v1071
      %v1088 = vmul.f32 %v1061, %v1072
      %v1089 = vmul.f32 %v1060, %v1073
      %v1090 = vmul.f32 %v1059, %v1074
      %v1091 = vmul.f32 %v1058, %v1075
      %v1092 = vmul.f32 %v1057, %v1076
      %v1093 = vmul.f32 %v1064, %v1077
      %v1094 = vpack.c.bf16 %v1087, %v1086
      %v1095 = vpack.c.bf16 %v1089, %v1088
      %v1096 = vpack.c.bf16 %v1091, %v1090
      %v1097 = vpack.c.bf16 %v1093, %v1092
      %1098 = vst [vmem:[#allocation2 + $0xc0] sm:$0xff] %v1094
      %1099 = vst [vmem:[#allocation2 + $0xc8] sm:$0xff] %v1095
      %1100 = vst [vmem:[#allocation2 + $0xd0] sm:$0xff] %v1096
      %1101 = vst [vmem:[#allocation2 + $0xd8] sm:$0xff] %v1097
      %s1102 = scalar_lea.vmem %s2, 7
      %v1103 = vld [vmem:[%s1102] ss:$8 sm:$0xf]
      %v1104 = vld [vmem:[%s1102] ss:$8 sm:$0xf0]
      %v1105 = vor.u32 %v1103, %v1104
      %v1107 = vperm.slane %v1105, 0
      %v1108 = vperm.slane %v1105, 1
      %v1109 = vperm.slane %v1105, 2
      %v1110 = vperm.slane %v1105, 3
      %v1111 = vperm.slane %v1105, 4
      %v1112 = vperm.slane %v1105, 5
      %v1113 = vperm.slane %v1105, 6
      %v1114 = vperm.slane %v1105, 7
      %v1123 = vmul.f32 %v701, %v1107
      %v1124 = vmul.f32 %v700, %v1108
      %v1125 = vmul.f32 %v699, %v1109
      %v1126 = vmul.f32 %v698, %v1110
      %v1127 = vmul.f32 %v697, %v1111
      %v1128 = vmul.f32 %v696, %v1112
      %v1129 = vmul.f32 %v695, %v1113
      %v1130 = vmul.f32 %v702, %v1114
      %v1131 = vpack.c.bf16 %v1124, %v1123
      %v1132 = vpack.c.bf16 %v1126, %v1125
      %v1133 = vpack.c.bf16 %v1128, %v1127
      %v1134 = vpack.c.bf16 %v1130, %v1129
      %1135 = vst [vmem:[#allocation2 + $0xe0] sm:$0xff] %v1131
      %1136 = vst [vmem:[#allocation2 + $0xe8] sm:$0xff] %v1132
      %1137 = vst [vmem:[#allocation2 + $0xf0] sm:$0xff] %v1133
      %1138 = vst [vmem:[#allocation2 + $0xf8] sm:$0xff] %v1134
      %s1139 = scalar_lea.vmem %s2, 64
      %v1140 = vld [vmem:[%s1139] ss:$8 sm:$0xf]
      %v1141 = vld [vmem:[%s1139] ss:$8 sm:$0xf0]
      %v1142 = vor.u32 %v1140, %v1141
      %v1144 = vperm.slane %v1142, 0
      %v1145 = vperm.slane %v1142, 1
      %v1146 = vperm.slane %v1142, 2
      %v1147 = vperm.slane %v1142, 3
      %v1148 = vperm.slane %v1142, 4
      %v1149 = vperm.slane %v1142, 5
      %v1150 = vperm.slane %v1142, 6
      %v1151 = vperm.slane %v1142, 7
      %v1160 = vmul.f32 %v734, %v1144
      %v1161 = vmul.f32 %v733, %v1145
      %v1162 = vmul.f32 %v732, %v1146
      %v1163 = vmul.f32 %v731, %v1147
      %v1164 = vmul.f32 %v730, %v1148
      %v1165 = vmul.f32 %v729, %v1149
      %v1166 = vmul.f32 %v728, %v1150
      %v1167 = vmul.f32 %v735, %v1151
      %v1168 = vpack.c.bf16 %v1161, %v1160
      %v1169 = vpack.c.bf16 %v1163, %v1162
      %v1170 = vpack.c.bf16 %v1165, %v1164
      %v1171 = vpack.c.bf16 %v1167, %v1166
      %1172 = vst [vmem:[#allocation2 + $0x100] sm:$0xff] %v1168
      %1173 = vst [vmem:[#allocation2 + $0x108] sm:$0xff] %v1169
      %1174 = vst [vmem:[#allocation2 + $0x110] sm:$0xff] %v1170
      %1175 = vst [vmem:[#allocation2 + $0x118] sm:$0xff] %v1171
      %v1176 = vld [vmem:[#allocation2] sm:$0xff]
      %v1177 = vld [vmem:[#allocation2 + $0x8] sm:$0xff]
      %v1178 = vld [vmem:[#allocation2 + $0x10] sm:$0xff]
      %v1179 = vld [vmem:[#allocation2 + $0x18] sm:$0xff]
      %v1180 = vld [vmem:[#allocation2 + $0x20] sm:$0xff]
      %v1181 = vld [vmem:[#allocation2 + $0x28] sm:$0xff]
      %v1182 = vld [vmem:[#allocation2 + $0x30] sm:$0xff]
      %v1183 = vld [vmem:[#allocation2 + $0x38] sm:$0xff]
      %v1184 = vld [vmem:[#allocation2 + $0x40] sm:$0xff]
      %v1185 = vld [vmem:[#allocation2 + $0x48] sm:$0xff]
      %v1186 = vld [vmem:[#allocation2 + $0x50] sm:$0xff]
      %v1187 = vld [vmem:[#allocation2 + $0x58] sm:$0xff]
      %v1188 = vld [vmem:[#allocation2 + $0x60] sm:$0xff]
      %v1189 = vld [vmem:[#allocation2 + $0x68] sm:$0xff]
      %v1190 = vld [vmem:[#allocation2 + $0x70] sm:$0xff]
      %v1191 = vld [vmem:[#allocation2 + $0x78] sm:$0xff]
      %v1192 = vld [vmem:[#allocation2 + $0x80] sm:$0xff]
      %v1193 = vld [vmem:[#allocation2 + $0x88] sm:$0xff]
      %v1194 = vld [vmem:[#allocation2 + $0x90] sm:$0xff]
      %v1195 = vld [vmem:[#allocation2 + $0x98] sm:$0xff]
      %v1196 = vld [vmem:[#allocation2 + $0xa0] sm:$0xff]
      %v1197 = vld [vmem:[#allocation2 + $0xa8] sm:$0xff]
      %v1198 = vld [vmem:[#allocation2 + $0xb0] sm:$0xff]
      %v1199 = vld [vmem:[#allocation2 + $0xb8] sm:$0xff]
      %v1200 = vld [vmem:[#allocation2 + $0xc0] sm:$0xff]
      %v1201 = vld [vmem:[#allocation2 + $0xc8] sm:$0xff]
      %v1202 = vld [vmem:[#allocation2 + $0xd0] sm:$0xff]
      %v1203 = vld [vmem:[#allocation2 + $0xd8] sm:$0xff]
      %v1204 = vld [vmem:[#allocation2 + $0xe0] sm:$0xff]
      %v1205 = vld [vmem:[#allocation2 + $0xe8] sm:$0xff]
      %v1206 = vld [vmem:[#allocation2 + $0xf0] sm:$0xff]
      %v1207 = vld [vmem:[#allocation2 + $0xf8] sm:$0xff]
      %v1208 = vld [vmem:[#allocation2 + $0x100] sm:$0xff]
      %v1209 = vld [vmem:[#allocation2 + $0x108] sm:$0xff]
      %v1210 = vld [vmem:[#allocation2 + $0x110] sm:$0xff]
      %v1211 = vld [vmem:[#allocation2 + $0x118] sm:$0xff]
      %v1212 = vld [vmem:[%s6] sm:$0xf]
      %v1213 = vld [vmem:[%s7] sm:$0xff]
      %1215 = vset.pattern.permute.xlu0 0
      %1216 = vperm.xlu0 %1215, %v1213
      %v1217 = vpop.permute.xlu0 %1216
      %v1255 = vunpack.c.l.b16 %v1176
      %v1256 = vunpack.c.h.b16 %v1176
      %v1257 = vunpack.c.l.b16 %v1177
      %v1258 = vunpack.c.h.b16 %v1177
      %v1259 = vunpack.c.l.b16 %v1178
      %v1260 = vunpack.c.h.b16 %v1178
      %v1261 = vunpack.c.l.b16 %v1179
      %v1262 = vunpack.c.h.b16 %v1179
      %v1263 = vunpack.c.l.b16 %v1180
      %v1264 = vunpack.c.h.b16 %v1180
      %v1265 = vunpack.c.l.b16 %v1181
      %v1266 = vunpack.c.h.b16 %v1181
      %v1267 = vunpack.c.l.b16 %v1182
      %v1268 = vunpack.c.h.b16 %v1182
      %v1269 = vunpack.c.l.b16 %v1183
      %v1270 = vunpack.c.h.b16 %v1183
      %v1271 = vunpack.c.l.b16 %v1184
      %v1272 = vunpack.c.h.b16 %v1184
      %v1273 = vunpack.c.l.b16 %v1185
      %v1274 = vunpack.c.h.b16 %v1185
      %v1275 = vunpack.c.l.b16 %v1186
      %v1276 = vunpack.c.h.b16 %v1186
      %v1277 = vunpack.c.l.b16 %v1187
      %v1278 = vunpack.c.h.b16 %v1187
      %v1279 = vunpack.c.l.b16 %v1188
      %v1280 = vunpack.c.h.b16 %v1188
      %v1281 = vunpack.c.l.b16 %v1189
      %v1282 = vunpack.c.h.b16 %v1189
      %v1283 = vunpack.c.l.b16 %v1190
      %v1284 = vunpack.c.h.b16 %v1190
      %v1285 = vunpack.c.l.b16 %v1191
      %v1286 = vunpack.c.h.b16 %v1191
      %v1287 = vunpack.c.l.b16 %v1192
      %v1288 = vunpack.c.h.b16 %v1192
      %v1289 = vunpack.c.l.b16 %v1193
      %v1290 = vunpack.c.h.b16 %v1193
      %v1291 = vunpack.c.l.b16 %v1194
      %v1292 = vunpack.c.h.b16 %v1194
      %v1293 = vunpack.c.l.b16 %v1195
      %v1294 = vunpack.c.h.b16 %v1195
      %v1295 = vunpack.c.l.b16 %v1196
      %v1296 = vunpack.c.h.b16 %v1196
      %v1297 = vunpack.c.l.b16 %v1197
      %v1298 = vunpack.c.h.b16 %v1197
      %v1299 = vunpack.c.l.b16 %v1198
      %v1300 = vunpack.c.h.b16 %v1198
      %v1301 = vunpack.c.l.b16 %v1199
      %v1302 = vunpack.c.h.b16 %v1199
      %v1303 = vunpack.c.l.b16 %v1200
      %v1304 = vunpack.c.h.b16 %v1200
      %v1305 = vunpack.c.l.b16 %v1201
      %v1306 = vunpack.c.h.b16 %v1201
      %v1307 = vunpack.c.l.b16 %v1202
      %v1308 = vunpack.c.h.b16 %v1202
      %v1309 = vunpack.c.l.b16 %v1203
      %v1310 = vunpack.c.h.b16 %v1203
      %v1311 = vunpack.c.l.b16 %v1204
      %v1312 = vunpack.c.h.b16 %v1204
      %v1313 = vunpack.c.l.b16 %v1205
      %v1314 = vunpack.c.h.b16 %v1205
      %v1315 = vunpack.c.l.b16 %v1206
      %v1316 = vunpack.c.h.b16 %v1206
      %v1317 = vunpack.c.l.b16 %v1207
      %v1318 = vunpack.c.h.b16 %v1207
      %v1319 = vunpack.c.l.b16 %v1208
      %v1320 = vunpack.c.h.b16 %v1208
      %v1321 = vunpack.c.l.b16 %v1209
      %v1322 = vunpack.c.h.b16 %v1209
      %v1323 = vunpack.c.l.b16 %v1210
      %v1324 = vunpack.c.h.b16 %v1210
      %v1325 = vunpack.c.l.b16 %v1211
      %v1326 = vunpack.c.h.b16 %v1211
      %v1327 = vpack.c.b16 %v1263, %v1255
      %v1328 = vpack.c.b16 %v1264, %v1256
      %v1329 = vpack.c.b16 %v1265, %v1257
      %v1330 = vpack.c.b16 %v1266, %v1258
      %v1331 = vpack.c.b16 %v1267, %v1259
      %v1332 = vpack.c.b16 %v1268, %v1260
      %v1333 = vpack.c.b16 %v1269, %v1261
      %v1334 = vpack.c.b16 %v1270, %v1262
      %v1335 = vpack.c.b16 %v1279, %v1271
      %v1336 = vpack.c.b16 %v1280, %v1272
      %v1337 = vpack.c.b16 %v1281, %v1273
      %v1338 = vpack.c.b16 %v1282, %v1274
      %v1339 = vpack.c.b16 %v1283, %v1275
      %v1340 = vpack.c.b16 %v1284, %v1276
      %v1341 = vpack.c.b16 %v1285, %v1277
      %v1342 = vpack.c.b16 %v1286, %v1278
      %v1343 = vpack.c.b16 %v1295, %v1287
      %v1344 = vpack.c.b16 %v1296, %v1288
      %v1345 = vpack.c.b16 %v1297, %v1289
      %v1346 = vpack.c.b16 %v1298, %v1290
      %v1347 = vpack.c.b16 %v1299, %v1291
      %v1348 = vpack.c.b16 %v1300, %v1292
      %v1349 = vpack.c.b16 %v1301, %v1293
      %v1350 = vpack.c.b16 %v1302, %v1294
      %v1351 = vpack.c.b16 %v1311, %v1303
      %v1352 = vpack.c.b16 %v1312, %v1304
      %v1353 = vpack.c.b16 %v1313, %v1305
      %v1354 = vpack.c.b16 %v1314, %v1306
      %v1355 = vpack.c.b16 %v1315, %v1307
      %v1356 = vpack.c.b16 %v1316, %v1308
      %v1357 = vpack.c.b16 %v1317, %v1309
      %v1358 = vpack.c.b16 %v1318, %v1310
      %v1359 = vpack.c.b16 %v1319, %v1319
      %v1360 = vpack.c.b16 %v1320, %v1320
      %v1361 = vpack.c.b16 %v1321, %v1321
      %v1362 = vpack.c.b16 %v1322, %v1322
      %v1363 = vpack.c.b16 %v1323, %v1323
      %v1364 = vpack.c.b16 %v1324, %v1324
      %v1365 = vpack.c.b16 %v1325, %v1325
      %v1366 = vpack.c.b16 %v1326, %v1326
      %vm1399 = vcmask 588800
      %v1401 = vsel %vm1399, %v1212, 0
      %vm1403 = vcmask 1043456
      %v1405 = vsel %vm1403, %v1359, 0
      %v1408 = vsel %vm1403, %v1360, 0
      %v1411 = vsel %vm1403, %v1361, 0
      %v1414 = vsel %vm1403, %v1362, 0
      %v1417 = vsel %vm1403, %v1363, 0
      %v1420 = vsel %vm1403, %v1364, 0
      %v1423 = vsel %vm1403, %v1365, 0
      %v1426 = vsel %vm1403, %v1366, 0
      %1428 = vmatpush.bf16.msra.mxu0 0
      %1429 = vmatpush.bf16.msra.mxu0 0
      %1430 = vmatpush.bf16.msra.mxu0 0
      %1431 = vmatpush.bf16.msra.mxu0 %v1405
      %1432 = vmatpush.bf16.msra.mxu0 %v1351
      %1433 = vmatpush.bf16.msra.mxu0 %v1343
      %1434 = vmatpush.bf16.msra.mxu0 %v1335
      %1435 = vmatpush.bf16.msra.mxu0 %v1327
      %1436 = vmatmul.bf16.gmra.mxu0 %v1401
      %v1437 = vpop.f32.mrf.mxu0
      %v1438 = vadd.f32 %v1217, %v1437
      %v1439 = vpop.f32.mrf.mxu0
      %1440 = vdwg.mxu0
      %1441 = vmatpush.bf16.msra.mxu0 0
      %1442 = vmatpush.bf16.msra.mxu0 0
      %1443 = vmatpush.bf16.msra.mxu0 0
      %1444 = vmatpush.bf16.msra.mxu0 %v1408
      %1445 = vmatpush.bf16.msra.mxu0 %v1352
      %1446 = vmatpush.bf16.msra.mxu0 %v1344
      %1447 = vmatpush.bf16.msra.mxu0 %v1336
      %1448 = vmatpush.bf16.msra.mxu0 %v1328
      %1449 = vmatmul.bf16.gmra.mxu0 %v1401
      %v1450 = vpop.f32.mrf.mxu0
      %v1451 = vadd.f32 %v1217, %v1450
      %v1452 = vpop.f32.mrf.mxu0
      %1453 = vdwg.mxu0
      %1454 = vmatpush.bf16.msra.mxu0 0
      %1455 = vmatpush.bf16.msra.mxu0 0
      %1456 = vmatpush.bf16.msra.mxu0 0
      %1457 = vmatpush.bf16.msra.mxu0 %v1411
      %1458 = vmatpush.bf16.msra.mxu0 %v1353
      %1459 = vmatpush.bf16.msra.mxu0 %v1345
      %1460 = vmatpush.bf16.msra.mxu0 %v1337
      %1461 = vmatpush.bf16.msra.mxu0 %v1329
      %1462 = vmatmul.bf16.gmra.mxu0 %v1401
      %v1463 = vpop.f32.mrf.mxu0
      %v1464 = vadd.f32 %v1217, %v1463
      %v1465 = vpop.f32.mrf.mxu0
      %1466 = vdwg.mxu0
      %1467 = vmatpush.bf16.msra.mxu0 0
      %1468 = vmatpush.bf16.msra.mxu0 0
      %1469 = vmatpush.bf16.msra.mxu0 0
      %1470 = vmatpush.bf16.msra.mxu0 %v1414
      %1471 = vmatpush.bf16.msra.mxu0 %v1354
      %1472 = vmatpush.bf16.msra.mxu0 %v1346
      %1473 = vmatpush.bf16.msra.mxu0 %v1338
      %1474 = vmatpush.bf16.msra.mxu0 %v1330
      %1475 = vmatmul.bf16.gmra.mxu0 %v1401
      %v1476 = vpop.f32.mrf.mxu0
      %v1477 = vadd.f32 %v1217, %v1476
      %v1478 = vpop.f32.mrf.mxu0
      %1479 = vdwg.mxu0
      %1480 = vmatpush.bf16.msra.mxu0 0
      %1481 = vmatpush.bf16.msra.mxu0 0
      %1482 = vmatpush.bf16.msra.mxu0 0
      %1483 = vmatpush.bf16.msra.mxu0 %v1417
      %1484 = vmatpush.bf16.msra.mxu0 %v1355
      %1485 = vmatpush.bf16.msra.mxu0 %v1347
      %1486 = vmatpush.bf16.msra.mxu0 %v1339
      %1487 = vmatpush.bf16.msra.mxu0 %v1331
      %1488 = vmatmul.bf16.gmra.mxu0 %v1401
      %v1489 = vpop.f32.mrf.mxu0
      %v1490 = vadd.f32 %v1217, %v1489
      %v1491 = vpop.f32.mrf.mxu0
      %1492 = vdwg.mxu0
      %1493 = vmatpush.bf16.msra.mxu0 0
      %1494 = vmatpush.bf16.msra.mxu0 0
      %1495 = vmatpush.bf16.msra.mxu0 0
      %1496 = vmatpush.bf16.msra.mxu0 %v1420
      %1497 = vmatpush.bf16.msra.mxu0 %v1356
      %1498 = vmatpush.bf16.msra.mxu0 %v1348
      %1499 = vmatpush.bf16.msra.mxu0 %v1340
      %1500 = vmatpush.bf16.msra.mxu0 %v1332
      %1501 = vmatmul.bf16.gmra.mxu0 %v1401
      %v1502 = vpop.f32.mrf.mxu0
      %v1503 = vadd.f32 %v1217, %v1502
      %v1504 = vpop.f32.mrf.mxu0
      %1505 = vdwg.mxu0
      %1506 = vmatpush.bf16.msra.mxu0 0
      %1507 = vmatpush.bf16.msra.mxu0 0
      %1508 = vmatpush.bf16.msra.mxu0 0
      %1509 = vmatpush.bf16.msra.mxu0 %v1423
      %1510 = vmatpush.bf16.msra.mxu0 %v1357
      %1511 = vmatpush.bf16.msra.mxu0 %v1349
      %1512 = vmatpush.bf16.msra.mxu0 %v1341
      %1513 = vmatpush.bf16.msra.mxu0 %v1333
      %1514 = vmatmul.bf16.gmra.mxu0 %v1401
      %v1515 = vpop.f32.mrf.mxu0
      %v1516 = vadd.f32 %v1217, %v1515
      %v1517 = vpop.f32.mrf.mxu0
      %1518 = vdwg.mxu0
      %1519 = vmatpush.bf16.msra.mxu0 0
      %1520 = vmatpush.bf16.msra.mxu0 0
      %1521 = vmatpush.bf16.msra.mxu0 0
      %1522 = vmatpush.bf16.msra.mxu0 %v1426
      %1523 = vmatpush.bf16.msra.mxu0 %v1358
      %1524 = vmatpush.bf16.msra.mxu0 %v1350
      %1525 = vmatpush.bf16.msra.mxu0 %v1342
      %1526 = vmatpush.bf16.msra.mxu0 %v1334
      %1527 = vmatmul.bf16.gmra.mxu0 %v1401
      %v1528 = vpop.f32.mrf.mxu0
      %v1529 = vadd.f32 %v1217, %v1528
      %v1530 = vpop.f32.mrf.mxu0
      %1531 = vdwg.mxu0
      %v1532 = vmax.f32 %v1438, 0.0
      %v1533 = vmax.f32 %v1451, 0.0
      %v1534 = vmax.f32 %v1464, 0.0
      %v1535 = vmax.f32 %v1477, 0.0
      %v1536 = vmax.f32 %v1490, 0.0
      %v1537 = vmax.f32 %v1503, 0.0
      %v1538 = vmax.f32 %v1516, 0.0
      %v1539 = vmax.f32 %v1529, 0.0
      %1540 = vrot.lane.b32.xlu0 %v1532, 17
      %v1541 = vpop.permute.xlu0 %1540
      %1542 = vrot.lane.b32.xlu0 %v1533, 17
      %v1543 = vpop.permute.xlu0 %1542
      %1544 = vrot.lane.b32.xlu0 %v1534, 17
      %v1545 = vpop.permute.xlu0 %1544
      %1546 = vrot.lane.b32.xlu0 %v1535, 17
      %v1547 = vpop.permute.xlu0 %1546
      %1548 = vrot.lane.b32.xlu0 %v1536, 17
      %v1549 = vpop.permute.xlu0 %1548
      %1550 = vrot.lane.b32.xlu0 %v1537, 17
      %v1551 = vpop.permute.xlu0 %1550
      %1552 = vrot.lane.b32.xlu0 %v1538, 17
      %v1553 = vpop.permute.xlu0 %1552
      %1554 = vrot.lane.b32.xlu0 %v1539, 17
      %v1555 = vpop.permute.xlu0 %1554
      %v1556 = vsel %vm768, %v1553, %v1555
      %v1557 = vsel %vm768, %v1551, %v1553
      %v1558 = vsel %vm768, %v1549, %v1551
      %v1559 = vsel %vm768, %v1547, %v1549
      %v1560 = vsel %vm768, %v1545, %v1547
      %v1561 = vsel %vm768, %v1543, %v1545
      %v1562 = vsel %vm768, %v1541, %v1543
      %v1563 = vsel %vm768, %v1555, %v1541
      %v1564 = vld [vmem:[%s2] ss:$8 sm:$0xf]
      %v1565 = vld [vmem:[%s2] ss:$8 sm:$0xf0]
      %v1566 = vor.u32 %v1564, %v1565
      %v1568 = vperm.slane %v1566, 0
      %v1569 = vperm.slane %v1566, 1
      %v1570 = vperm.slane %v1566, 2
      %v1571 = vperm.slane %v1566, 3
      %v1572 = vperm.slane %v1566, 4
      %v1573 = vperm.slane %v1566, 5
      %v1574 = vperm.slane %v1566, 6
      %v1575 = vperm.slane %v1566, 7
      %v1584 = vmul.f32 %v1563, %v1568
      %v1585 = vmul.f32 %v1562, %v1569
      %v1586 = vmul.f32 %v1561, %v1570
      %v1587 = vmul.f32 %v1560, %v1571
      %v1588 = vmul.f32 %v1559, %v1572
      %v1589 = vmul.f32 %v1558, %v1573
      %v1590 = vmul.f32 %v1557, %v1574
      %v1591 = vmul.f32 %v1556, %v1575
      %v1592 = vld [vmem:[%s8] sm:$0xff]
      %1594 = vset.pattern.permute.xlu0 0
      %1595 = vperm.xlu0 %1594, %v1592
      %v1596 = vpop.permute.xlu0 %1595
      %v1598 = vmul.f32 %v1584, %v1596
      %v1599 = vmul.f32 %v1585, %v1596
      %v1600 = vmul.f32 %v1586, %v1596
      %v1601 = vmul.f32 %v1587, %v1596
      %v1602 = vmul.f32 %v1588, %v1596
      %v1603 = vmul.f32 %v1589, %v1596
      %v1604 = vmul.f32 %v1590, %v1596
      %v1605 = vmul.f32 %v1591, %v1596
      %v1606 = vadd.f32 %v1598, 0.0
      %v1607 = vadd.f32 %v1599, 0.0
      %v1608 = vadd.f32 %v1600, 0.0
      %v1609 = vadd.f32 %v1601, 0.0
      %v1610 = vadd.f32 %v1602, 0.0
      %v1611 = vadd.f32 %v1603, 0.0
      %v1612 = vadd.f32 %v1604, 0.0
      %v1613 = vadd.f32 %v1605, 0.0
      %1614 = vrot.lane.b32.xlu0 %v1532, 16
      %v1615 = vpop.permute.xlu0 %1614
      %1616 = vrot.lane.b32.xlu0 %v1533, 16
      %v1617 = vpop.permute.xlu0 %1616
      %1618 = vrot.lane.b32.xlu0 %v1534, 16
      %v1619 = vpop.permute.xlu0 %1618
      %1620 = vrot.lane.b32.xlu0 %v1535, 16
      %v1621 = vpop.permute.xlu0 %1620
      %1622 = vrot.lane.b32.xlu0 %v1536, 16
      %v1623 = vpop.permute.xlu0 %1622
      %1624 = vrot.lane.b32.xlu0 %v1537, 16
      %v1625 = vpop.permute.xlu0 %1624
      %1626 = vrot.lane.b32.xlu0 %v1538, 16
      %v1627 = vpop.permute.xlu0 %1626
      %1628 = vrot.lane.b32.xlu0 %v1539, 16
      %v1629 = vpop.permute.xlu0 %1628
      %v1630 = vsel %vm829, %v1627, %v1629
      %v1631 = vsel %vm829, %v1625, %v1627
      %v1632 = vsel %vm829, %v1623, %v1625
      %v1633 = vsel %vm829, %v1621, %v1623
      %v1634 = vsel %vm829, %v1619, %v1621
      %v1635 = vsel %vm829, %v1617, %v1619
      %v1636 = vsel %vm829, %v1615, %v1617
      %v1637 = vsel %vm829, %v1629, %v1615
      %v1638 = vld [vmem:[%s838] ss:$8 sm:$0xf]
      %v1639 = vld [vmem:[%s838] ss:$8 sm:$0xf0]
      %v1640 = vor.u32 %v1638, %v1639
      %v1642 = vperm.slane %v1640, 0
      %v1643 = vperm.slane %v1640, 1
      %v1644 = vperm.slane %v1640, 2
      %v1645 = vperm.slane %v1640, 3
      %v1646 = vperm.slane %v1640, 4
      %v1647 = vperm.slane %v1640, 5
      %v1648 = vperm.slane %v1640, 6
      %v1649 = vperm.slane %v1640, 7
      %v1658 = vmul.f32 %v1637, %v1642
      %v1659 = vmul.f32 %v1636, %v1643
      %v1660 = vmul.f32 %v1635, %v1644
      %v1661 = vmul.f32 %v1634, %v1645
      %v1662 = vmul.f32 %v1633, %v1646
      %v1663 = vmul.f32 %v1632, %v1647
      %v1664 = vmul.f32 %v1631, %v1648
      %v1665 = vmul.f32 %v1630, %v1649
      %1666 = vset.pattern.permute.xlu0 1
      %1667 = vperm.xlu0 %1666, %v1592
      %v1668 = vpop.permute.xlu0 %1667
      %v1670 = vmul.f32 %v1658, %v1668
      %v1671 = vmul.f32 %v1659, %v1668
      %v1672 = vmul.f32 %v1660, %v1668
      %v1673 = vmul.f32 %v1661, %v1668
      %v1674 = vmul.f32 %v1662, %v1668
      %v1675 = vmul.f32 %v1663, %v1668
      %v1676 = vmul.f32 %v1664, %v1668
      %v1677 = vmul.f32 %v1665, %v1668
      %v1678 = vadd.f32 %v1606, %v1670
      %v1679 = vadd.f32 %v1607, %v1671
      %v1680 = vadd.f32 %v1608, %v1672
      %v1681 = vadd.f32 %v1609, %v1673
      %v1682 = vadd.f32 %v1610, %v1674
      %v1683 = vadd.f32 %v1611, %v1675
      %v1684 = vadd.f32 %v1612, %v1676
      %v1685 = vadd.f32 %v1613, %v1677
      %1686 = vrot.lane.b32.xlu0 %v1532, 15
      %v1687 = vpop.permute.xlu0 %1686
      %1688 = vrot.lane.b32.xlu0 %v1533, 15
      %v1689 = vpop.permute.xlu0 %1688
      %1690 = vrot.lane.b32.xlu0 %v1534, 15
      %v1691 = vpop.permute.xlu0 %1690
      %1692 = vrot.lane.b32.xlu0 %v1535, 15
      %v1693 = vpop.permute.xlu0 %1692
      %1694 = vrot.lane.b32.xlu0 %v1536, 15
      %v1695 = vpop.permute.xlu0 %1694
      %1696 = vrot.lane.b32.xlu0 %v1537, 15
      %v1697 = vpop.permute.xlu0 %1696
      %1698 = vrot.lane.b32.xlu0 %v1538, 15
      %v1699 = vpop.permute.xlu0 %1698
      %1700 = vrot.lane.b32.xlu0 %v1539, 15
      %v1701 = vpop.permute.xlu0 %1700
      %v1702 = vsel %vm891, %v1699, %v1701
      %v1703 = vsel %vm891, %v1697, %v1699
      %v1704 = vsel %vm891, %v1695, %v1697
      %v1705 = vsel %vm891, %v1693, %v1695
      %v1706 = vsel %vm891, %v1691, %v1693
      %v1707 = vsel %vm891, %v1689, %v1691
      %v1708 = vsel %vm891, %v1687, %v1689
      %v1709 = vsel %vm891, %v1701, %v1687
      %v1710 = vld [vmem:[%s900] ss:$8 sm:$0xf]
      %v1711 = vld [vmem:[%s900] ss:$8 sm:$0xf0]
      %v1712 = vor.u32 %v1710, %v1711
      %v1714 = vperm.slane %v1712, 0
      %v1715 = vperm.slane %v1712, 1
      %v1716 = vperm.slane %v1712, 2
      %v1717 = vperm.slane %v1712, 3
      %v1718 = vperm.slane %v1712, 4
      %v1719 = vperm.slane %v1712, 5
      %v1720 = vperm.slane %v1712, 6
      %v1721 = vperm.slane %v1712, 7
      %v1730 = vmul.f32 %v1709, %v1714
      %v1731 = vmul.f32 %v1708, %v1715
      %v1732 = vmul.f32 %v1707, %v1716
      %v1733 = vmul.f32 %v1706, %v1717
      %v1734 = vmul.f32 %v1705, %v1718
      %v1735 = vmul.f32 %v1704, %v1719
      %v1736 = vmul.f32 %v1703, %v1720
      %v1737 = vmul.f32 %v1702, %v1721
      %1738 = vset.pattern.permute.xlu0 2
      %1739 = vperm.xlu0 %1738, %v1592
      %v1740 = vpop.permute.xlu0 %1739
      %v1742 = vmul.f32 %v1730, %v1740
      %v1743 = vmul.f32 %v1731, %v1740
      %v1744 = vmul.f32 %v1732, %v1740
      %v1745 = vmul.f32 %v1733, %v1740
      %v1746 = vmul.f32 %v1734, %v1740
      %v1747 = vmul.f32 %v1735, %v1740
      %v1748 = vmul.f32 %v1736, %v1740
      %v1749 = vmul.f32 %v1737, %v1740
      %v1750 = vadd.f32 %v1678, %v1742
      %v1751 = vadd.f32 %v1679, %v1743
      %v1752 = vadd.f32 %v1680, %v1744
      %v1753 = vadd.f32 %v1681, %v1745
      %v1754 = vadd.f32 %v1682, %v1746
      %v1755 = vadd.f32 %v1683, %v1747
      %v1756 = vadd.f32 %v1684, %v1748
      %v1757 = vadd.f32 %v1685, %v1749
      %1758 = vrot.lane.b32.xlu0 %v1532, 1
      %v1759 = vpop.permute.xlu0 %1758
      %1760 = vrot.lane.b32.xlu0 %v1533, 1
      %v1761 = vpop.permute.xlu0 %1760
      %1762 = vrot.lane.b32.xlu0 %v1534, 1
      %v1763 = vpop.permute.xlu0 %1762
      %1764 = vrot.lane.b32.xlu0 %v1535, 1
      %v1765 = vpop.permute.xlu0 %1764
      %1766 = vrot.lane.b32.xlu0 %v1536, 1
      %v1767 = vpop.permute.xlu0 %1766
      %1768 = vrot.lane.b32.xlu0 %v1537, 1
      %v1769 = vpop.permute.xlu0 %1768
      %1770 = vrot.lane.b32.xlu0 %v1538, 1
      %v1771 = vpop.permute.xlu0 %1770
      %1772 = vrot.lane.b32.xlu0 %v1539, 1
      %v1773 = vpop.permute.xlu0 %1772
      %v1774 = vsel %vm953, %v1771, %v1773
      %v1775 = vsel %vm953, %v1769, %v1771
      %v1776 = vsel %vm953, %v1767, %v1769
      %v1777 = vsel %vm953, %v1765, %v1767
      %v1778 = vsel %vm953, %v1763, %v1765
      %v1779 = vsel %vm953, %v1761, %v1763
      %v1780 = vsel %vm953, %v1759, %v1761
      %v1781 = vsel %vm953, %v1773, %v1759
      %v1782 = vld [vmem:[%s962] ss:$8 sm:$0xf]
      %v1783 = vld [vmem:[%s962] ss:$8 sm:$0xf0]
      %v1784 = vor.u32 %v1782, %v1783
      %v1786 = vperm.slane %v1784, 0
      %v1787 = vperm.slane %v1784, 1
      %v1788 = vperm.slane %v1784, 2
      %v1789 = vperm.slane %v1784, 3
      %v1790 = vperm.slane %v1784, 4
      %v1791 = vperm.slane %v1784, 5
      %v1792 = vperm.slane %v1784, 6
      %v1793 = vperm.slane %v1784, 7
      %v1802 = vmul.f32 %v1781, %v1786
      %v1803 = vmul.f32 %v1780, %v1787
      %v1804 = vmul.f32 %v1779, %v1788
      %v1805 = vmul.f32 %v1778, %v1789
      %v1806 = vmul.f32 %v1777, %v1790
      %v1807 = vmul.f32 %v1776, %v1791
      %v1808 = vmul.f32 %v1775, %v1792
      %v1809 = vmul.f32 %v1774, %v1793
      %1810 = vset.pattern.permute.xlu0 3
      %1811 = vperm.xlu0 %1810, %v1592
      %v1812 = vpop.permute.xlu0 %1811
      %v1814 = vmul.f32 %v1802, %v1812
      %v1815 = vmul.f32 %v1803, %v1812
      %v1816 = vmul.f32 %v1804, %v1812
      %v1817 = vmul.f32 %v1805, %v1812
      %v1818 = vmul.f32 %v1806, %v1812
      %v1819 = vmul.f32 %v1807, %v1812
      %v1820 = vmul.f32 %v1808, %v1812
      %v1821 = vmul.f32 %v1809, %v1812
      %v1822 = vadd.f32 %v1750, %v1814
      %v1823 = vadd.f32 %v1751, %v1815
      %v1824 = vadd.f32 %v1752, %v1816
      %v1825 = vadd.f32 %v1753, %v1817
      %v1826 = vadd.f32 %v1754, %v1818
      %v1827 = vadd.f32 %v1755, %v1819
      %v1828 = vadd.f32 %v1756, %v1820
      %v1829 = vadd.f32 %v1757, %v1821
      %1830 = vset.pattern.permute.xlu0 4
      %1831 = vperm.xlu0 %1830, %v1592
      %v1832 = vpop.permute.xlu0 %1831
      %v1834 = vmul.f32 %v1532, %v1832
      %v1835 = vmul.f32 %v1533, %v1832
      %v1836 = vmul.f32 %v1534, %v1832
      %v1837 = vmul.f32 %v1535, %v1832
      %v1838 = vmul.f32 %v1536, %v1832
      %v1839 = vmul.f32 %v1537, %v1832
      %v1840 = vmul.f32 %v1538, %v1832
      %v1841 = vmul.f32 %v1539, %v1832
      %v1842 = vadd.f32 %v1822, %v1834
      %v1843 = vadd.f32 %v1823, %v1835
      %v1844 = vadd.f32 %v1824, %v1836
      %v1845 = vadd.f32 %v1825, %v1837
      %v1846 = vadd.f32 %v1826, %v1838
      %v1847 = vadd.f32 %v1827, %v1839
      %v1848 = vadd.f32 %v1828, %v1840
      %v1849 = vadd.f32 %v1829, %v1841
      %1850 = vrot.lane.b32.xlu0 %v1532, 127
      %v1851 = vpop.permute.xlu0 %1850
      %1852 = vrot.lane.b32.xlu0 %v1533, 127
      %v1853 = vpop.permute.xlu0 %1852
      %1854 = vrot.lane.b32.xlu0 %v1534, 127
      %v1855 = vpop.permute.xlu0 %1854
      %1856 = vrot.lane.b32.xlu0 %v1535, 127
      %v1857 = vpop.permute.xlu0 %1856
      %1858 = vrot.lane.b32.xlu0 %v1536, 127
      %v1859 = vpop.permute.xlu0 %1858
      %1860 = vrot.lane.b32.xlu0 %v1537, 127
      %v1861 = vpop.permute.xlu0 %1860
      %1862 = vrot.lane.b32.xlu0 %v1538, 127
      %v1863 = vpop.permute.xlu0 %1862
      %1864 = vrot.lane.b32.xlu0 %v1539, 127
      %v1865 = vpop.permute.xlu0 %1864
      %v1866 = vsel %vm661, %v1863, %v1865
      %v1867 = vsel %vm661, %v1861, %v1863
      %v1868 = vsel %vm661, %v1859, %v1861
      %v1869 = vsel %vm661, %v1857, %v1859
      %v1870 = vsel %vm661, %v1855, %v1857
      %v1871 = vsel %vm661, %v1853, %v1855
      %v1872 = vsel %vm661, %v1851, %v1853
      %v1873 = vsel %vm661, %v1865, %v1851
      %v1874 = vld [vmem:[%s1003] ss:$8 sm:$0xf]
      %v1875 = vld [vmem:[%s1003] ss:$8 sm:$0xf0]
      %v1876 = vor.u32 %v1874, %v1875
      %v1878 = vperm.slane %v1876, 0
      %v1879 = vperm.slane %v1876, 1
      %v1880 = vperm.slane %v1876, 2
      %v1881 = vperm.slane %v1876, 3
      %v1882 = vperm.slane %v1876, 4
      %v1883 = vperm.slane %v1876, 5
      %v1884 = vperm.slane %v1876, 6
      %v1885 = vperm.slane %v1876, 7
      %v1894 = vmul.f32 %v1872, %v1878
      %v1895 = vmul.f32 %v1871, %v1879
      %v1896 = vmul.f32 %v1870, %v1880
      %v1897 = vmul.f32 %v1869, %v1881
      %v1898 = vmul.f32 %v1868, %v1882
      %v1899 = vmul.f32 %v1867, %v1883
      %v1900 = vmul.f32 %v1866, %v1884
      %v1901 = vmul.f32 %v1873, %v1885
      %1902 = vset.pattern.permute.xlu0 5
      %1903 = vperm.xlu0 %1902, %v1592
      %v1904 = vpop.permute.xlu0 %1903
      %v1906 = vmul.f32 %v1894, %v1904
      %v1907 = vmul.f32 %v1895, %v1904
      %v1908 = vmul.f32 %v1896, %v1904
      %v1909 = vmul.f32 %v1897, %v1904
      %v1910 = vmul.f32 %v1898, %v1904
      %v1911 = vmul.f32 %v1899, %v1904
      %v1912 = vmul.f32 %v1900, %v1904
      %v1913 = vmul.f32 %v1901, %v1904
      %v1914 = vadd.f32 %v1842, %v1906
      %v1915 = vadd.f32 %v1843, %v1907
      %v1916 = vadd.f32 %v1844, %v1908
      %v1917 = vadd.f32 %v1845, %v1909
      %v1918 = vadd.f32 %v1846, %v1910
      %v1919 = vadd.f32 %v1847, %v1911
      %v1920 = vadd.f32 %v1848, %v1912
      %v1921 = vadd.f32 %v1849, %v1913
      %1922 = vrot.lane.b32.xlu0 %v1532, 113
      %v1923 = vpop.permute.xlu0 %1922
      %1924 = vrot.lane.b32.xlu0 %v1533, 113
      %v1925 = vpop.permute.xlu0 %1924
      %1926 = vrot.lane.b32.xlu0 %v1534, 113
      %v1927 = vpop.permute.xlu0 %1926
      %1928 = vrot.lane.b32.xlu0 %v1535, 113
      %v1929 = vpop.permute.xlu0 %1928
      %1930 = vrot.lane.b32.xlu0 %v1536, 113
      %v1931 = vpop.permute.xlu0 %1930
      %1932 = vrot.lane.b32.xlu0 %v1537, 113
      %v1933 = vpop.permute.xlu0 %1932
      %1934 = vrot.lane.b32.xlu0 %v1538, 113
      %v1935 = vpop.permute.xlu0 %1934
      %1936 = vrot.lane.b32.xlu0 %v1539, 113
      %v1937 = vpop.permute.xlu0 %1936
      %v1938 = vsel %vm1056, %v1935, %v1937
      %v1939 = vsel %vm1056, %v1933, %v1935
      %v1940 = vsel %vm1056, %v1931, %v1933
      %v1941 = vsel %vm1056, %v1929, %v1931
      %v1942 = vsel %vm1056, %v1927, %v1929
      %v1943 = vsel %vm1056, %v1925, %v1927
      %v1944 = vsel %vm1056, %v1923, %v1925
      %v1945 = vsel %vm1056, %v1937, %v1923
      %v1946 = vld [vmem:[%s1065] ss:$8 sm:$0xf]
      %v1947 = vld [vmem:[%s1065] ss:$8 sm:$0xf0]
      %v1948 = vor.u32 %v1946, %v1947
      %v1950 = vperm.slane %v1948, 0
      %v1951 = vperm.slane %v1948, 1
      %v1952 = vperm.slane %v1948, 2
      %v1953 = vperm.slane %v1948, 3
      %v1954 = vperm.slane %v1948, 4
      %v1955 = vperm.slane %v1948, 5
      %v1956 = vperm.slane %v1948, 6
      %v1957 = vperm.slane %v1948, 7
      %v1966 = vmul.f32 %v1944, %v1950
      %v1967 = vmul.f32 %v1943, %v1951
      %v1968 = vmul.f32 %v1942, %v1952
      %v1969 = vmul.f32 %v1941, %v1953
      %v1970 = vmul.f32 %v1940, %v1954
      %v1971 = vmul.f32 %v1939, %v1955
      %v1972 = vmul.f32 %v1938, %v1956
      %v1973 = vmul.f32 %v1945, %v1957
      %1974 = vset.pattern.permute.xlu0 6
      %1975 = vperm.xlu0 %1974, %v1592
      %v1976 = vpop.permute.xlu0 %1975
      %v1978 = vmul.f32 %v1966, %v1976
      %v1979 = vmul.f32 %v1967, %v1976
      %v1980 = vmul.f32 %v1968, %v1976
      %v1981 = vmul.f32 %v1969, %v1976
      %v1982 = vmul.f32 %v1970, %v1976
      %v1983 = vmul.f32 %v1971, %v1976
      %v1984 = vmul.f32 %v1972, %v1976
      %v1985 = vmul.f32 %v1973, %v1976
      %v1986 = vadd.f32 %v1914, %v1978
      %v1987 = vadd.f32 %v1915, %v1979
      %v1988 = vadd.f32 %v1916, %v1980
      %v1989 = vadd.f32 %v1917, %v1981
      %v1990 = vadd.f32 %v1918, %v1982
      %v1991 = vadd.f32 %v1919, %v1983
      %v1992 = vadd.f32 %v1920, %v1984
      %v1993 = vadd.f32 %v1921, %v1985
      %1994 = vrot.lane.b32.xlu0 %v1532, 112
      %v1995 = vpop.permute.xlu0 %1994
      %1996 = vrot.lane.b32.xlu0 %v1533, 112
      %v1997 = vpop.permute.xlu0 %1996
      %1998 = vrot.lane.b32.xlu0 %v1534, 112
      %v1999 = vpop.permute.xlu0 %1998
      %2000 = vrot.lane.b32.xlu0 %v1535, 112
      %v2001 = vpop.permute.xlu0 %2000
      %2002 = vrot.lane.b32.xlu0 %v1536, 112
      %v2003 = vpop.permute.xlu0 %2002
      %2004 = vrot.lane.b32.xlu0 %v1537, 112
      %v2005 = vpop.permute.xlu0 %2004
      %2006 = vrot.lane.b32.xlu0 %v1538, 112
      %v2007 = vpop.permute.xlu0 %2006
      %2008 = vrot.lane.b32.xlu0 %v1539, 112
      %v2009 = vpop.permute.xlu0 %2008
      %v2010 = vsel %vm694, %v2007, %v2009
      %v2011 = vsel %vm694, %v2005, %v2007
      %v2012 = vsel %vm694, %v2003, %v2005
      %v2013 = vsel %vm694, %v2001, %v2003
      %v2014 = vsel %vm694, %v1999, %v2001
      %v2015 = vsel %vm694, %v1997, %v1999
      %v2016 = vsel %vm694, %v1995, %v1997
      %v2017 = vsel %vm694, %v2009, %v1995
      %v2018 = vld [vmem:[%s1102] ss:$8 sm:$0xf]
      %v2019 = vld [vmem:[%s1102] ss:$8 sm:$0xf0]
      %v2020 = vor.u32 %v2018, %v2019
      %v2022 = vperm.slane %v2020, 0
      %v2023 = vperm.slane %v2020, 1
      %v2024 = vperm.slane %v2020, 2
      %v2025 = vperm.slane %v2020, 3
      %v2026 = vperm.slane %v2020, 4
      %v2027 = vperm.slane %v2020, 5
      %v2028 = vperm.slane %v2020, 6
      %v2029 = vperm.slane %v2020, 7
      %v2038 = vmul.f32 %v2016, %v2022
      %v2039 = vmul.f32 %v2015, %v2023
      %v2040 = vmul.f32 %v2014, %v2024
      %v2041 = vmul.f32 %v2013, %v2025
      %v2042 = vmul.f32 %v2012, %v2026
      %v2043 = vmul.f32 %v2011, %v2027
      %v2044 = vmul.f32 %v2010, %v2028
      %v2045 = vmul.f32 %v2017, %v2029
      %2046 = vset.pattern.permute.xlu0 7
      %2047 = vperm.xlu0 %2046, %v1592
      %v2048 = vpop.permute.xlu0 %2047
      %v2050 = vmul.f32 %v2038, %v2048
      %v2051 = vmul.f32 %v2039, %v2048
      %v2052 = vmul.f32 %v2040, %v2048
      %v2053 = vmul.f32 %v2041, %v2048
      %v2054 = vmul.f32 %v2042, %v2048
      %v2055 = vmul.f32 %v2043, %v2048
      %v2056 = vmul.f32 %v2044, %v2048
      %v2057 = vmul.f32 %v2045, %v2048
      %v2058 = vadd.f32 %v1986, %v2050
      %v2059 = vadd.f32 %v1987, %v2051
      %v2060 = vadd.f32 %v1988, %v2052
      %v2061 = vadd.f32 %v1989, %v2053
      %v2062 = vadd.f32 %v1990, %v2054
      %v2063 = vadd.f32 %v1991, %v2055
      %v2064 = vadd.f32 %v1992, %v2056
      %v2065 = vadd.f32 %v1993, %v2057
      %2066 = vrot.lane.b32.xlu0 %v1532, 111
      %v2067 = vpop.permute.xlu0 %2066
      %2068 = vrot.lane.b32.xlu0 %v1533, 111
      %v2069 = vpop.permute.xlu0 %2068
      %2070 = vrot.lane.b32.xlu0 %v1534, 111
      %v2071 = vpop.permute.xlu0 %2070
      %2072 = vrot.lane.b32.xlu0 %v1535, 111
      %v2073 = vpop.permute.xlu0 %2072
      %2074 = vrot.lane.b32.xlu0 %v1536, 111
      %v2075 = vpop.permute.xlu0 %2074
      %2076 = vrot.lane.b32.xlu0 %v1537, 111
      %v2077 = vpop.permute.xlu0 %2076
      %2078 = vrot.lane.b32.xlu0 %v1538, 111
      %v2079 = vpop.permute.xlu0 %2078
      %2080 = vrot.lane.b32.xlu0 %v1539, 111
      %v2081 = vpop.permute.xlu0 %2080
      %v2082 = vsel %vm727, %v2079, %v2081
      %v2083 = vsel %vm727, %v2077, %v2079
      %v2084 = vsel %vm727, %v2075, %v2077
      %v2085 = vsel %vm727, %v2073, %v2075
      %v2086 = vsel %vm727, %v2071, %v2073
      %v2087 = vsel %vm727, %v2069, %v2071
      %v2088 = vsel %vm727, %v2067, %v2069
      %v2089 = vsel %vm727, %v2081, %v2067
      %v2090 = vld [vmem:[%s1139] ss:$8 sm:$0xf]
      %v2091 = vld [vmem:[%s1139] ss:$8 sm:$0xf0]
      %v2092 = vor.u32 %v2090, %v2091
      %v2094 = vperm.slane %v2092, 0
      %v2095 = vperm.slane %v2092, 1
      %v2096 = vperm.slane %v2092, 2
      %v2097 = vperm.slane %v2092, 3
      %v2098 = vperm.slane %v2092, 4
      %v2099 = vperm.slane %v2092, 5
      %v2100 = vperm.slane %v2092, 6
      %v2101 = vperm.slane %v2092, 7
      %v2110 = vmul.f32 %v2088, %v2094
      %v2111 = vmul.f32 %v2087, %v2095
      %v2112 = vmul.f32 %v2086, %v2096
      %v2113 = vmul.f32 %v2085, %v2097
      %v2114 = vmul.f32 %v2084, %v2098
      %v2115 = vmul.f32 %v2083, %v2099
      %v2116 = vmul.f32 %v2082, %v2100
      %v2117 = vmul.f32 %v2089, %v2101
      %2118 = vset.pattern.permute.xlu0 8
      %2119 = vperm.xlu0 %2118, %v1592
      %v2120 = vpop.permute.xlu0 %2119
      %v2122 = vmul.f32 %v2110, %v2120
      %v2123 = vmul.f32 %v2111, %v2120
      %v2124 = vmul.f32 %v2112, %v2120
      %v2125 = vmul.f32 %v2113, %v2120
      %v2126 = vmul.f32 %v2114, %v2120
      %v2127 = vmul.f32 %v2115, %v2120
      %v2128 = vmul.f32 %v2116, %v2120
      %v2129 = vmul.f32 %v2117, %v2120
      %v2130 = vadd.f32 %v2058, %v2122
      %v2131 = vadd.f32 %v2059, %v2123
      %v2132 = vadd.f32 %v2060, %v2124
      %v2133 = vadd.f32 %v2061, %v2125
      %v2134 = vadd.f32 %v2062, %v2126
      %v2135 = vadd.f32 %v2063, %v2127
      %v2136 = vadd.f32 %v2064, %v2128
      %v2137 = vadd.f32 %v2065, %v2129
      %v2138 = vld [vmem:[%s9] sm:$0xff]
      %2140 = vset.pattern.permute.xlu0 0
      %2141 = vperm.xlu0 %2140, %v2138
      %v2142 = vpop.permute.xlu0 %2141
      %v2144 = vadd.f32 %v2130, %v2142
      %v2145 = vadd.f32 %v2131, %v2142
      %v2146 = vadd.f32 %v2132, %v2142
      %v2147 = vadd.f32 %v2133, %v2142
      %v2148 = vadd.f32 %v2134, %v2142
      %v2149 = vadd.f32 %v2135, %v2142
      %v2150 = vadd.f32 %v2136, %v2142
      %v2151 = vadd.f32 %v2137, %v2142
      %v2152 = vmax.f32 %v2144, 0.0
      %v2153 = vmax.f32 %v2145, 0.0
      %v2154 = vmax.f32 %v2146, 0.0
      %v2155 = vmax.f32 %v2147, 0.0
      %v2156 = vmax.f32 %v2148, 0.0
      %v2157 = vmax.f32 %v2149, 0.0
      %v2158 = vmax.f32 %v2150, 0.0
      %v2159 = vmax.f32 %v2151, 0.0
      %2160 = vrot.lane.b32.xlu0 %v744, 34
      %v2161 = vpop.permute.xlu0 %2160
      %2162 = vrot.lane.b32.xlu0 %v745, 34
      %v2163 = vpop.permute.xlu0 %2162
      %2164 = vrot.lane.b32.xlu0 %v746, 34
      %v2165 = vpop.permute.xlu0 %2164
      %2166 = vrot.lane.b32.xlu0 %v747, 34
      %v2167 = vpop.permute.xlu0 %2166
      %2168 = vrot.lane.b32.xlu0 %v748, 34
      %v2169 = vpop.permute.xlu0 %2168
      %2170 = vrot.lane.b32.xlu0 %v749, 34
      %v2171 = vpop.permute.xlu0 %2170
      %2172 = vrot.lane.b32.xlu0 %v750, 34
      %v2173 = vpop.permute.xlu0 %2172
      %2174 = vrot.lane.b32.xlu0 %v751, 34
      %v2175 = vpop.permute.xlu0 %2174
      %vm2176 = vcmp.lt.s32.totalorder %v660, 34
      %v2177 = vsel %vm2176, %v2173, %v2175
      %v2178 = vsel %vm2176, %v2171, %v2173
      %v2179 = vsel %vm2176, %v2169, %v2171
      %v2180 = vsel %vm2176, %v2167, %v2169
      %v2181 = vsel %vm2176, %v2165, %v2167
      %v2182 = vsel %vm2176, %v2163, %v2165
      %v2183 = vsel %vm2176, %v2161, %v2163
      %v2184 = vsel %vm2176, %v2175, %v2161
      %v2185 = vld [vmem:[%s3] ss:$8 sm:$0xf]
      %v2186 = vld [vmem:[%s3] ss:$8 sm:$0xf0]
      %v2187 = vor.u32 %v2185, %v2186
      %v2189 = vperm.slane %v2187, 0
      %v2190 = vperm.slane %v2187, 1
      %v2191 = vperm.slane %v2187, 2
      %v2192 = vperm.slane %v2187, 3
      %v2193 = vperm.slane %v2187, 4
      %v2194 = vperm.slane %v2187, 5
      %v2195 = vperm.slane %v2187, 6
      %v2196 = vperm.slane %v2187, 7
      %v2205 = vmul.f32 %v2184, %v2189
      %v2206 = vmul.f32 %v2183, %v2190
      %v2207 = vmul.f32 %v2182, %v2191
      %v2208 = vmul.f32 %v2181, %v2192
      %v2209 = vmul.f32 %v2180, %v2193
      %v2210 = vmul.f32 %v2179, %v2194
      %v2211 = vmul.f32 %v2178, %v2195
      %v2212 = vmul.f32 %v2177, %v2196
      %v2213 = vpack.c.bf16 %v2206, %v2205
      %v2214 = vpack.c.bf16 %v2208, %v2207
      %v2215 = vpack.c.bf16 %v2210, %v2209
      %v2216 = vpack.c.bf16 %v2212, %v2211
      %2217 = vst [vmem:[#allocation2] sm:$0xff] %v2213
      %2218 = vst [vmem:[#allocation2 + $0x8] sm:$0xff] %v2214
      %2219 = vst [vmem:[#allocation2 + $0x10] sm:$0xff] %v2215
      %2220 = vst [vmem:[#allocation2 + $0x18] sm:$0xff] %v2216
      %2221 = vrot.lane.b32.xlu0 %v744, 32
      %v2222 = vpop.permute.xlu0 %2221
      %2223 = vrot.lane.b32.xlu0 %v745, 32
      %v2224 = vpop.permute.xlu0 %2223
      %2225 = vrot.lane.b32.xlu0 %v746, 32
      %v2226 = vpop.permute.xlu0 %2225
      %2227 = vrot.lane.b32.xlu0 %v747, 32
      %v2228 = vpop.permute.xlu0 %2227
      %2229 = vrot.lane.b32.xlu0 %v748, 32
      %v2230 = vpop.permute.xlu0 %2229
      %2231 = vrot.lane.b32.xlu0 %v749, 32
      %v2232 = vpop.permute.xlu0 %2231
      %2233 = vrot.lane.b32.xlu0 %v750, 32
      %v2234 = vpop.permute.xlu0 %2233
      %2235 = vrot.lane.b32.xlu0 %v751, 32
      %v2236 = vpop.permute.xlu0 %2235
      %vm2237 = vcmp.lt.s32.totalorder %v660, 32
      %v2238 = vsel %vm2237, %v2234, %v2236
      %v2239 = vsel %vm2237, %v2232, %v2234
      %v2240 = vsel %vm2237, %v2230, %v2232
      %v2241 = vsel %vm2237, %v2228, %v2230
      %v2242 = vsel %vm2237, %v2226, %v2228
      %v2243 = vsel %vm2237, %v2224, %v2226
      %v2244 = vsel %vm2237, %v2222, %v2224
      %v2245 = vsel %vm2237, %v2236, %v2222
      %s2246 = scalar_lea.vmem %s3, 1
      %v2247 = vld [vmem:[%s2246] ss:$8 sm:$0xf]
      %v2248 = vld [vmem:[%s2246] ss:$8 sm:$0xf0]
      %v2249 = vor.u32 %v2247, %v2248
      %v2251 = vperm.slane %v2249, 0
      %v2252 = vperm.slane %v2249, 1
      %v2253 = vperm.slane %v2249, 2
      %v2254 = vperm.slane %v2249, 3
      %v2255 = vperm.slane %v2249, 4
      %v2256 = vperm.slane %v2249, 5
      %v2257 = vperm.slane %v2249, 6
      %v2258 = vperm.slane %v2249, 7
      %v2267 = vmul.f32 %v2245, %v2251
      %v2268 = vmul.f32 %v2244, %v2252
      %v2269 = vmul.f32 %v2243, %v2253
      %v2270 = vmul.f32 %v2242, %v2254
      %v2271 = vmul.f32 %v2241, %v2255
      %v2272 = vmul.f32 %v2240, %v2256
      %v2273 = vmul.f32 %v2239, %v2257
      %v2274 = vmul.f32 %v2238, %v2258
      %v2275 = vpack.c.bf16 %v2268, %v2267
      %v2276 = vpack.c.bf16 %v2270, %v2269
      %v2277 = vpack.c.bf16 %v2272, %v2271
      %v2278 = vpack.c.bf16 %v2274, %v2273
      %2279 = vst [vmem:[#allocation2 + $0x20] sm:$0xff] %v2275
      %2280 = vst [vmem:[#allocation2 + $0x28] sm:$0xff] %v2276
      %2281 = vst [vmem:[#allocation2 + $0x30] sm:$0xff] %v2277
      %2282 = vst [vmem:[#allocation2 + $0x38] sm:$0xff] %v2278
      %2283 = vrot.lane.b32.xlu0 %v744, 30
      %v2284 = vpop.permute.xlu0 %2283
      %2285 = vrot.lane.b32.xlu0 %v745, 30
      %v2286 = vpop.permute.xlu0 %2285
      %2287 = vrot.lane.b32.xlu0 %v746, 30
      %v2288 = vpop.permute.xlu0 %2287
      %2289 = vrot.lane.b32.xlu0 %v747, 30
      %v2290 = vpop.permute.xlu0 %2289
      %2291 = vrot.lane.b32.xlu0 %v748, 30
      %v2292 = vpop.permute.xlu0 %2291
      %2293 = vrot.lane.b32.xlu0 %v749, 30
      %v2294 = vpop.permute.xlu0 %2293
      %2295 = vrot.lane.b32.xlu0 %v750, 30
      %v2296 = vpop.permute.xlu0 %2295
      %2297 = vrot.lane.b32.xlu0 %v751, 30
      %v2298 = vpop.permute.xlu0 %2297
      %vm2299 = vcmp.lt.s32.totalorder %v660, 30
      %v2300 = vsel %vm2299, %v2296, %v2298
      %v2301 = vsel %vm2299, %v2294, %v2296
      %v2302 = vsel %vm2299, %v2292, %v2294
      %v2303 = vsel %vm2299, %v2290, %v2292
      %v2304 = vsel %vm2299, %v2288, %v2290
      %v2305 = vsel %vm2299, %v2286, %v2288
      %v2306 = vsel %vm2299, %v2284, %v2286
      %v2307 = vsel %vm2299, %v2298, %v2284
      %s2308 = scalar_lea.vmem %s3, 2
      %v2309 = vld [vmem:[%s2308] ss:$8 sm:$0xf]
      %v2310 = vld [vmem:[%s2308] ss:$8 sm:$0xf0]
      %v2311 = vor.u32 %v2309, %v2310
      %v2313 = vperm.slane %v2311, 0
      %v2314 = vperm.slane %v2311, 1
      %v2315 = vperm.slane %v2311, 2
      %v2316 = vperm.slane %v2311, 3
      %v2317 = vperm.slane %v2311, 4
      %v2318 = vperm.slane %v2311, 5
      %v2319 = vperm.slane %v2311, 6
      %v2320 = vperm.slane %v2311, 7
      %v2329 = vmul.f32 %v2307, %v2313
      %v2330 = vmul.f32 %v2306, %v2314
      %v2331 = vmul.f32 %v2305, %v2315
      %v2332 = vmul.f32 %v2304, %v2316
      %v2333 = vmul.f32 %v2303, %v2317
      %v2334 = vmul.f32 %v2302, %v2318
      %v2335 = vmul.f32 %v2301, %v2319
      %v2336 = vmul.f32 %v2300, %v2320
      %v2337 = vpack.c.bf16 %v2330, %v2329
      %v2338 = vpack.c.bf16 %v2332, %v2331
      %v2339 = vpack.c.bf16 %v2334, %v2333
      %v2340 = vpack.c.bf16 %v2336, %v2335
      %2341 = vst [vmem:[#allocation2 + $0x40] sm:$0xff] %v2337
      %2342 = vst [vmem:[#allocation2 + $0x48] sm:$0xff] %v2338
      %2343 = vst [vmem:[#allocation2 + $0x50] sm:$0xff] %v2339
      %2344 = vst [vmem:[#allocation2 + $0x58] sm:$0xff] %v2340
      %2345 = vrot.lane.b32.xlu0 %v744, 2
      %v2346 = vpop.permute.xlu0 %2345
      %2347 = vrot.lane.b32.xlu0 %v745, 2
      %v2348 = vpop.permute.xlu0 %2347
      %2349 = vrot.lane.b32.xlu0 %v746, 2
      %v2350 = vpop.permute.xlu0 %2349
      %2351 = vrot.lane.b32.xlu0 %v747, 2
      %v2352 = vpop.permute.xlu0 %2351
      %2353 = vrot.lane.b32.xlu0 %v748, 2
      %v2354 = vpop.permute.xlu0 %2353
      %2355 = vrot.lane.b32.xlu0 %v749, 2
      %v2356 = vpop.permute.xlu0 %2355
      %2357 = vrot.lane.b32.xlu0 %v750, 2
      %v2358 = vpop.permute.xlu0 %2357
      %2359 = vrot.lane.b32.xlu0 %v751, 2
      %v2360 = vpop.permute.xlu0 %2359
      %vm2361 = vcmp.lt.s32.totalorder %v660, 2
      %v2362 = vsel %vm2361, %v2358, %v2360
      %v2363 = vsel %vm2361, %v2356, %v2358
      %v2364 = vsel %vm2361, %v2354, %v2356
      %v2365 = vsel %vm2361, %v2352, %v2354
      %v2366 = vsel %vm2361, %v2350, %v2352
      %v2367 = vsel %vm2361, %v2348, %v2350
      %v2368 = vsel %vm2361, %v2346, %v2348
      %v2369 = vsel %vm2361, %v2360, %v2346
      %s2370 = scalar_lea.vmem %s3, 3
      %v2371 = vld [vmem:[%s2370] ss:$8 sm:$0xf]
      %v2372 = vld [vmem:[%s2370] ss:$8 sm:$0xf0]
      %v2373 = vor.u32 %v2371, %v2372
      %v2375 = vperm.slane %v2373, 0
      %v2376 = vperm.slane %v2373, 1
      %v2377 = vperm.slane %v2373, 2
      %v2378 = vperm.slane %v2373, 3
      %v2379 = vperm.slane %v2373, 4
      %v2380 = vperm.slane %v2373, 5
      %v2381 = vperm.slane %v2373, 6
      %v2382 = vperm.slane %v2373, 7
      %v2391 = vmul.f32 %v2369, %v2375
      %v2392 = vmul.f32 %v2368, %v2376
      %v2393 = vmul.f32 %v2367, %v2377
      %v2394 = vmul.f32 %v2366, %v2378
      %v2395 = vmul.f32 %v2365, %v2379
      %v2396 = vmul.f32 %v2364, %v2380
      %v2397 = vmul.f32 %v2363, %v2381
      %v2398 = vmul.f32 %v2362, %v2382
      %v2399 = vpack.c.bf16 %v2392, %v2391
      %v2400 = vpack.c.bf16 %v2394, %v2393
      %v2401 = vpack.c.bf16 %v2396, %v2395
      %v2402 = vpack.c.bf16 %v2398, %v2397
      %2403 = vst [vmem:[#allocation2 + $0x60] sm:$0xff] %v2399
      %2404 = vst [vmem:[#allocation2 + $0x68] sm:$0xff] %v2400
      %2405 = vst [vmem:[#allocation2 + $0x70] sm:$0xff] %v2401
      %2406 = vst [vmem:[#allocation2 + $0x78] sm:$0xff] %v2402
      %v2407 = vpack.c.bf16 %v745, %v744
      %v2408 = vpack.c.bf16 %v747, %v746
      %v2409 = vpack.c.bf16 %v749, %v748
      %v2410 = vpack.c.bf16 %v751, %v750
      %2411 = vst [vmem:[#allocation2 + $0x80] sm:$0xff] %v2407
      %2412 = vst [vmem:[#allocation2 + $0x88] sm:$0xff] %v2408
      %2413 = vst [vmem:[#allocation2 + $0x90] sm:$0xff] %v2409
      %2414 = vst [vmem:[#allocation2 + $0x98] sm:$0xff] %v2410
      %2415 = vrot.lane.b32.xlu0 %v744, 126
      %v2416 = vpop.permute.xlu0 %2415
      %2417 = vrot.lane.b32.xlu0 %v745, 126
      %v2418 = vpop.permute.xlu0 %2417
      %2419 = vrot.lane.b32.xlu0 %v746, 126
      %v2420 = vpop.permute.xlu0 %2419
      %2421 = vrot.lane.b32.xlu0 %v747, 126
      %v2422 = vpop.permute.xlu0 %2421
      %2423 = vrot.lane.b32.xlu0 %v748, 126
      %v2424 = vpop.permute.xlu0 %2423
      %2425 = vrot.lane.b32.xlu0 %v749, 126
      %v2426 = vpop.permute.xlu0 %2425
      %2427 = vrot.lane.b32.xlu0 %v750, 126
      %v2428 = vpop.permute.xlu0 %2427
      %2429 = vrot.lane.b32.xlu0 %v751, 126
      %v2430 = vpop.permute.xlu0 %2429
      %vm2431 = vcmp.lt.s32.totalorder %v660, 126
      %v2432 = vsel %vm2431, %v2428, %v2430
      %v2433 = vsel %vm2431, %v2426, %v2428
      %v2434 = vsel %vm2431, %v2424, %v2426
      %v2435 = vsel %vm2431, %v2422, %v2424
      %v2436 = vsel %vm2431, %v2420, %v2422
      %v2437 = vsel %vm2431, %v2418, %v2420
      %v2438 = vsel %vm2431, %v2416, %v2418
      %v2439 = vsel %vm2431, %v2430, %v2416
      %s2440 = scalar_lea.vmem %s3, 5
      %v2441 = vld [vmem:[%s2440] ss:$8 sm:$0xf]
      %v2442 = vld [vmem:[%s2440] ss:$8 sm:$0xf0]
      %v2443 = vor.u32 %v2441, %v2442
      %v2445 = vperm.slane %v2443, 0
      %v2446 = vperm.slane %v2443, 1
      %v2447 = vperm.slane %v2443, 2
      %v2448 = vperm.slane %v2443, 3
      %v2449 = vperm.slane %v2443, 4
      %v2450 = vperm.slane %v2443, 5
      %v2451 = vperm.slane %v2443, 6
      %v2452 = vperm.slane %v2443, 7
      %v2461 = vmul.f32 %v2438, %v2445
      %v2462 = vmul.f32 %v2437, %v2446
      %v2463 = vmul.f32 %v2436, %v2447
      %v2464 = vmul.f32 %v2435, %v2448
      %v2465 = vmul.f32 %v2434, %v2449
      %v2466 = vmul.f32 %v2433, %v2450
      %v2467 = vmul.f32 %v2432, %v2451
      %v2468 = vmul.f32 %v2439, %v2452
      %v2469 = vpack.c.bf16 %v2462, %v2461
      %v2470 = vpack.c.bf16 %v2464, %v2463
      %v2471 = vpack.c.bf16 %v2466, %v2465
      %v2472 = vpack.c.bf16 %v2468, %v2467
      %2473 = vst [vmem:[#allocation2 + $0xa0] sm:$0xff] %v2469
      %2474 = vst [vmem:[#allocation2 + $0xa8] sm:$0xff] %v2470
      %2475 = vst [vmem:[#allocation2 + $0xb0] sm:$0xff] %v2471
      %2476 = vst [vmem:[#allocation2 + $0xb8] sm:$0xff] %v2472
      %2477 = vrot.lane.b32.xlu0 %v744, 98
      %v2478 = vpop.permute.xlu0 %2477
      %2479 = vrot.lane.b32.xlu0 %v745, 98
      %v2480 = vpop.permute.xlu0 %2479
      %2481 = vrot.lane.b32.xlu0 %v746, 98
      %v2482 = vpop.permute.xlu0 %2481
      %2483 = vrot.lane.b32.xlu0 %v747, 98
      %v2484 = vpop.permute.xlu0 %2483
      %2485 = vrot.lane.b32.xlu0 %v748, 98
      %v2486 = vpop.permute.xlu0 %2485
      %2487 = vrot.lane.b32.xlu0 %v749, 98
      %v2488 = vpop.permute.xlu0 %2487
      %2489 = vrot.lane.b32.xlu0 %v750, 98
      %v2490 = vpop.permute.xlu0 %2489
      %2491 = vrot.lane.b32.xlu0 %v751, 98
      %v2492 = vpop.permute.xlu0 %2491
      %vm2493 = vcmp.lt.s32.totalorder %v660, 98
      %v2494 = vsel %vm2493, %v2490, %v2492
      %v2495 = vsel %vm2493, %v2488, %v2490
      %v2496 = vsel %vm2493, %v2486, %v2488
      %v2497 = vsel %vm2493, %v2484, %v2486
      %v2498 = vsel %vm2493, %v2482, %v2484
      %v2499 = vsel %vm2493, %v2480, %v2482
      %v2500 = vsel %vm2493, %v2478, %v2480
      %v2501 = vsel %vm2493, %v2492, %v2478
      %s2502 = scalar_lea.vmem %s3, 6
      %v2503 = vld [vmem:[%s2502] ss:$8 sm:$0xf]
      %v2504 = vld [vmem:[%s2502] ss:$8 sm:$0xf0]
      %v2505 = vor.u32 %v2503, %v2504
      %v2507 = vperm.slane %v2505, 0
      %v2508 = vperm.slane %v2505, 1
      %v2509 = vperm.slane %v2505, 2
      %v2510 = vperm.slane %v2505, 3
      %v2511 = vperm.slane %v2505, 4
      %v2512 = vperm.slane %v2505, 5
      %v2513 = vperm.slane %v2505, 6
      %v2514 = vperm.slane %v2505, 7
      %v2523 = vmul.f32 %v2500, %v2507
      %v2524 = vmul.f32 %v2499, %v2508
      %v2525 = vmul.f32 %v2498, %v2509
      %v2526 = vmul.f32 %v2497, %v2510
      %v2527 = vmul.f32 %v2496, %v2511
      %v2528 = vmul.f32 %v2495, %v2512
      %v2529 = vmul.f32 %v2494, %v2513
      %v2530 = vmul.f32 %v2501, %v2514
      %v2531 = vpack.c.bf16 %v2524, %v2523
      %v2532 = vpack.c.bf16 %v2526, %v2525
      %v2533 = vpack.c.bf16 %v2528, %v2527
      %v2534 = vpack.c.bf16 %v2530, %v2529
      %2535 = vst [vmem:[#allocation2 + $0xc0] sm:$0xff] %v2531
      %2536 = vst [vmem:[#allocation2 + $0xc8] sm:$0xff] %v2532
      %2537 = vst [vmem:[#allocation2 + $0xd0] sm:$0xff] %v2533
      %2538 = vst [vmem:[#allocation2 + $0xd8] sm:$0xff] %v2534
      %2539 = vrot.lane.b32.xlu0 %v744, 96
      %v2540 = vpop.permute.xlu0 %2539
      %2541 = vrot.lane.b32.xlu0 %v745, 96
      %v2542 = vpop.permute.xlu0 %2541
      %2543 = vrot.lane.b32.xlu0 %v746, 96
      %v2544 = vpop.permute.xlu0 %2543
      %2545 = vrot.lane.b32.xlu0 %v747, 96
      %v2546 = vpop.permute.xlu0 %2545
      %2547 = vrot.lane.b32.xlu0 %v748, 96
      %v2548 = vpop.permute.xlu0 %2547
      %2549 = vrot.lane.b32.xlu0 %v749, 96
      %v2550 = vpop.permute.xlu0 %2549
      %2551 = vrot.lane.b32.xlu0 %v750, 96
      %v2552 = vpop.permute.xlu0 %2551
      %2553 = vrot.lane.b32.xlu0 %v751, 96
      %v2554 = vpop.permute.xlu0 %2553
      %vm2555 = vcmp.lt.s32.totalorder %v660, 96
      %v2556 = vsel %vm2555, %v2552, %v2554
      %v2557 = vsel %vm2555, %v2550, %v2552
      %v2558 = vsel %vm2555, %v2548, %v2550
      %v2559 = vsel %vm2555, %v2546, %v2548
      %v2560 = vsel %vm2555, %v2544, %v2546
      %v2561 = vsel %vm2555, %v2542, %v2544
      %v2562 = vsel %vm2555, %v2540, %v2542
      %v2563 = vsel %vm2555, %v2554, %v2540
      %s2564 = scalar_lea.vmem %s3, 7
      %v2565 = vld [vmem:[%s2564] ss:$8 sm:$0xf]
      %v2566 = vld [vmem:[%s2564] ss:$8 sm:$0xf0]
      %v2567 = vor.u32 %v2565, %v2566
      %v2569 = vperm.slane %v2567, 0
      %v2570 = vperm.slane %v2567, 1
      %v2571 = vperm.slane %v2567, 2
      %v2572 = vperm.slane %v2567, 3
      %v2573 = vperm.slane %v2567, 4
      %v2574 = vperm.slane %v2567, 5
      %v2575 = vperm.slane %v2567, 6
      %v2576 = vperm.slane %v2567, 7
      %v2585 = vmul.f32 %v2562, %v2569
      %v2586 = vmul.f32 %v2561, %v2570
      %v2587 = vmul.f32 %v2560, %v2571
      %v2588 = vmul.f32 %v2559, %v2572
      %v2589 = vmul.f32 %v2558, %v2573
      %v2590 = vmul.f32 %v2557, %v2574
      %v2591 = vmul.f32 %v2556, %v2575
      %v2592 = vmul.f32 %v2563, %v2576
      %v2593 = vpack.c.bf16 %v2586, %v2585
      %v2594 = vpack.c.bf16 %v2588, %v2587
      %v2595 = vpack.c.bf16 %v2590, %v2589
      %v2596 = vpack.c.bf16 %v2592, %v2591
      %2597 = vst [vmem:[#allocation2 + $0xe0] sm:$0xff] %v2593
      %2598 = vst [vmem:[#allocation2 + $0xe8] sm:$0xff] %v2594
      %2599 = vst [vmem:[#allocation2 + $0xf0] sm:$0xff] %v2595
      %2600 = vst [vmem:[#allocation2 + $0xf8] sm:$0xff] %v2596
      %2601 = vrot.lane.b32.xlu0 %v744, 94
      %v2602 = vpop.permute.xlu0 %2601
      %2603 = vrot.lane.b32.xlu0 %v745, 94
      %v2604 = vpop.permute.xlu0 %2603
      %2605 = vrot.lane.b32.xlu0 %v746, 94
      %v2606 = vpop.permute.xlu0 %2605
      %2607 = vrot.lane.b32.xlu0 %v747, 94
      %v2608 = vpop.permute.xlu0 %2607
      %2609 = vrot.lane.b32.xlu0 %v748, 94
      %v2610 = vpop.permute.xlu0 %2609
      %2611 = vrot.lane.b32.xlu0 %v749, 94
      %v2612 = vpop.permute.xlu0 %2611
      %2613 = vrot.lane.b32.xlu0 %v750, 94
      %v2614 = vpop.permute.xlu0 %2613
      %2615 = vrot.lane.b32.xlu0 %v751, 94
      %v2616 = vpop.permute.xlu0 %2615
      %vm2617 = vcmp.lt.s32.totalorder %v660, 94
      %v2618 = vsel %vm2617, %v2614, %v2616
      %v2619 = vsel %vm2617, %v2612, %v2614
      %v2620 = vsel %vm2617, %v2610, %v2612
      %v2621 = vsel %vm2617, %v2608, %v2610
      %v2622 = vsel %vm2617, %v2606, %v2608
      %v2623 = vsel %vm2617, %v2604, %v2606
      %v2624 = vsel %vm2617, %v2602, %v2604
      %v2625 = vsel %vm2617, %v2616, %v2602
      %s2626 = scalar_lea.vmem %s3, 64
      %v2627 = vld [vmem:[%s2626] ss:$8 sm:$0xf]
      %v2628 = vld [vmem:[%s2626] ss:$8 sm:$0xf0]
      %v2629 = vor.u32 %v2627, %v2628
      %v2631 = vperm.slane %v2629, 0
      %v2632 = vperm.slane %v2629, 1
      %v2633 = vperm.slane %v2629, 2
      %v2634 = vperm.slane %v2629, 3
      %v2635 = vperm.slane %v2629, 4
      %v2636 = vperm.slane %v2629, 5
      %v2637 = vperm.slane %v2629, 6
      %v2638 = vperm.slane %v2629, 7
      %v2647 = vmul.f32 %v2624, %v2631
      %v2648 = vmul.f32 %v2623, %v2632
      %v2649 = vmul.f32 %v2622, %v2633
      %v2650 = vmul.f32 %v2621, %v2634
      %v2651 = vmul.f32 %v2620, %v2635
      %v2652 = vmul.f32 %v2619, %v2636
      %v2653 = vmul.f32 %v2618, %v2637
      %v2654 = vmul.f32 %v2625, %v2638
      %v2655 = vpack.c.bf16 %v2648, %v2647
      %v2656 = vpack.c.bf16 %v2650, %v2649
      %v2657 = vpack.c.bf16 %v2652, %v2651
      %v2658 = vpack.c.bf16 %v2654, %v2653
      %2659 = vst [vmem:[#allocation2 + $0x100] sm:$0xff] %v2655
      %2660 = vst [vmem:[#allocation2 + $0x108] sm:$0xff] %v2656
      %2661 = vst [vmem:[#allocation2 + $0x110] sm:$0xff] %v2657
      %2662 = vst [vmem:[#allocation2 + $0x118] sm:$0xff] %v2658
      %v2663 = vld [vmem:[#allocation2] sm:$0xff]
      %v2664 = vld [vmem:[#allocation2 + $0x8] sm:$0xff]
      %v2665 = vld [vmem:[#allocation2 + $0x10] sm:$0xff]
      %v2666 = vld [vmem:[#allocation2 + $0x18] sm:$0xff]
      %v2667 = vld [vmem:[#allocation2 + $0x20] sm:$0xff]
      %v2668 = vld [vmem:[#allocation2 + $0x28] sm:$0xff]
      %v2669 = vld [vmem:[#allocation2 + $0x30] sm:$0xff]
      %v2670 = vld [vmem:[#allocation2 + $0x38] sm:$0xff]
      %v2671 = vld [vmem:[#allocation2 + $0x40] sm:$0xff]
      %v2672 = vld [vmem:[#allocation2 + $0x48] sm:$0xff]
      %v2673 = vld [vmem:[#allocation2 + $0x50] sm:$0xff]
      %v2674 = vld [vmem:[#allocation2 + $0x58] sm:$0xff]
      %v2675 = vld [vmem:[#allocation2 + $0x60] sm:$0xff]
      %v2676 = vld [vmem:[#allocation2 + $0x68] sm:$0xff]
      %v2677 = vld [vmem:[#allocation2 + $0x70] sm:$0xff]
      %v2678 = vld [vmem:[#allocation2 + $0x78] sm:$0xff]
      %v2679 = vld [vmem:[#allocation2 + $0x80] sm:$0xff]
      %v2680 = vld [vmem:[#allocation2 + $0x88] sm:$0xff]
      %v2681 = vld [vmem:[#allocation2 + $0x90] sm:$0xff]
      %v2682 = vld [vmem:[#allocation2 + $0x98] sm:$0xff]
      %v2683 = vld [vmem:[#allocation2 + $0xa0] sm:$0xff]
      %v2684 = vld [vmem:[#allocation2 + $0xa8] sm:$0xff]
      %v2685 = vld [vmem:[#allocation2 + $0xb0] sm:$0xff]
      %v2686 = vld [vmem:[#allocation2 + $0xb8] sm:$0xff]
      %v2687 = vld [vmem:[#allocation2 + $0xc0] sm:$0xff]
      %v2688 = vld [vmem:[#allocation2 + $0xc8] sm:$0xff]
      %v2689 = vld [vmem:[#allocation2 + $0xd0] sm:$0xff]
      %v2690 = vld [vmem:[#allocation2 + $0xd8] sm:$0xff]
      %v2691 = vld [vmem:[#allocation2 + $0xe0] sm:$0xff]
      %v2692 = vld [vmem:[#allocation2 + $0xe8] sm:$0xff]
      %v2693 = vld [vmem:[#allocation2 + $0xf0] sm:$0xff]
      %v2694 = vld [vmem:[#allocation2 + $0xf8] sm:$0xff]
      %v2695 = vld [vmem:[#allocation2 + $0x100] sm:$0xff]
      %v2696 = vld [vmem:[#allocation2 + $0x108] sm:$0xff]
      %v2697 = vld [vmem:[#allocation2 + $0x110] sm:$0xff]
      %v2698 = vld [vmem:[#allocation2 + $0x118] sm:$0xff]
      %v2699 = vld [vmem:[%s10] sm:$0xf]
      %v2700 = vld [vmem:[%s10 + $0x4] sm:$0xf]
      %v2701 = vld [vmem:[%s11] sm:$0xff]
      %v2702 = vld [vmem:[%s11 + $0x8] sm:$0xff]
      %2704 = vset.pattern.permute.xlu0 0
      %2705 = vperm.xlu0 %2704, %v2701
      %v2706 = vpop.permute.xlu0 %2705
      %2709 = vset.pattern.permute.xlu0 0
      %2710 = vperm.xlu0 %2709, %v2702
      %v2711 = vpop.permute.xlu0 %2710
      %v2715 = vunpack.c.l.b16 %v2699
      %v2716 = vunpack.c.l.b16 %v2700
      %v2717 = vpack.c.b16 %v2716, %v2715
      %v2754 = vunpack.c.l.b16 %v2663
      %v2755 = vunpack.c.h.b16 %v2663
      %v2756 = vunpack.c.l.b16 %v2664
      %v2757 = vunpack.c.h.b16 %v2664
      %v2758 = vunpack.c.l.b16 %v2665
      %v2759 = vunpack.c.h.b16 %v2665
      %v2760 = vunpack.c.l.b16 %v2666
      %v2761 = vunpack.c.h.b16 %v2666
      %v2762 = vunpack.c.l.b16 %v2667
      %v2763 = vunpack.c.h.b16 %v2667
      %v2764 = vunpack.c.l.b16 %v2668
      %v2765 = vunpack.c.h.b16 %v2668
      %v2766 = vunpack.c.l.b16 %v2669
      %v2767 = vunpack.c.h.b16 %v2669
      %v2768 = vunpack.c.l.b16 %v2670
      %v2769 = vunpack.c.h.b16 %v2670
      %v2770 = vunpack.c.l.b16 %v2671
      %v2771 = vunpack.c.h.b16 %v2671
      %v2772 = vunpack.c.l.b16 %v2672
      %v2773 = vunpack.c.h.b16 %v2672
      %v2774 = vunpack.c.l.b16 %v2673
      %v2775 = vunpack.c.h.b16 %v2673
      %v2776 = vunpack.c.l.b16 %v2674
      %v2777 = vunpack.c.h.b16 %v2674
      %v2778 = vunpack.c.l.b16 %v2675
      %v2779 = vunpack.c.h.b16 %v2675
      %v2780 = vunpack.c.l.b16 %v2676
      %v2781 = vunpack.c.h.b16 %v2676
      %v2782 = vunpack.c.l.b16 %v2677
      %v2783 = vunpack.c.h.b16 %v2677
      %v2784 = vunpack.c.l.b16 %v2678
      %v2785 = vunpack.c.h.b16 %v2678
      %v2786 = vunpack.c.l.b16 %v2679
      %v2787 = vunpack.c.h.b16 %v2679
      %v2788 = vunpack.c.l.b16 %v2680
      %v2789 = vunpack.c.h.b16 %v2680
      %v2790 = vunpack.c.l.b16 %v2681
      %v2791 = vunpack.c.h.b16 %v2681
      %v2792 = vunpack.c.l.b16 %v2682
      %v2793 = vunpack.c.h.b16 %v2682
      %v2794 = vunpack.c.l.b16 %v2683
      %v2795 = vunpack.c.h.b16 %v2683
      %v2796 = vunpack.c.l.b16 %v2684
      %v2797 = vunpack.c.h.b16 %v2684
      %v2798 = vunpack.c.l.b16 %v2685
      %v2799 = vunpack.c.h.b16 %v2685
      %v2800 = vunpack.c.l.b16 %v2686
      %v2801 = vunpack.c.h.b16 %v2686
      %v2802 = vunpack.c.l.b16 %v2687
      %v2803 = vunpack.c.h.b16 %v2687
      %v2804 = vunpack.c.l.b16 %v2688
      %v2805 = vunpack.c.h.b16 %v2688
      %v2806 = vunpack.c.l.b16 %v2689
      %v2807 = vunpack.c.h.b16 %v2689
      %v2808 = vunpack.c.l.b16 %v2690
      %v2809 = vunpack.c.h.b16 %v2690
      %v2810 = vunpack.c.l.b16 %v2691
      %v2811 = vunpack.c.h.b16 %v2691
      %v2812 = vunpack.c.l.b16 %v2692
      %v2813 = vunpack.c.h.b16 %v2692
      %v2814 = vunpack.c.l.b16 %v2693
      %v2815 = vunpack.c.h.b16 %v2693
      %v2816 = vunpack.c.l.b16 %v2694
      %v2817 = vunpack.c.h.b16 %v2694
      %v2818 = vunpack.c.l.b16 %v2695
      %v2819 = vunpack.c.h.b16 %v2695
      %v2820 = vunpack.c.l.b16 %v2696
      %v2821 = vunpack.c.h.b16 %v2696
      %v2822 = vunpack.c.l.b16 %v2697
      %v2823 = vunpack.c.h.b16 %v2697
      %v2824 = vunpack.c.l.b16 %v2698
      %v2825 = vunpack.c.h.b16 %v2698
      %v2826 = vpack.c.b16 %v2762, %v2754
      %v2827 = vpack.c.b16 %v2763, %v2755
      %v2828 = vpack.c.b16 %v2764, %v2756
      %v2829 = vpack.c.b16 %v2765, %v2757
      %v2830 = vpack.c.b16 %v2766, %v2758
      %v2831 = vpack.c.b16 %v2767, %v2759
      %v2832 = vpack.c.b16 %v2768, %v2760
      %v2833 = vpack.c.b16 %v2769, %v2761
      %v2834 = vpack.c.b16 %v2778, %v2770
      %v2835 = vpack.c.b16 %v2779, %v2771
      %v2836 = vpack.c.b16 %v2780, %v2772
      %v2837 = vpack.c.b16 %v2781, %v2773
      %v2838 = vpack.c.b16 %v2782, %v2774
      %v2839 = vpack.c.b16 %v2783, %v2775
      %v2840 = vpack.c.b16 %v2784, %v2776
      %v2841 = vpack.c.b16 %v2785, %v2777
      %v2842 = vpack.c.b16 %v2794, %v2786
      %v2843 = vpack.c.b16 %v2795, %v2787
      %v2844 = vpack.c.b16 %v2796, %v2788
      %v2845 = vpack.c.b16 %v2797, %v2789
      %v2846 = vpack.c.b16 %v2798, %v2790
      %v2847 = vpack.c.b16 %v2799, %v2791
      %v2848 = vpack.c.b16 %v2800, %v2792
      %v2849 = vpack.c.b16 %v2801, %v2793
      %v2850 = vpack.c.b16 %v2810, %v2802
      %v2851 = vpack.c.b16 %v2811, %v2803
      %v2852 = vpack.c.b16 %v2812, %v2804
      %v2853 = vpack.c.b16 %v2813, %v2805
      %v2854 = vpack.c.b16 %v2814, %v2806
      %v2855 = vpack.c.b16 %v2815, %v2807
      %v2856 = vpack.c.b16 %v2816, %v2808
      %v2857 = vpack.c.b16 %v2817, %v2809
      %v2858 = vpack.c.b16 %v2818, %v2818
      %v2859 = vpack.c.b16 %v2819, %v2819
      %v2860 = vpack.c.b16 %v2820, %v2820
      %v2861 = vpack.c.b16 %v2821, %v2821
      %v2862 = vpack.c.b16 %v2822, %v2822
      %v2863 = vpack.c.b16 %v2823, %v2823
      %v2864 = vpack.c.b16 %v2824, %v2824
      %v2865 = vpack.c.b16 %v2825, %v2825
      %v2899 = vsel %vm1399, %v2717, 0
      %v2902 = vsel %vm1403, %v2858, 0
      %v2905 = vsel %vm1403, %v2859, 0
      %v2908 = vsel %vm1403, %v2860, 0
      %v2911 = vsel %vm1403, %v2861, 0
      %v2914 = vsel %vm1403, %v2862, 0
      %v2917 = vsel %vm1403, %v2863, 0
      %v2920 = vsel %vm1403, %v2864, 0
      %v2923 = vsel %vm1403, %v2865, 0
      %2925 = vmatpush.bf16.msra.mxu0 0
      %2926 = vmatpush.bf16.msra.mxu0 0
      %2927 = vmatpush.bf16.msra.mxu0 0
      %2928 = vmatpush.bf16.msra.mxu0 %v2902
      %2929 = vmatpush.bf16.msra.mxu0 %v2850
      %2930 = vmatpush.bf16.msra.mxu0 %v2842
      %2931 = vmatpush.bf16.msra.mxu0 %v2834
      %2932 = vmatpush.bf16.msra.mxu0 %v2826
      %2933 = vmatmul.bf16.gmra.mxu0 %v2899
      %v2934 = vpop.f32.mrf.mxu0
      %v2935 = vadd.f32 %v2706, %v2934
      %v2936 = vpop.f32.mrf.mxu0
      %v2937 = vadd.f32 %v2711, %v2936
      %2938 = vdwg.mxu0
      %2939 = vmatpush.bf16.msra.mxu0 0
      %2940 = vmatpush.bf16.msra.mxu0 0
      %2941 = vmatpush.bf16.msra.mxu0 0
      %2942 = vmatpush.bf16.msra.mxu0 %v2905
      %2943 = vmatpush.bf16.msra.mxu0 %v2851
      %2944 = vmatpush.bf16.msra.mxu0 %v2843
      %2945 = vmatpush.bf16.msra.mxu0 %v2835
      %2946 = vmatpush.bf16.msra.mxu0 %v2827
      %2947 = vmatmul.bf16.gmra.mxu0 %v2899
      %v2948 = vpop.f32.mrf.mxu0
      %v2949 = vadd.f32 %v2706, %v2948
      %v2950 = vpop.f32.mrf.mxu0
      %v2951 = vadd.f32 %v2711, %v2950
      %2952 = vdwg.mxu0
      %2953 = vmatpush.bf16.msra.mxu0 0
      %2954 = vmatpush.bf16.msra.mxu0 0
      %2955 = vmatpush.bf16.msra.mxu0 0
      %2956 = vmatpush.bf16.msra.mxu0 %v2908
      %2957 = vmatpush.bf16.msra.mxu0 %v2852
      %2958 = vmatpush.bf16.msra.mxu0 %v2844
      %2959 = vmatpush.bf16.msra.mxu0 %v2836
      %2960 = vmatpush.bf16.msra.mxu0 %v2828
      %2961 = vmatmul.bf16.gmra.mxu0 %v2899
      %v2962 = vpop.f32.mrf.mxu0
      %v2963 = vadd.f32 %v2706, %v2962
      %v2964 = vpop.f32.mrf.mxu0
      %v2965 = vadd.f32 %v2711, %v2964
      %2966 = vdwg.mxu0
      %2967 = vmatpush.bf16.msra.mxu0 0
      %2968 = vmatpush.bf16.msra.mxu0 0
      %2969 = vmatpush.bf16.msra.mxu0 0
      %2970 = vmatpush.bf16.msra.mxu0 %v2911
      %2971 = vmatpush.bf16.msra.mxu0 %v2853
      %2972 = vmatpush.bf16.msra.mxu0 %v2845
      %2973 = vmatpush.bf16.msra.mxu0 %v2837
      %2974 = vmatpush.bf16.msra.mxu0 %v2829
      %2975 = vmatmul.bf16.gmra.mxu0 %v2899
      %v2976 = vpop.f32.mrf.mxu0
      %v2977 = vadd.f32 %v2706, %v2976
      %v2978 = vpop.f32.mrf.mxu0
      %v2979 = vadd.f32 %v2711, %v2978
      %2980 = vdwg.mxu0
      %2981 = vmatpush.bf16.msra.mxu0 0
      %2982 = vmatpush.bf16.msra.mxu0 0
      %2983 = vmatpush.bf16.msra.mxu0 0
      %2984 = vmatpush.bf16.msra.mxu0 %v2914
      %2985 = vmatpush.bf16.msra.mxu0 %v2854
      %2986 = vmatpush.bf16.msra.mxu0 %v2846
      %2987 = vmatpush.bf16.msra.mxu0 %v2838
      %2988 = vmatpush.bf16.msra.mxu0 %v2830
      %2989 = vmatmul.bf16.gmra.mxu0 %v2899
      %v2990 = vpop.f32.mrf.mxu0
      %v2991 = vadd.f32 %v2706, %v2990
      %v2992 = vpop.f32.mrf.mxu0
      %v2993 = vadd.f32 %v2711, %v2992
      %2994 = vdwg.mxu0
      %2995 = vmatpush.bf16.msra.mxu0 0
      %2996 = vmatpush.bf16.msra.mxu0 0
      %2997 = vmatpush.bf16.msra.mxu0 0
      %2998 = vmatpush.bf16.msra.mxu0 %v2917
      %2999 = vmatpush.bf16.msra.mxu0 %v2855
      %3000 = vmatpush.bf16.msra.mxu0 %v2847
      %3001 = vmatpush.bf16.msra.mxu0 %v2839
      %3002 = vmatpush.bf16.msra.mxu0 %v2831
      %3003 = vmatmul.bf16.gmra.mxu0 %v2899
      %v3004 = vpop.f32.mrf.mxu0
      %v3005 = vadd.f32 %v2706, %v3004
      %v3006 = vpop.f32.mrf.mxu0
      %v3007 = vadd.f32 %v2711, %v3006
      %3008 = vdwg.mxu0
      %3009 = vmatpush.bf16.msra.mxu0 0
      %3010 = vmatpush.bf16.msra.mxu0 0
      %3011 = vmatpush.bf16.msra.mxu0 0
      %3012 = vmatpush.bf16.msra.mxu0 %v2920
      %3013 = vmatpush.bf16.msra.mxu0 %v2856
      %3014 = vmatpush.bf16.msra.mxu0 %v2848
      %3015 = vmatpush.bf16.msra.mxu0 %v2840
      %3016 = vmatpush.bf16.msra.mxu0 %v2832
      %3017 = vmatmul.bf16.gmra.mxu0 %v2899
      %v3018 = vpop.f32.mrf.mxu0
      %v3019 = vadd.f32 %v2706, %v3018
      %v3020 = vpop.f32.mrf.mxu0
      %v3021 = vadd.f32 %v2711, %v3020
      %3022 = vdwg.mxu0
      %3023 = vmatpush.bf16.msra.mxu0 0
      %3024 = vmatpush.bf16.msra.mxu0 0
      %3025 = vmatpush.bf16.msra.mxu0 0
      %3026 = vmatpush.bf16.msra.mxu0 %v2923
      %3027 = vmatpush.bf16.msra.mxu0 %v2857
      %3028 = vmatpush.bf16.msra.mxu0 %v2849
      %3029 = vmatpush.bf16.msra.mxu0 %v2841
      %3030 = vmatpush.bf16.msra.mxu0 %v2833
      %3031 = vmatmul.bf16.gmra.mxu0 %v2899
      %v3032 = vpop.f32.mrf.mxu0
      %v3033 = vadd.f32 %v2706, %v3032
      %v3034 = vpop.f32.mrf.mxu0
      %v3035 = vadd.f32 %v2711, %v3034
      %3036 = vdwg.mxu0
      %3037 = vrot.lane.b32.xlu0 %v2935, 4
      %v3038 = vpop.permute.xlu0 %3037
      %3039 = vrot.lane.b32.xlu0 %v2937, 4
      %v3040 = vpop.permute.xlu0 %3039
      %3041 = vrot.lane.b32.xlu0 %v2949, 4
      %v3042 = vpop.permute.xlu0 %3041
      %3043 = vrot.lane.b32.xlu0 %v2951, 4
      %v3044 = vpop.permute.xlu0 %3043
      %3045 = vrot.lane.b32.xlu0 %v2963, 4
      %v3046 = vpop.permute.xlu0 %3045
      %3047 = vrot.lane.b32.xlu0 %v2965, 4
      %v3048 = vpop.permute.xlu0 %3047
      %3049 = vrot.lane.b32.xlu0 %v2977, 4
      %v3050 = vpop.permute.xlu0 %3049
      %3051 = vrot.lane.b32.xlu0 %v2979, 4
      %v3052 = vpop.permute.xlu0 %3051
      %3053 = vrot.lane.b32.xlu0 %v2991, 4
      %v3054 = vpop.permute.xlu0 %3053
      %3055 = vrot.lane.b32.xlu0 %v2993, 4
      %v3056 = vpop.permute.xlu0 %3055
      %3057 = vrot.lane.b32.xlu0 %v3005, 4
      %v3058 = vpop.permute.xlu0 %3057
      %3059 = vrot.lane.b32.xlu0 %v3007, 4
      %v3060 = vpop.permute.xlu0 %3059
      %3061 = vrot.lane.b32.xlu0 %v3019, 4
      %v3062 = vpop.permute.xlu0 %3061
      %3063 = vrot.lane.b32.xlu0 %v3021, 4
      %v3064 = vpop.permute.xlu0 %3063
      %3065 = vrot.lane.b32.xlu0 %v3033, 4
      %v3066 = vpop.permute.xlu0 %3065
      %3067 = vrot.lane.b32.xlu0 %v3035, 4
      %v3068 = vpop.permute.xlu0 %3067
      %vm3069 = vcmp.lt.s32.totalorder %v660, 4
      %v3070 = vsel %vm3069, %v3062, %v3066
      %v3071 = vsel %vm3069, %v3064, %v3068
      %v3072 = vsel %vm3069, %v3058, %v3062
      %v3073 = vsel %vm3069, %v3060, %v3064
      %v3074 = vsel %vm3069, %v3054, %v3058
      %v3075 = vsel %vm3069, %v3056, %v3060
      %v3076 = vsel %vm3069, %v3050, %v3054
      %v3077 = vsel %vm3069, %v3052, %v3056
      %v3078 = vsel %vm3069, %v3046, %v3050
      %v3079 = vsel %vm3069, %v3048, %v3052
      %v3080 = vsel %vm3069, %v3042, %v3046
      %v3081 = vsel %vm3069, %v3044, %v3048
      %v3082 = vsel %vm3069, %v3038, %v3042
      %v3083 = vsel %vm3069, %v3040, %v3044
      %v3084 = vsel %vm3069, %v3066, %v3038
      %v3085 = vsel %vm3069, %v3068, %v3040
      %v3086 = vld [vmem:[%s4] ss:$8 sm:$0xf]
      %v3087 = vld [vmem:[%s4] ss:$8 sm:$0xf0]
      %v3088 = vor.u32 %v3086, %v3087
      %v3090 = vperm.slane %v3088, 0
      %v3091 = vperm.slane %v3088, 1
      %v3092 = vperm.slane %v3088, 2
      %v3093 = vperm.slane %v3088, 3
      %v3094 = vperm.slane %v3088, 4
      %v3095 = vperm.slane %v3088, 5
      %v3096 = vperm.slane %v3088, 6
      %v3097 = vperm.slane %v3088, 7
      %v3106 = vmul.f32 %v3084, %v3090
      %v3107 = vmul.f32 %v3082, %v3091
      %v3108 = vmul.f32 %v3080, %v3092
      %v3109 = vmul.f32 %v3078, %v3093
      %v3110 = vmul.f32 %v3076, %v3094
      %v3111 = vmul.f32 %v3074, %v3095
      %v3112 = vmul.f32 %v3072, %v3096
      %v3113 = vmul.f32 %v3070, %v3097
      %v3114 = vmul.f32 %v3085, %v3090
      %v3115 = vmul.f32 %v3083, %v3091
      %v3116 = vmul.f32 %v3081, %v3092
      %v3117 = vmul.f32 %v3079, %v3093
      %v3118 = vmul.f32 %v3077, %v3094
      %v3119 = vmul.f32 %v3075, %v3095
      %v3120 = vmul.f32 %v3073, %v3096
      %v3121 = vmul.f32 %v3071, %v3097
      %v3122 = vld [vmem:[%s12] sm:$0xff]
      %v3123 = vld [vmem:[%s12 + $0x8] sm:$0xff]
      %3125 = vset.pattern.permute.xlu0 0
      %3126 = vperm.xlu0 %3125, %v3122
      %v3127 = vpop.permute.xlu0 %3126
      %3130 = vset.pattern.permute.xlu0 0
      %3131 = vperm.xlu0 %3130, %v3123
      %v3132 = vpop.permute.xlu0 %3131
      %v3134 = vmul.f32 %v3106, %v3127
      %v3135 = vmul.f32 %v3107, %v3127
      %v3136 = vmul.f32 %v3108, %v3127
      %v3137 = vmul.f32 %v3109, %v3127
      %v3138 = vmul.f32 %v3110, %v3127
      %v3139 = vmul.f32 %v3111, %v3127
      %v3140 = vmul.f32 %v3112, %v3127
      %v3141 = vmul.f32 %v3113, %v3127
      %v3142 = vmul.f32 %v3114, %v3132
      %v3143 = vmul.f32 %v3115, %v3132
      %v3144 = vmul.f32 %v3116, %v3132
      %v3145 = vmul.f32 %v3117, %v3132
      %v3146 = vmul.f32 %v3118, %v3132
      %v3147 = vmul.f32 %v3119, %v3132
      %v3148 = vmul.f32 %v3120, %v3132
      %v3149 = vmul.f32 %v3121, %v3132
      %v3150 = vadd.f32 %v3134, 0.0
      %v3151 = vadd.f32 %v3135, 0.0
      %v3152 = vadd.f32 %v3136, 0.0
      %v3153 = vadd.f32 %v3137, 0.0
      %v3154 = vadd.f32 %v3138, 0.0
      %v3155 = vadd.f32 %v3139, 0.0
      %v3156 = vadd.f32 %v3140, 0.0
      %v3157 = vadd.f32 %v3141, 0.0
      %v3158 = vadd.f32 %v3142, 0.0
      %v3159 = vadd.f32 %v3143, 0.0
      %v3160 = vadd.f32 %v3144, 0.0
      %v3161 = vadd.f32 %v3145, 0.0
      %v3162 = vadd.f32 %v3146, 0.0
      %v3163 = vadd.f32 %v3147, 0.0
      %v3164 = vadd.f32 %v3148, 0.0
      %v3165 = vadd.f32 %v3149, 0.0
      %3166 = vrot.lane.b32.xlu0 %v2935, 2
      %v3167 = vpop.permute.xlu0 %3166
      %3168 = vrot.lane.b32.xlu0 %v2937, 2
      %v3169 = vpop.permute.xlu0 %3168
      %3170 = vrot.lane.b32.xlu0 %v2949, 2
      %v3171 = vpop.permute.xlu0 %3170
      %3172 = vrot.lane.b32.xlu0 %v2951, 2
      %v3173 = vpop.permute.xlu0 %3172
      %3174 = vrot.lane.b32.xlu0 %v2963, 2
      %v3175 = vpop.permute.xlu0 %3174
      %3176 = vrot.lane.b32.xlu0 %v2965, 2
      %v3177 = vpop.permute.xlu0 %3176
      %3178 = vrot.lane.b32.xlu0 %v2977, 2
      %v3179 = vpop.permute.xlu0 %3178
      %3180 = vrot.lane.b32.xlu0 %v2979, 2
      %v3181 = vpop.permute.xlu0 %3180
      %3182 = vrot.lane.b32.xlu0 %v2991, 2
      %v3183 = vpop.permute.xlu0 %3182
      %3184 = vrot.lane.b32.xlu0 %v2993, 2
      %v3185 = vpop.permute.xlu0 %3184
      %3186 = vrot.lane.b32.xlu0 %v3005, 2
      %v3187 = vpop.permute.xlu0 %3186
      %3188 = vrot.lane.b32.xlu0 %v3007, 2
      %v3189 = vpop.permute.xlu0 %3188
      %3190 = vrot.lane.b32.xlu0 %v3019, 2
      %v3191 = vpop.permute.xlu0 %3190
      %3192 = vrot.lane.b32.xlu0 %v3021, 2
      %v3193 = vpop.permute.xlu0 %3192
      %3194 = vrot.lane.b32.xlu0 %v3033, 2
      %v3195 = vpop.permute.xlu0 %3194
      %3196 = vrot.lane.b32.xlu0 %v3035, 2
      %v3197 = vpop.permute.xlu0 %3196
      %v3198 = vsel %vm2361, %v3191, %v3195
      %v3199 = vsel %vm2361, %v3193, %v3197
      %v3200 = vsel %vm2361, %v3187, %v3191
      %v3201 = vsel %vm2361, %v3189, %v3193
      %v3202 = vsel %vm2361, %v3183, %v3187
      %v3203 = vsel %vm2361, %v3185, %v3189
      %v3204 = vsel %vm2361, %v3179, %v3183
      %v3205 = vsel %vm2361, %v3181, %v3185
      %v3206 = vsel %vm2361, %v3175, %v3179
      %v3207 = vsel %vm2361, %v3177, %v3181
      %v3208 = vsel %vm2361, %v3171, %v3175
      %v3209 = vsel %vm2361, %v3173, %v3177
      %v3210 = vsel %vm2361, %v3167, %v3171
      %v3211 = vsel %vm2361, %v3169, %v3173
      %v3212 = vsel %vm2361, %v3195, %v3167
      %v3213 = vsel %vm2361, %v3197, %v3169
      %s3214 = scalar_lea.vmem %s4, 1
      %v3215 = vld [vmem:[%s3214] ss:$8 sm:$0xf]
      %v3216 = vld [vmem:[%s3214] ss:$8 sm:$0xf0]
      %v3217 = vor.u32 %v3215, %v3216
      %v3219 = vperm.slane %v3217, 0
      %v3220 = vperm.slane %v3217, 1
      %v3221 = vperm.slane %v3217, 2
      %v3222 = vperm.slane %v3217, 3
      %v3223 = vperm.slane %v3217, 4
      %v3224 = vperm.slane %v3217, 5
      %v3225 = vperm.slane %v3217, 6
      %v3226 = vperm.slane %v3217, 7
      %v3235 = vmul.f32 %v3212, %v3219
      %v3236 = vmul.f32 %v3210, %v3220
      %v3237 = vmul.f32 %v3208, %v3221
      %v3238 = vmul.f32 %v3206, %v3222
      %v3239 = vmul.f32 %v3204, %v3223
      %v3240 = vmul.f32 %v3202, %v3224
      %v3241 = vmul.f32 %v3200, %v3225
      %v3242 = vmul.f32 %v3198, %v3226
      %v3243 = vmul.f32 %v3213, %v3219
      %v3244 = vmul.f32 %v3211, %v3220
      %v3245 = vmul.f32 %v3209, %v3221
      %v3246 = vmul.f32 %v3207, %v3222
      %v3247 = vmul.f32 %v3205, %v3223
      %v3248 = vmul.f32 %v3203, %v3224
      %v3249 = vmul.f32 %v3201, %v3225
      %v3250 = vmul.f32 %v3199, %v3226
      %3251 = vset.pattern.permute.xlu0 1
      %3252 = vperm.xlu0 %3251, %v3122
      %v3253 = vpop.permute.xlu0 %3252
      %3255 = vset.pattern.permute.xlu0 1
      %3256 = vperm.xlu0 %3255, %v3123
      %v3257 = vpop.permute.xlu0 %3256
      %v3259 = vmul.f32 %v3235, %v3253
      %v3260 = vmul.f32 %v3236, %v3253
      %v3261 = vmul.f32 %v3237, %v3253
      %v3262 = vmul.f32 %v3238, %v3253
      %v3263 = vmul.f32 %v3239, %v3253
      %v3264 = vmul.f32 %v3240, %v3253
      %v3265 = vmul.f32 %v3241, %v3253
      %v3266 = vmul.f32 %v3242, %v3253
      %v3267 = vmul.f32 %v3243, %v3257
      %v3268 = vmul.f32 %v3244, %v3257
      %v3269 = vmul.f32 %v3245, %v3257
      %v3270 = vmul.f32 %v3246, %v3257
      %v3271 = vmul.f32 %v3247, %v3257
      %v3272 = vmul.f32 %v3248, %v3257
      %v3273 = vmul.f32 %v3249, %v3257
      %v3274 = vmul.f32 %v3250, %v3257
      %v3275 = vadd.f32 %v3150, %v3259
      %v3276 = vadd.f32 %v3151, %v3260
      %v3277 = vadd.f32 %v3152, %v3261
      %v3278 = vadd.f32 %v3153, %v3262
      %v3279 = vadd.f32 %v3154, %v3263
      %v3280 = vadd.f32 %v3155, %v3264
      %v3281 = vadd.f32 %v3156, %v3265
      %v3282 = vadd.f32 %v3157, %v3266
      %v3283 = vadd.f32 %v3158, %v3267
      %v3284 = vadd.f32 %v3159, %v3268
      %v3285 = vadd.f32 %v3160, %v3269
      %v3286 = vadd.f32 %v3161, %v3270
      %v3287 = vadd.f32 %v3162, %v3271
      %v3288 = vadd.f32 %v3163, %v3272
      %v3289 = vadd.f32 %v3164, %v3273
      %v3290 = vadd.f32 %v3165, %v3274
      %3291 = vset.pattern.permute.xlu0 2
      %3292 = vperm.xlu0 %3291, %v3122
      %v3293 = vpop.permute.xlu0 %3292
      %3295 = vset.pattern.permute.xlu0 2
      %3296 = vperm.xlu0 %3295, %v3123
      %v3297 = vpop.permute.xlu0 %3296
      %v3299 = vmul.f32 %v2935, %v3293
      %v3300 = vmul.f32 %v2949, %v3293
      %v3301 = vmul.f32 %v2963, %v3293
      %v3302 = vmul.f32 %v2977, %v3293
      %v3303 = vmul.f32 %v2991, %v3293
      %v3304 = vmul.f32 %v3005, %v3293
      %v3305 = vmul.f32 %v3019, %v3293
      %v3306 = vmul.f32 %v3033, %v3293
      %v3307 = vmul.f32 %v2937, %v3297
      %v3308 = vmul.f32 %v2951, %v3297
      %v3309 = vmul.f32 %v2965, %v3297
      %v3310 = vmul.f32 %v2979, %v3297
      %v3311 = vmul.f32 %v2993, %v3297
      %v3312 = vmul.f32 %v3007, %v3297
      %v3313 = vmul.f32 %v3021, %v3297
      %v3314 = vmul.f32 %v3035, %v3297
      %v3315 = vadd.f32 %v3275, %v3299
      %v3316 = vadd.f32 %v3276, %v3300
      %v3317 = vadd.f32 %v3277, %v3301
      %v3318 = vadd.f32 %v3278, %v3302
      %v3319 = vadd.f32 %v3279, %v3303
      %v3320 = vadd.f32 %v3280, %v3304
      %v3321 = vadd.f32 %v3281, %v3305
      %v3322 = vadd.f32 %v3282, %v3306
      %v3323 = vadd.f32 %v3283, %v3307
      %v3324 = vadd.f32 %v3284, %v3308
      %v3325 = vadd.f32 %v3285, %v3309
      %v3326 = vadd.f32 %v3286, %v3310
      %v3327 = vadd.f32 %v3287, %v3311
      %v3328 = vadd.f32 %v3288, %v3312
      %v3329 = vadd.f32 %v3289, %v3313
      %v3330 = vadd.f32 %v3290, %v3314
      %3331 = vrot.lane.b32.xlu0 %v2935, 126
      %v3332 = vpop.permute.xlu0 %3331
      %3333 = vrot.lane.b32.xlu0 %v2937, 126
      %v3334 = vpop.permute.xlu0 %3333
      %3335 = vrot.lane.b32.xlu0 %v2949, 126
      %v3336 = vpop.permute.xlu0 %3335
      %3337 = vrot.lane.b32.xlu0 %v2951, 126
      %v3338 = vpop.permute.xlu0 %3337
      %3339 = vrot.lane.b32.xlu0 %v2963, 126
      %v3340 = vpop.permute.xlu0 %3339
      %3341 = vrot.lane.b32.xlu0 %v2965, 126
      %v3342 = vpop.permute.xlu0 %3341
      %3343 = vrot.lane.b32.xlu0 %v2977, 126
      %v3344 = vpop.permute.xlu0 %3343
      %3345 = vrot.lane.b32.xlu0 %v2979, 126
      %v3346 = vpop.permute.xlu0 %3345
      %3347 = vrot.lane.b32.xlu0 %v2991, 126
      %v3348 = vpop.permute.xlu0 %3347
      %3349 = vrot.lane.b32.xlu0 %v2993, 126
      %v3350 = vpop.permute.xlu0 %3349
      %3351 = vrot.lane.b32.xlu0 %v3005, 126
      %v3352 = vpop.permute.xlu0 %3351
      %3353 = vrot.lane.b32.xlu0 %v3007, 126
      %v3354 = vpop.permute.xlu0 %3353
      %3355 = vrot.lane.b32.xlu0 %v3019, 126
      %v3356 = vpop.permute.xlu0 %3355
      %3357 = vrot.lane.b32.xlu0 %v3021, 126
      %v3358 = vpop.permute.xlu0 %3357
      %3359 = vrot.lane.b32.xlu0 %v3033, 126
      %v3360 = vpop.permute.xlu0 %3359
      %3361 = vrot.lane.b32.xlu0 %v3035, 126
      %v3362 = vpop.permute.xlu0 %3361
      %v3363 = vsel %vm2431, %v3356, %v3360
      %v3364 = vsel %vm2431, %v3358, %v3362
      %v3365 = vsel %vm2431, %v3352, %v3356
      %v3366 = vsel %vm2431, %v3354, %v3358
      %v3367 = vsel %vm2431, %v3348, %v3352
      %v3368 = vsel %vm2431, %v3350, %v3354
      %v3369 = vsel %vm2431, %v3344, %v3348
      %v3370 = vsel %vm2431, %v3346, %v3350
      %v3371 = vsel %vm2431, %v3340, %v3344
      %v3372 = vsel %vm2431, %v3342, %v3346
      %v3373 = vsel %vm2431, %v3336, %v3340
      %v3374 = vsel %vm2431, %v3338, %v3342
      %v3375 = vsel %vm2431, %v3332, %v3336
      %v3376 = vsel %vm2431, %v3334, %v3338
      %v3377 = vsel %vm2431, %v3360, %v3332
      %v3378 = vsel %vm2431, %v3362, %v3334
      %s3379 = scalar_lea.vmem %s4, 3
      %v3380 = vld [vmem:[%s3379] ss:$8 sm:$0xf]
      %v3381 = vld [vmem:[%s3379] ss:$8 sm:$0xf0]
      %v3382 = vor.u32 %v3380, %v3381
      %v3384 = vperm.slane %v3382, 0
      %v3385 = vperm.slane %v3382, 1
      %v3386 = vperm.slane %v3382, 2
      %v3387 = vperm.slane %v3382, 3
      %v3388 = vperm.slane %v3382, 4
      %v3389 = vperm.slane %v3382, 5
      %v3390 = vperm.slane %v3382, 6
      %v3391 = vperm.slane %v3382, 7
      %v3400 = vmul.f32 %v3375, %v3384
      %v3401 = vmul.f32 %v3373, %v3385
      %v3402 = vmul.f32 %v3371, %v3386
      %v3403 = vmul.f32 %v3369, %v3387
      %v3404 = vmul.f32 %v3367, %v3388
      %v3405 = vmul.f32 %v3365, %v3389
      %v3406 = vmul.f32 %v3363, %v3390
      %v3407 = vmul.f32 %v3377, %v3391
      %v3408 = vmul.f32 %v3376, %v3384
      %v3409 = vmul.f32 %v3374, %v3385
      %v3410 = vmul.f32 %v3372, %v3386
      %v3411 = vmul.f32 %v3370, %v3387
      %v3412 = vmul.f32 %v3368, %v3388
      %v3413 = vmul.f32 %v3366, %v3389
      %v3414 = vmul.f32 %v3364, %v3390
      %v3415 = vmul.f32 %v3378, %v3391
      %3416 = vset.pattern.permute.xlu0 3
      %3417 = vperm.xlu0 %3416, %v3122
      %v3418 = vpop.permute.xlu0 %3417
      %3420 = vset.pattern.permute.xlu0 3
      %3421 = vperm.xlu0 %3420, %v3123
      %v3422 = vpop.permute.xlu0 %3421
      %v3424 = vmul.f32 %v3400, %v3418
      %v3425 = vmul.f32 %v3401, %v3418
      %v3426 = vmul.f32 %v3402, %v3418
      %v3427 = vmul.f32 %v3403, %v3418
      %v3428 = vmul.f32 %v3404, %v3418
      %v3429 = vmul.f32 %v3405, %v3418
      %v3430 = vmul.f32 %v3406, %v3418
      %v3431 = vmul.f32 %v3407, %v3418
      %v3432 = vmul.f32 %v3408, %v3422
      %v3433 = vmul.f32 %v3409, %v3422
      %v3434 = vmul.f32 %v3410, %v3422
      %v3435 = vmul.f32 %v3411, %v3422
      %v3436 = vmul.f32 %v3412, %v3422
      %v3437 = vmul.f32 %v3413, %v3422
      %v3438 = vmul.f32 %v3414, %v3422
      %v3439 = vmul.f32 %v3415, %v3422
      %v3440 = vadd.f32 %v3315, %v3424
      %v3441 = vadd.f32 %v3316, %v3425
      %v3442 = vadd.f32 %v3317, %v3426
      %v3443 = vadd.f32 %v3318, %v3427
      %v3444 = vadd.f32 %v3319, %v3428
      %v3445 = vadd.f32 %v3320, %v3429
      %v3446 = vadd.f32 %v3321, %v3430
      %v3447 = vadd.f32 %v3322, %v3431
      %v3448 = vadd.f32 %v3323, %v3432
      %v3449 = vadd.f32 %v3324, %v3433
      %v3450 = vadd.f32 %v3325, %v3434
      %v3451 = vadd.f32 %v3326, %v3435
      %v3452 = vadd.f32 %v3327, %v3436
      %v3453 = vadd.f32 %v3328, %v3437
      %v3454 = vadd.f32 %v3329, %v3438
      %v3455 = vadd.f32 %v3330, %v3439
      %3456 = vrot.lane.b32.xlu0 %v2935, 124
      %v3457 = vpop.permute.xlu0 %3456
      %3458 = vrot.lane.b32.xlu0 %v2937, 124
      %v3459 = vpop.permute.xlu0 %3458
      %3460 = vrot.lane.b32.xlu0 %v2949, 124
      %v3461 = vpop.permute.xlu0 %3460
      %3462 = vrot.lane.b32.xlu0 %v2951, 124
      %v3463 = vpop.permute.xlu0 %3462
      %3464 = vrot.lane.b32.xlu0 %v2963, 124
      %v3465 = vpop.permute.xlu0 %3464
      %3466 = vrot.lane.b32.xlu0 %v2965, 124
      %v3467 = vpop.permute.xlu0 %3466
      %3468 = vrot.lane.b32.xlu0 %v2977, 124
      %v3469 = vpop.permute.xlu0 %3468
      %3470 = vrot.lane.b32.xlu0 %v2979, 124
      %v3471 = vpop.permute.xlu0 %3470
      %3472 = vrot.lane.b32.xlu0 %v2991, 124
      %v3473 = vpop.permute.xlu0 %3472
      %3474 = vrot.lane.b32.xlu0 %v2993, 124
      %v3475 = vpop.permute.xlu0 %3474
      %3476 = vrot.lane.b32.xlu0 %v3005, 124
      %v3477 = vpop.permute.xlu0 %3476
      %3478 = vrot.lane.b32.xlu0 %v3007, 124
      %v3479 = vpop.permute.xlu0 %3478
      %3480 = vrot.lane.b32.xlu0 %v3019, 124
      %v3481 = vpop.permute.xlu0 %3480
      %3482 = vrot.lane.b32.xlu0 %v3021, 124
      %v3483 = vpop.permute.xlu0 %3482
      %3484 = vrot.lane.b32.xlu0 %v3033, 124
      %v3485 = vpop.permute.xlu0 %3484
      %3486 = vrot.lane.b32.xlu0 %v3035, 124
      %v3487 = vpop.permute.xlu0 %3486
      %vm3488 = vcmp.lt.s32.totalorder %v660, 124
      %v3489 = vsel %vm3488, %v3481, %v3485
      %v3490 = vsel %vm3488, %v3483, %v3487
      %v3491 = vsel %vm3488, %v3477, %v3481
      %v3492 = vsel %vm3488, %v3479, %v3483
      %v3493 = vsel %vm3488, %v3473, %v3477
      %v3494 = vsel %vm3488, %v3475, %v3479
      %v3495 = vsel %vm3488, %v3469, %v3473
      %v3496 = vsel %vm3488, %v3471, %v3475
      %v3497 = vsel %vm3488, %v3465, %v3469
      %v3498 = vsel %vm3488, %v3467, %v3471
      %v3499 = vsel %vm3488, %v3461, %v3465
      %v3500 = vsel %vm3488, %v3463, %v3467
      %v3501 = vsel %vm3488, %v3457, %v3461
      %v3502 = vsel %vm3488, %v3459, %v3463
      %v3503 = vsel %vm3488, %v3485, %v3457
      %v3504 = vsel %vm3488, %v3487, %v3459
      %s3505 = scalar_lea.vmem %s4, 4
      %v3506 = vld [vmem:[%s3505] ss:$8 sm:$0xf]
      %v3507 = vld [vmem:[%s3505] ss:$8 sm:$0xf0]
      %v3508 = vor.u32 %v3506, %v3507
      %v3510 = vperm.slane %v3508, 0
      %v3511 = vperm.slane %v3508, 1
      %v3512 = vperm.slane %v3508, 2
      %v3513 = vperm.slane %v3508, 3
      %v3514 = vperm.slane %v3508, 4
      %v3515 = vperm.slane %v3508, 5
      %v3516 = vperm.slane %v3508, 6
      %v3517 = vperm.slane %v3508, 7
      %v3526 = vmul.f32 %v3501, %v3510
      %v3527 = vmul.f32 %v3499, %v3511
      %v3528 = vmul.f32 %v3497, %v3512
      %v3529 = vmul.f32 %v3495, %v3513
      %v3530 = vmul.f32 %v3493, %v3514
      %v3531 = vmul.f32 %v3491, %v3515
      %v3532 = vmul.f32 %v3489, %v3516
      %v3533 = vmul.f32 %v3503, %v3517
      %v3534 = vmul.f32 %v3502, %v3510
      %v3535 = vmul.f32 %v3500, %v3511
      %v3536 = vmul.f32 %v3498, %v3512
      %v3537 = vmul.f32 %v3496, %v3513
      %v3538 = vmul.f32 %v3494, %v3514
      %v3539 = vmul.f32 %v3492, %v3515
      %v3540 = vmul.f32 %v3490, %v3516
      %v3541 = vmul.f32 %v3504, %v3517
      %3542 = vset.pattern.permute.xlu0 4
      %3543 = vperm.xlu0 %3542, %v3122
      %v3544 = vpop.permute.xlu0 %3543
      %3546 = vset.pattern.permute.xlu0 4
      %3547 = vperm.xlu0 %3546, %v3123
      %v3548 = vpop.permute.xlu0 %3547
      %v3550 = vmul.f32 %v3526, %v3544
      %v3551 = vmul.f32 %v3527, %v3544
      %v3552 = vmul.f32 %v3528, %v3544
      %v3553 = vmul.f32 %v3529, %v3544
      %v3554 = vmul.f32 %v3530, %v3544
      %v3555 = vmul.f32 %v3531, %v3544
      %v3556 = vmul.f32 %v3532, %v3544
      %v3557 = vmul.f32 %v3533, %v3544
      %v3558 = vmul.f32 %v3534, %v3548
      %v3559 = vmul.f32 %v3535, %v3548
      %v3560 = vmul.f32 %v3536, %v3548
      %v3561 = vmul.f32 %v3537, %v3548
      %v3562 = vmul.f32 %v3538, %v3548
      %v3563 = vmul.f32 %v3539, %v3548
      %v3564 = vmul.f32 %v3540, %v3548
      %v3565 = vmul.f32 %v3541, %v3548
      %v3566 = vadd.f32 %v3440, %v3550
      %v3567 = vadd.f32 %v3441, %v3551
      %v3568 = vadd.f32 %v3442, %v3552
      %v3569 = vadd.f32 %v3443, %v3553
      %v3570 = vadd.f32 %v3444, %v3554
      %v3571 = vadd.f32 %v3445, %v3555
      %v3572 = vadd.f32 %v3446, %v3556
      %v3573 = vadd.f32 %v3447, %v3557
      %v3574 = vadd.f32 %v3448, %v3558
      %v3575 = vadd.f32 %v3449, %v3559
      %v3576 = vadd.f32 %v3450, %v3560
      %v3577 = vadd.f32 %v3451, %v3561
      %v3578 = vadd.f32 %v3452, %v3562
      %v3579 = vadd.f32 %v3453, %v3563
      %v3580 = vadd.f32 %v3454, %v3564
      %v3581 = vadd.f32 %v3455, %v3565
      %v3582 = vld [vmem:[%s13] sm:$0xff]
      %v3583 = vld [vmem:[%s13 + $0x8] sm:$0xff]
      %3585 = vset.pattern.permute.xlu0 0
      %3586 = vperm.xlu0 %3585, %v3582
      %v3587 = vpop.permute.xlu0 %3586
      %3590 = vset.pattern.permute.xlu0 0
      %3591 = vperm.xlu0 %3590, %v3583
      %v3592 = vpop.permute.xlu0 %3591
      %v3594 = vadd.f32 %v3566, %v3587
      %v3595 = vadd.f32 %v3567, %v3587
      %v3596 = vadd.f32 %v3568, %v3587
      %v3597 = vadd.f32 %v3569, %v3587
      %v3598 = vadd.f32 %v3570, %v3587
      %v3599 = vadd.f32 %v3571, %v3587
      %v3600 = vadd.f32 %v3572, %v3587
      %v3601 = vadd.f32 %v3573, %v3587
      %v3602 = vadd.f32 %v3574, %v3592
      %v3603 = vadd.f32 %v3575, %v3592
      %v3604 = vadd.f32 %v3576, %v3592
      %v3605 = vadd.f32 %v3577, %v3592
      %v3606 = vadd.f32 %v3578, %v3592
      %v3607 = vadd.f32 %v3579, %v3592
      %v3608 = vadd.f32 %v3580, %v3592
      %v3609 = vadd.f32 %v3581, %v3592
      %3610 = vrot.lane.b32.xlu0 %v3594, 64
      %v3611 = vpop.permute.xlu0 %3610
      %3612 = vrot.lane.b32.xlu0 %v3602, 64
      %v3613 = vpop.permute.xlu0 %3612
      %3614 = vrot.lane.b32.xlu0 %v3595, 64
      %v3615 = vpop.permute.xlu0 %3614
      %3616 = vrot.lane.b32.xlu0 %v3603, 64
      %v3617 = vpop.permute.xlu0 %3616
      %3618 = vrot.lane.b32.xlu0 %v3596, 64
      %v3619 = vpop.permute.xlu0 %3618
      %3620 = vrot.lane.b32.xlu0 %v3604, 64
      %v3621 = vpop.permute.xlu0 %3620
      %3622 = vrot.lane.b32.xlu0 %v3597, 64
      %v3623 = vpop.permute.xlu0 %3622
      %3624 = vrot.lane.b32.xlu0 %v3605, 64
      %v3625 = vpop.permute.xlu0 %3624
      %3626 = vrot.lane.b32.xlu0 %v3598, 64
      %v3627 = vpop.permute.xlu0 %3626
      %3628 = vrot.lane.b32.xlu0 %v3606, 64
      %v3629 = vpop.permute.xlu0 %3628
      %3630 = vrot.lane.b32.xlu0 %v3599, 64
      %v3631 = vpop.permute.xlu0 %3630
      %3632 = vrot.lane.b32.xlu0 %v3607, 64
      %v3633 = vpop.permute.xlu0 %3632
      %3634 = vrot.lane.b32.xlu0 %v3600, 64
      %v3635 = vpop.permute.xlu0 %3634
      %3636 = vrot.lane.b32.xlu0 %v3608, 64
      %v3637 = vpop.permute.xlu0 %3636
      %3638 = vrot.lane.b32.xlu0 %v3601, 64
      %v3639 = vpop.permute.xlu0 %3638
      %3640 = vrot.lane.b32.xlu0 %v3609, 64
      %v3641 = vpop.permute.xlu0 %3640
      %vm3642 = vcmp.lt.s32.totalorder %v660, 64
      %v3643 = vsel %vm3642, %v3635, %v3639
      %v3644 = vsel %vm3642, %v3637, %v3641
      %v3645 = vsel %vm3642, %v3631, %v3635
      %v3646 = vsel %vm3642, %v3633, %v3637
      %v3647 = vsel %vm3642, %v3627, %v3631
      %v3648 = vsel %vm3642, %v3629, %v3633
      %v3649 = vsel %vm3642, %v3623, %v3627
      %v3650 = vsel %vm3642, %v3625, %v3629
      %v3651 = vsel %vm3642, %v3619, %v3623
      %v3652 = vsel %vm3642, %v3621, %v3625
      %v3653 = vsel %vm3642, %v3615, %v3619
      %v3654 = vsel %vm3642, %v3617, %v3621
      %v3655 = vsel %vm3642, %v3611, %v3615
      %v3656 = vsel %vm3642, %v3613, %v3617
      %v3657 = vsel %vm3642, %v3639, %v3611
      %v3658 = vsel %vm3642, %v3641, %v3613
      %v3659 = vld [vmem:[%s5] ss:$8 sm:$0xf]
      %v3660 = vld [vmem:[%s5] ss:$8 sm:$0xf0]
      %v3661 = vor.u32 %v3659, %v3660
      %v3663 = vperm.slane %v3661, 0
      %v3664 = vperm.slane %v3661, 1
      %v3665 = vperm.slane %v3661, 2
      %v3666 = vperm.slane %v3661, 3
      %v3667 = vperm.slane %v3661, 4
      %v3668 = vperm.slane %v3661, 5
      %v3669 = vperm.slane %v3661, 6
      %v3670 = vperm.slane %v3661, 7
      %v3679 = vmul.f32 %v3657, %v3663
      %v3680 = vmul.f32 %v3655, %v3664
      %v3681 = vmul.f32 %v3653, %v3665
      %v3682 = vmul.f32 %v3651, %v3666
      %v3683 = vmul.f32 %v3649, %v3667
      %v3684 = vmul.f32 %v3647, %v3668
      %v3685 = vmul.f32 %v3645, %v3669
      %v3686 = vmul.f32 %v3643, %v3670
      %v3687 = vmul.f32 %v3658, %v3663
      %v3688 = vmul.f32 %v3656, %v3664
      %v3689 = vmul.f32 %v3654, %v3665
      %v3690 = vmul.f32 %v3652, %v3666
      %v3691 = vmul.f32 %v3650, %v3667
      %v3692 = vmul.f32 %v3648, %v3668
      %v3693 = vmul.f32 %v3646, %v3669
      %v3694 = vmul.f32 %v3644, %v3670
      %v3695 = vld [vmem:[%s14] sm:$0xff]
      %v3696 = vld [vmem:[%s14 + $0x8] sm:$0xff]
      %3698 = vset.pattern.permute.xlu0 0
      %3699 = vperm.xlu0 %3698, %v3695
      %v3700 = vpop.permute.xlu0 %3699
      %3703 = vset.pattern.permute.xlu0 0
      %3704 = vperm.xlu0 %3703, %v3696
      %v3705 = vpop.permute.xlu0 %3704
      %v3707 = vmul.f32 %v3679, %v3700
      %v3708 = vmul.f32 %v3680, %v3700
      %v3709 = vmul.f32 %v3681, %v3700
      %v3710 = vmul.f32 %v3682, %v3700
      %v3711 = vmul.f32 %v3683, %v3700
      %v3712 = vmul.f32 %v3684, %v3700
      %v3713 = vmul.f32 %v3685, %v3700
      %v3714 = vmul.f32 %v3686, %v3700
      %v3715 = vmul.f32 %v3687, %v3705
      %v3716 = vmul.f32 %v3688, %v3705
      %v3717 = vmul.f32 %v3689, %v3705
      %v3718 = vmul.f32 %v3690, %v3705
      %v3719 = vmul.f32 %v3691, %v3705
      %v3720 = vmul.f32 %v3692, %v3705
      %v3721 = vmul.f32 %v3693, %v3705
      %v3722 = vmul.f32 %v3694, %v3705
      %v3723 = vadd.f32 %v3707, 0.0
      %v3724 = vadd.f32 %v3708, 0.0
      %v3725 = vadd.f32 %v3709, 0.0
      %v3726 = vadd.f32 %v3710, 0.0
      %v3727 = vadd.f32 %v3711, 0.0
      %v3728 = vadd.f32 %v3712, 0.0
      %v3729 = vadd.f32 %v3713, 0.0
      %v3730 = vadd.f32 %v3714, 0.0
      %v3731 = vadd.f32 %v3715, 0.0
      %v3732 = vadd.f32 %v3716, 0.0
      %v3733 = vadd.f32 %v3717, 0.0
      %v3734 = vadd.f32 %v3718, 0.0
      %v3735 = vadd.f32 %v3719, 0.0
      %v3736 = vadd.f32 %v3720, 0.0
      %v3737 = vadd.f32 %v3721, 0.0
      %v3738 = vadd.f32 %v3722, 0.0
      %3739 = vrot.lane.b32.xlu0 %v3594, 32
      %v3740 = vpop.permute.xlu0 %3739
      %3741 = vrot.lane.b32.xlu0 %v3602, 32
      %v3742 = vpop.permute.xlu0 %3741
      %3743 = vrot.lane.b32.xlu0 %v3595, 32
      %v3744 = vpop.permute.xlu0 %3743
      %3745 = vrot.lane.b32.xlu0 %v3603, 32
      %v3746 = vpop.permute.xlu0 %3745
      %3747 = vrot.lane.b32.xlu0 %v3596, 32
      %v3748 = vpop.permute.xlu0 %3747
      %3749 = vrot.lane.b32.xlu0 %v3604, 32
      %v3750 = vpop.permute.xlu0 %3749
      %3751 = vrot.lane.b32.xlu0 %v3597, 32
      %v3752 = vpop.permute.xlu0 %3751
      %3753 = vrot.lane.b32.xlu0 %v3605, 32
      %v3754 = vpop.permute.xlu0 %3753
      %3755 = vrot.lane.b32.xlu0 %v3598, 32
      %v3756 = vpop.permute.xlu0 %3755
      %3757 = vrot.lane.b32.xlu0 %v3606, 32
      %v3758 = vpop.permute.xlu0 %3757
      %3759 = vrot.lane.b32.xlu0 %v3599, 32
      %v3760 = vpop.permute.xlu0 %3759
      %3761 = vrot.lane.b32.xlu0 %v3607, 32
      %v3762 = vpop.permute.xlu0 %3761
      %3763 = vrot.lane.b32.xlu0 %v3600, 32
      %v3764 = vpop.permute.xlu0 %3763
      %3765 = vrot.lane.b32.xlu0 %v3608, 32
      %v3766 = vpop.permute.xlu0 %3765
      %3767 = vrot.lane.b32.xlu0 %v3601, 32
      %v3768 = vpop.permute.xlu0 %3767
      %3769 = vrot.lane.b32.xlu0 %v3609, 32
      %v3770 = vpop.permute.xlu0 %3769
      %v3771 = vsel %vm2237, %v3764, %v3768
      %v3772 = vsel %vm2237, %v3766, %v3770
      %v3773 = vsel %vm2237, %v3760, %v3764
      %v3774 = vsel %vm2237, %v3762, %v3766
      %v3775 = vsel %vm2237, %v3756, %v3760
      %v3776 = vsel %vm2237, %v3758, %v3762
      %v3777 = vsel %vm2237, %v3752, %v3756
      %v3778 = vsel %vm2237, %v3754, %v3758
      %v3779 = vsel %vm2237, %v3748, %v3752
      %v3780 = vsel %vm2237, %v3750, %v3754
      %v3781 = vsel %vm2237, %v3744, %v3748
      %v3782 = vsel %vm2237, %v3746, %v3750
      %v3783 = vsel %vm2237, %v3740, %v3744
      %v3784 = vsel %vm2237, %v3742, %v3746
      %v3785 = vsel %vm2237, %v3768, %v3740
      %v3786 = vsel %vm2237, %v3770, %v3742
      %s3787 = scalar_lea.vmem %s5, 1
      %v3788 = vld [vmem:[%s3787] ss:$8 sm:$0xf]
      %v3789 = vld [vmem:[%s3787] ss:$8 sm:$0xf0]
      %v3790 = vor.u32 %v3788, %v3789
      %v3792 = vperm.slane %v3790, 0
      %v3793 = vperm.slane %v3790, 1
      %v3794 = vperm.slane %v3790, 2
      %v3795 = vperm.slane %v3790, 3
      %v3796 = vperm.slane %v3790, 4
      %v3797 = vperm.slane %v3790, 5
      %v3798 = vperm.slane %v3790, 6
      %v3799 = vperm.slane %v3790, 7
      %v3808 = vmul.f32 %v3785, %v3792
      %v3809 = vmul.f32 %v3783, %v3793
      %v3810 = vmul.f32 %v3781, %v3794
      %v3811 = vmul.f32 %v3779, %v3795
      %v3812 = vmul.f32 %v3777, %v3796
      %v3813 = vmul.f32 %v3775, %v3797
      %v3814 = vmul.f32 %v3773, %v3798
      %v3815 = vmul.f32 %v3771, %v3799
      %v3816 = vmul.f32 %v3786, %v3792
      %v3817 = vmul.f32 %v3784, %v3793
      %v3818 = vmul.f32 %v3782, %v3794
      %v3819 = vmul.f32 %v3780, %v3795
      %v3820 = vmul.f32 %v3778, %v3796
      %v3821 = vmul.f32 %v3776, %v3797
      %v3822 = vmul.f32 %v3774, %v3798
      %v3823 = vmul.f32 %v3772, %v3799
      %3824 = vset.pattern.permute.xlu0 1
      %3825 = vperm.xlu0 %3824, %v3695
      %v3826 = vpop.permute.xlu0 %3825
      %3828 = vset.pattern.permute.xlu0 1
      %3829 = vperm.xlu0 %3828, %v3696
      %v3830 = vpop.permute.xlu0 %3829
      %v3832 = vmul.f32 %v3808, %v3826
      %v3833 = vmul.f32 %v3809, %v3826
      %v3834 = vmul.f32 %v3810, %v3826
      %v3835 = vmul.f32 %v3811, %v3826
      %v3836 = vmul.f32 %v3812, %v3826
      %v3837 = vmul.f32 %v3813, %v3826
      %v3838 = vmul.f32 %v3814, %v3826
      %v3839 = vmul.f32 %v3815, %v3826
      %v3840 = vmul.f32 %v3816, %v3830
      %v3841 = vmul.f32 %v3817, %v3830
      %v3842 = vmul.f32 %v3818, %v3830
      %v3843 = vmul.f32 %v3819, %v3830
      %v3844 = vmul.f32 %v3820, %v3830
      %v3845 = vmul.f32 %v3821, %v3830
      %v3846 = vmul.f32 %v3822, %v3830
      %v3847 = vmul.f32 %v3823, %v3830
      %v3848 = vadd.f32 %v3723, %v3832
      %v3849 = vadd.f32 %v3724, %v3833
      %v3850 = vadd.f32 %v3725, %v3834
      %v3851 = vadd.f32 %v3726, %v3835
      %v3852 = vadd.f32 %v3727, %v3836
      %v3853 = vadd.f32 %v3728, %v3837
      %v3854 = vadd.f32 %v3729, %v3838
      %v3855 = vadd.f32 %v3730, %v3839
      %v3856 = vadd.f32 %v3731, %v3840
      %v3857 = vadd.f32 %v3732, %v3841
      %v3858 = vadd.f32 %v3733, %v3842
      %v3859 = vadd.f32 %v3734, %v3843
      %v3860 = vadd.f32 %v3735, %v3844
      %v3861 = vadd.f32 %v3736, %v3845
      %v3862 = vadd.f32 %v3737, %v3846
      %v3863 = vadd.f32 %v3738, %v3847
      %3864 = vset.pattern.permute.xlu0 2
      %3865 = vperm.xlu0 %3864, %v3695
      %v3866 = vpop.permute.xlu0 %3865
      %3868 = vset.pattern.permute.xlu0 2
      %3869 = vperm.xlu0 %3868, %v3696
      %v3870 = vpop.permute.xlu0 %3869
      %v3872 = vmul.f32 %v3594, %v3866
      %v3873 = vmul.f32 %v3595, %v3866
      %v3874 = vmul.f32 %v3596, %v3866
      %v3875 = vmul.f32 %v3597, %v3866
      %v3876 = vmul.f32 %v3598, %v3866
      %v3877 = vmul.f32 %v3599, %v3866
      %v3878 = vmul.f32 %v3600, %v3866
      %v3879 = vmul.f32 %v3601, %v3866
      %v3880 = vmul.f32 %v3602, %v3870
      %v3881 = vmul.f32 %v3603, %v3870
      %v3882 = vmul.f32 %v3604, %v3870
      %v3883 = vmul.f32 %v3605, %v3870
      %v3884 = vmul.f32 %v3606, %v3870
      %v3885 = vmul.f32 %v3607, %v3870
      %v3886 = vmul.f32 %v3608, %v3870
      %v3887 = vmul.f32 %v3609, %v3870
      %v3888 = vadd.f32 %v3848, %v3872
      %v3889 = vadd.f32 %v3849, %v3873
      %v3890 = vadd.f32 %v3850, %v3874
      %v3891 = vadd.f32 %v3851, %v3875
      %v3892 = vadd.f32 %v3852, %v3876
      %v3893 = vadd.f32 %v3853, %v3877
      %v3894 = vadd.f32 %v3854, %v3878
      %v3895 = vadd.f32 %v3855, %v3879
      %v3896 = vadd.f32 %v3856, %v3880
      %v3897 = vadd.f32 %v3857, %v3881
      %v3898 = vadd.f32 %v3858, %v3882
      %v3899 = vadd.f32 %v3859, %v3883
      %v3900 = vadd.f32 %v3860, %v3884
      %v3901 = vadd.f32 %v3861, %v3885
      %v3902 = vadd.f32 %v3862, %v3886
      %v3903 = vadd.f32 %v3863, %v3887
      %3904 = vrot.lane.b32.xlu0 %v3594, 96
      %v3905 = vpop.permute.xlu0 %3904
      %3906 = vrot.lane.b32.xlu0 %v3602, 96
      %v3907 = vpop.permute.xlu0 %3906
      %3908 = vrot.lane.b32.xlu0 %v3595, 96
      %v3909 = vpop.permute.xlu0 %3908
      %3910 = vrot.lane.b32.xlu0 %v3603, 96
      %v3911 = vpop.permute.xlu0 %3910
      %3912 = vrot.lane.b32.xlu0 %v3596, 96
      %v3913 = vpop.permute.xlu0 %3912
      %3914 = vrot.lane.b32.xlu0 %v3604, 96
      %v3915 = vpop.permute.xlu0 %3914
      %3916 = vrot.lane.b32.xlu0 %v3597, 96
      %v3917 = vpop.permute.xlu0 %3916
      %3918 = vrot.lane.b32.xlu0 %v3605, 96
      %v3919 = vpop.permute.xlu0 %3918
      %3920 = vrot.lane.b32.xlu0 %v3598, 96
      %v3921 = vpop.permute.xlu0 %3920
      %3922 = vrot.lane.b32.xlu0 %v3606, 96
      %v3923 = vpop.permute.xlu0 %3922
      %3924 = vrot.lane.b32.xlu0 %v3599, 96
      %v3925 = vpop.permute.xlu0 %3924
      %3926 = vrot.lane.b32.xlu0 %v3607, 96
      %v3927 = vpop.permute.xlu0 %3926
      %3928 = vrot.lane.b32.xlu0 %v3600, 96
      %v3929 = vpop.permute.xlu0 %3928
      %3930 = vrot.lane.b32.xlu0 %v3608, 96
      %v3931 = vpop.permute.xlu0 %3930
      %3932 = vrot.lane.b32.xlu0 %v3601, 96
      %v3933 = vpop.permute.xlu0 %3932
      %3934 = vrot.lane.b32.xlu0 %v3609, 96
      %v3935 = vpop.permute.xlu0 %3934
      %v3936 = vsel %vm2555, %v3929, %v3933
      %v3937 = vsel %vm2555, %v3931, %v3935
      %v3938 = vsel %vm2555, %v3925, %v3929
      %v3939 = vsel %vm2555, %v3927, %v3931
      %v3940 = vsel %vm2555, %v3921, %v3925
      %v3941 = vsel %vm2555, %v3923, %v3927
      %v3942 = vsel %vm2555, %v3917, %v3921
      %v3943 = vsel %vm2555, %v3919, %v3923
      %v3944 = vsel %vm2555, %v3913, %v3917
      %v3945 = vsel %vm2555, %v3915, %v3919
      %v3946 = vsel %vm2555, %v3909, %v3913
      %v3947 = vsel %vm2555, %v3911, %v3915
      %v3948 = vsel %vm2555, %v3905, %v3909
      %v3949 = vsel %vm2555, %v3907, %v3911
      %v3950 = vsel %vm2555, %v3933, %v3905
      %v3951 = vsel %vm2555, %v3935, %v3907
      %s3952 = scalar_lea.vmem %s5, 3
      %v3953 = vld [vmem:[%s3952] ss:$8 sm:$0xf]
      %v3954 = vld [vmem:[%s3952] ss:$8 sm:$0xf0]
      %v3955 = vor.u32 %v3953, %v3954
      %v3957 = vperm.slane %v3955, 0
      %v3958 = vperm.slane %v3955, 1
      %v3959 = vperm.slane %v3955, 2
      %v3960 = vperm.slane %v3955, 3
      %v3961 = vperm.slane %v3955, 4
      %v3962 = vperm.slane %v3955, 5
      %v3963 = vperm.slane %v3955, 6
      %v3964 = vperm.slane %v3955, 7
      %v3973 = vmul.f32 %v3948, %v3957
      %v3974 = vmul.f32 %v3946, %v3958
      %v3975 = vmul.f32 %v3944, %v3959
      %v3976 = vmul.f32 %v3942, %v3960
      %v3977 = vmul.f32 %v3940, %v3961
      %v3978 = vmul.f32 %v3938, %v3962
      %v3979 = vmul.f32 %v3936, %v3963
      %v3980 = vmul.f32 %v3950, %v3964
      %v3981 = vmul.f32 %v3949, %v3957
      %v3982 = vmul.f32 %v3947, %v3958
      %v3983 = vmul.f32 %v3945, %v3959
      %v3984 = vmul.f32 %v3943, %v3960
      %v3985 = vmul.f32 %v3941, %v3961
      %v3986 = vmul.f32 %v3939, %v3962
      %v3987 = vmul.f32 %v3937, %v3963
      %v3988 = vmul.f32 %v3951, %v3964
      %3989 = vset.pattern.permute.xlu0 3
      %3990 = vperm.xlu0 %3989, %v3695
      %v3991 = vpop.permute.xlu0 %3990
      %3993 = vset.pattern.permute.xlu0 3
      %3994 = vperm.xlu0 %3993, %v3696
      %v3995 = vpop.permute.xlu0 %3994
      %v3997 = vmul.f32 %v3973, %v3991
      %v3998 = vmul.f32 %v3974, %v3991
      %v3999 = vmul.f32 %v3975, %v3991
      %v4000 = vmul.f32 %v3976, %v3991
      %v4001 = vmul.f32 %v3977, %v3991
      %v4002 = vmul.f32 %v3978, %v3991
      %v4003 = vmul.f32 %v3979, %v3991
      %v4004 = vmul.f32 %v3980, %v3991
      %v4005 = vmul.f32 %v3981, %v3995
      %v4006 = vmul.f32 %v3982, %v3995
      %v4007 = vmul.f32 %v3983, %v3995
      %v4008 = vmul.f32 %v3984, %v3995
      %v4009 = vmul.f32 %v3985, %v3995
      %v4010 = vmul.f32 %v3986, %v3995
      %v4011 = vmul.f32 %v3987, %v3995
      %v4012 = vmul.f32 %v3988, %v3995
      %v4013 = vadd.f32 %v3888, %v3997
      %v4014 = vadd.f32 %v3889, %v3998
      %v4015 = vadd.f32 %v3890, %v3999
      %v4016 = vadd.f32 %v3891, %v4000
      %v4017 = vadd.f32 %v3892, %v4001
      %v4018 = vadd.f32 %v3893, %v4002
      %v4019 = vadd.f32 %v3894, %v4003
      %v4020 = vadd.f32 %v3895, %v4004
      %v4021 = vadd.f32 %v3896, %v4005
      %v4022 = vadd.f32 %v3897, %v4006
      %v4023 = vadd.f32 %v3898, %v4007
      %v4024 = vadd.f32 %v3899, %v4008
      %v4025 = vadd.f32 %v3900, %v4009
      %v4026 = vadd.f32 %v3901, %v4010
      %v4027 = vadd.f32 %v3902, %v4011
      %v4028 = vadd.f32 %v3903, %v4012
      %s4029 = scalar_lea.vmem %s5, 4
      %v4030 = vld [vmem:[%s4029] ss:$8 sm:$0xf]
      %v4031 = vld [vmem:[%s4029] ss:$8 sm:$0xf0]
      %v4032 = vor.u32 %v4030, %v4031
      %v4034 = vperm.slane %v4032, 0
      %v4035 = vperm.slane %v4032, 1
      %v4036 = vperm.slane %v4032, 2
      %v4037 = vperm.slane %v4032, 3
      %v4038 = vperm.slane %v4032, 4
      %v4039 = vperm.slane %v4032, 5
      %v4040 = vperm.slane %v4032, 6
      %v4041 = vperm.slane %v4032, 7
      %v4050 = vmul.f32 %v3655, %v4034
      %v4051 = vmul.f32 %v3653, %v4035
      %v4052 = vmul.f32 %v3651, %v4036
      %v4053 = vmul.f32 %v3649, %v4037
      %v4054 = vmul.f32 %v3647, %v4038
      %v4055 = vmul.f32 %v3645, %v4039
      %v4056 = vmul.f32 %v3643, %v4040
      %v4057 = vmul.f32 %v3657, %v4041
      %v4058 = vmul.f32 %v3656, %v4034
      %v4059 = vmul.f32 %v3654, %v4035
      %v4060 = vmul.f32 %v3652, %v4036
      %v4061 = vmul.f32 %v3650, %v4037
      %v4062 = vmul.f32 %v3648, %v4038
      %v4063 = vmul.f32 %v3646, %v4039
      %v4064 = vmul.f32 %v3644, %v4040
      %v4065 = vmul.f32 %v3658, %v4041
      %4066 = vset.pattern.permute.xlu0 4
      %4067 = vperm.xlu0 %4066, %v3695
      %v4068 = vpop.permute.xlu0 %4067
      %4070 = vset.pattern.permute.xlu0 4
      %4071 = vperm.xlu0 %4070, %v3696
      %v4072 = vpop.permute.xlu0 %4071
      %v4074 = vmul.f32 %v4050, %v4068
      %v4075 = vmul.f32 %v4051, %v4068
      %v4076 = vmul.f32 %v4052, %v4068
      %v4077 = vmul.f32 %v4053, %v4068
      %v4078 = vmul.f32 %v4054, %v4068
      %v4079 = vmul.f32 %v4055, %v4068
      %v4080 = vmul.f32 %v4056, %v4068
      %v4081 = vmul.f32 %v4057, %v4068
      %v4082 = vmul.f32 %v4058, %v4072
      %v4083 = vmul.f32 %v4059, %v4072
      %v4084 = vmul.f32 %v4060, %v4072
      %v4085 = vmul.f32 %v4061, %v4072
      %v4086 = vmul.f32 %v4062, %v4072
      %v4087 = vmul.f32 %v4063, %v4072
      %v4088 = vmul.f32 %v4064, %v4072
      %v4089 = vmul.f32 %v4065, %v4072
      %v4090 = vadd.f32 %v4013, %v4074
      %v4091 = vadd.f32 %v4014, %v4075
      %v4092 = vadd.f32 %v4015, %v4076
      %v4093 = vadd.f32 %v4016, %v4077
      %v4094 = vadd.f32 %v4017, %v4078
      %v4095 = vadd.f32 %v4018, %v4079
      %v4096 = vadd.f32 %v4019, %v4080
      %v4097 = vadd.f32 %v4020, %v4081
      %v4098 = vadd.f32 %v4021, %v4082
      %v4099 = vadd.f32 %v4022, %v4083
      %v4100 = vadd.f32 %v4023, %v4084
      %v4101 = vadd.f32 %v4024, %v4085
      %v4102 = vadd.f32 %v4025, %v4086
      %v4103 = vadd.f32 %v4026, %v4087
      %v4104 = vadd.f32 %v4027, %v4088
      %v4105 = vadd.f32 %v4028, %v4089
      %v4106 = vld [vmem:[%s15] sm:$0xff]
      %v4107 = vld [vmem:[%s15 + $0x8] sm:$0xff]
      %4109 = vset.pattern.permute.xlu0 0
      %4110 = vperm.xlu0 %4109, %v4106
      %v4111 = vpop.permute.xlu0 %4110
      %4114 = vset.pattern.permute.xlu0 0
      %4115 = vperm.xlu0 %4114, %v4107
      %v4116 = vpop.permute.xlu0 %4115
      %v4118 = vadd.f32 %v4090, %v4111
      %v4119 = vadd.f32 %v4091, %v4111
      %v4120 = vadd.f32 %v4092, %v4111
      %v4121 = vadd.f32 %v4093, %v4111
      %v4122 = vadd.f32 %v4094, %v4111
      %v4123 = vadd.f32 %v4095, %v4111
      %v4124 = vadd.f32 %v4096, %v4111
      %v4125 = vadd.f32 %v4097, %v4111
      %v4126 = vadd.f32 %v4098, %v4116
      %v4127 = vadd.f32 %v4099, %v4116
      %v4128 = vadd.f32 %v4100, %v4116
      %v4129 = vadd.f32 %v4101, %v4116
      %v4130 = vadd.f32 %v4102, %v4116
      %v4131 = vadd.f32 %v4103, %v4116
      %v4132 = vadd.f32 %v4104, %v4116
      %v4133 = vadd.f32 %v4105, %v4116
      %v4134 = vxor.u32 %v4118, 2147483648
      %v4135 = vxor.u32 %v4119, 2147483648
      %v4136 = vxor.u32 %v4120, 2147483648
      %v4137 = vxor.u32 %v4121, 2147483648
      %v4138 = vxor.u32 %v4122, 2147483648
      %v4139 = vxor.u32 %v4123, 2147483648
      %v4140 = vxor.u32 %v4124, 2147483648
      %v4141 = vxor.u32 %v4125, 2147483648
      %v4142 = vxor.u32 %v4126, 2147483648
      %v4143 = vxor.u32 %v4127, 2147483648
      %v4144 = vxor.u32 %v4128, 2147483648
      %v4145 = vxor.u32 %v4129, 2147483648
      %v4146 = vxor.u32 %v4130, 2147483648
      %v4147 = vxor.u32 %v4131, 2147483648
      %v4148 = vxor.u32 %v4132, 2147483648
      %v4149 = vxor.u32 %v4133, 2147483648
      %v4150 = vmul.f32 %v4134, 1.442695
      %v4151 = vpow.pop %v4150
      %v4152 = vmul.f32 %v4135, 1.442695
      %v4153 = vpow.pop %v4152
      %v4154 = vmul.f32 %v4136, 1.442695
      %v4155 = vpow.pop %v4154
      %v4156 = vmul.f32 %v4137, 1.442695
      %v4157 = vpow.pop %v4156
      %v4158 = vmul.f32 %v4138, 1.442695
      %v4159 = vpow.pop %v4158
      %v4160 = vmul.f32 %v4139, 1.442695
      %v4161 = vpow.pop %v4160
      %v4162 = vmul.f32 %v4140, 1.442695
      %v4163 = vpow.pop %v4162
      %v4164 = vmul.f32 %v4141, 1.442695
      %v4165 = vpow.pop %v4164
      %v4166 = vmul.f32 %v4142, 1.442695
      %v4167 = vpow.pop %v4166
      %v4168 = vmul.f32 %v4143, 1.442695
      %v4169 = vpow.pop %v4168
      %v4170 = vmul.f32 %v4144, 1.442695
      %v4171 = vpow.pop %v4170
      %v4172 = vmul.f32 %v4145, 1.442695
      %v4173 = vpow.pop %v4172
      %v4174 = vmul.f32 %v4146, 1.442695
      %v4175 = vpow.pop %v4174
      %v4176 = vmul.f32 %v4147, 1.442695
      %v4177 = vpow.pop %v4176
      %v4178 = vmul.f32 %v4148, 1.442695
      %v4179 = vpow.pop %v4178
      %v4180 = vmul.f32 %v4149, 1.442695
      %v4181 = vpow.pop %v4180
      %v4182 = vadd.f32 %v4151, 1.0
      %v4183 = vadd.f32 %v4153, 1.0
      %v4184 = vadd.f32 %v4155, 1.0
      %v4185 = vadd.f32 %v4157, 1.0
      %v4186 = vadd.f32 %v4159, 1.0
      %v4187 = vadd.f32 %v4161, 1.0
      %v4188 = vadd.f32 %v4163, 1.0
      %v4189 = vadd.f32 %v4165, 1.0
      %v4190 = vadd.f32 %v4167, 1.0
      %v4191 = vadd.f32 %v4169, 1.0
      %v4192 = vadd.f32 %v4171, 1.0
      %v4193 = vadd.f32 %v4173, 1.0
      %v4194 = vadd.f32 %v4175, 1.0
      %v4195 = vadd.f32 %v4177, 1.0
      %v4196 = vadd.f32 %v4179, 1.0
      %v4197 = vadd.f32 %v4181, 1.0
      %v4198 = vrcp.pop %v4182
      %v4199 = vmul.f32 %v4182, %v4198
      %v4200 = vsub.f32 1.0, %v4199
      %v4201 = vmul.f32 %v4198, %v4200
      %v4202 = vadd.f32 %v4198, %v4201
      %vm4203 = vweird.f32 %v4182
      %vm4204 = vweird.f32 %v4198
      %vm4205 = vmor %vm4203, %vm4204
      %v4206 = vsel %vm4205, %v4198, %v4202
      %v4207 = vand.u32 2147483647, %v4182
      %vm4208 = vcmp.eq.f32.partialorder %v4207, 8.507059e+37
      %v4209 = vand.u32 %v4182, 2147483648
      %v4210 = vor.u32 1.1754944e-38, %v4209
      %v4211 = vsel %vm4208, %v4210, %v4206
      %v4212 = vmul.f32 1.0, %v4211
      %v4213 = vrcp.pop %v4183
      %v4214 = vmul.f32 %v4183, %v4213
      %v4215 = vsub.f32 1.0, %v4214
      %v4216 = vmul.f32 %v4213, %v4215
      %v4217 = vadd.f32 %v4213, %v4216
      %vm4218 = vweird.f32 %v4183
      %vm4219 = vweird.f32 %v4213
      %vm4220 = vmor %vm4218, %vm4219
      %v4221 = vsel %vm4220, %v4213, %v4217
      %v4222 = vand.u32 2147483647, %v4183
      %vm4223 = vcmp.eq.f32.partialorder %v4222, 8.507059e+37
      %v4224 = vand.u32 %v4183, 2147483648
      %v4225 = vor.u32 1.1754944e-38, %v4224
      %v4226 = vsel %vm4223, %v4225, %v4221
      %v4227 = vmul.f32 1.0, %v4226
      %v4228 = vrcp.pop %v4184
      %v4229 = vmul.f32 %v4184, %v4228
      %v4230 = vsub.f32 1.0, %v4229
      %v4231 = vmul.f32 %v4228, %v4230
      %v4232 = vadd.f32 %v4228, %v4231
      %vm4233 = vweird.f32 %v4184
      %vm4234 = vweird.f32 %v4228
      %vm4235 = vmor %vm4233, %vm4234
      %v4236 = vsel %vm4235, %v4228, %v4232
      %v4237 = vand.u32 2147483647, %v4184
      %vm4238 = vcmp.eq.f32.partialorder %v4237, 8.507059e+37
      %v4239 = vand.u32 %v4184, 2147483648
      %v4240 = vor.u32 1.1754944e-38, %v4239
      %v4241 = vsel %vm4238, %v4240, %v4236
      %v4242 = vmul.f32 1.0, %v4241
      %v4243 = vrcp.pop %v4185
      %v4244 = vmul.f32 %v4185, %v4243
      %v4245 = vsub.f32 1.0, %v4244
      %v4246 = vmul.f32 %v4243, %v4245
      %v4247 = vadd.f32 %v4243, %v4246
      %vm4248 = vweird.f32 %v4185
      %vm4249 = vweird.f32 %v4243
      %vm4250 = vmor %vm4248, %vm4249
      %v4251 = vsel %vm4250, %v4243, %v4247
      %v4252 = vand.u32 2147483647, %v4185
      %vm4253 = vcmp.eq.f32.partialorder %v4252, 8.507059e+37
      %v4254 = vand.u32 %v4185, 2147483648
      %v4255 = vor.u32 1.1754944e-38, %v4254
      %v4256 = vsel %vm4253, %v4255, %v4251
      %v4257 = vmul.f32 1.0, %v4256
      %v4258 = vrcp.pop %v4186
      %v4259 = vmul.f32 %v4186, %v4258
      %v4260 = vsub.f32 1.0, %v4259
      %v4261 = vmul.f32 %v4258, %v4260
      %v4262 = vadd.f32 %v4258, %v4261
      %vm4263 = vweird.f32 %v4186
      %vm4264 = vweird.f32 %v4258
      %vm4265 = vmor %vm4263, %vm4264
      %v4266 = vsel %vm4265, %v4258, %v4262
      %v4267 = vand.u32 2147483647, %v4186
      %vm4268 = vcmp.eq.f32.partialorder %v4267, 8.507059e+37
      %v4269 = vand.u32 %v4186, 2147483648
      %v4270 = vor.u32 1.1754944e-38, %v4269
      %v4271 = vsel %vm4268, %v4270, %v4266
      %v4272 = vmul.f32 1.0, %v4271
      %v4273 = vrcp.pop %v4187
      %v4274 = vmul.f32 %v4187, %v4273
      %v4275 = vsub.f32 1.0, %v4274
      %v4276 = vmul.f32 %v4273, %v4275
      %v4277 = vadd.f32 %v4273, %v4276
      %vm4278 = vweird.f32 %v4187
      %vm4279 = vweird.f32 %v4273
      %vm4280 = vmor %vm4278, %vm4279
      %v4281 = vsel %vm4280, %v4273, %v4277
      %v4282 = vand.u32 2147483647, %v4187
      %vm4283 = vcmp.eq.f32.partialorder %v4282, 8.507059e+37
      %v4284 = vand.u32 %v4187, 2147483648
      %v4285 = vor.u32 1.1754944e-38, %v4284
      %v4286 = vsel %vm4283, %v4285, %v4281
      %v4287 = vmul.f32 1.0, %v4286
      %v4288 = vrcp.pop %v4188
      %v4289 = vmul.f32 %v4188, %v4288
      %v4290 = vsub.f32 1.0, %v4289
      %v4291 = vmul.f32 %v4288, %v4290
      %v4292 = vadd.f32 %v4288, %v4291
      %vm4293 = vweird.f32 %v4188
      %vm4294 = vweird.f32 %v4288
      %vm4295 = vmor %vm4293, %vm4294
      %v4296 = vsel %vm4295, %v4288, %v4292
      %v4297 = vand.u32 2147483647, %v4188
      %vm4298 = vcmp.eq.f32.partialorder %v4297, 8.507059e+37
      %v4299 = vand.u32 %v4188, 2147483648
      %v4300 = vor.u32 1.1754944e-38, %v4299
      %v4301 = vsel %vm4298, %v4300, %v4296
      %v4302 = vmul.f32 1.0, %v4301
      %v4303 = vrcp.pop %v4189
      %v4304 = vmul.f32 %v4189, %v4303
      %v4305 = vsub.f32 1.0, %v4304
      %v4306 = vmul.f32 %v4303, %v4305
      %v4307 = vadd.f32 %v4303, %v4306
      %vm4308 = vweird.f32 %v4189
      %vm4309 = vweird.f32 %v4303
      %vm4310 = vmor %vm4308, %vm4309
      %v4311 = vsel %vm4310, %v4303, %v4307
      %v4312 = vand.u32 2147483647, %v4189
      %vm4313 = vcmp.eq.f32.partialorder %v4312, 8.507059e+37
      %v4314 = vand.u32 %v4189, 2147483648
      %v4315 = vor.u32 1.1754944e-38, %v4314
      %v4316 = vsel %vm4313, %v4315, %v4311
      %v4317 = vmul.f32 1.0, %v4316
      %v4318 = vrcp.pop %v4190
      %v4319 = vmul.f32 %v4190, %v4318
      %v4320 = vsub.f32 1.0, %v4319
      %v4321 = vmul.f32 %v4318, %v4320
      %v4322 = vadd.f32 %v4318, %v4321
      %vm4323 = vweird.f32 %v4190
      %vm4324 = vweird.f32 %v4318
      %vm4325 = vmor %vm4323, %vm4324
      %v4326 = vsel %vm4325, %v4318, %v4322
      %v4327 = vand.u32 2147483647, %v4190
      %vm4328 = vcmp.eq.f32.partialorder %v4327, 8.507059e+37
      %v4329 = vand.u32 %v4190, 2147483648
      %v4330 = vor.u32 1.1754944e-38, %v4329
      %v4331 = vsel %vm4328, %v4330, %v4326
      %v4332 = vmul.f32 1.0, %v4331
      %v4333 = vrcp.pop %v4191
      %v4334 = vmul.f32 %v4191, %v4333
      %v4335 = vsub.f32 1.0, %v4334
      %v4336 = vmul.f32 %v4333, %v4335
      %v4337 = vadd.f32 %v4333, %v4336
      %vm4338 = vweird.f32 %v4191
      %vm4339 = vweird.f32 %v4333
      %vm4340 = vmor %vm4338, %vm4339
      %v4341 = vsel %vm4340, %v4333, %v4337
      %v4342 = vand.u32 2147483647, %v4191
      %vm4343 = vcmp.eq.f32.partialorder %v4342, 8.507059e+37
      %v4344 = vand.u32 %v4191, 2147483648
      %v4345 = vor.u32 1.1754944e-38, %v4344
      %v4346 = vsel %vm4343, %v4345, %v4341
      %v4347 = vmul.f32 1.0, %v4346
      %v4348 = vrcp.pop %v4192
      %v4349 = vmul.f32 %v4192, %v4348
      %v4350 = vsub.f32 1.0, %v4349
      %v4351 = vmul.f32 %v4348, %v4350
      %v4352 = vadd.f32 %v4348, %v4351
      %vm4353 = vweird.f32 %v4192
      %vm4354 = vweird.f32 %v4348
      %vm4355 = vmor %vm4353, %vm4354
      %v4356 = vsel %vm4355, %v4348, %v4352
      %v4357 = vand.u32 2147483647, %v4192
      %vm4358 = vcmp.eq.f32.partialorder %v4357, 8.507059e+37
      %v4359 = vand.u32 %v4192, 2147483648
      %v4360 = vor.u32 1.1754944e-38, %v4359
      %v4361 = vsel %vm4358, %v4360, %v4356
      %v4362 = vmul.f32 1.0, %v4361
      %v4363 = vrcp.pop %v4193
      %v4364 = vmul.f32 %v4193, %v4363
      %v4365 = vsub.f32 1.0, %v4364
      %v4366 = vmul.f32 %v4363, %v4365
      %v4367 = vadd.f32 %v4363, %v4366
      %vm4368 = vweird.f32 %v4193
      %vm4369 = vweird.f32 %v4363
      %vm4370 = vmor %vm4368, %vm4369
      %v4371 = vsel %vm4370, %v4363, %v4367
      %v4372 = vand.u32 2147483647, %v4193
      %vm4373 = vcmp.eq.f32.partialorder %v4372, 8.507059e+37
      %v4374 = vand.u32 %v4193, 2147483648
      %v4375 = vor.u32 1.1754944e-38, %v4374
      %v4376 = vsel %vm4373, %v4375, %v4371
      %v4377 = vmul.f32 1.0, %v4376
      %v4378 = vrcp.pop %v4194
      %v4379 = vmul.f32 %v4194, %v4378
      %v4380 = vsub.f32 1.0, %v4379
      %v4381 = vmul.f32 %v4378, %v4380
      %v4382 = vadd.f32 %v4378, %v4381
      %vm4383 = vweird.f32 %v4194
      %vm4384 = vweird.f32 %v4378
      %vm4385 = vmor %vm4383, %vm4384
      %v4386 = vsel %vm4385, %v4378, %v4382
      %v4387 = vand.u32 2147483647, %v4194
      %vm4388 = vcmp.eq.f32.partialorder %v4387, 8.507059e+37
      %v4389 = vand.u32 %v4194, 2147483648
      %v4390 = vor.u32 1.1754944e-38, %v4389
      %v4391 = vsel %vm4388, %v4390, %v4386
      %v4392 = vmul.f32 1.0, %v4391
      %v4393 = vrcp.pop %v4195
      %v4394 = vmul.f32 %v4195, %v4393
      %v4395 = vsub.f32 1.0, %v4394
      %v4396 = vmul.f32 %v4393, %v4395
      %v4397 = vadd.f32 %v4393, %v4396
      %vm4398 = vweird.f32 %v4195
      %vm4399 = vweird.f32 %v4393
      %vm4400 = vmor %vm4398, %vm4399
      %v4401 = vsel %vm4400, %v4393, %v4397
      %v4402 = vand.u32 2147483647, %v4195
      %vm4403 = vcmp.eq.f32.partialorder %v4402, 8.507059e+37
      %v4404 = vand.u32 %v4195, 2147483648
      %v4405 = vor.u32 1.1754944e-38, %v4404
      %v4406 = vsel %vm4403, %v4405, %v4401
      %v4407 = vmul.f32 1.0, %v4406
      %v4408 = vrcp.pop %v4196
      %v4409 = vmul.f32 %v4196, %v4408
      %v4410 = vsub.f32 1.0, %v4409
      %v4411 = vmul.f32 %v4408, %v4410
      %v4412 = vadd.f32 %v4408, %v4411
      %vm4413 = vweird.f32 %v4196
      %vm4414 = vweird.f32 %v4408
      %vm4415 = vmor %vm4413, %vm4414
      %v4416 = vsel %vm4415, %v4408, %v4412
      %v4417 = vand.u32 2147483647, %v4196
      %vm4418 = vcmp.eq.f32.partialorder %v4417, 8.507059e+37
      %v4419 = vand.u32 %v4196, 2147483648
      %v4420 = vor.u32 1.1754944e-38, %v4419
      %v4421 = vsel %vm4418, %v4420, %v4416
      %v4422 = vmul.f32 1.0, %v4421
      %v4423 = vrcp.pop %v4197
      %v4424 = vmul.f32 %v4197, %v4423
      %v4425 = vsub.f32 1.0, %v4424
      %v4426 = vmul.f32 %v4423, %v4425
      %v4427 = vadd.f32 %v4423, %v4426
      %vm4428 = vweird.f32 %v4197
      %vm4429 = vweird.f32 %v4423
      %vm4430 = vmor %vm4428, %vm4429
      %v4431 = vsel %vm4430, %v4423, %v4427
      %v4432 = vand.u32 2147483647, %v4197
      %vm4433 = vcmp.eq.f32.partialorder %v4432, 8.507059e+37
      %v4434 = vand.u32 %v4197, 2147483648
      %v4435 = vor.u32 1.1754944e-38, %v4434
      %v4436 = vsel %vm4433, %v4435, %v4431
      %v4437 = vmul.f32 1.0, %v4436
      %v4438 = vld [vmem:[%s1] sm:$0xff]
      %v4440 = vperm.slane %v4438, 0
      %v4441 = vperm.slane %v4438, 1
      %v4442 = vperm.slane %v4438, 2
      %v4443 = vperm.slane %v4438, 3
      %v4444 = vperm.slane %v4438, 4
      %v4445 = vperm.slane %v4438, 5
      %v4446 = vperm.slane %v4438, 6
      %v4447 = vperm.slane %v4438, 7
      %v4456 = vmul.f32 %v4212, %v4440
      %v4457 = vmul.f32 %v4227, %v4441
      %v4458 = vmul.f32 %v4242, %v4442
      %v4459 = vmul.f32 %v4257, %v4443
      %v4460 = vmul.f32 %v4272, %v4444
      %v4461 = vmul.f32 %v4287, %v4445
      %v4462 = vmul.f32 %v4302, %v4446
      %v4463 = vmul.f32 %v4317, %v4447
      %v4464 = vmul.f32 %v4332, %v4440
      %v4465 = vmul.f32 %v4347, %v4441
      %v4466 = vmul.f32 %v4362, %v4442
      %v4467 = vmul.f32 %v4377, %v4443
      %v4468 = vmul.f32 %v4392, %v4444
      %v4469 = vmul.f32 %v4407, %v4445
      %v4470 = vmul.f32 %v4422, %v4446
      %v4471 = vmul.f32 %v4437, %v4447
      %4472 = vrot.lane.b32.xlu0 %v4456, 1
      %v4473 = vpop.permute.xlu0 %4472
      %4474 = vrot.lane.b32.xlu0 %v4464, 1
      %v4475 = vpop.permute.xlu0 %4474
      %4476 = vrot.lane.b32.xlu0 %v4457, 1
      %v4477 = vpop.permute.xlu0 %4476
      %4478 = vrot.lane.b32.xlu0 %v4465, 1
      %v4479 = vpop.permute.xlu0 %4478
      %4480 = vrot.lane.b32.xlu0 %v4458, 1
      %v4481 = vpop.permute.xlu0 %4480
      %4482 = vrot.lane.b32.xlu0 %v4466, 1
      %v4483 = vpop.permute.xlu0 %4482
      %4484 = vrot.lane.b32.xlu0 %v4459, 1
      %v4485 = vpop.permute.xlu0 %4484
      %4486 = vrot.lane.b32.xlu0 %v4467, 1
      %v4487 = vpop.permute.xlu0 %4486
      %4488 = vrot.lane.b32.xlu0 %v4460, 1
      %v4489 = vpop.permute.xlu0 %4488
      %4490 = vrot.lane.b32.xlu0 %v4468, 1
      %v4491 = vpop.permute.xlu0 %4490
      %4492 = vrot.lane.b32.xlu0 %v4461, 1
      %v4493 = vpop.permute.xlu0 %4492
      %4494 = vrot.lane.b32.xlu0 %v4469, 1
      %v4495 = vpop.permute.xlu0 %4494
      %4496 = vrot.lane.b32.xlu0 %v4462, 1
      %v4497 = vpop.permute.xlu0 %4496
      %4498 = vrot.lane.b32.xlu0 %v4470, 1
      %v4499 = vpop.permute.xlu0 %4498
      %4500 = vrot.lane.b32.xlu0 %v4463, 1
      %v4501 = vpop.permute.xlu0 %4500
      %4502 = vrot.lane.b32.xlu0 %v4471, 1
      %v4503 = vpop.permute.xlu0 %4502
      %v4504 = vsel %vm953, %v4497, %v4501
      %v4505 = vsel %vm953, %v4499, %v4503
      %v4506 = vsel %vm953, %v4493, %v4497
      %v4507 = vsel %vm953, %v4495, %v4499
      %v4508 = vsel %vm953, %v4489, %v4493
      %v4509 = vsel %vm953, %v4491, %v4495
      %v4510 = vsel %vm953, %v4485, %v4489
      %v4511 = vsel %vm953, %v4487, %v4491
      %v4512 = vsel %vm953, %v4481, %v4485
      %v4513 = vsel %vm953, %v4483, %v4487
      %v4514 = vsel %vm953, %v4477, %v4481
      %v4515 = vsel %vm953, %v4479, %v4483
      %v4516 = vsel %vm953, %v4473, %v4477
      %v4517 = vsel %vm953, %v4475, %v4479
      %v4518 = vsel %vm953, %v4501, %v4473
      %v4519 = vsel %vm953, %v4503, %v4475
      %v4520 = vadd.f32 %v4456, %v4518
      %v4521 = vadd.f32 %v4457, %v4516
      %v4522 = vadd.f32 %v4458, %v4514
      %v4523 = vadd.f32 %v4459, %v4512
      %v4524 = vadd.f32 %v4460, %v4510
      %v4525 = vadd.f32 %v4461, %v4508
      %v4526 = vadd.f32 %v4462, %v4506
      %v4527 = vadd.f32 %v4463, %v4504
      %v4528 = vadd.f32 %v4464, %v4519
      %v4529 = vadd.f32 %v4465, %v4517
      %v4530 = vadd.f32 %v4466, %v4515
      %v4531 = vadd.f32 %v4467, %v4513
      %v4532 = vadd.f32 %v4468, %v4511
      %v4533 = vadd.f32 %v4469, %v4509
      %v4534 = vadd.f32 %v4470, %v4507
      %v4535 = vadd.f32 %v4471, %v4505
      %4536 = vrot.lane.b32.xlu0 %v4520, 16
      %v4537 = vpop.permute.xlu0 %4536
      %4538 = vrot.lane.b32.xlu0 %v4528, 16
      %v4539 = vpop.permute.xlu0 %4538
      %4540 = vrot.lane.b32.xlu0 %v4521, 16
      %v4541 = vpop.permute.xlu0 %4540
      %4542 = vrot.lane.b32.xlu0 %v4529, 16
      %v4543 = vpop.permute.xlu0 %4542
      %4544 = vrot.lane.b32.xlu0 %v4522, 16
      %v4545 = vpop.permute.xlu0 %4544
      %4546 = vrot.lane.b32.xlu0 %v4530, 16
      %v4547 = vpop.permute.xlu0 %4546
      %4548 = vrot.lane.b32.xlu0 %v4523, 16
      %v4549 = vpop.permute.xlu0 %4548
      %4550 = vrot.lane.b32.xlu0 %v4531, 16
      %v4551 = vpop.permute.xlu0 %4550
      %4552 = vrot.lane.b32.xlu0 %v4524, 16
      %v4553 = vpop.permute.xlu0 %4552
      %4554 = vrot.lane.b32.xlu0 %v4532, 16
      %v4555 = vpop.permute.xlu0 %4554
      %4556 = vrot.lane.b32.xlu0 %v4525, 16
      %v4557 = vpop.permute.xlu0 %4556
      %4558 = vrot.lane.b32.xlu0 %v4533, 16
      %v4559 = vpop.permute.xlu0 %4558
      %4560 = vrot.lane.b32.xlu0 %v4526, 16
      %v4561 = vpop.permute.xlu0 %4560
      %4562 = vrot.lane.b32.xlu0 %v4534, 16
      %v4563 = vpop.permute.xlu0 %4562
      %4564 = vrot.lane.b32.xlu0 %v4527, 16
      %v4565 = vpop.permute.xlu0 %4564
      %4566 = vrot.lane.b32.xlu0 %v4535, 16
      %v4567 = vpop.permute.xlu0 %4566
      %v4568 = vsel %vm829, %v4561, %v4565
      %v4569 = vsel %vm829, %v4563, %v4567
      %v4570 = vsel %vm829, %v4557, %v4561
      %v4571 = vsel %vm829, %v4559, %v4563
      %v4572 = vsel %vm829, %v4553, %v4557
      %v4573 = vsel %vm829, %v4555, %v4559
      %v4574 = vsel %vm829, %v4549, %v4553
      %v4575 = vsel %vm829, %v4551, %v4555
      %v4576 = vsel %vm829, %v4545, %v4549
      %v4577 = vsel %vm829, %v4547, %v4551
      %v4578 = vsel %vm829, %v4541, %v4545
      %v4579 = vsel %vm829, %v4543, %v4547
      %v4580 = vsel %vm829, %v4537, %v4541
      %v4581 = vsel %vm829, %v4539, %v4543
      %v4582 = vsel %vm829, %v4565, %v4537
      %v4583 = vsel %vm829, %v4567, %v4539
      %v4584 = vadd.f32 %v4520, %v4582
      %v4585 = vadd.f32 %v4521, %v4580
      %v4586 = vadd.f32 %v4522, %v4578
      %v4587 = vadd.f32 %v4523, %v4576
      %v4588 = vadd.f32 %v4524, %v4574
      %v4589 = vadd.f32 %v4525, %v4572
      %v4590 = vadd.f32 %v4526, %v4570
      %v4591 = vadd.f32 %v4527, %v4568
      %v4592 = vadd.f32 %v4528, %v4583
      %v4593 = vadd.f32 %v4529, %v4581
      %v4594 = vadd.f32 %v4530, %v4579
      %v4595 = vadd.f32 %v4531, %v4577
      %v4596 = vadd.f32 %v4532, %v4575
      %v4597 = vadd.f32 %v4533, %v4573
      %v4598 = vadd.f32 %v4534, %v4571
      %v4599 = vadd.f32 %v4535, %v4569
      %v4600 = vmul.f32 %v1532, %v4584
      %v4601 = vmul.f32 %v1533, %v4585
      %v4602 = vmul.f32 %v1534, %v4586
      %v4603 = vmul.f32 %v1535, %v4587
      %v4604 = vmul.f32 %v1536, %v4588
      %v4605 = vmul.f32 %v1537, %v4589
      %v4606 = vmul.f32 %v1538, %v4590
      %v4607 = vmul.f32 %v1539, %v4591
      %v4608 = vmul.f32 %v2152, %v4592
      %v4609 = vmul.f32 %v2153, %v4593
      %v4610 = vmul.f32 %v2154, %v4594
      %v4611 = vmul.f32 %v2155, %v4595
      %v4612 = vmul.f32 %v2156, %v4596
      %v4613 = vmul.f32 %v2157, %v4597
      %v4614 = vmul.f32 %v2158, %v4598
      %v4615 = vmul.f32 %v2159, %v4599
      %4616 = vrot.lane.b32.xlu0 %v4600, 17
      %v4617 = vpop.permute.xlu0 %4616
      %4618 = vrot.lane.b32.xlu0 %v4608, 17
      %v4619 = vpop.permute.xlu0 %4618
      %4620 = vrot.lane.b32.xlu0 %v4601, 17
      %v4621 = vpop.permute.xlu0 %4620
      %4622 = vrot.lane.b32.xlu0 %v4609, 17
      %v4623 = vpop.permute.xlu0 %4622
      %4624 = vrot.lane.b32.xlu0 %v4602, 17
      %v4625 = vpop.permute.xlu0 %4624
      %4626 = vrot.lane.b32.xlu0 %v4610, 17
      %v4627 = vpop.permute.xlu0 %4626
      %4628 = vrot.lane.b32.xlu0 %v4603, 17
      %v4629 = vpop.permute.xlu0 %4628
      %4630 = vrot.lane.b32.xlu0 %v4611, 17
      %v4631 = vpop.permute.xlu0 %4630
      %4632 = vrot.lane.b32.xlu0 %v4604, 17
      %v4633 = vpop.permute.xlu0 %4632
      %4634 = vrot.lane.b32.xlu0 %v4612, 17
      %v4635 = vpop.permute.xlu0 %4634
      %4636 = vrot.lane.b32.xlu0 %v4605, 17
      %v4637 = vpop.permute.xlu0 %4636
      %4638 = vrot.lane.b32.xlu0 %v4613, 17
      %v4639 = vpop.permute.xlu0 %4638
      %4640 = vrot.lane.b32.xlu0 %v4606, 17
      %v4641 = vpop.permute.xlu0 %4640
      %4642 = vrot.lane.b32.xlu0 %v4614, 17
      %v4643 = vpop.permute.xlu0 %4642
      %4644 = vrot.lane.b32.xlu0 %v4607, 17
      %v4645 = vpop.permute.xlu0 %4644
      %4646 = vrot.lane.b32.xlu0 %v4615, 17
      %v4647 = vpop.permute.xlu0 %4646
      %v4648 = vsel %vm768, %v4641, %v4645
      %v4649 = vsel %vm768, %v4643, %v4647
      %v4650 = vsel %vm768, %v4637, %v4641
      %v4651 = vsel %vm768, %v4639, %v4643
      %v4652 = vsel %vm768, %v4633, %v4637
      %v4653 = vsel %vm768, %v4635, %v4639
      %v4654 = vsel %vm768, %v4629, %v4633
      %v4655 = vsel %vm768, %v4631, %v4635
      %v4656 = vsel %vm768, %v4625, %v4629
      %v4657 = vsel %vm768, %v4627, %v4631
      %v4658 = vsel %vm768, %v4621, %v4625
      %v4659 = vsel %vm768, %v4623, %v4627
      %v4660 = vsel %vm768, %v4617, %v4621
      %v4661 = vsel %vm768, %v4619, %v4623
      %v4662 = vsel %vm768, %v4645, %v4617
      %v4663 = vsel %vm768, %v4647, %v4619
      %v4664 = vld [vmem:[%s2] ss:$8 sm:$0xf]
      %v4665 = vld [vmem:[%s2] ss:$8 sm:$0xf0]
      %v4666 = vor.u32 %v4664, %v4665
      %v4668 = vperm.slane %v4666, 0
      %v4669 = vperm.slane %v4666, 1
      %v4670 = vperm.slane %v4666, 2
      %v4671 = vperm.slane %v4666, 3
      %v4672 = vperm.slane %v4666, 4
      %v4673 = vperm.slane %v4666, 5
      %v4674 = vperm.slane %v4666, 6
      %v4675 = vperm.slane %v4666, 7
      %v4684 = vmul.f32 %v4662, %v4668
      %v4685 = vmul.f32 %v4660, %v4669
      %v4686 = vmul.f32 %v4658, %v4670
      %v4687 = vmul.f32 %v4656, %v4671
      %v4688 = vmul.f32 %v4654, %v4672
      %v4689 = vmul.f32 %v4652, %v4673
      %v4690 = vmul.f32 %v4650, %v4674
      %v4691 = vmul.f32 %v4648, %v4675
      %v4692 = vmul.f32 %v4663, %v4668
      %v4693 = vmul.f32 %v4661, %v4669
      %v4694 = vmul.f32 %v4659, %v4670
      %v4695 = vmul.f32 %v4657, %v4671
      %v4696 = vmul.f32 %v4655, %v4672
      %v4697 = vmul.f32 %v4653, %v4673
      %v4698 = vmul.f32 %v4651, %v4674
      %v4699 = vmul.f32 %v4649, %v4675
      %v4700 = vpack.c.bf16 %v4685, %v4684
      %v4701 = vpack.c.bf16 %v4687, %v4686
      %v4702 = vpack.c.bf16 %v4689, %v4688
      %v4703 = vpack.c.bf16 %v4691, %v4690
      %v4704 = vpack.c.bf16 %v4693, %v4692
      %v4705 = vpack.c.bf16 %v4695, %v4694
      %v4706 = vpack.c.bf16 %v4697, %v4696
      %v4707 = vpack.c.bf16 %v4699, %v4698
      %4708 = vst [vmem:[#allocation2] sm:$0xff] %v4700
      %4709 = vst [vmem:[#allocation2 + $0x8] sm:$0xff] %v4701
      %4710 = vst [vmem:[#allocation2 + $0x10] sm:$0xff] %v4702
      %4711 = vst [vmem:[#allocation2 + $0x18] sm:$0xff] %v4703
      %4712 = vst [vmem:[#allocation2 + $0x20] sm:$0xff] %v4704
      %4713 = vst [vmem:[#allocation2 + $0x28] sm:$0xff] %v4705
      %4714 = vst [vmem:[#allocation2 + $0x30] sm:$0xff] %v4706
      %4715 = vst [vmem:[#allocation2 + $0x38] sm:$0xff] %v4707
      %4716 = vrot.lane.b32.xlu0 %v4600, 16
      %v4717 = vpop.permute.xlu0 %4716
      %4718 = vrot.lane.b32.xlu0 %v4608, 16
      %v4719 = vpop.permute.xlu0 %4718
      %4720 = vrot.lane.b32.xlu0 %v4601, 16
      %v4721 = vpop.permute.xlu0 %4720
      %4722 = vrot.lane.b32.xlu0 %v4609, 16
      %v4723 = vpop.permute.xlu0 %4722
      %4724 = vrot.lane.b32.xlu0 %v4602, 16
      %v4725 = vpop.permute.xlu0 %4724
      %4726 = vrot.lane.b32.xlu0 %v4610, 16
      %v4727 = vpop.permute.xlu0 %4726
      %4728 = vrot.lane.b32.xlu0 %v4603, 16
      %v4729 = vpop.permute.xlu0 %4728
      %4730 = vrot.lane.b32.xlu0 %v4611, 16
      %v4731 = vpop.permute.xlu0 %4730
      %4732 = vrot.lane.b32.xlu0 %v4604, 16
      %v4733 = vpop.permute.xlu0 %4732
      %4734 = vrot.lane.b32.xlu0 %v4612, 16
      %v4735 = vpop.permute.xlu0 %4734
      %4736 = vrot.lane.b32.xlu0 %v4605, 16
      %v4737 = vpop.permute.xlu0 %4736
      %4738 = vrot.lane.b32.xlu0 %v4613, 16
      %v4739 = vpop.permute.xlu0 %4738
      %4740 = vrot.lane.b32.xlu0 %v4606, 16
      %v4741 = vpop.permute.xlu0 %4740
      %4742 = vrot.lane.b32.xlu0 %v4614, 16
      %v4743 = vpop.permute.xlu0 %4742
      %4744 = vrot.lane.b32.xlu0 %v4607, 16
      %v4745 = vpop.permute.xlu0 %4744
      %4746 = vrot.lane.b32.xlu0 %v4615, 16
      %v4747 = vpop.permute.xlu0 %4746
      %v4748 = vsel %vm829, %v4741, %v4745
      %v4749 = vsel %vm829, %v4743, %v4747
      %v4750 = vsel %vm829, %v4737, %v4741
      %v4751 = vsel %vm829, %v4739, %v4743
      %v4752 = vsel %vm829, %v4733, %v4737
      %v4753 = vsel %vm829, %v4735, %v4739
      %v4754 = vsel %vm829, %v4729, %v4733
      %v4755 = vsel %vm829, %v4731, %v4735
      %v4756 = vsel %vm829, %v4725, %v4729
      %v4757 = vsel %vm829, %v4727, %v4731
      %v4758 = vsel %vm829, %v4721, %v4725
      %v4759 = vsel %vm829, %v4723, %v4727
      %v4760 = vsel %vm829, %v4717, %v4721
      %v4761 = vsel %vm829, %v4719, %v4723
      %v4762 = vsel %vm829, %v4745, %v4717
      %v4763 = vsel %vm829, %v4747, %v4719
      %v4764 = vld [vmem:[%s838] ss:$8 sm:$0xf]
      %v4765 = vld [vmem:[%s838] ss:$8 sm:$0xf0]
      %v4766 = vor.u32 %v4764, %v4765
      %v4768 = vperm.slane %v4766, 0
      %v4769 = vperm.slane %v4766, 1
      %v4770 = vperm.slane %v4766, 2
      %v4771 = vperm.slane %v4766, 3
      %v4772 = vperm.slane %v4766, 4
      %v4773 = vperm.slane %v4766, 5
      %v4774 = vperm.slane %v4766, 6
      %v4775 = vperm.slane %v4766, 7
      %v4784 = vmul.f32 %v4762, %v4768
      %v4785 = vmul.f32 %v4760, %v4769
      %v4786 = vmul.f32 %v4758, %v4770
      %v4787 = vmul.f32 %v4756, %v4771
      %v4788 = vmul.f32 %v4754, %v4772
      %v4789 = vmul.f32 %v4752, %v4773
      %v4790 = vmul.f32 %v4750, %v4774
      %v4791 = vmul.f32 %v4748, %v4775
      %v4792 = vmul.f32 %v4763, %v4768
      %v4793 = vmul.f32 %v4761, %v4769
      %v4794 = vmul.f32 %v4759, %v4770
      %v4795 = vmul.f32 %v4757, %v4771
      %v4796 = vmul.f32 %v4755, %v4772
      %v4797 = vmul.f32 %v4753, %v4773
      %v4798 = vmul.f32 %v4751, %v4774
      %v4799 = vmul.f32 %v4749, %v4775
      %v4800 = vpack.c.bf16 %v4785, %v4784
      %v4801 = vpack.c.bf16 %v4787, %v4786
      %v4802 = vpack.c.bf16 %v4789, %v4788
      %v4803 = vpack.c.bf16 %v4791, %v4790
      %v4804 = vpack.c.bf16 %v4793, %v4792
      %v4805 = vpack.c.bf16 %v4795, %v4794
      %v4806 = vpack.c.bf16 %v4797, %v4796
      %v4807 = vpack.c.bf16 %v4799, %v4798
      %4808 = vst [vmem:[#allocation2 + $0x40] sm:$0xff] %v4800
      %4809 = vst [vmem:[#allocation2 + $0x48] sm:$0xff] %v4801
      %4810 = vst [vmem:[#allocation2 + $0x50] sm:$0xff] %v4802
      %4811 = vst [vmem:[#allocation2 + $0x58] sm:$0xff] %v4803
      %4812 = vst [vmem:[#allocation2 + $0x60] sm:$0xff] %v4804
      %4813 = vst [vmem:[#allocation2 + $0x68] sm:$0xff] %v4805
      %4814 = vst [vmem:[#allocation2 + $0x70] sm:$0xff] %v4806
      %4815 = vst [vmem:[#allocation2 + $0x78] sm:$0xff] %v4807
      %4816 = vrot.lane.b32.xlu0 %v4600, 15
      %v4817 = vpop.permute.xlu0 %4816
      %4818 = vrot.lane.b32.xlu0 %v4608, 15
      %v4819 = vpop.permute.xlu0 %4818
      %4820 = vrot.lane.b32.xlu0 %v4601, 15
      %v4821 = vpop.permute.xlu0 %4820
      %4822 = vrot.lane.b32.xlu0 %v4609, 15
      %v4823 = vpop.permute.xlu0 %4822
      %4824 = vrot.lane.b32.xlu0 %v4602, 15
      %v4825 = vpop.permute.xlu0 %4824
      %4826 = vrot.lane.b32.xlu0 %v4610, 15
      %v4827 = vpop.permute.xlu0 %4826
      %4828 = vrot.lane.b32.xlu0 %v4603, 15
      %v4829 = vpop.permute.xlu0 %4828
      %4830 = vrot.lane.b32.xlu0 %v4611, 15
      %v4831 = vpop.permute.xlu0 %4830
      %4832 = vrot.lane.b32.xlu0 %v4604, 15
      %v4833 = vpop.permute.xlu0 %4832
      %4834 = vrot.lane.b32.xlu0 %v4612, 15
      %v4835 = vpop.permute.xlu0 %4834
      %4836 = vrot.lane.b32.xlu0 %v4605, 15
      %v4837 = vpop.permute.xlu0 %4836
      %4838 = vrot.lane.b32.xlu0 %v4613, 15
      %v4839 = vpop.permute.xlu0 %4838
      %4840 = vrot.lane.b32.xlu0 %v4606, 15
      %v4841 = vpop.permute.xlu0 %4840
      %4842 = vrot.lane.b32.xlu0 %v4614, 15
      %v4843 = vpop.permute.xlu0 %4842
      %4844 = vrot.lane.b32.xlu0 %v4607, 15
      %v4845 = vpop.permute.xlu0 %4844
      %4846 = vrot.lane.b32.xlu0 %v4615, 15
      %v4847 = vpop.permute.xlu0 %4846
      %v4848 = vsel %vm891, %v4841, %v4845
      %v4849 = vsel %vm891, %v4843, %v4847
      %v4850 = vsel %vm891, %v4837, %v4841
      %v4851 = vsel %vm891, %v4839, %v4843
      %v4852 = vsel %vm891, %v4833, %v4837
      %v4853 = vsel %vm891, %v4835, %v4839
      %v4854 = vsel %vm891, %v4829, %v4833
      %v4855 = vsel %vm891, %v4831, %v4835
      %v4856 = vsel %vm891, %v4825, %v4829
      %v4857 = vsel %vm891, %v4827, %v4831
      %v4858 = vsel %vm891, %v4821, %v4825
      %v4859 = vsel %vm891, %v4823, %v4827
      %v4860 = vsel %vm891, %v4817, %v4821
      %v4861 = vsel %vm891, %v4819, %v4823
      %v4862 = vsel %vm891, %v4845, %v4817
      %v4863 = vsel %vm891, %v4847, %v4819
      %v4864 = vld [vmem:[%s900] ss:$8 sm:$0xf]
      %v4865 = vld [vmem:[%s900] ss:$8 sm:$0xf0]
      %v4866 = vor.u32 %v4864, %v4865
      %v4868 = vperm.slane %v4866, 0
      %v4869 = vperm.slane %v4866, 1
      %v4870 = vperm.slane %v4866, 2
      %v4871 = vperm.slane %v4866, 3
      %v4872 = vperm.slane %v4866, 4
      %v4873 = vperm.slane %v4866, 5
      %v4874 = vperm.slane %v4866, 6
      %v4875 = vperm.slane %v4866, 7
      %v4884 = vmul.f32 %v4862, %v4868
      %v4885 = vmul.f32 %v4860, %v4869
      %v4886 = vmul.f32 %v4858, %v4870
      %v4887 = vmul.f32 %v4856, %v4871
      %v4888 = vmul.f32 %v4854, %v4872
      %v4889 = vmul.f32 %v4852, %v4873
      %v4890 = vmul.f32 %v4850, %v4874
      %v4891 = vmul.f32 %v4848, %v4875
      %v4892 = vmul.f32 %v4863, %v4868
      %v4893 = vmul.f32 %v4861, %v4869
      %v4894 = vmul.f32 %v4859, %v4870
      %v4895 = vmul.f32 %v4857, %v4871
      %v4896 = vmul.f32 %v4855, %v4872
      %v4897 = vmul.f32 %v4853, %v4873
      %v4898 = vmul.f32 %v4851, %v4874
      %v4899 = vmul.f32 %v4849, %v4875
      %v4900 = vpack.c.bf16 %v4885, %v4884
      %v4901 = vpack.c.bf16 %v4887, %v4886
      %v4902 = vpack.c.bf16 %v4889, %v4888
      %v4903 = vpack.c.bf16 %v4891, %v4890
      %v4904 = vpack.c.bf16 %v4893, %v4892
      %v4905 = vpack.c.bf16 %v4895, %v4894
      %v4906 = vpack.c.bf16 %v4897, %v4896
      %v4907 = vpack.c.bf16 %v4899, %v4898
      %4908 = vst [vmem:[#allocation2 + $0x80] sm:$0xff] %v4900
      %4909 = vst [vmem:[#allocation2 + $0x88] sm:$0xff] %v4901
      %4910 = vst [vmem:[#allocation2 + $0x90] sm:$0xff] %v4902
      %4911 = vst [vmem:[#allocation2 + $0x98] sm:$0xff] %v4903
      %4912 = vst [vmem:[#allocation2 + $0xa0] sm:$0xff] %v4904
      %4913 = vst [vmem:[#allocation2 + $0xa8] sm:$0xff] %v4905
      %4914 = vst [vmem:[#allocation2 + $0xb0] sm:$0xff] %v4906
      %4915 = vst [vmem:[#allocation2 + $0xb8] sm:$0xff] %v4907
      %4916 = vrot.lane.b32.xlu0 %v4600, 1
      %v4917 = vpop.permute.xlu0 %4916
      %4918 = vrot.lane.b32.xlu0 %v4608, 1
      %v4919 = vpop.permute.xlu0 %4918
      %4920 = vrot.lane.b32.xlu0 %v4601, 1
      %v4921 = vpop.permute.xlu0 %4920
      %4922 = vrot.lane.b32.xlu0 %v4609, 1
      %v4923 = vpop.permute.xlu0 %4922
      %4924 = vrot.lane.b32.xlu0 %v4602, 1
      %v4925 = vpop.permute.xlu0 %4924
      %4926 = vrot.lane.b32.xlu0 %v4610, 1
      %v4927 = vpop.permute.xlu0 %4926
      %4928 = vrot.lane.b32.xlu0 %v4603, 1
      %v4929 = vpop.permute.xlu0 %4928
      %4930 = vrot.lane.b32.xlu0 %v4611, 1
      %v4931 = vpop.permute.xlu0 %4930
      %4932 = vrot.lane.b32.xlu0 %v4604, 1
      %v4933 = vpop.permute.xlu0 %4932
      %4934 = vrot.lane.b32.xlu0 %v4612, 1
      %v4935 = vpop.permute.xlu0 %4934
      %4936 = vrot.lane.b32.xlu0 %v4605, 1
      %v4937 = vpop.permute.xlu0 %4936
      %4938 = vrot.lane.b32.xlu0 %v4613, 1
      %v4939 = vpop.permute.xlu0 %4938
      %4940 = vrot.lane.b32.xlu0 %v4606, 1
      %v4941 = vpop.permute.xlu0 %4940
      %4942 = vrot.lane.b32.xlu0 %v4614, 1
      %v4943 = vpop.permute.xlu0 %4942
      %4944 = vrot.lane.b32.xlu0 %v4607, 1
      %v4945 = vpop.permute.xlu0 %4944
      %4946 = vrot.lane.b32.xlu0 %v4615, 1
      %v4947 = vpop.permute.xlu0 %4946
      %v4948 = vsel %vm953, %v4941, %v4945
      %v4949 = vsel %vm953, %v4943, %v4947
      %v4950 = vsel %vm953, %v4937, %v4941
      %v4951 = vsel %vm953, %v4939, %v4943
      %v4952 = vsel %vm953, %v4933, %v4937
      %v4953 = vsel %vm953, %v4935, %v4939
      %v4954 = vsel %vm953, %v4929, %v4933
      %v4955 = vsel %vm953, %v4931, %v4935
      %v4956 = vsel %vm953, %v4925, %v4929
      %v4957 = vsel %vm953, %v4927, %v4931
      %v4958 = vsel %vm953, %v4921, %v4925
      %v4959 = vsel %vm953, %v4923, %v4927
      %v4960 = vsel %vm953, %v4917, %v4921
      %v4961 = vsel %vm953, %v4919, %v4923
      %v4962 = vsel %vm953, %v4945, %v4917
      %v4963 = vsel %vm953, %v4947, %v4919
      %v4964 = vld [vmem:[%s962] ss:$8 sm:$0xf]
      %v4965 = vld [vmem:[%s962] ss:$8 sm:$0xf0]
      %v4966 = vor.u32 %v4964, %v4965
      %v4968 = vperm.slane %v4966, 0
      %v4969 = vperm.slane %v4966, 1
      %v4970 = vperm.slane %v4966, 2
      %v4971 = vperm.slane %v4966, 3
      %v4972 = vperm.slane %v4966, 4
      %v4973 = vperm.slane %v4966, 5
      %v4974 = vperm.slane %v4966, 6
      %v4975 = vperm.slane %v4966, 7
      %v4984 = vmul.f32 %v4962, %v4968
      %v4985 = vmul.f32 %v4960, %v4969
      %v4986 = vmul.f32 %v4958, %v4970
      %v4987 = vmul.f32 %v4956, %v4971
      %v4988 = vmul.f32 %v4954, %v4972
      %v4989 = vmul.f32 %v4952, %v4973
      %v4990 = vmul.f32 %v4950, %v4974
      %v4991 = vmul.f32 %v4948, %v4975
      %v4992 = vmul.f32 %v4963, %v4968
      %v4993 = vmul.f32 %v4961, %v4969
      %v4994 = vmul.f32 %v4959, %v4970
      %v4995 = vmul.f32 %v4957, %v4971
      %v4996 = vmul.f32 %v4955, %v4972
      %v4997 = vmul.f32 %v4953, %v4973
      %v4998 = vmul.f32 %v4951, %v4974
      %v4999 = vmul.f32 %v4949, %v4975
      %v5000 = vpack.c.bf16 %v4985, %v4984
      %v5001 = vpack.c.bf16 %v4987, %v4986
      %v5002 = vpack.c.bf16 %v4989, %v4988
      %v5003 = vpack.c.bf16 %v4991, %v4990
      %v5004 = vpack.c.bf16 %v4993, %v4992
      %v5005 = vpack.c.bf16 %v4995, %v4994
      %v5006 = vpack.c.bf16 %v4997, %v4996
      %v5007 = vpack.c.bf16 %v4999, %v4998
      %5008 = vst [vmem:[#allocation2 + $0xc0] sm:$0xff] %v5000
      %5009 = vst [vmem:[#allocation2 + $0xc8] sm:$0xff] %v5001
      %5010 = vst [vmem:[#allocation2 + $0xd0] sm:$0xff] %v5002
      %5011 = vst [vmem:[#allocation2 + $0xd8] sm:$0xff] %v5003
      %5012 = vst [vmem:[#allocation2 + $0xe0] sm:$0xff] %v5004
      %5013 = vst [vmem:[#allocation2 + $0xe8] sm:$0xff] %v5005
      %5014 = vst [vmem:[#allocation2 + $0xf0] sm:$0xff] %v5006
      %5015 = vst [vmem:[#allocation2 + $0xf8] sm:$0xff] %v5007
      %v5016 = vpack.c.bf16 %v4601, %v4600
      %v5017 = vpack.c.bf16 %v4603, %v4602
      %v5018 = vpack.c.bf16 %v4605, %v4604
      %v5019 = vpack.c.bf16 %v4607, %v4606
      %v5020 = vpack.c.bf16 %v4609, %v4608
      %v5021 = vpack.c.bf16 %v4611, %v4610
      %v5022 = vpack.c.bf16 %v4613, %v4612
      %v5023 = vpack.c.bf16 %v4615, %v4614
      %5024 = vst [vmem:[#allocation2 + $0x100] sm:$0xff] %v5016
      %5025 = vst [vmem:[#allocation2 + $0x108] sm:$0xff] %v5017
      %5026 = vst [vmem:[#allocation2 + $0x110] sm:$0xff] %v5018
      %5027 = vst [vmem:[#allocation2 + $0x118] sm:$0xff] %v5019
      %5028 = vst [vmem:[#allocation2 + $0x120] sm:$0xff] %v5020
      %5029 = vst [vmem:[#allocation2 + $0x128] sm:$0xff] %v5021
      %5030 = vst [vmem:[#allocation2 + $0x130] sm:$0xff] %v5022
      %5031 = vst [vmem:[#allocation2 + $0x138] sm:$0xff] %v5023
      %5032 = vrot.lane.b32.xlu0 %v4600, 127
      %v5033 = vpop.permute.xlu0 %5032
      %5034 = vrot.lane.b32.xlu0 %v4608, 127
      %v5035 = vpop.permute.xlu0 %5034
      %5036 = vrot.lane.b32.xlu0 %v4601, 127
      %v5037 = vpop.permute.xlu0 %5036
      %5038 = vrot.lane.b32.xlu0 %v4609, 127
      %v5039 = vpop.permute.xlu0 %5038
      %5040 = vrot.lane.b32.xlu0 %v4602, 127
      %v5041 = vpop.permute.xlu0 %5040
      %5042 = vrot.lane.b32.xlu0 %v4610, 127
      %v5043 = vpop.permute.xlu0 %5042
      %5044 = vrot.lane.b32.xlu0 %v4603, 127
      %v5045 = vpop.permute.xlu0 %5044
      %5046 = vrot.lane.b32.xlu0 %v4611, 127
      %v5047 = vpop.permute.xlu0 %5046
      %5048 = vrot.lane.b32.xlu0 %v4604, 127
      %v5049 = vpop.permute.xlu0 %5048
      %5050 = vrot.lane.b32.xlu0 %v4612, 127
      %v5051 = vpop.permute.xlu0 %5050
      %5052 = vrot.lane.b32.xlu0 %v4605, 127
      %v5053 = vpop.permute.xlu0 %5052
      %5054 = vrot.lane.b32.xlu0 %v4613, 127
      %v5055 = vpop.permute.xlu0 %5054
      %5056 = vrot.lane.b32.xlu0 %v4606, 127
      %v5057 = vpop.permute.xlu0 %5056
      %5058 = vrot.lane.b32.xlu0 %v4614, 127
      %v5059 = vpop.permute.xlu0 %5058
      %5060 = vrot.lane.b32.xlu0 %v4607, 127
      %v5061 = vpop.permute.xlu0 %5060
      %5062 = vrot.lane.b32.xlu0 %v4615, 127
      %v5063 = vpop.permute.xlu0 %5062
      %v5064 = vsel %vm661, %v5057, %v5061
      %v5065 = vsel %vm661, %v5059, %v5063
      %v5066 = vsel %vm661, %v5053, %v5057
      %v5067 = vsel %vm661, %v5055, %v5059
      %v5068 = vsel %vm661, %v5049, %v5053
      %v5069 = vsel %vm661, %v5051, %v5055
      %v5070 = vsel %vm661, %v5045, %v5049
      %v5071 = vsel %vm661, %v5047, %v5051
      %v5072 = vsel %vm661, %v5041, %v5045
      %v5073 = vsel %vm661, %v5043, %v5047
      %v5074 = vsel %vm661, %v5037, %v5041
      %v5075 = vsel %vm661, %v5039, %v5043
      %v5076 = vsel %vm661, %v5033, %v5037
      %v5077 = vsel %vm661, %v5035, %v5039
      %v5078 = vsel %vm661, %v5061, %v5033
      %v5079 = vsel %vm661, %v5063, %v5035
      %v5080 = vld [vmem:[%s1003] ss:$8 sm:$0xf]
      %v5081 = vld [vmem:[%s1003] ss:$8 sm:$0xf0]
      %v5082 = vor.u32 %v5080, %v5081
      %v5084 = vperm.slane %v5082, 0
      %v5085 = vperm.slane %v5082, 1
      %v5086 = vperm.slane %v5082, 2
      %v5087 = vperm.slane %v5082, 3
      %v5088 = vperm.slane %v5082, 4
      %v5089 = vperm.slane %v5082, 5
      %v5090 = vperm.slane %v5082, 6
      %v5091 = vperm.slane %v5082, 7
      %v5100 = vmul.f32 %v5076, %v5084
      %v5101 = vmul.f32 %v5074, %v5085
      %v5102 = vmul.f32 %v5072, %v5086
      %v5103 = vmul.f32 %v5070, %v5087
      %v5104 = vmul.f32 %v5068, %v5088
      %v5105 = vmul.f32 %v5066, %v5089
      %v5106 = vmul.f32 %v5064, %v5090
      %v5107 = vmul.f32 %v5078, %v5091
      %v5108 = vmul.f32 %v5077, %v5084
      %v5109 = vmul.f32 %v5075, %v5085
      %v5110 = vmul.f32 %v5073, %v5086
      %v5111 = vmul.f32 %v5071, %v5087
      %v5112 = vmul.f32 %v5069, %v5088
      %v5113 = vmul.f32 %v5067, %v5089
      %v5114 = vmul.f32 %v5065, %v5090
      %v5115 = vmul.f32 %v5079, %v5091
      %v5116 = vpack.c.bf16 %v5101, %v5100
      %v5117 = vpack.c.bf16 %v5103, %v5102
      %v5118 = vpack.c.bf16 %v5105, %v5104
      %v5119 = vpack.c.bf16 %v5107, %v5106
      %v5120 = vpack.c.bf16 %v5109, %v5108
      %v5121 = vpack.c.bf16 %v5111, %v5110
      %v5122 = vpack.c.bf16 %v5113, %v5112
      %v5123 = vpack.c.bf16 %v5115, %v5114
      %5124 = vst [vmem:[#allocation2 + $0x140] sm:$0xff] %v5116
      %5125 = vst [vmem:[#allocation2 + $0x148] sm:$0xff] %v5117
      %5126 = vst [vmem:[#allocation2 + $0x150] sm:$0xff] %v5118
      %5127 = vst [vmem:[#allocation2 + $0x158] sm:$0xff] %v5119
      %5128 = vst [vmem:[#allocation2 + $0x160] sm:$0xff] %v5120
      %5129 = vst [vmem:[#allocation2 + $0x168] sm:$0xff] %v5121
      %5130 = vst [vmem:[#allocation2 + $0x170] sm:$0xff] %v5122
      %5131 = vst [vmem:[#allocation2 + $0x178] sm:$0xff] %v5123
      %5132 = vrot.lane.b32.xlu0 %v4600, 113
      %v5133 = vpop.permute.xlu0 %5132
      %5134 = vrot.lane.b32.xlu0 %v4608, 113
      %v5135 = vpop.permute.xlu0 %5134
      %5136 = vrot.lane.b32.xlu0 %v4601, 113
      %v5137 = vpop.permute.xlu0 %5136
      %5138 = vrot.lane.b32.xlu0 %v4609, 113
      %v5139 = vpop.permute.xlu0 %5138
      %5140 = vrot.lane.b32.xlu0 %v4602, 113
      %v5141 = vpop.permute.xlu0 %5140
      %5142 = vrot.lane.b32.xlu0 %v4610, 113
      %v5143 = vpop.permute.xlu0 %5142
      %5144 = vrot.lane.b32.xlu0 %v4603, 113
      %v5145 = vpop.permute.xlu0 %5144
      %5146 = vrot.lane.b32.xlu0 %v4611, 113
      %v5147 = vpop.permute.xlu0 %5146
      %5148 = vrot.lane.b32.xlu0 %v4604, 113
      %v5149 = vpop.permute.xlu0 %5148
      %5150 = vrot.lane.b32.xlu0 %v4612, 113
      %v5151 = vpop.permute.xlu0 %5150
      %5152 = vrot.lane.b32.xlu0 %v4605, 113
      %v5153 = vpop.permute.xlu0 %5152
      %5154 = vrot.lane.b32.xlu0 %v4613, 113
      %v5155 = vpop.permute.xlu0 %5154
      %5156 = vrot.lane.b32.xlu0 %v4606, 113
      %v5157 = vpop.permute.xlu0 %5156
      %5158 = vrot.lane.b32.xlu0 %v4614, 113
      %v5159 = vpop.permute.xlu0 %5158
      %5160 = vrot.lane.b32.xlu0 %v4607, 113
      %v5161 = vpop.permute.xlu0 %5160
      %5162 = vrot.lane.b32.xlu0 %v4615, 113
      %v5163 = vpop.permute.xlu0 %5162
      %v5164 = vsel %vm1056, %v5157, %v5161
      %v5165 = vsel %vm1056, %v5159, %v5163
      %v5166 = vsel %vm1056, %v5153, %v5157
      %v5167 = vsel %vm1056, %v5155, %v5159
      %v5168 = vsel %vm1056, %v5149, %v5153
      %v5169 = vsel %vm1056, %v5151, %v5155
      %v5170 = vsel %vm1056, %v5145, %v5149
      %v5171 = vsel %vm1056, %v5147, %v5151
      %v5172 = vsel %vm1056, %v5141, %v5145
      %v5173 = vsel %vm1056, %v5143, %v5147
      %v5174 = vsel %vm1056, %v5137, %v5141
      %v5175 = vsel %vm1056, %v5139, %v5143
      %v5176 = vsel %vm1056, %v5133, %v5137
      %v5177 = vsel %vm1056, %v5135, %v5139
      %v5178 = vsel %vm1056, %v5161, %v5133
      %v5179 = vsel %vm1056, %v5163, %v5135
      %v5180 = vld [vmem:[%s1065] ss:$8 sm:$0xf]
      %v5181 = vld [vmem:[%s1065] ss:$8 sm:$0xf0]
      %v5182 = vor.u32 %v5180, %v5181
      %v5184 = vperm.slane %v5182, 0
      %v5185 = vperm.slane %v5182, 1
      %v5186 = vperm.slane %v5182, 2
      %v5187 = vperm.slane %v5182, 3
      %v5188 = vperm.slane %v5182, 4
      %v5189 = vperm.slane %v5182, 5
      %v5190 = vperm.slane %v5182, 6
      %v5191 = vperm.slane %v5182, 7
      %v5200 = vmul.f32 %v5176, %v5184
      %v5201 = vmul.f32 %v5174, %v5185
      %v5202 = vmul.f32 %v5172, %v5186
      %v5203 = vmul.f32 %v5170, %v5187
      %v5204 = vmul.f32 %v5168, %v5188
      %v5205 = vmul.f32 %v5166, %v5189
      %v5206 = vmul.f32 %v5164, %v5190
      %v5207 = vmul.f32 %v5178, %v5191
      %v5208 = vmul.f32 %v5177, %v5184
      %v5209 = vmul.f32 %v5175, %v5185
      %v5210 = vmul.f32 %v5173, %v5186
      %v5211 = vmul.f32 %v5171, %v5187
      %v5212 = vmul.f32 %v5169, %v5188
      %v5213 = vmul.f32 %v5167, %v5189
      %v5214 = vmul.f32 %v5165, %v5190
      %v5215 = vmul.f32 %v5179, %v5191
      %v5216 = vpack.c.bf16 %v5201, %v5200
      %v5217 = vpack.c.bf16 %v5203, %v5202
      %v5218 = vpack.c.bf16 %v5205, %v5204
      %v5219 = vpack.c.bf16 %v5207, %v5206
      %v5220 = vpack.c.bf16 %v5209, %v5208
      %v5221 = vpack.c.bf16 %v5211, %v5210
      %v5222 = vpack.c.bf16 %v5213, %v5212
      %v5223 = vpack.c.bf16 %v5215, %v5214
      %5224 = vst [vmem:[#allocation2 + $0x180] sm:$0xff] %v5216
      %5225 = vst [vmem:[#allocation2 + $0x188] sm:$0xff] %v5217
      %5226 = vst [vmem:[#allocation2 + $0x190] sm:$0xff] %v5218
      %5227 = vst [vmem:[#allocation2 + $0x198] sm:$0xff] %v5219
      %5228 = vst [vmem:[#allocation2 + $0x1a0] sm:$0xff] %v5220
      %5229 = vst [vmem:[#allocation2 + $0x1a8] sm:$0xff] %v5221
      %5230 = vst [vmem:[#allocation2 + $0x1b0] sm:$0xff] %v5222
      %5231 = vst [vmem:[#allocation2 + $0x1b8] sm:$0xff] %v5223
      %5232 = vrot.lane.b32.xlu0 %v4600, 112
      %v5233 = vpop.permute.xlu0 %5232
      %5234 = vrot.lane.b32.xlu0 %v4608, 112
      %v5235 = vpop.permute.xlu0 %5234
      %5236 = vrot.lane.b32.xlu0 %v4601, 112
      %v5237 = vpop.permute.xlu0 %5236
      %5238 = vrot.lane.b32.xlu0 %v4609, 112
      %v5239 = vpop.permute.xlu0 %5238
      %5240 = vrot.lane.b32.xlu0 %v4602, 112
      %v5241 = vpop.permute.xlu0 %5240
      %5242 = vrot.lane.b32.xlu0 %v4610, 112
      %v5243 = vpop.permute.xlu0 %5242
      %5244 = vrot.lane.b32.xlu0 %v4603, 112
      %v5245 = vpop.permute.xlu0 %5244
      %5246 = vrot.lane.b32.xlu0 %v4611, 112
      %v5247 = vpop.permute.xlu0 %5246
      %5248 = vrot.lane.b32.xlu0 %v4604, 112
      %v5249 = vpop.permute.xlu0 %5248
      %5250 = vrot.lane.b32.xlu0 %v4612, 112
      %v5251 = vpop.permute.xlu0 %5250
      %5252 = vrot.lane.b32.xlu0 %v4605, 112
      %v5253 = vpop.permute.xlu0 %5252
      %5254 = vrot.lane.b32.xlu0 %v4613, 112
      %v5255 = vpop.permute.xlu0 %5254
      %5256 = vrot.lane.b32.xlu0 %v4606, 112
      %v5257 = vpop.permute.xlu0 %5256
      %5258 = vrot.lane.b32.xlu0 %v4614, 112
      %v5259 = vpop.permute.xlu0 %5258
      %5260 = vrot.lane.b32.xlu0 %v4607, 112
      %v5261 = vpop.permute.xlu0 %5260
      %5262 = vrot.lane.b32.xlu0 %v4615, 112
      %v5263 = vpop.permute.xlu0 %5262
      %v5264 = vsel %vm694, %v5257, %v5261
      %v5265 = vsel %vm694, %v5259, %v5263
      %v5266 = vsel %vm694, %v5253, %v5257
      %v5267 = vsel %vm694, %v5255, %v5259
      %v5268 = vsel %vm694, %v5249, %v5253
      %v5269 = vsel %vm694, %v5251, %v5255
      %v5270 = vsel %vm694, %v5245, %v5249
      %v5271 = vsel %vm694, %v5247, %v5251
      %v5272 = vsel %vm694, %v5241, %v5245
      %v5273 = vsel %vm694, %v5243, %v5247
      %v5274 = vsel %vm694, %v5237, %v5241
      %v5275 = vsel %vm694, %v5239, %v5243
      %v5276 = vsel %vm694, %v5233, %v5237
      %v5277 = vsel %vm694, %v5235, %v5239
      %v5278 = vsel %vm694, %v5261, %v5233
      %v5279 = vsel %vm694, %v5263, %v5235
      %v5280 = vld [vmem:[%s1102] ss:$8 sm:$0xf]
      %v5281 = vld [vmem:[%s1102] ss:$8 sm:$0xf0]
      %v5282 = vor.u32 %v5280, %v5281
      %v5284 = vperm.slane %v5282, 0
      %v5285 = vperm.slane %v5282, 1
      %v5286 = vperm.slane %v5282, 2
      %v5287 = vperm.slane %v5282, 3
      %v5288 = vperm.slane %v5282, 4
      %v5289 = vperm.slane %v5282, 5
      %v5290 = vperm.slane %v5282, 6
      %v5291 = vperm.slane %v5282, 7
      %v5300 = vmul.f32 %v5276, %v5284
      %v5301 = vmul.f32 %v5274, %v5285
      %v5302 = vmul.f32 %v5272, %v5286
      %v5303 = vmul.f32 %v5270, %v5287
      %v5304 = vmul.f32 %v5268, %v5288
      %v5305 = vmul.f32 %v5266, %v5289
      %v5306 = vmul.f32 %v5264, %v5290
      %v5307 = vmul.f32 %v5278, %v5291
      %v5308 = vmul.f32 %v5277, %v5284
      %v5309 = vmul.f32 %v5275, %v5285
      %v5310 = vmul.f32 %v5273, %v5286
      %v5311 = vmul.f32 %v5271, %v5287
      %v5312 = vmul.f32 %v5269, %v5288
      %v5313 = vmul.f32 %v5267, %v5289
      %v5314 = vmul.f32 %v5265, %v5290
      %v5315 = vmul.f32 %v5279, %v5291
      %v5316 = vpack.c.bf16 %v5301, %v5300
      %v5317 = vpack.c.bf16 %v5303, %v5302
      %v5318 = vpack.c.bf16 %v5305, %v5304
      %v5319 = vpack.c.bf16 %v5307, %v5306
      %v5320 = vpack.c.bf16 %v5309, %v5308
      %v5321 = vpack.c.bf16 %v5311, %v5310
      %v5322 = vpack.c.bf16 %v5313, %v5312
      %v5323 = vpack.c.bf16 %v5315, %v5314
      %5324 = vst [vmem:[#allocation2 + $0x1c0] sm:$0xff] %v5316
      %5325 = vst [vmem:[#allocation2 + $0x1c8] sm:$0xff] %v5317
      %5326 = vst [vmem:[#allocation2 + $0x1d0] sm:$0xff] %v5318
      %5327 = vst [vmem:[#allocation2 + $0x1d8] sm:$0xff] %v5319
      %5328 = vst [vmem:[#allocation2 + $0x1e0] sm:$0xff] %v5320
      %5329 = vst [vmem:[#allocation2 + $0x1e8] sm:$0xff] %v5321
      %5330 = vst [vmem:[#allocation2 + $0x1f0] sm:$0xff] %v5322
      %5331 = vst [vmem:[#allocation2 + $0x1f8] sm:$0xff] %v5323
      %5332 = vrot.lane.b32.xlu0 %v4600, 111
      %v5333 = vpop.permute.xlu0 %5332
      %5334 = vrot.lane.b32.xlu0 %v4608, 111
      %v5335 = vpop.permute.xlu0 %5334
      %5336 = vrot.lane.b32.xlu0 %v4601, 111
      %v5337 = vpop.permute.xlu0 %5336
      %5338 = vrot.lane.b32.xlu0 %v4609, 111
      %v5339 = vpop.permute.xlu0 %5338
      %5340 = vrot.lane.b32.xlu0 %v4602, 111
      %v5341 = vpop.permute.xlu0 %5340
      %5342 = vrot.lane.b32.xlu0 %v4610, 111
      %v5343 = vpop.permute.xlu0 %5342
      %5344 = vrot.lane.b32.xlu0 %v4603, 111
      %v5345 = vpop.permute.xlu0 %5344
      %5346 = vrot.lane.b32.xlu0 %v4611, 111
      %v5347 = vpop.permute.xlu0 %5346
      %5348 = vrot.lane.b32.xlu0 %v4604, 111
      %v5349 = vpop.permute.xlu0 %5348
      %5350 = vrot.lane.b32.xlu0 %v4612, 111
      %v5351 = vpop.permute.xlu0 %5350
      %5352 = vrot.lane.b32.xlu0 %v4605, 111
      %v5353 = vpop.permute.xlu0 %5352
      %5354 = vrot.lane.b32.xlu0 %v4613, 111
      %v5355 = vpop.permute.xlu0 %5354
      %5356 = vrot.lane.b32.xlu0 %v4606, 111
      %v5357 = vpop.permute.xlu0 %5356
      %5358 = vrot.lane.b32.xlu0 %v4614, 111
      %v5359 = vpop.permute.xlu0 %5358
      %5360 = vrot.lane.b32.xlu0 %v4607, 111
      %v5361 = vpop.permute.xlu0 %5360
      %5362 = vrot.lane.b32.xlu0 %v4615, 111
      %v5363 = vpop.permute.xlu0 %5362
      %v5364 = vsel %vm727, %v5357, %v5361
      %v5365 = vsel %vm727, %v5359, %v5363
      %v5366 = vsel %vm727, %v5353, %v5357
      %v5367 = vsel %vm727, %v5355, %v5359
      %v5368 = vsel %vm727, %v5349, %v5353
      %v5369 = vsel %vm727, %v5351, %v5355
      %v5370 = vsel %vm727, %v5345, %v5349
      %v5371 = vsel %vm727, %v5347, %v5351
      %v5372 = vsel %vm727, %v5341, %v5345
      %v5373 = vsel %vm727, %v5343, %v5347
      %v5374 = vsel %vm727, %v5337, %v5341
      %v5375 = vsel %vm727, %v5339, %v5343
      %v5376 = vsel %vm727, %v5333, %v5337
      %v5377 = vsel %vm727, %v5335, %v5339
      %v5378 = vsel %vm727, %v5361, %v5333
      %v5379 = vsel %vm727, %v5363, %v5335
      %v5380 = vld [vmem:[%s1139] ss:$8 sm:$0xf]
      %v5381 = vld [vmem:[%s1139] ss:$8 sm:$0xf0]
      %v5382 = vor.u32 %v5380, %v5381
      %v5384 = vperm.slane %v5382, 0
      %v5385 = vperm.slane %v5382, 1
      %v5386 = vperm.slane %v5382, 2
      %v5387 = vperm.slane %v5382, 3
      %v5388 = vperm.slane %v5382, 4
      %v5389 = vperm.slane %v5382, 5
      %v5390 = vperm.slane %v5382, 6
      %v5391 = vperm.slane %v5382, 7
      %v5400 = vmul.f32 %v5376, %v5384
      %v5401 = vmul.f32 %v5374, %v5385
      %v5402 = vmul.f32 %v5372, %v5386
      %v5403 = vmul.f32 %v5370, %v5387
      %v5404 = vmul.f32 %v5368, %v5388
      %v5405 = vmul.f32 %v5366, %v5389
      %v5406 = vmul.f32 %v5364, %v5390
      %v5407 = vmul.f32 %v5378, %v5391
      %v5408 = vmul.f32 %v5377, %v5384
      %v5409 = vmul.f32 %v5375, %v5385
      %v5410 = vmul.f32 %v5373, %v5386
      %v5411 = vmul.f32 %v5371, %v5387
      %v5412 = vmul.f32 %v5369, %v5388
      %v5413 = vmul.f32 %v5367, %v5389
      %v5414 = vmul.f32 %v5365, %v5390
      %v5415 = vmul.f32 %v5379, %v5391
      %v5416 = vpack.c.bf16 %v5401, %v5400
      %v5417 = vpack.c.bf16 %v5403, %v5402
      %v5418 = vpack.c.bf16 %v5405, %v5404
      %v5419 = vpack.c.bf16 %v5407, %v5406
      %v5420 = vpack.c.bf16 %v5409, %v5408
      %v5421 = vpack.c.bf16 %v5411, %v5410
      %v5422 = vpack.c.bf16 %v5413, %v5412
      %v5423 = vpack.c.bf16 %v5415, %v5414
      %5424 = vst [vmem:[#allocation2 + $0x200] sm:$0xff] %v5416
      %5425 = vst [vmem:[#allocation2 + $0x208] sm:$0xff] %v5417
      %5426 = vst [vmem:[#allocation2 + $0x210] sm:$0xff] %v5418
      %5427 = vst [vmem:[#allocation2 + $0x218] sm:$0xff] %v5419
      %5428 = vst [vmem:[#allocation2 + $0x220] sm:$0xff] %v5420
      %5429 = vst [vmem:[#allocation2 + $0x228] sm:$0xff] %v5421
      %5430 = vst [vmem:[#allocation2 + $0x230] sm:$0xff] %v5422
      %5431 = vst [vmem:[#allocation2 + $0x238] sm:$0xff] %v5423
      %v5432 = vld [vmem:[#allocation2] sm:$0xff]
      %v5433 = vld [vmem:[#allocation2 + $0x8] sm:$0xff]
      %v5434 = vld [vmem:[#allocation2 + $0x10] sm:$0xff]
      %v5435 = vld [vmem:[#allocation2 + $0x18] sm:$0xff]
      %v5436 = vld [vmem:[#allocation2 + $0x20] sm:$0xff]
      %v5437 = vld [vmem:[#allocation2 + $0x28] sm:$0xff]
      %v5438 = vld [vmem:[#allocation2 + $0x30] sm:$0xff]
      %v5439 = vld [vmem:[#allocation2 + $0x38] sm:$0xff]
      %v5440 = vld [vmem:[#allocation2 + $0x40] sm:$0xff]
      %v5441 = vld [vmem:[#allocation2 + $0x48] sm:$0xff]
      %v5442 = vld [vmem:[#allocation2 + $0x50] sm:$0xff]
      %v5443 = vld [vmem:[#allocation2 + $0x58] sm:$0xff]
      %v5444 = vld [vmem:[#allocation2 + $0x60] sm:$0xff]
      %v5445 = vld [vmem:[#allocation2 + $0x68] sm:$0xff]
      %v5446 = vld [vmem:[#allocation2 + $0x70] sm:$0xff]
      %v5447 = vld [vmem:[#allocation2 + $0x78] sm:$0xff]
      %v5448 = vld [vmem:[#allocation2 + $0x80] sm:$0xff]
      %v5449 = vld [vmem:[#allocation2 + $0x88] sm:$0xff]
      %v5450 = vld [vmem:[#allocation2 + $0x90] sm:$0xff]
      %v5451 = vld [vmem:[#allocation2 + $0x98] sm:$0xff]
      %v5452 = vld [vmem:[#allocation2 + $0xa0] sm:$0xff]
      %v5453 = vld [vmem:[#allocation2 + $0xa8] sm:$0xff]
      %v5454 = vld [vmem:[#allocation2 + $0xb0] sm:$0xff]
      %v5455 = vld [vmem:[#allocation2 + $0xb8] sm:$0xff]
      %v5456 = vld [vmem:[#allocation2 + $0xc0] sm:$0xff]
      %v5457 = vld [vmem:[#allocation2 + $0xc8] sm:$0xff]
      %v5458 = vld [vmem:[#allocation2 + $0xd0] sm:$0xff]
      %v5459 = vld [vmem:[#allocation2 + $0xd8] sm:$0xff]
      %v5460 = vld [vmem:[#allocation2 + $0xe0] sm:$0xff]
      %v5461 = vld [vmem:[#allocation2 + $0xe8] sm:$0xff]
      %v5462 = vld [vmem:[#allocation2 + $0xf0] sm:$0xff]
      %v5463 = vld [vmem:[#allocation2 + $0xf8] sm:$0xff]
      %v5464 = vld [vmem:[#allocation2 + $0x100] sm:$0xff]
      %v5465 = vld [vmem:[#allocation2 + $0x108] sm:$0xff]
      %v5466 = vld [vmem:[#allocation2 + $0x110] sm:$0xff]
      %v5467 = vld [vmem:[#allocation2 + $0x118] sm:$0xff]
      %v5468 = vld [vmem:[#allocation2 + $0x120] sm:$0xff]
      %v5469 = vld [vmem:[#allocation2 + $0x128] sm:$0xff]
      %v5470 = vld [vmem:[#allocation2 + $0x130] sm:$0xff]
      %v5471 = vld [vmem:[#allocation2 + $0x138] sm:$0xff]
      %v5472 = vld [vmem:[#allocation2 + $0x140] sm:$0xff]
      %v5473 = vld [vmem:[#allocation2 + $0x148] sm:$0xff]
      %v5474 = vld [vmem:[#allocation2 + $0x150] sm:$0xff]
      %v5475 = vld [vmem:[#allocation2 + $0x158] sm:$0xff]
      %v5476 = vld [vmem:[#allocation2 + $0x160] sm:$0xff]
      %v5477 = vld [vmem:[#allocation2 + $0x168] sm:$0xff]
      %v5478 = vld [vmem:[#allocation2 + $0x170] sm:$0xff]
      %v5479 = vld [vmem:[#allocation2 + $0x178] sm:$0xff]
      %v5480 = vld [vmem:[#allocation2 + $0x180] sm:$0xff]
      %v5481 = vld [vmem:[#allocation2 + $0x188] sm:$0xff]
      %v5482 = vld [vmem:[#allocation2 + $0x190] sm:$0xff]
      %v5483 = vld [vmem:[#allocation2 + $0x198] sm:$0xff]
      %v5484 = vld [vmem:[#allocation2 + $0x1a0] sm:$0xff]
      %v5485 = vld [vmem:[#allocation2 + $0x1a8] sm:$0xff]
      %v5486 = vld [vmem:[#allocation2 + $0x1b0] sm:$0xff]
      %v5487 = vld [vmem:[#allocation2 + $0x1b8] sm:$0xff]
      %v5488 = vld [vmem:[#allocation2 + $0x1c0] sm:$0xff]
      %v5489 = vld [vmem:[#allocation2 + $0x1c8] sm:$0xff]
      %v5490 = vld [vmem:[#allocation2 + $0x1d0] sm:$0xff]
      %v5491 = vld [vmem:[#allocation2 + $0x1d8] sm:$0xff]
      %v5492 = vld [vmem:[#allocation2 + $0x1e0] sm:$0xff]
      %v5493 = vld [vmem:[#allocation2 + $0x1e8] sm:$0xff]
      %v5494 = vld [vmem:[#allocation2 + $0x1f0] sm:$0xff]
      %v5495 = vld [vmem:[#allocation2 + $0x1f8] sm:$0xff]
      %v5496 = vld [vmem:[#allocation2 + $0x200] sm:$0xff]
      %v5497 = vld [vmem:[#allocation2 + $0x208] sm:$0xff]
      %v5498 = vld [vmem:[#allocation2 + $0x210] sm:$0xff]
      %v5499 = vld [vmem:[#allocation2 + $0x218] sm:$0xff]
      %v5500 = vld [vmem:[#allocation2 + $0x220] sm:$0xff]
      %v5501 = vld [vmem:[#allocation2 + $0x228] sm:$0xff]
      %v5502 = vld [vmem:[#allocation2 + $0x230] sm:$0xff]
      %v5503 = vld [vmem:[#allocation2 + $0x238] sm:$0xff]
      %v5504 = vld [vmem:[%s16] sm:$0xf]
      %v5505 = vld [vmem:[%s17] sm:$0xf]
      %5507 = vset.pattern.permute.xlu0 0
      %5508 = vperm.xlu0 %5507, %v5505
      %v5509 = vpop.permute.xlu0 %5508
      %5512 = vst [vmem:[#allocation1] ss:$4 sm:$0xff] %v5504
      %v5513 = vld.sshfl [vmem:[#allocation1] sm:$0xff pattern:$0x73625140]
      %v5514 = vld.sshfl [vmem:[#allocation1 + $0x8] sm:$0xff pattern:$0x73625140]
      %v5588 = vunpack.c.l.b16 %v5432
      %v5589 = vunpack.c.h.b16 %v5432
      %v5590 = vunpack.c.l.b16 %v5433
      %v5591 = vunpack.c.h.b16 %v5433
      %v5592 = vunpack.c.l.b16 %v5434
      %v5593 = vunpack.c.h.b16 %v5434
      %v5594 = vunpack.c.l.b16 %v5435
      %v5595 = vunpack.c.h.b16 %v5435
      %v5596 = vunpack.c.l.b16 %v5436
      %v5597 = vunpack.c.h.b16 %v5436
      %v5598 = vunpack.c.l.b16 %v5437
      %v5599 = vunpack.c.h.b16 %v5437
      %v5600 = vunpack.c.l.b16 %v5438
      %v5601 = vunpack.c.h.b16 %v5438
      %v5602 = vunpack.c.l.b16 %v5439
      %v5603 = vunpack.c.h.b16 %v5439
      %v5604 = vunpack.c.l.b16 %v5440
      %v5605 = vunpack.c.h.b16 %v5440
      %v5606 = vunpack.c.l.b16 %v5441
      %v5607 = vunpack.c.h.b16 %v5441
      %v5608 = vunpack.c.l.b16 %v5442
      %v5609 = vunpack.c.h.b16 %v5442
      %v5610 = vunpack.c.l.b16 %v5443
      %v5611 = vunpack.c.h.b16 %v5443
      %v5612 = vunpack.c.l.b16 %v5444
      %v5613 = vunpack.c.h.b16 %v5444
      %v5614 = vunpack.c.l.b16 %v5445
      %v5615 = vunpack.c.h.b16 %v5445
      %v5616 = vunpack.c.l.b16 %v5446
      %v5617 = vunpack.c.h.b16 %v5446
      %v5618 = vunpack.c.l.b16 %v5447
      %v5619 = vunpack.c.h.b16 %v5447
      %v5620 = vunpack.c.l.b16 %v5448
      %v5621 = vunpack.c.h.b16 %v5448
      %v5622 = vunpack.c.l.b16 %v5449
      %v5623 = vunpack.c.h.b16 %v5449
      %v5624 = vunpack.c.l.b16 %v5450
      %v5625 = vunpack.c.h.b16 %v5450
      %v5626 = vunpack.c.l.b16 %v5451
      %v5627 = vunpack.c.h.b16 %v5451
      %v5628 = vunpack.c.l.b16 %v5452
      %v5629 = vunpack.c.h.b16 %v5452
      %v5630 = vunpack.c.l.b16 %v5453
      %v5631 = vunpack.c.h.b16 %v5453
      %v5632 = vunpack.c.l.b16 %v5454
      %v5633 = vunpack.c.h.b16 %v5454
      %v5634 = vunpack.c.l.b16 %v5455
      %v5635 = vunpack.c.h.b16 %v5455
      %v5636 = vunpack.c.l.b16 %v5456
      %v5637 = vunpack.c.h.b16 %v5456
      %v5638 = vunpack.c.l.b16 %v5457
      %v5639 = vunpack.c.h.b16 %v5457
      %v5640 = vunpack.c.l.b16 %v5458
      %v5641 = vunpack.c.h.b16 %v5458
      %v5642 = vunpack.c.l.b16 %v5459
      %v5643 = vunpack.c.h.b16 %v5459
      %v5644 = vunpack.c.l.b16 %v5460
      %v5645 = vunpack.c.h.b16 %v5460
      %v5646 = vunpack.c.l.b16 %v5461
      %v5647 = vunpack.c.h.b16 %v5461
      %v5648 = vunpack.c.l.b16 %v5462
      %v5649 = vunpack.c.h.b16 %v5462
      %v5650 = vunpack.c.l.b16 %v5463
      %v5651 = vunpack.c.h.b16 %v5463
      %v5652 = vunpack.c.l.b16 %v5464
      %v5653 = vunpack.c.h.b16 %v5464
      %v5654 = vunpack.c.l.b16 %v5465
      %v5655 = vunpack.c.h.b16 %v5465
      %v5656 = vunpack.c.l.b16 %v5466
      %v5657 = vunpack.c.h.b16 %v5466
      %v5658 = vunpack.c.l.b16 %v5467
      %v5659 = vunpack.c.h.b16 %v5467
      %v5660 = vunpack.c.l.b16 %v5468
      %v5661 = vunpack.c.h.b16 %v5468
      %v5662 = vunpack.c.l.b16 %v5469
      %v5663 = vunpack.c.h.b16 %v5469
      %v5664 = vunpack.c.l.b16 %v5470
      %v5665 = vunpack.c.h.b16 %v5470
      %v5666 = vunpack.c.l.b16 %v5471
      %v5667 = vunpack.c.h.b16 %v5471
      %v5668 = vunpack.c.l.b16 %v5472
      %v5669 = vunpack.c.h.b16 %v5472
      %v5670 = vunpack.c.l.b16 %v5473
      %v5671 = vunpack.c.h.b16 %v5473
      %v5672 = vunpack.c.l.b16 %v5474
      %v5673 = vunpack.c.h.b16 %v5474
      %v5674 = vunpack.c.l.b16 %v5475
      %v5675 = vunpack.c.h.b16 %v5475
      %v5676 = vunpack.c.l.b16 %v5476
      %v5677 = vunpack.c.h.b16 %v5476
      %v5678 = vunpack.c.l.b16 %v5477
      %v5679 = vunpack.c.h.b16 %v5477
      %v5680 = vunpack.c.l.b16 %v5478
      %v5681 = vunpack.c.h.b16 %v5478
      %v5682 = vunpack.c.l.b16 %v5479
      %v5683 = vunpack.c.h.b16 %v5479
      %v5684 = vunpack.c.l.b16 %v5480
      %v5685 = vunpack.c.h.b16 %v5480
      %v5686 = vunpack.c.l.b16 %v5481
      %v5687 = vunpack.c.h.b16 %v5481
      %v5688 = vunpack.c.l.b16 %v5482
      %v5689 = vunpack.c.h.b16 %v5482
      %v5690 = vunpack.c.l.b16 %v5483
      %v5691 = vunpack.c.h.b16 %v5483
      %v5692 = vunpack.c.l.b16 %v5484
      %v5693 = vunpack.c.h.b16 %v5484
      %v5694 = vunpack.c.l.b16 %v5485
      %v5695 = vunpack.c.h.b16 %v5485
      %v5696 = vunpack.c.l.b16 %v5486
      %v5697 = vunpack.c.h.b16 %v5486
      %v5698 = vunpack.c.l.b16 %v5487
      %v5699 = vunpack.c.h.b16 %v5487
      %v5700 = vunpack.c.l.b16 %v5488
      %v5701 = vunpack.c.h.b16 %v5488
      %v5702 = vunpack.c.l.b16 %v5489
      %v5703 = vunpack.c.h.b16 %v5489
      %v5704 = vunpack.c.l.b16 %v5490
      %v5705 = vunpack.c.h.b16 %v5490
      %v5706 = vunpack.c.l.b16 %v5491
      %v5707 = vunpack.c.h.b16 %v5491
      %v5708 = vunpack.c.l.b16 %v5492
      %v5709 = vunpack.c.h.b16 %v5492
      %v5710 = vunpack.c.l.b16 %v5493
      %v5711 = vunpack.c.h.b16 %v5493
      %v5712 = vunpack.c.l.b16 %v5494
      %v5713 = vunpack.c.h.b16 %v5494
      %v5714 = vunpack.c.l.b16 %v5495
      %v5715 = vunpack.c.h.b16 %v5495
      %v5716 = vunpack.c.l.b16 %v5496
      %v5717 = vunpack.c.h.b16 %v5496
      %v5718 = vunpack.c.l.b16 %v5497
      %v5719 = vunpack.c.h.b16 %v5497
      %v5720 = vunpack.c.l.b16 %v5498
      %v5721 = vunpack.c.h.b16 %v5498
      %v5722 = vunpack.c.l.b16 %v5499
      %v5723 = vunpack.c.h.b16 %v5499
      %v5724 = vunpack.c.l.b16 %v5500
      %v5725 = vunpack.c.h.b16 %v5500
      %v5726 = vunpack.c.l.b16 %v5501
      %v5727 = vunpack.c.h.b16 %v5501
      %v5728 = vunpack.c.l.b16 %v5502
      %v5729 = vunpack.c.h.b16 %v5502
      %v5730 = vunpack.c.l.b16 %v5503
      %v5731 = vunpack.c.h.b16 %v5503
      %v5732 = vpack.c.b16 %v5596, %v5588
      %v5733 = vpack.c.b16 %v5597, %v5589
      %v5734 = vpack.c.b16 %v5598, %v5590
      %v5735 = vpack.c.b16 %v5599, %v5591
      %v5736 = vpack.c.b16 %v5600, %v5592
      %v5737 = vpack.c.b16 %v5601, %v5593
      %v5738 = vpack.c.b16 %v5602, %v5594
      %v5739 = vpack.c.b16 %v5603, %v5595
      %v5740 = vpack.c.b16 %v5612, %v5604
      %v5741 = vpack.c.b16 %v5613, %v5605
      %v5742 = vpack.c.b16 %v5614, %v5606
      %v5743 = vpack.c.b16 %v5615, %v5607
      %v5744 = vpack.c.b16 %v5616, %v5608
      %v5745 = vpack.c.b16 %v5617, %v5609
      %v5746 = vpack.c.b16 %v5618, %v5610
      %v5747 = vpack.c.b16 %v5619, %v5611
      %v5748 = vpack.c.b16 %v5628, %v5620
      %v5749 = vpack.c.b16 %v5629, %v5621
      %v5750 = vpack.c.b16 %v5630, %v5622
      %v5751 = vpack.c.b16 %v5631, %v5623
      %v5752 = vpack.c.b16 %v5632, %v5624
      %v5753 = vpack.c.b16 %v5633, %v5625
      %v5754 = vpack.c.b16 %v5634, %v5626
      %v5755 = vpack.c.b16 %v5635, %v5627
      %v5756 = vpack.c.b16 %v5644, %v5636
      %v5757 = vpack.c.b16 %v5645, %v5637
      %v5758 = vpack.c.b16 %v5646, %v5638
      %v5759 = vpack.c.b16 %v5647, %v5639
      %v5760 = vpack.c.b16 %v5648, %v5640
      %v5761 = vpack.c.b16 %v5649, %v5641
      %v5762 = vpack.c.b16 %v5650, %v5642
      %v5763 = vpack.c.b16 %v5651, %v5643
      %v5764 = vpack.c.b16 %v5660, %v5652
      %v5765 = vpack.c.b16 %v5661, %v5653
      %v5766 = vpack.c.b16 %v5662, %v5654
      %v5767 = vpack.c.b16 %v5663, %v5655
      %v5768 = vpack.c.b16 %v5664, %v5656
      %v5769 = vpack.c.b16 %v5665, %v5657
      %v5770 = vpack.c.b16 %v5666, %v5658
      %v5771 = vpack.c.b16 %v5667, %v5659
      %v5772 = vpack.c.b16 %v5676, %v5668
      %v5773 = vpack.c.b16 %v5677, %v5669
      %v5774 = vpack.c.b16 %v5678, %v5670
      %v5775 = vpack.c.b16 %v5679, %v5671
      %v5776 = vpack.c.b16 %v5680, %v5672
      %v5777 = vpack.c.b16 %v5681, %v5673
      %v5778 = vpack.c.b16 %v5682, %v5674
      %v5779 = vpack.c.b16 %v5683, %v5675
      %v5780 = vpack.c.b16 %v5692, %v5684
      %v5781 = vpack.c.b16 %v5693, %v5685
      %v5782 = vpack.c.b16 %v5694, %v5686
      %v5783 = vpack.c.b16 %v5695, %v5687
      %v5784 = vpack.c.b16 %v5696, %v5688
      %v5785 = vpack.c.b16 %v5697, %v5689
      %v5786 = vpack.c.b16 %v5698, %v5690
      %v5787 = vpack.c.b16 %v5699, %v5691
      %v5788 = vpack.c.b16 %v5708, %v5700
      %v5789 = vpack.c.b16 %v5709, %v5701
      %v5790 = vpack.c.b16 %v5710, %v5702
      %v5791 = vpack.c.b16 %v5711, %v5703
      %v5792 = vpack.c.b16 %v5712, %v5704
      %v5793 = vpack.c.b16 %v5713, %v5705
      %v5794 = vpack.c.b16 %v5714, %v5706
      %v5795 = vpack.c.b16 %v5715, %v5707
      %v5796 = vpack.c.b16 %v5724, %v5716
      %v5797 = vpack.c.b16 %v5725, %v5717
      %v5798 = vpack.c.b16 %v5726, %v5718
      %v5799 = vpack.c.b16 %v5727, %v5719
      %v5800 = vpack.c.b16 %v5728, %v5720
      %v5801 = vpack.c.b16 %v5729, %v5721
      %v5802 = vpack.c.b16 %v5730, %v5722
      %v5803 = vpack.c.b16 %v5731, %v5723
      %vm5876 = vcmask 130048
      %v5877 = vsel %vm5876, %v5514, 0
      %5879 = vmatpush.bf16.msra.mxu0 %v5788
      %5880 = vmatpush.bf16.msra.mxu0 %v5780
      %5881 = vmatpush.bf16.msra.mxu0 %v5772
      %5882 = vmatpush.bf16.msra.mxu0 %v5764
      %5883 = vmatpush.bf16.msra.mxu0 %v5756
      %5884 = vmatpush.bf16.msra.mxu0 %v5748
      %5885 = vmatpush.bf16.msra.mxu0 %v5740
      %5886 = vmatpush.bf16.msra.mxu0 %v5732
      %5887 = vmatmul.bf16.gmra.mxu0 %v5513
      %v5888 = vpop.f32.mrf.mxu0
      %v5889 = vadd.f32 %v5509, %v5888
      %v5890 = vpop.f32.mrf.mxu0
      %5891 = vdwg.mxu0
      %5892 = vmatpush.bf16.msra.mxu0 0
      %5893 = vmatpush.bf16.msra.mxu0 0
      %5894 = vmatpush.bf16.msra.mxu0 0
      %5895 = vmatpush.bf16.msra.mxu0 0
      %5896 = vmatpush.bf16.msra.mxu0 0
      %5897 = vmatpush.bf16.msra.mxu0 0
      %5898 = vmatpush.bf16.msra.mxu0 0
      %5899 = vmatpush.bf16.msra.mxu0 %v5796
      %5900 = vmatmul.bf16.gmra.mxu0 %v5877
      %v5901 = vpop.f32.mrf.mxu0
      %v5902 = vadd.f32 %v5889, %v5901
      %v5903 = vpop.f32.mrf.mxu0
      %5904 = vdwg.mxu0
      %5905 = vmatpush.bf16.msra.mxu0 %v5789
      %5906 = vmatpush.bf16.msra.mxu0 %v5781
      %5907 = vmatpush.bf16.msra.mxu0 %v5773
      %5908 = vmatpush.bf16.msra.mxu0 %v5765
      %5909 = vmatpush.bf16.msra.mxu0 %v5757
      %5910 = vmatpush.bf16.msra.mxu0 %v5749
      %5911 = vmatpush.bf16.msra.mxu0 %v5741
      %5912 = vmatpush.bf16.msra.mxu0 %v5733
      %5913 = vmatmul.bf16.gmra.mxu0 %v5513
      %v5914 = vpop.f32.mrf.mxu0
      %v5915 = vadd.f32 %v5509, %v5914
      %v5916 = vpop.f32.mrf.mxu0
      %5917 = vdwg.mxu0
      %5918 = vmatpush.bf16.msra.mxu0 0
      %5919 = vmatpush.bf16.msra.mxu0 0
      %5920 = vmatpush.bf16.msra.mxu0 0
      %5921 = vmatpush.bf16.msra.mxu0 0
      %5922 = vmatpush.bf16.msra.mxu0 0
      %5923 = vmatpush.bf16.msra.mxu0 0
      %5924 = vmatpush.bf16.msra.mxu0 0
      %5925 = vmatpush.bf16.msra.mxu0 %v5797
      %5926 = vmatmul.bf16.gmra.mxu0 %v5877
      %v5927 = vpop.f32.mrf.mxu0
      %v5928 = vadd.f32 %v5915, %v5927
      %v5929 = vpop.f32.mrf.mxu0
      %5930 = vdwg.mxu0
      %5931 = vmatpush.bf16.msra.mxu0 %v5790
      %5932 = vmatpush.bf16.msra.mxu0 %v5782
      %5933 = vmatpush.bf16.msra.mxu0 %v5774
      %5934 = vmatpush.bf16.msra.mxu0 %v5766
      %5935 = vmatpush.bf16.msra.mxu0 %v5758
      %5936 = vmatpush.bf16.msra.mxu0 %v5750
      %5937 = vmatpush.bf16.msra.mxu0 %v5742
      %5938 = vmatpush.bf16.msra.mxu0 %v5734
      %5939 = vmatmul.bf16.gmra.mxu0 %v5513
      %v5940 = vpop.f32.mrf.mxu0
      %v5941 = vadd.f32 %v5509, %v5940
      %v5942 = vpop.f32.mrf.mxu0
      %5943 = vdwg.mxu0
      %5944 = vmatpush.bf16.msra.mxu0 0
      %5945 = vmatpush.bf16.msra.mxu0 0
      %5946 = vmatpush.bf16.msra.mxu0 0
      %5947 = vmatpush.bf16.msra.mxu0 0
      %5948 = vmatpush.bf16.msra.mxu0 0
      %5949 = vmatpush.bf16.msra.mxu0 0
      %5950 = vmatpush.bf16.msra.mxu0 0
      %5951 = vmatpush.bf16.msra.mxu0 %v5798
      %5952 = vmatmul.bf16.gmra.mxu0 %v5877
      %v5953 = vpop.f32.mrf.mxu0
      %v5954 = vadd.f32 %v5941, %v5953
      %v5955 = vpop.f32.mrf.mxu0
      %5956 = vdwg.mxu0
      %5957 = vmatpush.bf16.msra.mxu0 %v5791
      %5958 = vmatpush.bf16.msra.mxu0 %v5783
      %5959 = vmatpush.bf16.msra.mxu0 %v5775
      %5960 = vmatpush.bf16.msra.mxu0 %v5767
      %5961 = vmatpush.bf16.msra.mxu0 %v5759
      %5962 = vmatpush.bf16.msra.mxu0 %v5751
      %5963 = vmatpush.bf16.msra.mxu0 %v5743
      %5964 = vmatpush.bf16.msra.mxu0 %v5735
      %5965 = vmatmul.bf16.gmra.mxu0 %v5513
      %v5966 = vpop.f32.mrf.mxu0
      %v5967 = vadd.f32 %v5509, %v5966
      %v5968 = vpop.f32.mrf.mxu0
      %5969 = vdwg.mxu0
      %5970 = vmatpush.bf16.msra.mxu0 0
      %5971 = vmatpush.bf16.msra.mxu0 0
      %5972 = vmatpush.bf16.msra.mxu0 0
      %5973 = vmatpush.bf16.msra.mxu0 0
      %5974 = vmatpush.bf16.msra.mxu0 0
      %5975 = vmatpush.bf16.msra.mxu0 0
      %5976 = vmatpush.bf16.msra.mxu0 0
      %5977 = vmatpush.bf16.msra.mxu0 %v5799
      %5978 = vmatmul.bf16.gmra.mxu0 %v5877
      %v5979 = vpop.f32.mrf.mxu0
      %v5980 = vadd.f32 %v5967, %v5979
      %v5981 = vpop.f32.mrf.mxu0
      %5982 = vdwg.mxu0
      %5983 = vmatpush.bf16.msra.mxu0 %v5792
      %5984 = vmatpush.bf16.msra.mxu0 %v5784
      %5985 = vmatpush.bf16.msra.mxu0 %v5776
      %5986 = vmatpush.bf16.msra.mxu0 %v5768
      %5987 = vmatpush.bf16.msra.mxu0 %v5760
      %5988 = vmatpush.bf16.msra.mxu0 %v5752
      %5989 = vmatpush.bf16.msra.mxu0 %v5744
      %5990 = vmatpush.bf16.msra.mxu0 %v5736
      %5991 = vmatmul.bf16.gmra.mxu0 %v5513
      %v5992 = vpop.f32.mrf.mxu0
      %v5993 = vadd.f32 %v5509, %v5992
      %v5994 = vpop.f32.mrf.mxu0
      %5995 = vdwg.mxu0
      %5996 = vmatpush.bf16.msra.mxu0 0
      %5997 = vmatpush.bf16.msra.mxu0 0
      %5998 = vmatpush.bf16.msra.mxu0 0
      %5999 = vmatpush.bf16.msra.mxu0 0
      %6000 = vmatpush.bf16.msra.mxu0 0
      %6001 = vmatpush.bf16.msra.mxu0 0
      %6002 = vmatpush.bf16.msra.mxu0 0
      %6003 = vmatpush.bf16.msra.mxu0 %v5800
      %6004 = vmatmul.bf16.gmra.mxu0 %v5877
      %v6005 = vpop.f32.mrf.mxu0
      %v6006 = vadd.f32 %v5993, %v6005
      %v6007 = vpop.f32.mrf.mxu0
      %6008 = vdwg.mxu0
      %6009 = vmatpush.bf16.msra.mxu0 %v5793
      %6010 = vmatpush.bf16.msra.mxu0 %v5785
      %6011 = vmatpush.bf16.msra.mxu0 %v5777
      %6012 = vmatpush.bf16.msra.mxu0 %v5769
      %6013 = vmatpush.bf16.msra.mxu0 %v5761
      %6014 = vmatpush.bf16.msra.mxu0 %v5753
      %6015 = vmatpush.bf16.msra.mxu0 %v5745
      %6016 = vmatpush.bf16.msra.mxu0 %v5737
      %6017 = vmatmul.bf16.gmra.mxu0 %v5513
      %v6018 = vpop.f32.mrf.mxu0
      %v6019 = vadd.f32 %v5509, %v6018
      %v6020 = vpop.f32.mrf.mxu0
      %6021 = vdwg.mxu0
      %6022 = vmatpush.bf16.msra.mxu0 0
      %6023 = vmatpush.bf16.msra.mxu0 0
      %6024 = vmatpush.bf16.msra.mxu0 0
      %6025 = vmatpush.bf16.msra.mxu0 0
      %6026 = vmatpush.bf16.msra.mxu0 0
      %6027 = vmatpush.bf16.msra.mxu0 0
      %6028 = vmatpush.bf16.msra.mxu0 0
      %6029 = vmatpush.bf16.msra.mxu0 %v5801
      %6030 = vmatmul.bf16.gmra.mxu0 %v5877
      %v6031 = vpop.f32.mrf.mxu0
      %v6032 = vadd.f32 %v6019, %v6031
      %v6033 = vpop.f32.mrf.mxu0
      %6034 = vdwg.mxu0
      %6035 = vmatpush.bf16.msra.mxu0 %v5794
      %6036 = vmatpush.bf16.msra.mxu0 %v5786
      %6037 = vmatpush.bf16.msra.mxu0 %v5778
      %6038 = vmatpush.bf16.msra.mxu0 %v5770
      %6039 = vmatpush.bf16.msra.mxu0 %v5762
      %6040 = vmatpush.bf16.msra.mxu0 %v5754
      %6041 = vmatpush.bf16.msra.mxu0 %v5746
      %6042 = vmatpush.bf16.msra.mxu0 %v5738
      %6043 = vmatmul.bf16.gmra.mxu0 %v5513
      %v6044 = vpop.f32.mrf.mxu0
      %v6045 = vadd.f32 %v5509, %v6044
      %v6046 = vpop.f32.mrf.mxu0
      %6047 = vdwg.mxu0
      %6048 = vmatpush.bf16.msra.mxu0 0
      %6049 = vmatpush.bf16.msra.mxu0 0
      %6050 = vmatpush.bf16.msra.mxu0 0
      %6051 = vmatpush.bf16.msra.mxu0 0
      %6052 = vmatpush.bf16.msra.mxu0 0
      %6053 = vmatpush.bf16.msra.mxu0 0
      %6054 = vmatpush.bf16.msra.mxu0 0
      %6055 = vmatpush.bf16.msra.mxu0 %v5802
      %6056 = vmatmul.bf16.gmra.mxu0 %v5877
      %v6057 = vpop.f32.mrf.mxu0
      %v6058 = vadd.f32 %v6045, %v6057
      %v6059 = vpop.f32.mrf.mxu0
      %6060 = vdwg.mxu0
      %6061 = vmatpush.bf16.msra.mxu0 %v5795
      %6062 = vmatpush.bf16.msra.mxu0 %v5787
      %6063 = vmatpush.bf16.msra.mxu0 %v5779
      %6064 = vmatpush.bf16.msra.mxu0 %v5771
      %6065 = vmatpush.bf16.msra.mxu0 %v5763
      %6066 = vmatpush.bf16.msra.mxu0 %v5755
      %6067 = vmatpush.bf16.msra.mxu0 %v5747
      %6068 = vmatpush.bf16.msra.mxu0 %v5739
      %6069 = vmatmul.bf16.gmra.mxu0 %v5513
      %v6070 = vpop.f32.mrf.mxu0
      %v6071 = vadd.f32 %v5509, %v6070
      %v6072 = vpop.f32.mrf.mxu0
      %6073 = vdwg.mxu0
      %6074 = vmatpush.bf16.msra.mxu0 0
      %6075 = vmatpush.bf16.msra.mxu0 0
      %6076 = vmatpush.bf16.msra.mxu0 0
      %6077 = vmatpush.bf16.msra.mxu0 0
      %6078 = vmatpush.bf16.msra.mxu0 0
      %6079 = vmatpush.bf16.msra.mxu0 0
      %6080 = vmatpush.bf16.msra.mxu0 0
      %6081 = vmatpush.bf16.msra.mxu0 %v5803
      %6082 = vmatmul.bf16.gmra.mxu0 %v5877
      %v6083 = vpop.f32.mrf.mxu0
      %v6084 = vadd.f32 %v6071, %v6083
      %v6085 = vpop.f32.mrf.mxu0
      %6086 = vdwg.mxu0
      %6087 = vrot.lane.b32.xlu0 %v5902, 17
      %v6088 = vpop.permute.xlu0 %6087
      %6089 = vrot.lane.b32.xlu0 %v5928, 17
      %v6090 = vpop.permute.xlu0 %6089
      %6091 = vrot.lane.b32.xlu0 %v5954, 17
      %v6092 = vpop.permute.xlu0 %6091
      %6093 = vrot.lane.b32.xlu0 %v5980, 17
      %v6094 = vpop.permute.xlu0 %6093
      %6095 = vrot.lane.b32.xlu0 %v6006, 17
      %v6096 = vpop.permute.xlu0 %6095
      %6097 = vrot.lane.b32.xlu0 %v6032, 17
      %v6098 = vpop.permute.xlu0 %6097
      %6099 = vrot.lane.b32.xlu0 %v6058, 17
      %v6100 = vpop.permute.xlu0 %6099
      %6101 = vrot.lane.b32.xlu0 %v6084, 17
      %v6102 = vpop.permute.xlu0 %6101
      %v6103 = vsel %vm768, %v6100, %v6102
      %v6104 = vsel %vm768, %v6098, %v6100
      %v6105 = vsel %vm768, %v6096, %v6098
      %v6106 = vsel %vm768, %v6094, %v6096
      %v6107 = vsel %vm768, %v6092, %v6094
      %v6108 = vsel %vm768, %v6090, %v6092
      %v6109 = vsel %vm768, %v6088, %v6090
      %v6110 = vsel %vm768, %v6102, %v6088
      %v6111 = vld [vmem:[%s2] ss:$8 sm:$0xf]
      %v6112 = vld [vmem:[%s2] ss:$8 sm:$0xf0]
      %v6113 = vor.u32 %v6111, %v6112
      %v6115 = vperm.slane %v6113, 0
      %v6116 = vperm.slane %v6113, 1
      %v6117 = vperm.slane %v6113, 2
      %v6118 = vperm.slane %v6113, 3
      %v6119 = vperm.slane %v6113, 4
      %v6120 = vperm.slane %v6113, 5
      %v6121 = vperm.slane %v6113, 6
      %v6122 = vperm.slane %v6113, 7
      %v6131 = vmul.f32 %v6110, %v6115
      %v6132 = vmul.f32 %v6109, %v6116
      %v6133 = vmul.f32 %v6108, %v6117
      %v6134 = vmul.f32 %v6107, %v6118
      %v6135 = vmul.f32 %v6106, %v6119
      %v6136 = vmul.f32 %v6105, %v6120
      %v6137 = vmul.f32 %v6104, %v6121
      %v6138 = vmul.f32 %v6103, %v6122
      %v6139 = vld [vmem:[%s18] sm:$0xf]
      %6141 = vset.pattern.permute.xlu0 0
      %6142 = vperm.xlu0 %6141, %v6139
      %v6143 = vpop.permute.xlu0 %6142
      %v6145 = vmul.f32 %v6131, %v6143
      %v6146 = vmul.f32 %v6132, %v6143
      %v6147 = vmul.f32 %v6133, %v6143
      %v6148 = vmul.f32 %v6134, %v6143
      %v6149 = vmul.f32 %v6135, %v6143
      %v6150 = vmul.f32 %v6136, %v6143
      %v6151 = vmul.f32 %v6137, %v6143
      %v6152 = vmul.f32 %v6138, %v6143
      %v6153 = vadd.f32 %v6145, 0.0
      %v6154 = vadd.f32 %v6146, 0.0
      %v6155 = vadd.f32 %v6147, 0.0
      %v6156 = vadd.f32 %v6148, 0.0
      %v6157 = vadd.f32 %v6149, 0.0
      %v6158 = vadd.f32 %v6150, 0.0
      %v6159 = vadd.f32 %v6151, 0.0
      %v6160 = vadd.f32 %v6152, 0.0
      %6161 = vrot.lane.b32.xlu0 %v5902, 16
      %v6162 = vpop.permute.xlu0 %6161
      %6163 = vrot.lane.b32.xlu0 %v5928, 16
      %v6164 = vpop.permute.xlu0 %6163
      %6165 = vrot.lane.b32.xlu0 %v5954, 16
      %v6166 = vpop.permute.xlu0 %6165
      %6167 = vrot.lane.b32.xlu0 %v5980, 16
      %v6168 = vpop.permute.xlu0 %6167
      %6169 = vrot.lane.b32.xlu0 %v6006, 16
      %v6170 = vpop.permute.xlu0 %6169
      %6171 = vrot.lane.b32.xlu0 %v6032, 16
      %v6172 = vpop.permute.xlu0 %6171
      %6173 = vrot.lane.b32.xlu0 %v6058, 16
      %v6174 = vpop.permute.xlu0 %6173
      %6175 = vrot.lane.b32.xlu0 %v6084, 16
      %v6176 = vpop.permute.xlu0 %6175
      %v6177 = vsel %vm829, %v6174, %v6176
      %v6178 = vsel %vm829, %v6172, %v6174
      %v6179 = vsel %vm829, %v6170, %v6172
      %v6180 = vsel %vm829, %v6168, %v6170
      %v6181 = vsel %vm829, %v6166, %v6168
      %v6182 = vsel %vm829, %v6164, %v6166
      %v6183 = vsel %vm829, %v6162, %v6164
      %v6184 = vsel %vm829, %v6176, %v6162
      %v6185 = vld [vmem:[%s838] ss:$8 sm:$0xf]
      %v6186 = vld [vmem:[%s838] ss:$8 sm:$0xf0]
      %v6187 = vor.u32 %v6185, %v6186
      %v6189 = vperm.slane %v6187, 0
      %v6190 = vperm.slane %v6187, 1
      %v6191 = vperm.slane %v6187, 2
      %v6192 = vperm.slane %v6187, 3
      %v6193 = vperm.slane %v6187, 4
      %v6194 = vperm.slane %v6187, 5
      %v6195 = vperm.slane %v6187, 6
      %v6196 = vperm.slane %v6187, 7
      %v6205 = vmul.f32 %v6184, %v6189
      %v6206 = vmul.f32 %v6183, %v6190
      %v6207 = vmul.f32 %v6182, %v6191
      %v6208 = vmul.f32 %v6181, %v6192
      %v6209 = vmul.f32 %v6180, %v6193
      %v6210 = vmul.f32 %v6179, %v6194
      %v6211 = vmul.f32 %v6178, %v6195
      %v6212 = vmul.f32 %v6177, %v6196
      %6213 = vset.pattern.permute.xlu0 1
      %6214 = vperm.xlu0 %6213, %v6139
      %v6215 = vpop.permute.xlu0 %6214
      %v6217 = vmul.f32 %v6205, %v6215
      %v6218 = vmul.f32 %v6206, %v6215
      %v6219 = vmul.f32 %v6207, %v6215
      %v6220 = vmul.f32 %v6208, %v6215
      %v6221 = vmul.f32 %v6209, %v6215
      %v6222 = vmul.f32 %v6210, %v6215
      %v6223 = vmul.f32 %v6211, %v6215
      %v6224 = vmul.f32 %v6212, %v6215
      %v6225 = vadd.f32 %v6153, %v6217
      %v6226 = vadd.f32 %v6154, %v6218
      %v6227 = vadd.f32 %v6155, %v6219
      %v6228 = vadd.f32 %v6156, %v6220
      %v6229 = vadd.f32 %v6157, %v6221
      %v6230 = vadd.f32 %v6158, %v6222
      %v6231 = vadd.f32 %v6159, %v6223
      %v6232 = vadd.f32 %v6160, %v6224
      %6233 = vrot.lane.b32.xlu0 %v5902, 15
      %v6234 = vpop.permute.xlu0 %6233
      %6235 = vrot.lane.b32.xlu0 %v5928, 15
      %v6236 = vpop.permute.xlu0 %6235
      %6237 = vrot.lane.b32.xlu0 %v5954, 15
      %v6238 = vpop.permute.xlu0 %6237
      %6239 = vrot.lane.b32.xlu0 %v5980, 15
      %v6240 = vpop.permute.xlu0 %6239
      %6241 = vrot.lane.b32.xlu0 %v6006, 15
      %v6242 = vpop.permute.xlu0 %6241
      %6243 = vrot.lane.b32.xlu0 %v6032, 15
      %v6244 = vpop.permute.xlu0 %6243
      %6245 = vrot.lane.b32.xlu0 %v6058, 15
      %v6246 = vpop.permute.xlu0 %6245
      %6247 = vrot.lane.b32.xlu0 %v6084, 15
      %v6248 = vpop.permute.xlu0 %6247
      %v6249 = vsel %vm891, %v6246, %v6248
      %v6250 = vsel %vm891, %v6244, %v6246
      %v6251 = vsel %vm891, %v6242, %v6244
      %v6252 = vsel %vm891, %v6240, %v6242
      %v6253 = vsel %vm891, %v6238, %v6240
      %v6254 = vsel %vm891, %v6236, %v6238
      %v6255 = vsel %vm891, %v6234, %v6236
      %v6256 = vsel %vm891, %v6248, %v6234
      %v6257 = vld [vmem:[%s900] ss:$8 sm:$0xf]
      %v6258 = vld [vmem:[%s900] ss:$8 sm:$0xf0]
      %v6259 = vor.u32 %v6257, %v6258
      %v6261 = vperm.slane %v6259, 0
      %v6262 = vperm.slane %v6259, 1
      %v6263 = vperm.slane %v6259, 2
      %v6264 = vperm.slane %v6259, 3
      %v6265 = vperm.slane %v6259, 4
      %v6266 = vperm.slane %v6259, 5
      %v6267 = vperm.slane %v6259, 6
      %v6268 = vperm.slane %v6259, 7
      %v6277 = vmul.f32 %v6256, %v6261
      %v6278 = vmul.f32 %v6255, %v6262
      %v6279 = vmul.f32 %v6254, %v6263
      %v6280 = vmul.f32 %v6253, %v6264
      %v6281 = vmul.f32 %v6252, %v6265
      %v6282 = vmul.f32 %v6251, %v6266
      %v6283 = vmul.f32 %v6250, %v6267
      %v6284 = vmul.f32 %v6249, %v6268
      %6285 = vset.pattern.permute.xlu0 2
      %6286 = vperm.xlu0 %6285, %v6139
      %v6287 = vpop.permute.xlu0 %6286
      %v6289 = vmul.f32 %v6277, %v6287
      %v6290 = vmul.f32 %v6278, %v6287
      %v6291 = vmul.f32 %v6279, %v6287
      %v6292 = vmul.f32 %v6280, %v6287
      %v6293 = vmul.f32 %v6281, %v6287
      %v6294 = vmul.f32 %v6282, %v6287
      %v6295 = vmul.f32 %v6283, %v6287
      %v6296 = vmul.f32 %v6284, %v6287
      %v6297 = vadd.f32 %v6225, %v6289
      %v6298 = vadd.f32 %v6226, %v6290
      %v6299 = vadd.f32 %v6227, %v6291
      %v6300 = vadd.f32 %v6228, %v6292
      %v6301 = vadd.f32 %v6229, %v6293
      %v6302 = vadd.f32 %v6230, %v6294
      %v6303 = vadd.f32 %v6231, %v6295
      %v6304 = vadd.f32 %v6232, %v6296
      %6305 = vrot.lane.b32.xlu0 %v5902, 1
      %v6306 = vpop.permute.xlu0 %6305
      %6307 = vrot.lane.b32.xlu0 %v5928, 1
      %v6308 = vpop.permute.xlu0 %6307
      %6309 = vrot.lane.b32.xlu0 %v5954, 1
      %v6310 = vpop.permute.xlu0 %6309
      %6311 = vrot.lane.b32.xlu0 %v5980, 1
      %v6312 = vpop.permute.xlu0 %6311
      %6313 = vrot.lane.b32.xlu0 %v6006, 1
      %v6314 = vpop.permute.xlu0 %6313
      %6315 = vrot.lane.b32.xlu0 %v6032, 1
      %v6316 = vpop.permute.xlu0 %6315
      %6317 = vrot.lane.b32.xlu0 %v6058, 1
      %v6318 = vpop.permute.xlu0 %6317
      %6319 = vrot.lane.b32.xlu0 %v6084, 1
      %v6320 = vpop.permute.xlu0 %6319
      %v6321 = vsel %vm953, %v6318, %v6320
      %v6322 = vsel %vm953, %v6316, %v6318
      %v6323 = vsel %vm953, %v6314, %v6316
      %v6324 = vsel %vm953, %v6312, %v6314
      %v6325 = vsel %vm953, %v6310, %v6312
      %v6326 = vsel %vm953, %v6308, %v6310
      %v6327 = vsel %vm953, %v6306, %v6308
      %v6328 = vsel %vm953, %v6320, %v6306
      %v6329 = vld [vmem:[%s962] ss:$8 sm:$0xf]
      %v6330 = vld [vmem:[%s962] ss:$8 sm:$0xf0]
      %v6331 = vor.u32 %v6329, %v6330
      %v6333 = vperm.slane %v6331, 0
      %v6334 = vperm.slane %v6331, 1
      %v6335 = vperm.slane %v6331, 2
      %v6336 = vperm.slane %v6331, 3
      %v6337 = vperm.slane %v6331, 4
      %v6338 = vperm.slane %v6331, 5
      %v6339 = vperm.slane %v6331, 6
      %v6340 = vperm.slane %v6331, 7
      %v6349 = vmul.f32 %v6328, %v6333
      %v6350 = vmul.f32 %v6327, %v6334
      %v6351 = vmul.f32 %v6326, %v6335
      %v6352 = vmul.f32 %v6325, %v6336
      %v6353 = vmul.f32 %v6324, %v6337
      %v6354 = vmul.f32 %v6323, %v6338
      %v6355 = vmul.f32 %v6322, %v6339
      %v6356 = vmul.f32 %v6321, %v6340
      %6357 = vset.pattern.permute.xlu0 3
      %6358 = vperm.xlu0 %6357, %v6139
      %v6359 = vpop.permute.xlu0 %6358
      %v6361 = vmul.f32 %v6349, %v6359
      %v6362 = vmul.f32 %v6350, %v6359
      %v6363 = vmul.f32 %v6351, %v6359
      %v6364 = vmul.f32 %v6352, %v6359
      %v6365 = vmul.f32 %v6353, %v6359
      %v6366 = vmul.f32 %v6354, %v6359
      %v6367 = vmul.f32 %v6355, %v6359
      %v6368 = vmul.f32 %v6356, %v6359
      %v6369 = vadd.f32 %v6297, %v6361
      %v6370 = vadd.f32 %v6298, %v6362
      %v6371 = vadd.f32 %v6299, %v6363
      %v6372 = vadd.f32 %v6300, %v6364
      %v6373 = vadd.f32 %v6301, %v6365
      %v6374 = vadd.f32 %v6302, %v6366
      %v6375 = vadd.f32 %v6303, %v6367
      %v6376 = vadd.f32 %v6304, %v6368
      %6377 = vset.pattern.permute.xlu0 4
      %6378 = vperm.xlu0 %6377, %v6139
      %v6379 = vpop.permute.xlu0 %6378
      %v6381 = vmul.f32 %v5902, %v6379
      %v6382 = vmul.f32 %v5928, %v6379
      %v6383 = vmul.f32 %v5954, %v6379
      %v6384 = vmul.f32 %v5980, %v6379
      %v6385 = vmul.f32 %v6006, %v6379
      %v6386 = vmul.f32 %v6032, %v6379
      %v6387 = vmul.f32 %v6058, %v6379
      %v6388 = vmul.f32 %v6084, %v6379
      %v6389 = vadd.f32 %v6369, %v6381
      %v6390 = vadd.f32 %v6370, %v6382
      %v6391 = vadd.f32 %v6371, %v6383
      %v6392 = vadd.f32 %v6372, %v6384
      %v6393 = vadd.f32 %v6373, %v6385
      %v6394 = vadd.f32 %v6374, %v6386
      %v6395 = vadd.f32 %v6375, %v6387
      %v6396 = vadd.f32 %v6376, %v6388
      %6397 = vrot.lane.b32.xlu0 %v5902, 127
      %v6398 = vpop.permute.xlu0 %6397
      %6399 = vrot.lane.b32.xlu0 %v5928, 127
      %v6400 = vpop.permute.xlu0 %6399
      %6401 = vrot.lane.b32.xlu0 %v5954, 127
      %v6402 = vpop.permute.xlu0 %6401
      %6403 = vrot.lane.b32.xlu0 %v5980, 127
      %v6404 = vpop.permute.xlu0 %6403
      %6405 = vrot.lane.b32.xlu0 %v6006, 127
      %v6406 = vpop.permute.xlu0 %6405
      %6407 = vrot.lane.b32.xlu0 %v6032, 127
      %v6408 = vpop.permute.xlu0 %6407
      %6409 = vrot.lane.b32.xlu0 %v6058, 127
      %v6410 = vpop.permute.xlu0 %6409
      %6411 = vrot.lane.b32.xlu0 %v6084, 127
      %v6412 = vpop.permute.xlu0 %6411
      %v6413 = vsel %vm661, %v6410, %v6412
      %v6414 = vsel %vm661, %v6408, %v6410
      %v6415 = vsel %vm661, %v6406, %v6408
      %v6416 = vsel %vm661, %v6404, %v6406
      %v6417 = vsel %vm661, %v6402, %v6404
      %v6418 = vsel %vm661, %v6400, %v6402
      %v6419 = vsel %vm661, %v6398, %v6400
      %v6420 = vsel %vm661, %v6412, %v6398
      %v6421 = vld [vmem:[%s1003] ss:$8 sm:$0xf]
      %v6422 = vld [vmem:[%s1003] ss:$8 sm:$0xf0]
      %v6423 = vor.u32 %v6421, %v6422
      %v6425 = vperm.slane %v6423, 0
      %v6426 = vperm.slane %v6423, 1
      %v6427 = vperm.slane %v6423, 2
      %v6428 = vperm.slane %v6423, 3
      %v6429 = vperm.slane %v6423, 4
      %v6430 = vperm.slane %v6423, 5
      %v6431 = vperm.slane %v6423, 6
      %v6432 = vperm.slane %v6423, 7
      %v6441 = vmul.f32 %v6419, %v6425
      %v6442 = vmul.f32 %v6418, %v6426
      %v6443 = vmul.f32 %v6417, %v6427
      %v6444 = vmul.f32 %v6416, %v6428
      %v6445 = vmul.f32 %v6415, %v6429
      %v6446 = vmul.f32 %v6414, %v6430
      %v6447 = vmul.f32 %v6413, %v6431
      %v6448 = vmul.f32 %v6420, %v6432
      %6449 = vset.pattern.permute.xlu0 5
      %6450 = vperm.xlu0 %6449, %v6139
      %v6451 = vpop.permute.xlu0 %6450
      %v6453 = vmul.f32 %v6441, %v6451
      %v6454 = vmul.f32 %v6442, %v6451
      %v6455 = vmul.f32 %v6443, %v6451
      %v6456 = vmul.f32 %v6444, %v6451
      %v6457 = vmul.f32 %v6445, %v6451
      %v6458 = vmul.f32 %v6446, %v6451
      %v6459 = vmul.f32 %v6447, %v6451
      %v6460 = vmul.f32 %v6448, %v6451
      %v6461 = vadd.f32 %v6389, %v6453
      %v6462 = vadd.f32 %v6390, %v6454
      %v6463 = vadd.f32 %v6391, %v6455
      %v6464 = vadd.f32 %v6392, %v6456
      %v6465 = vadd.f32 %v6393, %v6457
      %v6466 = vadd.f32 %v6394, %v6458
      %v6467 = vadd.f32 %v6395, %v6459
      %v6468 = vadd.f32 %v6396, %v6460
      %6469 = vrot.lane.b32.xlu0 %v5902, 113
      %v6470 = vpop.permute.xlu0 %6469
      %6471 = vrot.lane.b32.xlu0 %v5928, 113
      %v6472 = vpop.permute.xlu0 %6471
      %6473 = vrot.lane.b32.xlu0 %v5954, 113
      %v6474 = vpop.permute.xlu0 %6473
      %6475 = vrot.lane.b32.xlu0 %v5980, 113
      %v6476 = vpop.permute.xlu0 %6475
      %6477 = vrot.lane.b32.xlu0 %v6006, 113
      %v6478 = vpop.permute.xlu0 %6477
      %6479 = vrot.lane.b32.xlu0 %v6032, 113
      %v6480 = vpop.permute.xlu0 %6479
      %6481 = vrot.lane.b32.xlu0 %v6058, 113
      %v6482 = vpop.permute.xlu0 %6481
      %6483 = vrot.lane.b32.xlu0 %v6084, 113
      %v6484 = vpop.permute.xlu0 %6483
      %v6485 = vsel %vm1056, %v6482, %v6484
      %v6486 = vsel %vm1056, %v6480, %v6482
      %v6487 = vsel %vm1056, %v6478, %v6480
      %v6488 = vsel %vm1056, %v6476, %v6478
      %v6489 = vsel %vm1056, %v6474, %v6476
      %v6490 = vsel %vm1056, %v6472, %v6474
      %v6491 = vsel %vm1056, %v6470, %v6472
      %v6492 = vsel %vm1056, %v6484, %v6470
      %v6493 = vld [vmem:[%s1065] ss:$8 sm:$0xf]
      %v6494 = vld [vmem:[%s1065] ss:$8 sm:$0xf0]
      %v6495 = vor.u32 %v6493, %v6494
      %v6497 = vperm.slane %v6495, 0
      %v6498 = vperm.slane %v6495, 1
      %v6499 = vperm.slane %v6495, 2
      %v6500 = vperm.slane %v6495, 3
      %v6501 = vperm.slane %v6495, 4
      %v6502 = vperm.slane %v6495, 5
      %v6503 = vperm.slane %v6495, 6
      %v6504 = vperm.slane %v6495, 7
      %v6513 = vmul.f32 %v6491, %v6497
      %v6514 = vmul.f32 %v6490, %v6498
      %v6515 = vmul.f32 %v6489, %v6499
      %v6516 = vmul.f32 %v6488, %v6500
      %v6517 = vmul.f32 %v6487, %v6501
      %v6518 = vmul.f32 %v6486, %v6502
      %v6519 = vmul.f32 %v6485, %v6503
      %v6520 = vmul.f32 %v6492, %v6504
      %6521 = vset.pattern.permute.xlu0 6
      %6522 = vperm.xlu0 %6521, %v6139
      %v6523 = vpop.permute.xlu0 %6522
      %v6525 = vmul.f32 %v6513, %v6523
      %v6526 = vmul.f32 %v6514, %v6523
      %v6527 = vmul.f32 %v6515, %v6523
      %v6528 = vmul.f32 %v6516, %v6523
      %v6529 = vmul.f32 %v6517, %v6523
      %v6530 = vmul.f32 %v6518, %v6523
      %v6531 = vmul.f32 %v6519, %v6523
      %v6532 = vmul.f32 %v6520, %v6523
      %v6533 = vadd.f32 %v6461, %v6525
      %v6534 = vadd.f32 %v6462, %v6526
      %v6535 = vadd.f32 %v6463, %v6527
      %v6536 = vadd.f32 %v6464, %v6528
      %v6537 = vadd.f32 %v6465, %v6529
      %v6538 = vadd.f32 %v6466, %v6530
      %v6539 = vadd.f32 %v6467, %v6531
      %v6540 = vadd.f32 %v6468, %v6532
      %6541 = vrot.lane.b32.xlu0 %v5902, 112
      %v6542 = vpop.permute.xlu0 %6541
      %6543 = vrot.lane.b32.xlu0 %v5928, 112
      %v6544 = vpop.permute.xlu0 %6543
      %6545 = vrot.lane.b32.xlu0 %v5954, 112
      %v6546 = vpop.permute.xlu0 %6545
      %6547 = vrot.lane.b32.xlu0 %v5980, 112
      %v6548 = vpop.permute.xlu0 %6547
      %6549 = vrot.lane.b32.xlu0 %v6006, 112
      %v6550 = vpop.permute.xlu0 %6549
      %6551 = vrot.lane.b32.xlu0 %v6032, 112
      %v6552 = vpop.permute.xlu0 %6551
      %6553 = vrot.lane.b32.xlu0 %v6058, 112
      %v6554 = vpop.permute.xlu0 %6553
      %6555 = vrot.lane.b32.xlu0 %v6084, 112
      %v6556 = vpop.permute.xlu0 %6555
      %v6557 = vsel %vm694, %v6554, %v6556
      %v6558 = vsel %vm694, %v6552, %v6554
      %v6559 = vsel %vm694, %v6550, %v6552
      %v6560 = vsel %vm694, %v6548, %v6550
      %v6561 = vsel %vm694, %v6546, %v6548
      %v6562 = vsel %vm694, %v6544, %v6546
      %v6563 = vsel %vm694, %v6542, %v6544
      %v6564 = vsel %vm694, %v6556, %v6542
      %v6565 = vld [vmem:[%s1102] ss:$8 sm:$0xf]
      %v6566 = vld [vmem:[%s1102] ss:$8 sm:$0xf0]
      %v6567 = vor.u32 %v6565, %v6566
      %v6569 = vperm.slane %v6567, 0
      %v6570 = vperm.slane %v6567, 1
      %v6571 = vperm.slane %v6567, 2
      %v6572 = vperm.slane %v6567, 3
      %v6573 = vperm.slane %v6567, 4
      %v6574 = vperm.slane %v6567, 5
      %v6575 = vperm.slane %v6567, 6
      %v6576 = vperm.slane %v6567, 7
      %v6585 = vmul.f32 %v6563, %v6569
      %v6586 = vmul.f32 %v6562, %v6570
      %v6587 = vmul.f32 %v6561, %v6571
      %v6588 = vmul.f32 %v6560, %v6572
      %v6589 = vmul.f32 %v6559, %v6573
      %v6590 = vmul.f32 %v6558, %v6574
      %v6591 = vmul.f32 %v6557, %v6575
      %v6592 = vmul.f32 %v6564, %v6576
      %6593 = vset.pattern.permute.xlu0 7
      %6594 = vperm.xlu0 %6593, %v6139
      %v6595 = vpop.permute.xlu0 %6594
      %v6597 = vmul.f32 %v6585, %v6595
      %v6598 = vmul.f32 %v6586, %v6595
      %v6599 = vmul.f32 %v6587, %v6595
      %v6600 = vmul.f32 %v6588, %v6595
      %v6601 = vmul.f32 %v6589, %v6595
      %v6602 = vmul.f32 %v6590, %v6595
      %v6603 = vmul.f32 %v6591, %v6595
      %v6604 = vmul.f32 %v6592, %v6595
      %v6605 = vadd.f32 %v6533, %v6597
      %v6606 = vadd.f32 %v6534, %v6598
      %v6607 = vadd.f32 %v6535, %v6599
      %v6608 = vadd.f32 %v6536, %v6600
      %v6609 = vadd.f32 %v6537, %v6601
      %v6610 = vadd.f32 %v6538, %v6602
      %v6611 = vadd.f32 %v6539, %v6603
      %v6612 = vadd.f32 %v6540, %v6604
      %6613 = vrot.lane.b32.xlu0 %v5902, 111
      %v6614 = vpop.permute.xlu0 %6613
      %6615 = vrot.lane.b32.xlu0 %v5928, 111
      %v6616 = vpop.permute.xlu0 %6615
      %6617 = vrot.lane.b32.xlu0 %v5954, 111
      %v6618 = vpop.permute.xlu0 %6617
      %6619 = vrot.lane.b32.xlu0 %v5980, 111
      %v6620 = vpop.permute.xlu0 %6619
      %6621 = vrot.lane.b32.xlu0 %v6006, 111
      %v6622 = vpop.permute.xlu0 %6621
      %6623 = vrot.lane.b32.xlu0 %v6032, 111
      %v6624 = vpop.permute.xlu0 %6623
      %6625 = vrot.lane.b32.xlu0 %v6058, 111
      %v6626 = vpop.permute.xlu0 %6625
      %6627 = vrot.lane.b32.xlu0 %v6084, 111
      %v6628 = vpop.permute.xlu0 %6627
      %v6629 = vsel %vm727, %v6626, %v6628
      %v6630 = vsel %vm727, %v6624, %v6626
      %v6631 = vsel %vm727, %v6622, %v6624
      %v6632 = vsel %vm727, %v6620, %v6622
      %v6633 = vsel %vm727, %v6618, %v6620
      %v6634 = vsel %vm727, %v6616, %v6618
      %v6635 = vsel %vm727, %v6614, %v6616
      %v6636 = vsel %vm727, %v6628, %v6614
      %v6637 = vld [vmem:[%s1139] ss:$8 sm:$0xf]
      %v6638 = vld [vmem:[%s1139] ss:$8 sm:$0xf0]
      %v6639 = vor.u32 %v6637, %v6638
      %v6641 = vperm.slane %v6639, 0
      %v6642 = vperm.slane %v6639, 1
      %v6643 = vperm.slane %v6639, 2
      %v6644 = vperm.slane %v6639, 3
      %v6645 = vperm.slane %v6639, 4
      %v6646 = vperm.slane %v6639, 5
      %v6647 = vperm.slane %v6639, 6
      %v6648 = vperm.slane %v6639, 7
      %v6657 = vmul.f32 %v6635, %v6641
      %v6658 = vmul.f32 %v6634, %v6642
      %v6659 = vmul.f32 %v6633, %v6643
      %v6660 = vmul.f32 %v6632, %v6644
      %v6661 = vmul.f32 %v6631, %v6645
      %v6662 = vmul.f32 %v6630, %v6646
      %v6663 = vmul.f32 %v6629, %v6647
      %v6664 = vmul.f32 %v6636, %v6648
      %6665 = vset.pattern.permute.xlu0 8
      %6666 = vperm.xlu0 %6665, %v6139
      %v6667 = vpop.permute.xlu0 %6666
      %v6669 = vmul.f32 %v6657, %v6667
      %v6670 = vmul.f32 %v6658, %v6667
      %v6671 = vmul.f32 %v6659, %v6667
      %v6672 = vmul.f32 %v6660, %v6667
      %v6673 = vmul.f32 %v6661, %v6667
      %v6674 = vmul.f32 %v6662, %v6667
      %v6675 = vmul.f32 %v6663, %v6667
      %v6676 = vmul.f32 %v6664, %v6667
      %v6677 = vadd.f32 %v6605, %v6669
      %v6678 = vadd.f32 %v6606, %v6670
      %v6679 = vadd.f32 %v6607, %v6671
      %v6680 = vadd.f32 %v6608, %v6672
      %v6681 = vadd.f32 %v6609, %v6673
      %v6682 = vadd.f32 %v6610, %v6674
      %v6683 = vadd.f32 %v6611, %v6675
      %v6684 = vadd.f32 %v6612, %v6676
      %v6685 = vld [vmem:[%s19] sm:$0xf]
      %6687 = vset.pattern.permute.xlu0 0
      %6688 = vperm.xlu0 %6687, %v6685
      %v6689 = vpop.permute.xlu0 %6688
      %v6691 = vadd.f32 %v6677, %v6689
      %v6692 = vadd.f32 %v6678, %v6689
      %v6693 = vadd.f32 %v6679, %v6689
      %v6694 = vadd.f32 %v6680, %v6689
      %v6695 = vadd.f32 %v6681, %v6689
      %v6696 = vadd.f32 %v6682, %v6689
      %v6697 = vadd.f32 %v6683, %v6689
      %v6698 = vadd.f32 %v6684, %v6689
      %v6707 = vrot.slane %v6691, 4
      %v6708 = vrot.slane %v6692, 4
      %v6709 = vrot.slane %v6693, 4
      %v6710 = vrot.slane %v6694, 4
      %v6711 = vrot.slane %v6695, 4
      %v6712 = vrot.slane %v6696, 4
      %v6713 = vrot.slane %v6697, 4
      %v6714 = vrot.slane %v6698, 4
      %v6723 = vsel %vm1403, %v5902, %v6707
      %v6724 = vsel %vm1403, %v5928, %v6708
      %v6725 = vsel %vm1403, %v5954, %v6709
      %v6726 = vsel %vm1403, %v5980, %v6710
      %v6727 = vsel %vm1403, %v6006, %v6711
      %v6728 = vsel %vm1403, %v6032, %v6712
      %v6729 = vsel %vm1403, %v6058, %v6713
      %v6730 = vsel %vm1403, %v6084, %v6714
      %v6731 = vld [vmem:[%s624] sm:$0xff]
      %v6732 = vld [vmem:[%s624 + $0x8] sm:$0xff]
      %v6733 = vld [vmem:[%s624 + $0x10] sm:$0xff]
      %v6734 = vld [vmem:[%s624 + $0x18] sm:$0xff]
      %v6735 = vunpack.c.l.bf16 %v6731
      %v6736 = vunpack.c.h.bf16 %v6731
      %v6737 = vunpack.c.l.bf16 %v6732
      %v6738 = vunpack.c.h.bf16 %v6732
      %v6739 = vunpack.c.l.bf16 %v6733
      %v6740 = vunpack.c.h.bf16 %v6733
      %v6741 = vunpack.c.l.bf16 %v6734
      %v6742 = vunpack.c.h.bf16 %v6734
      %v6743 = vadd.f32 %v6723, %v6735
      %v6744 = vadd.f32 %v6724, %v6736
      %v6745 = vadd.f32 %v6725, %v6737
      %v6746 = vadd.f32 %v6726, %v6738
      %v6747 = vadd.f32 %v6727, %v6739
      %v6748 = vadd.f32 %v6728, %v6740
      %v6749 = vadd.f32 %v6729, %v6741
      %v6750 = vadd.f32 %v6730, %v6742
      %v6751 = vpack.c.bf16 %v6744, %v6743
      %v6752 = vpack.c.bf16 %v6746, %v6745
      %v6753 = vpack.c.bf16 %v6748, %v6747
      %v6754 = vpack.c.bf16 %v6750, %v6749
      %6755 = vst [vmem:[%s629] sm:$0xff] %v6751
      %6756 = vst [vmem:[%s629 + $0x8] sm:$0xff] %v6752
      %6757 = vst [vmem:[%s629 + $0x10] sm:$0xff] %v6753
      %6758 = vst [vmem:[%s629 + $0x18] sm:$0xff] %v6754
      %p6759 = scmp.lt.s32.totalorder %s31, 1
      %s6760 = scalar_select %p6759, %s31, 1
      %s6761 = smul.addr %s6760, 8
      %s6762 = smul.addr %s6761, 4
      %s6763 = scalar_lea.vmem %s20, %s6762
      // Predicated region
      $region101: #{ghost_bottleneck_v2.1} parent=99 // pred_check
        %p6764 = pneg %p474
      $region102: #{ghost_bottleneck_v2.1} parent=99 // pred_check_branch
        %6766 = sbr.rel (%p6764) target = $region104
      $region103: #{ghost_bottleneck_v2.1} parent=99 // pred_region
        _
      $region104: #{ghost_bottleneck_v2.1} parent=99 // pred_fallthru
        _
    $region100: #{ghost_bottleneck_v2.1} parent=5 // pred_fallthru
      _
    %p6767 = scmp.le.s32.totalorder 2, %s26
    // Predicated region
    $region105: #{ghost_bottleneck_v2.1} parent=5 // pred_check
      %p6768 = pneg %p6767
    $region106: #{ghost_bottleneck_v2.1} parent=5 // pred_check_branch
      %6770 = sbr.rel (%p6768) target = $region108
    $region107: #{ghost_bottleneck_v2.1} parent=5 // pred_region
      %s6771 = ssub.s32 %s26, 2
      // Predicated region
      $region109: #{ghost_bottleneck_v2.1} parent=107 // pred_check
        %p6772 = pneg %p480
      $region110: #{ghost_bottleneck_v2.1} parent=107 // pred_check_branch
        %6774 = sbr.rel (%p6772) target = $region112
      $region111: #{ghost_bottleneck_v2.1} parent=107 // pred_region
        %p6775 = scmp.lt.s32.totalorder %s32, 1
        %s6776 = scalar_select %p6775, %s32, 1
        %s6777 = smul.addr %s6776, 8
        %s6778 = smul.addr %s6777, 4
        %s6779 = scalar_lea.vmem %s20, %s6778
      $region112: #{ghost_bottleneck_v2.1} parent=107 // pred_fallthru
        _
    $region108: #{ghost_bottleneck_v2.1} parent=5 // pred_fallthru
      _
  $region6: #{ghost_bottleneck_v2.1} parent=0 // loop_footer
    %s30 = sadd.s32 1, %s26
  $region7: #{ghost_bottleneck_v2.1} parent=0 // loop_footer_branch
    %25 = sbr.rel target = $region3
  $region8: #{ghost_bottleneck_v2.1} parent=0 // loop_exit
    _

</llo_original>
